<compile_context>
chip_gen: v5e
topology: v5e:2x2
jax: 0.10.0
libtpu: 0.0.40
codegen_flags: <defaults>
</compile_context>

<pallas_src>
import functools

import jax
import jax.numpy as jnp
from jax import lax
from jax.experimental import pallas as pl
from jax.experimental.pallas import tpu as pltpu

# (expand_ratio, out_channels, stride, has_residual) for features[1..5]
_BLOCK_CFG = (
    (1, 16, 1, False),
    (6, 24, 2, False),
    (6, 24, 1, True),
    (6, 32, 2, False),
    (6, 32, 1, True),
)
_STEM_COUT = 32
_BN_EPS = 1e-5


# --------------------------------------------------------------------------- #
# fused kernel
# --------------------------------------------------------------------------- #
def _relu6(x):
    return jnp.clip(x, 0.0, 6.0)


def _stride1_block(x, H, W, cexp, we, be, wd, bd, wp, bp, pad_ref, has_residual):
    """[1x1 expand+ReLU6] -> dw3x3 s1 + ReLU6 -> 1x1 project (+ residual)."""
    f32 = jnp.float32
    M = H * W
    if we is not None:
        h = _relu6(jnp.dot(x, we[...], preferred_element_type=f32) + be[...])
    else:
        h = x

    # Border zeros via one aligned full clear (replaces per-sublane masked
    # column stores); interior fully overwritten.  Runs every grid step, so it
    # is megacore-safe (each core's private scratch is always initialised).
    pad_ref[...] = jnp.zeros(pad_ref.shape, f32)
    pad_ref[1:H + 1, 1:W + 1, :] = h.reshape(H, W, cexp)

    # Hoisted column shift: 3 column-shifted copies; the 3 row taps per copy
    # are free leading-dim slices (3 unaligned copies instead of 9).
    acc = jnp.zeros((H, W, cexp), f32)
    for dw in range(3):
        col = pad_ref[:, dw:dw + W, :]                      # (H+2, W, cexp)
        for dh in range(3):
            acc = acc + col[dh:dh + H] * wd[3 * dh + dw].reshape(1, 1, cexp)
    a2 = _relu6(acc.reshape(M, cexp) + bd[...])

    y = jnp.dot(a2, wp[...], preferred_element_type=f32) + bp[...]
    if has_residual:
        y = y + x
    return y


def _stride2_block(x, H, W, cexp, we, be, wd, bd, wp, bp, xs_ref, padw_ref):
    """[1x1 expand+ReLU6] -> dw3x3 s2 + ReLU6 -> 1x1 project (no residual)."""
    f32 = jnp.float32
    Ho, Wo = H // 2, W // 2
    Mo = Ho * Wo
    M = H * W

    # The stride-2 decimation needs exactly one even/odd column split.  Do it
    # on the narrow (M, Cin) block input via two strided reads of a tiny
    # staging scratch (W even => flat-pixel-index parity == column parity),
    # instead of 9 strided gathers of the 6x-wider expanded activation.
    xs_ref[...] = x
    x_even = xs_ref[pl.ds(0, M // 2, 2), :]                 # even columns
    x_odd = xs_ref[pl.ds(1, M // 2, 2), :]                  # odd columns
    h_even = _relu6(jnp.dot(x_even, we[...], preferred_element_type=f32) + be[...])
    h_odd = _relu6(jnp.dot(x_odd, we[...], preferred_element_type=f32) + be[...])

    # Column-parity-split padded scratch: padw[p, i, jj, :] = hpad[i, 2*jj+p, :]
    padw_ref[...] = jnp.zeros(padw_ref.shape, f32)
    padw_ref[1:2, 1:H + 1, 0:Wo, :] = h_even.reshape(1, H, Wo, cexp)
    padw_ref[0:1, 1:H + 1, 1:Wo + 1, :] = h_odd.reshape(1, H, Wo, cexp)

    plane0 = padw_ref[0]                                    # (H+2, Wo+1, cexp)
    plane1 = padw_ref[1]

    acc = jnp.zeros((Ho, Wo, cexp), f32)
    # dw -> (parity plane, column offset):  0->(p0,0)  1->(p1,0)  2->(p0,1)
    for dw, (plane, joff) in enumerate(((plane0, 0), (plane1, 0), (plane0, 1))):
        colv = plane[:, joff:joff + Wo, :]                  # contiguous slice
        colv = colv.reshape(Ho + 1, 2, Wo, cexp)            # row parity: free split
        for dh in range(3):
            tap = colv[(dh >> 1):(dh >> 1) + Ho, dh & 1]    # (Ho, Wo, cexp)
            acc = acc + tap * wd[3 * dh + dw].reshape(1, 1, cexp)
    a2 = _relu6(acc.reshape(Mo, cexp) + bd[...])

    return jnp.dot(a2, wp[...], preferred_element_type=f32) + bp[...]


def _fused_kernel(*refs, hw):
    """stem + features[1..5] for one batch element; activations stay in VMEM."""
    f32 = jnp.float32
    H, W = hw
    Ho1, Wo1 = H // 2, W // 2
    M1 = Ho1 * Wo1

    it = iter(refs)
    x_ref, w0_ref, b0_ref = next(it), next(it), next(it)
    blk = []
    for exp, _, _, _ in _BLOCK_CFG:
        d = {}
        if exp != 1:
            d["we"], d["be"] = next(it), next(it)
        d["wd"], d["bd"] = next(it), next(it)
        d["wp"], d["bp"] = next(it), next(it)
        blk.append(d)
    out_ref = next(it)
    scratch = list(it)

    # ---- features[0]: 3x3 s2 conv expressed as a 2x2 s1 conv on the 2x2
    # space-to-depth input (4 fused MXU dots, no strided reads) --------------
    xs = x_ref[0]                                           # (Ho1+1, Wo1+1, 12)
    acc = jnp.zeros((M1, _STEM_COUT), f32)
    for t, (a, b) in enumerate(((0, 0), (0, 1), (1, 0), (1, 1))):
        tap = xs[a:a + Ho1, b:b + Wo1, :].reshape(M1, 12)
        acc = acc + jnp.dot(tap, w0_ref[t], preferred_element_type=f32)
    h = _relu6(acc + b0_ref[...])                           # (M1, 32)

    # ---- features[1..5]: fused inverted-residual chain ---------------------
    curH, curW, cin = Ho1, Wo1, _STEM_COUT
    si = iter(scratch)
    for (exp, cout, stride, has_res), r in zip(_BLOCK_CFG, blk):
        cexp = cin * exp
        we, be = r.get("we"), r.get("be")
        if stride == 1:
            h = _stride1_block(h, curH, curW, cexp, we, be, r["wd"], r["bd"],
                               r["wp"], r["bp"], next(si), has_res)
        else:
            h = _stride2_block(h, curH, curW, cexp, we, be, r["wd"], r["bd"],
                               r["wp"], r["bp"], next(si), next(si))
            curH, curW = curH // 2, curW // 2
        cin = cout

    out_ref[0] = h.astype(out_ref.dtype)


# --------------------------------------------------------------------------- #
# pallas_call wrapper
# --------------------------------------------------------------------------- #
def _wspec(shape):
    zero = (0,) * len(shape)
    return pl.BlockSpec(shape, lambda n, _z=zero: _z)


@jax.jit
def mobilenet_v2_features(x_nchw, params):
    """Input (N, 3, H, W) f32 -> output (N, 32, H//8, W//8): features[0:6]."""
    N, _, H, W = x_nchw.shape
    Ho1, Wo1 = H // 2, W // 2
    H8, W8 = H // 8, W // 8
    m_out = H8 * W8
    c_out = _BLOCK_CFG[-1][1]

    # Single cheap XLA re-layout: NCHW -> padded NHWC -> 2x2 space-to-depth
    # (same byte count as the input; replaces the old 9x im2col blow-up).
    x_nhwc = jnp.transpose(x_nchw, (0, 2, 3, 1))
    xpad = jnp.pad(x_nhwc, ((0, 0), (1, 1), (1, 1), (0, 0)))
    xs2d = xpad.reshape(N, Ho1 + 1, 2, Wo1 + 1, 2, 3)
    xs2d = xs2d.transpose(0, 1, 3, 2, 4, 5).reshape(N, Ho1 + 1, Wo1 + 1, 12)

    args = [xs2d, params["stem_w"], params["stem_b"]]
    in_specs = [
        pl.BlockSpec((1, Ho1 + 1, Wo1 + 1, 12), lambda n: (n, 0, 0, 0)),
        _wspec((4, 12, _STEM_COUT)),
        _wspec((1, _STEM_COUT)),
    ]
    scratch_shapes = []
    curH, curW, cin = Ho1, Wo1, _STEM_COUT
    for (exp, cout, stride, _), p in zip(_BLOCK_CFG, params["blocks"]):
        cexp = cin * exp
        if exp != 1:
            args += [p["we"], p["be"]]
            in_specs += [_wspec((cin, cexp)), _wspec((1, cexp))]
        args += [p["wd"], p["bd"], p["wp"], p["bp"]]
        in_specs += [_wspec((9, 1, cexp)), _wspec((1, cexp)),
                     _wspec((cexp, cout)), _wspec((1, cout))]
        if stride == 1:
            scratch_shapes.append(
                pltpu.VMEM((curH + 2, curW + 2, cexp), jnp.float32))
        else:
            scratch_shapes.append(pltpu.VMEM((curH * curW, cin), jnp.float32))
            scratch_shapes.append(
                pltpu.VMEM((2, curH + 2, curW // 2 + 1, cexp), jnp.float32))
            curH, curW = curH // 2, curW // 2
        cin = cout

    out = pl.pallas_call(
        functools.partial(_fused_kernel, hw=(H, W)),
        out_shape=jax.ShapeDtypeStruct((N, m_out, c_out), x_nchw.dtype),
        grid_spec=pltpu.PrefetchScalarGridSpec(
            num_scalar_prefetch=0,
            grid=(N,),
            in_specs=in_specs,
            out_specs=pl.BlockSpec((1, m_out, c_out), lambda n: (n, 0, 0)),
            scratch_shapes=scratch_shapes,
        ),
        compiler_params=pltpu.CompilerParams(dimension_semantics=("parallel",)),
    )(*args)
    return jnp.transpose(out.reshape(N, H8, W8, c_out), (0, 3, 1, 2))


# --------------------------------------------------------------------------- #
# parameter synthesis, BN folding, pure-JAX reference
# --------------------------------------------------------------------------- #
def _make_bn(key, c):
    kg, kb, km, kv = jax.random.split(key, 4)
    gamma = 1.0 + 0.1 * jax.random.normal(kg, (c,), jnp.float32)
    beta = 0.1 * jax.random.normal(kb, (c,), jnp.float32)
    mean = 0.1 * jax.random.normal(km, (c,), jnp.float32)
    var = jax.random.uniform(kv, (c,), jnp.float32, minval=0.5, maxval=1.5)
    return gamma, beta, mean, var


def make_raw_params(key):
    keys = iter(jax.random.split(key, 64))
    raw = {"stem": {
        "w": jax.random.normal(next(keys), (3, 3, 3, _STEM_COUT), jnp.float32)
             * (2.0 / 27.0) ** 0.5,
        "bn": _make_bn(next(keys), _STEM_COUT)}}
    blocks, cin = [], _STEM_COUT
    for exp, cout, _, _ in _BLOCK_CFG:
        cexp = cin * exp
        prm = {}
        if exp != 1:
            prm["we"] = (jax.random.normal(next(keys), (cin, cexp), jnp.float32)
                         * (2.0 / cin) ** 0.5)
            prm["e_bn"] = _make_bn(next(keys), cexp)
        prm["wd"] = (jax.random.normal(next(keys), (3, 3, cexp), jnp.float32)
                     * (2.0 / 9.0) ** 0.5)
        prm["dw_bn"] = _make_bn(next(keys), cexp)
        prm["wp"] = (jax.random.normal(next(keys), (cexp, cout), jnp.float32)
                     * (2.0 / cexp) ** 0.5)
        prm["p_bn"] = _make_bn(next(keys), cout)
        blocks.append(prm)
        cin = cout
    raw["blocks"] = blocks
    return raw


def _fold(w, bn):
    gamma, beta, mean, var = bn
    s = gamma / jnp.sqrt(var + _BN_EPS)
    return w * s, beta - mean * s


def _pack_stem(wf, bf):
    """(3,3,3,Cout) folded stem weight -> (4, 12, Cout) taps for the 2x2-conv
    reformulation on the 2x2 space-to-depth input (unused phase = 0)."""
    cout = wf.shape[-1]
    w = jnp.zeros((2, 2, 2, 2, 3, cout), wf.dtype)   # (a, b, ph, pw, c, cout)
    for dh in range(3):
        a, ph = dh // 2, dh % 2
        for dw in range(3):
            b, pw = dw // 2, dw % 2
            w = w.at[a, b, ph, pw].set(wf[dh, dw])
    return w.reshape(4, 12, cout), bf.reshape(1, cout)


def fold_params(raw):
    sw, sb = _fold(raw["stem"]["w"], raw["stem"]["bn"])
    stem_w, stem_b = _pack_stem(sw, sb)
    params = {"stem_w": stem_w, "stem_b": stem_b, "blocks": []}
    for prm in raw["blocks"]:
        fp = {}
        if "we" in prm:
            we, be = _fold(prm["we"], prm["e_bn"])
            fp["we"], fp["be"] = we, be.reshape(1, -1)
        wd, bd = _fold(prm["wd"], prm["dw_bn"])
        fp["wd"], fp["bd"] = wd.reshape(9, 1, -1), bd.reshape(1, -1)
        wp, bp = _fold(prm["wp"], prm["p_bn"])
        fp["wp"], fp["bp"] = wp, bp.reshape(1, -1)
        params["blocks"].append(fp)
    return params


def _reference(x_nchw, raw):
    """Pure-JAX reference: explicit (unfolded) eval-mode BatchNorm."""
    hi = lax.Precision.HIGHEST

    def bn(t, p):
        gamma, beta, mean, var = p
        return (t - mean) * (gamma / jnp.sqrt(var + _BN_EPS)) + beta

    relu6 = lambda t: jnp.clip(t, 0.0, 6.0)
    x = jnp.transpose(x_nchw, (0, 2, 3, 1))

    w = raw["stem"]["w"]
    dn = lax.conv_dimension_numbers(x.shape, w.shape, ("NHWC", "HWIO", "NHWC"))
    y = lax.conv_general_dilated(x, w, (2, 2), [(1, 1), (1, 1)],
                                 dimension_numbers=dn, precision=hi)
    y = relu6(bn(y, raw["stem"]["bn"]))

    for (_, _, stride, has_res), prm in zip(_BLOCK_CFG, raw["blocks"]):
        inp = y
        if "we" in prm:
            y = relu6(bn(jnp.einsum("nhwc,cd->nhwd", y, prm["we"],
                                    precision=hi), prm["e_bn"]))
        c = y.shape[-1]
        wdw = prm["wd"].reshape(3, 3, 1, c)
        dn = lax.conv_dimension_numbers(y.shape, wdw.shape,
                                        ("NHWC", "HWIO", "NHWC"))
        y = lax.conv_general_dilated(y, wdw, (stride, stride), [(1, 1), (1, 1)],
                                     dimension_numbers=dn,
                                     feature_group_count=c, precision=hi)
        y = relu6(bn(y, prm["dw_bn"]))
        y = bn(jnp.einsum("nhwc,cd->nhwd", y, prm["wp"], precision=hi),
               prm["p_bn"])
        if has_res:
            y = y + inp
    return jnp.transpose(y, (0, 3, 1, 2))


if __name__ == "__main__":
    # small shapes consistent with the module: RGB input, three stride-2 stages
    N, C, H, W = 2, 3, 32, 32
    key = jax.random.PRNGKey(0)
    kx, kp = jax.random.split(key)
    x = jax.random.normal(kx, (N, C, H, W), jnp.float32)

    raw = make_raw_params(kp)
    params = fold_params(raw)

    out = jax.block_until_ready(mobilenet_v2_features(x, params))
    ref = jax.block_until_ready(_reference(x, raw))

    assert out.shape == (N, 32, H // 8, W // 8), out.shape
    err = float(jnp.max(jnp.abs(out - ref)))
    assert jnp.allclose(out, ref, atol=2e-3, rtol=2e-3), (
        f"mismatch vs JAX reference: max abs err = {err}")
    print("KERNEL_OK")
</pallas_src>

<mosaic_0001>
module attributes {stable_mosaic.version = 11 : i64} {
  func.func @_fused_kernel(%arg0: i32, %arg1: memref<1x17x17x12xf32, #tpu.memory_space<vmem>>, %arg2: memref<4x12x32xf32, #tpu.memory_space<vmem>>, %arg3: memref<1x32xf32, #tpu.memory_space<vmem>>, %arg4: memref<9x1x32xf32, #tpu.memory_space<vmem>>, %arg5: memref<1x32xf32, #tpu.memory_space<vmem>>, %arg6: memref<32x16xf32, #tpu.memory_space<vmem>>, %arg7: memref<1x16xf32, #tpu.memory_space<vmem>>, %arg8: memref<16x96xf32, #tpu.memory_space<vmem>>, %arg9: memref<1x96xf32, #tpu.memory_space<vmem>>, %arg10: memref<9x1x96xf32, #tpu.memory_space<vmem>>, %arg11: memref<1x96xf32, #tpu.memory_space<vmem>>, %arg12: memref<96x24xf32, #tpu.memory_space<vmem>>, %arg13: memref<1x24xf32, #tpu.memory_space<vmem>>, %arg14: memref<24x144xf32, #tpu.memory_space<vmem>>, %arg15: memref<1x144xf32, #tpu.memory_space<vmem>>, %arg16: memref<9x1x144xf32, #tpu.memory_space<vmem>>, %arg17: memref<1x144xf32, #tpu.memory_space<vmem>>, %arg18: memref<144x24xf32, #tpu.memory_space<vmem>>, %arg19: memref<1x24xf32, #tpu.memory_space<vmem>>, %arg20: memref<24x144xf32, #tpu.memory_space<vmem>>, %arg21: memref<1x144xf32, #tpu.memory_space<vmem>>, %arg22: memref<9x1x144xf32, #tpu.memory_space<vmem>>, %arg23: memref<1x144xf32, #tpu.memory_space<vmem>>, %arg24: memref<144x32xf32, #tpu.memory_space<vmem>>, %arg25: memref<1x32xf32, #tpu.memory_space<vmem>>, %arg26: memref<32x192xf32, #tpu.memory_space<vmem>>, %arg27: memref<1x192xf32, #tpu.memory_space<vmem>>, %arg28: memref<9x1x192xf32, #tpu.memory_space<vmem>>, %arg29: memref<1x192xf32, #tpu.memory_space<vmem>>, %arg30: memref<192x32xf32, #tpu.memory_space<vmem>>, %arg31: memref<1x32xf32, #tpu.memory_space<vmem>>, %arg32: memref<1x16x32xf32, #tpu.memory_space<vmem>>, %arg33: memref<18x18x32xf32, #tpu.memory_space<vmem>>, %arg34: memref<256x16xf32, #tpu.memory_space<vmem>>, %arg35: memref<2x18x9x96xf32, #tpu.memory_space<vmem>>, %arg36: memref<10x10x144xf32, #tpu.memory_space<vmem>>, %arg37: memref<64x24xf32, #tpu.memory_space<vmem>>, %arg38: memref<2x10x5x144xf32, #tpu.memory_space<vmem>>, %arg39: memref<6x6x192xf32, #tpu.memory_space<vmem>>) attributes {dimension_semantics = [#tpu.dimension_semantics<parallel>], iteration_bounds = array<i64: 2>, scalar_prefetch = 0 : i64, scratch_operands = 7 : i64, tpu.core_type = #tpu.core_type<tc>, window_params = [{transform_indices = @transform_0, window_bounds = array<i64: 1, 17, 17, 12>}, {pipeline_mode = #tpu.pipeline_mode<synchronous>, transform_indices = @transform_1, window_bounds = array<i64: 4, 12, 32>}, {pipeline_mode = #tpu.pipeline_mode<synchronous>, transform_indices = @transform_2, window_bounds = array<i64: 1, 32>}, {pipeline_mode = #tpu.pipeline_mode<synchronous>, transform_indices = @transform_3, window_bounds = array<i64: 9, 1, 32>}, {pipeline_mode = #tpu.pipeline_mode<synchronous>, transform_indices = @transform_4, window_bounds = array<i64: 1, 32>}, {pipeline_mode = #tpu.pipeline_mode<synchronous>, transform_indices = @transform_5, window_bounds = array<i64: 32, 16>}, {pipeline_mode = #tpu.pipeline_mode<synchronous>, transform_indices = @transform_6, window_bounds = array<i64: 1, 16>}, {pipeline_mode = #tpu.pipeline_mode<synchronous>, transform_indices = @transform_7, window_bounds = array<i64: 16, 96>}, {pipeline_mode = #tpu.pipeline_mode<synchronous>, transform_indices = @transform_8, window_bounds = array<i64: 1, 96>}, {pipeline_mode = #tpu.pipeline_mode<synchronous>, transform_indices = @transform_9, window_bounds = array<i64: 9, 1, 96>}, {pipeline_mode = #tpu.pipeline_mode<synchronous>, transform_indices = @transform_10, window_bounds = array<i64: 1, 96>}, {pipeline_mode = #tpu.pipeline_mode<synchronous>, transform_indices = @transform_11, window_bounds = array<i64: 96, 24>}, {pipeline_mode = #tpu.pipeline_mode<synchronous>, transform_indices = @transform_12, window_bounds = array<i64: 1, 24>}, {pipeline_mode = #tpu.pipeline_mode<synchronous>, transform_indices = @transform_13, window_bounds = array<i64: 24, 144>}, {pipeline_mode = #tpu.pipeline_mode<synchronous>, transform_indices = @transform_14, window_bounds = array<i64: 1, 144>}, {pipeline_mode = #tpu.pipeline_mode<synchronous>, transform_indices = @transform_15, window_bounds = array<i64: 9, 1, 144>}, {pipeline_mode = #tpu.pipeline_mode<synchronous>, transform_indices = @transform_16, window_bounds = array<i64: 1, 144>}, {pipeline_mode = #tpu.pipeline_mode<synchronous>, transform_indices = @transform_17, window_bounds = array<i64: 144, 24>}, {pipeline_mode = #tpu.pipeline_mode<synchronous>, transform_indices = @transform_18, window_bounds = array<i64: 1, 24>}, {pipeline_mode = #tpu.pipeline_mode<synchronous>, transform_indices = @transform_19, window_bounds = array<i64: 24, 144>}, {pipeline_mode = #tpu.pipeline_mode<synchronous>, transform_indices = @transform_20, window_bounds = array<i64: 1, 144>}, {pipeline_mode = #tpu.pipeline_mode<synchronous>, transform_indices = @transform_21, window_bounds = array<i64: 9, 1, 144>}, {pipeline_mode = #tpu.pipeline_mode<synchronous>, transform_indices = @transform_22, window_bounds = array<i64: 1, 144>}, {pipeline_mode = #tpu.pipeline_mode<synchronous>, transform_indices = @transform_23, window_bounds = array<i64: 144, 32>}, {pipeline_mode = #tpu.pipeline_mode<synchronous>, transform_indices = @transform_24, window_bounds = array<i64: 1, 32>}, {pipeline_mode = #tpu.pipeline_mode<synchronous>, transform_indices = @transform_25, window_bounds = array<i64: 32, 192>}, {pipeline_mode = #tpu.pipeline_mode<synchronous>, transform_indices = @transform_26, window_bounds = array<i64: 1, 192>}, {pipeline_mode = #tpu.pipeline_mode<synchronous>, transform_indices = @transform_27, window_bounds = array<i64: 9, 1, 192>}, {pipeline_mode = #tpu.pipeline_mode<synchronous>, transform_indices = @transform_28, window_bounds = array<i64: 1, 192>}, {pipeline_mode = #tpu.pipeline_mode<synchronous>, transform_indices = @transform_29, window_bounds = array<i64: 192, 32>}, {pipeline_mode = #tpu.pipeline_mode<synchronous>, transform_indices = @transform_30, window_bounds = array<i64: 1, 32>}, {transform_indices = @transform_31, window_bounds = array<i64: 1, 16, 32>}]} {
    %c0 = arith.constant 0 : index
    %c0_0 = arith.constant 0 : index
    %c0_1 = arith.constant 0 : index
    %c0_2 = arith.constant 0 : index
    %0 = vector.load %arg1[%c0, %c0_0, %c0_1, %c0_2] : memref<1x17x17x12xf32, #tpu.memory_space<vmem>>, vector<1x17x17x12xf32>
    %1 = vector.shape_cast %0 : vector<1x17x17x12xf32> to vector<17x17x12xf32>
    %cst = arith.constant 0.000000e+00 : f32
    %2 = vector.broadcast %cst : f32 to vector<256x32xf32>
    %3 = vector.extract_strided_slice %1 {offsets = [0, 0, 0], sizes = [16, 16, 12], strides = [1, 1, 1]} : vector<17x17x12xf32> to vector<16x16x12xf32>
    %4 = vector.shape_cast %3 : vector<16x16x12xf32> to vector<256x12xf32>
    %c0_3 = arith.constant 0 : index
    %c0_4 = arith.constant 0 : index
    %c0_5 = arith.constant 0 : index
    %5 = vector.load %arg2[%c0_3, %c0_4, %c0_5] : memref<4x12x32xf32, #tpu.memory_space<vmem>>, vector<1x12x32xf32>
    %6 = vector.shape_cast %5 : vector<1x12x32xf32> to vector<12x32xf32>
    %cst_6 = arith.constant dense<0.000000e+00> : vector<256x32xf32>
    %7 = tpu.matmul %4, %6, %cst_6 {dimension_numbers = #tpu.dot_dimension_numbers<[1], [0], [0], [1], [0, 0, 1, 1], [], []>} : vector<256x12xf32>, vector<12x32xf32>, vector<256x32xf32> -> vector<256x32xf32>
    %8 = arith.addf %2, %7 : vector<256x32xf32>
    %9 = vector.extract_strided_slice %1 {offsets = [0, 1, 0], sizes = [16, 16, 12], strides = [1, 1, 1]} : vector<17x17x12xf32> to vector<16x16x12xf32>
    %10 = vector.shape_cast %9 : vector<16x16x12xf32> to vector<256x12xf32>
    %c1 = arith.constant 1 : index
    %c0_7 = arith.constant 0 : index
    %c0_8 = arith.constant 0 : index
    %11 = vector.load %arg2[%c1, %c0_7, %c0_8] : memref<4x12x32xf32, #tpu.memory_space<vmem>>, vector<1x12x32xf32>
    %12 = vector.shape_cast %11 : vector<1x12x32xf32> to vector<12x32xf32>
    %cst_9 = arith.constant dense<0.000000e+00> : vector<256x32xf32>
    %13 = tpu.matmul %10, %12, %cst_9 {dimension_numbers = #tpu.dot_dimension_numbers<[1], [0], [0], [1], [0, 0, 1, 1], [], []>} : vector<256x12xf32>, vector<12x32xf32>, vector<256x32xf32> -> vector<256x32xf32>
    %14 = arith.addf %8, %13 : vector<256x32xf32>
    %15 = vector.extract_strided_slice %1 {offsets = [1, 0, 0], sizes = [16, 16, 12], strides = [1, 1, 1]} : vector<17x17x12xf32> to vector<16x16x12xf32>
    %16 = vector.shape_cast %15 : vector<16x16x12xf32> to vector<256x12xf32>
    %c2 = arith.constant 2 : index
    %c0_10 = arith.constant 0 : index
    %c0_11 = arith.constant 0 : index
    %17 = vector.load %arg2[%c2, %c0_10, %c0_11] : memref<4x12x32xf32, #tpu.memory_space<vmem>>, vector<1x12x32xf32>
    %18 = vector.shape_cast %17 : vector<1x12x32xf32> to vector<12x32xf32>
    %cst_12 = arith.constant dense<0.000000e+00> : vector<256x32xf32>
    %19 = tpu.matmul %16, %18, %cst_12 {dimension_numbers = #tpu.dot_dimension_numbers<[1], [0], [0], [1], [0, 0, 1, 1], [], []>} : vector<256x12xf32>, vector<12x32xf32>, vector<256x32xf32> -> vector<256x32xf32>
    %20 = arith.addf %14, %19 : vector<256x32xf32>
    %21 = vector.extract_strided_slice %1 {offsets = [1, 1, 0], sizes = [16, 16, 12], strides = [1, 1, 1]} : vector<17x17x12xf32> to vector<16x16x12xf32>
    %22 = vector.shape_cast %21 : vector<16x16x12xf32> to vector<256x12xf32>
    %c3 = arith.constant 3 : index
    %c0_13 = arith.constant 0 : index
    %c0_14 = arith.constant 0 : index
    %23 = vector.load %arg2[%c3, %c0_13, %c0_14] : memref<4x12x32xf32, #tpu.memory_space<vmem>>, vector<1x12x32xf32>
    %24 = vector.shape_cast %23 : vector<1x12x32xf32> to vector<12x32xf32>
    %cst_15 = arith.constant dense<0.000000e+00> : vector<256x32xf32>
    %25 = tpu.matmul %22, %24, %cst_15 {dimension_numbers = #tpu.dot_dimension_numbers<[1], [0], [0], [1], [0, 0, 1, 1], [], []>} : vector<256x12xf32>, vector<12x32xf32>, vector<256x32xf32> -> vector<256x32xf32>
    %26 = arith.addf %20, %25 : vector<256x32xf32>
    %c0_16 = arith.constant 0 : index
    %c0_17 = arith.constant 0 : index
    %27 = vector.load %arg3[%c0_16, %c0_17] : memref<1x32xf32, #tpu.memory_space<vmem>>, vector<1x32xf32>
    %28 = vector.broadcast %27 : vector<1x32xf32> to vector<256x32xf32>
    %29 = arith.addf %26, %28 : vector<256x32xf32>
    %cst_18 = arith.constant 0.000000e+00 : f32
    %cst_19 = arith.constant 6.000000e+00 : f32
    %30 = vector.broadcast %cst_18 : f32 to vector<256x32xf32>
    %31 = arith.maximumf %30, %29 : vector<256x32xf32>
    %32 = vector.broadcast %cst_19 : f32 to vector<256x32xf32>
    %33 = arith.minimumf %32, %31 : vector<256x32xf32>
    %cst_20 = arith.constant 0.000000e+00 : f32
    %34 = vector.broadcast %cst_20 : f32 to vector<18x18x32xf32>
    %c0_21 = arith.constant 0 : index
    %c0_22 = arith.constant 0 : index
    %c0_23 = arith.constant 0 : index
    %35 = vector.load %arg33[%c0_21, %c0_22, %c0_23] : memref<18x18x32xf32, #tpu.memory_space<vmem>>, vector<18x18x32xf32>
    tpu.vector_store %arg33[%c0_21, %c0_22, %c0_23], %34 {strides = array<i32>} : memref<18x18x32xf32, #tpu.memory_space<vmem>>, vector<18x18x32xf32>,
    %36 = vector.shape_cast %33 : vector<256x32xf32> to vector<16x16x32xf32>
    %c1_24 = arith.constant 1 : index
    %c1_25 = arith.constant 1 : index
    %c0_26 = arith.constant 0 : index
    %37 = vector.load %arg33[%c1_24, %c1_25, %c0_26] : memref<18x18x32xf32, #tpu.memory_space<vmem>>, vector<16x16x32xf32>
    tpu.vector_store %arg33[%c1_24, %c1_25, %c0_26], %36 {strides = array<i32>} : memref<18x18x32xf32, #tpu.memory_space<vmem>>, vector<16x16x32xf32>,
    %cst_27 = arith.constant 0.000000e+00 : f32
    %38 = vector.broadcast %cst_27 : f32 to vector<16x16x32xf32>
    %c0_28 = arith.constant 0 : index
    %c0_29 = arith.constant 0 : index
    %c0_30 = arith.constant 0 : index
    %39 = vector.load %arg33[%c0_28, %c0_29, %c0_30] : memref<18x18x32xf32, #tpu.memory_space<vmem>>, vector<18x16x32xf32>
    %40 = vector.extract_strided_slice %39 {offsets = [0, 0, 0], sizes = [16, 16, 32], strides = [1, 1, 1]} : vector<18x16x32xf32> to vector<16x16x32xf32>
    %c0_31 = arith.constant 0 : index
    %c0_32 = arith.constant 0 : index
    %c0_33 = arith.constant 0 : index
    %41 = vector.load %arg4[%c0_31, %c0_32, %c0_33] : memref<9x1x32xf32, #tpu.memory_space<vmem>>, vector<1x1x32xf32>
    %42 = vector.shape_cast %41 : vector<1x1x32xf32> to vector<1x32xf32>
    %43 = vector.shape_cast %42 : vector<1x32xf32> to vector<1x1x32xf32>
    %44 = vector.broadcast %43 : vector<1x1x32xf32> to vector<16x16x32xf32>
    %45 = arith.mulf %40, %44 : vector<16x16x32xf32>
    %46 = arith.addf %38, %45 : vector<16x16x32xf32>
    %47 = vector.extract_strided_slice %39 {offsets = [1, 0, 0], sizes = [16, 16, 32], strides = [1, 1, 1]} : vector<18x16x32xf32> to vector<16x16x32xf32>
    %c3_34 = arith.constant 3 : index
    %c0_35 = arith.constant 0 : index
    %c0_36 = arith.constant 0 : index
    %48 = vector.load %arg4[%c3_34, %c0_35, %c0_36] : memref<9x1x32xf32, #tpu.memory_space<vmem>>, vector<1x1x32xf32>
    %49 = vector.shape_cast %48 : vector<1x1x32xf32> to vector<1x32xf32>
    %50 = vector.shape_cast %49 : vector<1x32xf32> to vector<1x1x32xf32>
    %51 = vector.broadcast %50 : vector<1x1x32xf32> to vector<16x16x32xf32>
    %52 = arith.mulf %47, %51 : vector<16x16x32xf32>
    %53 = arith.addf %46, %52 : vector<16x16x32xf32>
    %54 = vector.extract_strided_slice %39 {offsets = [2, 0, 0], sizes = [16, 16, 32], strides = [1, 1, 1]} : vector<18x16x32xf32> to vector<16x16x32xf32>
    %c6 = arith.constant 6 : index
    %c0_37 = arith.constant 0 : index
    %c0_38 = arith.constant 0 : index
    %55 = vector.load %arg4[%c6, %c0_37, %c0_38] : memref<9x1x32xf32, #tpu.memory_space<vmem>>, vector<1x1x32xf32>
    %56 = vector.shape_cast %55 : vector<1x1x32xf32> to vector<1x32xf32>
    %57 = vector.shape_cast %56 : vector<1x32xf32> to vector<1x1x32xf32>
    %58 = vector.broadcast %57 : vector<1x1x32xf32> to vector<16x16x32xf32>
    %59 = arith.mulf %54, %58 : vector<16x16x32xf32>
    %60 = arith.addf %53, %59 : vector<16x16x32xf32>
    %c0_39 = arith.constant 0 : index
    %c1_40 = arith.constant 1 : index
    %c0_41 = arith.constant 0 : index
    %61 = vector.load %arg33[%c0_39, %c1_40, %c0_41] : memref<18x18x32xf32, #tpu.memory_space<vmem>>, vector<18x16x32xf32>
    %62 = vector.extract_strided_slice %61 {offsets = [0, 0, 0], sizes = [16, 16, 32], strides = [1, 1, 1]} : vector<18x16x32xf32> to vector<16x16x32xf32>
    %c1_42 = arith.constant 1 : index
    %c0_43 = arith.constant 0 : index
    %c0_44 = arith.constant 0 : index
    %63 = vector.load %arg4[%c1_42, %c0_43, %c0_44] : memref<9x1x32xf32, #tpu.memory_space<vmem>>, vector<1x1x32xf32>
    %64 = vector.shape_cast %63 : vector<1x1x32xf32> to vector<1x32xf32>
    %65 = vector.shape_cast %64 : vector<1x32xf32> to vector<1x1x32xf32>
    %66 = vector.broadcast %65 : vector<1x1x32xf32> to vector<16x16x32xf32>
    %67 = arith.mulf %62, %66 : vector<16x16x32xf32>
    %68 = arith.addf %60, %67 : vector<16x16x32xf32>
    %69 = vector.extract_strided_slice %61 {offsets = [1, 0, 0], sizes = [16, 16, 32], strides = [1, 1, 1]} : vector<18x16x32xf32> to vector<16x16x32xf32>
    %c4 = arith.constant 4 : index
    %c0_45 = arith.constant 0 : index
    %c0_46 = arith.constant 0 : index
    %70 = vector.load %arg4[%c4, %c0_45, %c0_46] : memref<9x1x32xf32, #tpu.memory_space<vmem>>, vector<1x1x32xf32>
    %71 = vector.shape_cast %70 : vector<1x1x32xf32> to vector<1x32xf32>
    %72 = vector.shape_cast %71 : vector<1x32xf32> to vector<1x1x32xf32>
    %73 = vector.broadcast %72 : vector<1x1x32xf32> to vector<16x16x32xf32>
    %74 = arith.mulf %69, %73 : vector<16x16x32xf32>
    %75 = arith.addf %68, %74 : vector<16x16x32xf32>
    %76 = vector.extract_strided_slice %61 {offsets = [2, 0, 0], sizes = [16, 16, 32], strides = [1, 1, 1]} : vector<18x16x32xf32> to vector<16x16x32xf32>
    %c7 = arith.constant 7 : index
    %c0_47 = arith.constant 0 : index
    %c0_48 = arith.constant 0 : index
    %77 = vector.load %arg4[%c7, %c0_47, %c0_48] : memref<9x1x32xf32, #tpu.memory_space<vmem>>, vector<1x1x32xf32>
    %78 = vector.shape_cast %77 : vector<1x1x32xf32> to vector<1x32xf32>
    %79 = vector.shape_cast %78 : vector<1x32xf32> to vector<1x1x32xf32>
    %80 = vector.broadcast %79 : vector<1x1x32xf32> to vector<16x16x32xf32>
    %81 = arith.mulf %76, %80 : vector<16x16x32xf32>
    %82 = arith.addf %75, %81 : vector<16x16x32xf32>
    %c0_49 = arith.constant 0 : index
    %c2_50 = arith.constant 2 : index
    %c0_51 = arith.constant 0 : index
    %83 = vector.load %arg33[%c0_49, %c2_50, %c0_51] : memref<18x18x32xf32, #tpu.memory_space<vmem>>, vector<18x16x32xf32>
    %84 = vector.extract_strided_slice %83 {offsets = [0, 0, 0], sizes = [16, 16, 32], strides = [1, 1, 1]} : vector<18x16x32xf32> to vector<16x16x32xf32>
    %c2_52 = arith.constant 2 : index
    %c0_53 = arith.constant 0 : index
    %c0_54 = arith.constant 0 : index
    %85 = vector.load %arg4[%c2_52, %c0_53, %c0_54] : memref<9x1x32xf32, #tpu.memory_space<vmem>>, vector<1x1x32xf32>
    %86 = vector.shape_cast %85 : vector<1x1x32xf32> to vector<1x32xf32>
    %87 = vector.shape_cast %86 : vector<1x32xf32> to vector<1x1x32xf32>
    %88 = vector.broadcast %87 : vector<1x1x32xf32> to vector<16x16x32xf32>
    %89 = arith.mulf %84, %88 : vector<16x16x32xf32>
    %90 = arith.addf %82, %89 : vector<16x16x32xf32>
    %91 = vector.extract_strided_slice %83 {offsets = [1, 0, 0], sizes = [16, 16, 32], strides = [1, 1, 1]} : vector<18x16x32xf32> to vector<16x16x32xf32>
    %c5 = arith.constant 5 : index
    %c0_55 = arith.constant 0 : index
    %c0_56 = arith.constant 0 : index
    %92 = vector.load %arg4[%c5, %c0_55, %c0_56] : memref<9x1x32xf32, #tpu.memory_space<vmem>>, vector<1x1x32xf32>
    %93 = vector.shape_cast %92 : vector<1x1x32xf32> to vector<1x32xf32>
    %94 = vector.shape_cast %93 : vector<1x32xf32> to vector<1x1x32xf32>
    %95 = vector.broadcast %94 : vector<1x1x32xf32> to vector<16x16x32xf32>
    %96 = arith.mulf %91, %95 : vector<16x16x32xf32>
    %97 = arith.addf %90, %96 : vector<16x16x32xf32>
    %98 = vector.extract_strided_slice %83 {offsets = [2, 0, 0], sizes = [16, 16, 32], strides = [1, 1, 1]} : vector<18x16x32xf32> to vector<16x16x32xf32>
    %c8 = arith.constant 8 : index
    %c0_57 = arith.constant 0 : index
    %c0_58 = arith.constant 0 : index
    %99 = vector.load %arg4[%c8, %c0_57, %c0_58] : memref<9x1x32xf32, #tpu.memory_space<vmem>>, vector<1x1x32xf32>
    %100 = vector.shape_cast %99 : vector<1x1x32xf32> to vector<1x32xf32>
    %101 = vector.shape_cast %100 : vector<1x32xf32> to vector<1x1x32xf32>
    %102 = vector.broadcast %101 : vector<1x1x32xf32> to vector<16x16x32xf32>
    %103 = arith.mulf %98, %102 : vector<16x16x32xf32>
    %104 = arith.addf %97, %103 : vector<16x16x32xf32>
    %105 = vector.shape_cast %104 : vector<16x16x32xf32> to vector<256x32xf32>
    %c0_59 = arith.constant 0 : index
    %c0_60 = arith.constant 0 : index
    %106 = vector.load %arg5[%c0_59, %c0_60] : memref<1x32xf32, #tpu.memory_space<vmem>>, vector<1x32xf32>
    %107 = vector.broadcast %106 : vector<1x32xf32> to vector<256x32xf32>
    %108 = arith.addf %105, %107 : vector<256x32xf32>
    %cst_61 = arith.constant 0.000000e+00 : f32
    %cst_62 = arith.constant 6.000000e+00 : f32
    %109 = vector.broadcast %cst_61 : f32 to vector<256x32xf32>
    %110 = arith.maximumf %109, %108 : vector<256x32xf32>
    %111 = vector.broadcast %cst_62 : f32 to vector<256x32xf32>
    %112 = arith.minimumf %111, %110 : vector<256x32xf32>
    %c0_63 = arith.constant 0 : index
    %c0_64 = arith.constant 0 : index
    %113 = vector.load %arg6[%c0_63, %c0_64] : memref<32x16xf32, #tpu.memory_space<vmem>>, vector<32x16xf32>
    %cst_65 = arith.constant dense<0.000000e+00> : vector<256x16xf32>
    %114 = tpu.matmul %112, %113, %cst_65 {dimension_numbers = #tpu.dot_dimension_numbers<[1], [0], [0], [1], [0, 0, 1, 1], [], []>} : vector<256x32xf32>, vector<32x16xf32>, vector<256x16xf32> -> vector<256x16xf32>
    %c0_66 = arith.constant 0 : index
    %c0_67 = arith.constant 0 : index
    %115 = vector.load %arg7[%c0_66, %c0_67] : memref<1x16xf32, #tpu.memory_space<vmem>>, vector<1x16xf32>
    %116 = vector.broadcast %115 : vector<1x16xf32> to vector<256x16xf32>
    %117 = arith.addf %114, %116 : vector<256x16xf32>
    %c0_68 = arith.constant 0 : index
    %c0_69 = arith.constant 0 : index
    %118 = vector.load %arg34[%c0_68, %c0_69] : memref<256x16xf32, #tpu.memory_space<vmem>>, vector<256x16xf32>
    tpu.vector_store %arg34[%c0_68, %c0_69], %117 {strides = array<i32>} : memref<256x16xf32, #tpu.memory_space<vmem>>, vector<256x16xf32>,
    %c0_70 = arith.constant 0 : index
    %c0_71 = arith.constant 0 : index
    %119 = tpu.strided_load %arg34[%c0_70, %c0_71] {strides = array<i32: 2, 1>} : memref<256x16xf32, #tpu.memory_space<vmem>>, vector<128x16xf32>
    %c1_72 = arith.constant 1 : index
    %c0_73 = arith.constant 0 : index
    %120 = tpu.strided_load %arg34[%c1_72, %c0_73] {strides = array<i32: 2, 1>} : memref<256x16xf32, #tpu.memory_space<vmem>>, vector<128x16xf32>
    %c0_74 = arith.constant 0 : index
    %c0_75 = arith.constant 0 : index
    %121 = vector.load %arg8[%c0_74, %c0_75] : memref<16x96xf32, #tpu.memory_space<vmem>>, vector<16x96xf32>
    %cst_76 = arith.constant dense<0.000000e+00> : vector<128x96xf32>
    %122 = tpu.matmul %119, %121, %cst_76 {dimension_numbers = #tpu.dot_dimension_numbers<[1], [0], [0], [1], [0, 0, 1, 1], [], []>} : vector<128x16xf32>, vector<16x96xf32>, vector<128x96xf32> -> vector<128x96xf32>
    %c0_77 = arith.constant 0 : index
    %c0_78 = arith.constant 0 : index
    %123 = vector.load %arg9[%c0_77, %c0_78] : memref<1x96xf32, #tpu.memory_space<vmem>>, vector<1x96xf32>
    %124 = vector.broadcast %123 : vector<1x96xf32> to vector<128x96xf32>
    %125 = arith.addf %122, %124 : vector<128x96xf32>
    %cst_79 = arith.constant 0.000000e+00 : f32
    %cst_80 = arith.constant 6.000000e+00 : f32
    %126 = vector.broadcast %cst_79 : f32 to vector<128x96xf32>
    %127 = arith.maximumf %126, %125 : vector<128x96xf32>
    %128 = vector.broadcast %cst_80 : f32 to vector<128x96xf32>
    %129 = arith.minimumf %128, %127 : vector<128x96xf32>
    %c0_81 = arith.constant 0 : index
    %c0_82 = arith.constant 0 : index
    %130 = vector.load %arg8[%c0_81, %c0_82] : memref<16x96xf32, #tpu.memory_space<vmem>>, vector<16x96xf32>
    %cst_83 = arith.constant dense<0.000000e+00> : vector<128x96xf32>
    %131 = tpu.matmul %120, %130, %cst_83 {dimension_numbers = #tpu.dot_dimension_numbers<[1], [0], [0], [1], [0, 0, 1, 1], [], []>} : vector<128x16xf32>, vector<16x96xf32>, vector<128x96xf32> -> vector<128x96xf32>
    %c0_84 = arith.constant 0 : index
    %c0_85 = arith.constant 0 : index
    %132 = vector.load %arg9[%c0_84, %c0_85] : memref<1x96xf32, #tpu.memory_space<vmem>>, vector<1x96xf32>
    %133 = vector.broadcast %132 : vector<1x96xf32> to vector<128x96xf32>
    %134 = arith.addf %131, %133 : vector<128x96xf32>
    %cst_86 = arith.constant 0.000000e+00 : f32
    %cst_87 = arith.constant 6.000000e+00 : f32
    %135 = vector.broadcast %cst_86 : f32 to vector<128x96xf32>
    %136 = arith.maximumf %135, %134 : vector<128x96xf32>
    %137 = vector.broadcast %cst_87 : f32 to vector<128x96xf32>
    %138 = arith.minimumf %137, %136 : vector<128x96xf32>
    %cst_88 = arith.constant 0.000000e+00 : f32
    %139 = vector.broadcast %cst_88 : f32 to vector<2x18x9x96xf32>
    %c0_89 = arith.constant 0 : index
    %c0_90 = arith.constant 0 : index
    %c0_91 = arith.constant 0 : index
    %c0_92 = arith.constant 0 : index
    %140 = vector.load %arg35[%c0_89, %c0_90, %c0_91, %c0_92] : memref<2x18x9x96xf32, #tpu.memory_space<vmem>>, vector<2x18x9x96xf32>
    tpu.vector_store %arg35[%c0_89, %c0_90, %c0_91, %c0_92], %139 {strides = array<i32>} : memref<2x18x9x96xf32, #tpu.memory_space<vmem>>, vector<2x18x9x96xf32>,
    %141 = vector.shape_cast %129 : vector<128x96xf32> to vector<1x16x8x96xf32>
    %c1_93 = arith.constant 1 : index
    %c1_94 = arith.constant 1 : index
    %c0_95 = arith.constant 0 : index
    %c0_96 = arith.constant 0 : index
    %142 = vector.load %arg35[%c1_93, %c1_94, %c0_95, %c0_96] : memref<2x18x9x96xf32, #tpu.memory_space<vmem>>, vector<1x16x8x96xf32>
    tpu.vector_store %arg35[%c1_93, %c1_94, %c0_95, %c0_96], %141 {strides = array<i32>} : memref<2x18x9x96xf32, #tpu.memory_space<vmem>>, vector<1x16x8x96xf32>,
    %143 = vector.shape_cast %138 : vector<128x96xf32> to vector<1x16x8x96xf32>
    %c0_97 = arith.constant 0 : index
    %c1_98 = arith.constant 1 : index
    %c1_99 = arith.constant 1 : index
    %c0_100 = arith.constant 0 : index
    %144 = vector.load %arg35[%c0_97, %c1_98, %c1_99, %c0_100] : memref<2x18x9x96xf32, #tpu.memory_space<vmem>>, vector<1x16x8x96xf32>
    tpu.vector_store %arg35[%c0_97, %c1_98, %c1_99, %c0_100], %143 {strides = array<i32>} : memref<2x18x9x96xf32, #tpu.memory_space<vmem>>, vector<1x16x8x96xf32>,
    %c0_101 = arith.constant 0 : index
    %c0_102 = arith.constant 0 : index
    %c0_103 = arith.constant 0 : index
    %c0_104 = arith.constant 0 : index
    %145 = vector.load %arg35[%c0_101, %c0_102, %c0_103, %c0_104] : memref<2x18x9x96xf32, #tpu.memory_space<vmem>>, vector<1x18x9x96xf32>
    %146 = vector.shape_cast %145 : vector<1x18x9x96xf32> to vector<18x9x96xf32>
    %c1_105 = arith.constant 1 : index
    %c0_106 = arith.constant 0 : index
    %c0_107 = arith.constant 0 : index
    %c0_108 = arith.constant 0 : index
    %147 = vector.load %arg35[%c1_105, %c0_106, %c0_107, %c0_108] : memref<2x18x9x96xf32, #tpu.memory_space<vmem>>, vector<1x18x9x96xf32>
    %148 = vector.shape_cast %147 : vector<1x18x9x96xf32> to vector<18x9x96xf32>
    %cst_109 = arith.constant 0.000000e+00 : f32
    %149 = vector.broadcast %cst_109 : f32 to vector<8x8x96xf32>
    %150 = vector.extract_strided_slice %146 {offsets = [0, 0, 0], sizes = [18, 8, 96], strides = [1, 1, 1]} : vector<18x9x96xf32> to vector<18x8x96xf32>
    %151 = vector.shape_cast %150 : vector<18x8x96xf32> to vector<9x2x8x96xf32>
    %152 = vector.extract_strided_slice %151 {offsets = [0, 0, 0, 0], sizes = [8, 1, 8, 96], strides = [1, 1, 1, 1]} : vector<9x2x8x96xf32> to vector<8x1x8x96xf32>
    %153 = vector.shape_cast %152 : vector<8x1x8x96xf32> to vector<8x8x96xf32>
    %c0_110 = arith.constant 0 : index
    %c0_111 = arith.constant 0 : index
    %c0_112 = arith.constant 0 : index
    %154 = vector.load %arg10[%c0_110, %c0_111, %c0_112] : memref<9x1x96xf32, #tpu.memory_space<vmem>>, vector<1x1x96xf32>
    %155 = vector.shape_cast %154 : vector<1x1x96xf32> to vector<1x96xf32>
    %156 = vector.shape_cast %155 : vector<1x96xf32> to vector<1x1x96xf32>
    %157 = vector.broadcast %156 : vector<1x1x96xf32> to vector<8x8x96xf32>
    %158 = arith.mulf %153, %157 : vector<8x8x96xf32>
    %159 = arith.addf %149, %158 : vector<8x8x96xf32>
    %160 = vector.extract_strided_slice %151 {offsets = [0, 1, 0, 0], sizes = [8, 1, 8, 96], strides = [1, 1, 1, 1]} : vector<9x2x8x96xf32> to vector<8x1x8x96xf32>
    %161 = vector.shape_cast %160 : vector<8x1x8x96xf32> to vector<8x8x96xf32>
    %c3_113 = arith.constant 3 : index
    %c0_114 = arith.constant 0 : index
    %c0_115 = arith.constant 0 : index
    %162 = vector.load %arg10[%c3_113, %c0_114, %c0_115] : memref<9x1x96xf32, #tpu.memory_space<vmem>>, vector<1x1x96xf32>
    %163 = vector.shape_cast %162 : vector<1x1x96xf32> to vector<1x96xf32>
    %164 = vector.shape_cast %163 : vector<1x96xf32> to vector<1x1x96xf32>
    %165 = vector.broadcast %164 : vector<1x1x96xf32> to vector<8x8x96xf32>
    %166 = arith.mulf %161, %165 : vector<8x8x96xf32>
    %167 = arith.addf %159, %166 : vector<8x8x96xf32>
    %168 = vector.extract_strided_slice %151 {offsets = [1, 0, 0, 0], sizes = [8, 1, 8, 96], strides = [1, 1, 1, 1]} : vector<9x2x8x96xf32> to vector<8x1x8x96xf32>
    %169 = vector.shape_cast %168 : vector<8x1x8x96xf32> to vector<8x8x96xf32>
    %c6_116 = arith.constant 6 : index
    %c0_117 = arith.constant 0 : index
    %c0_118 = arith.constant 0 : index
    %170 = vector.load %arg10[%c6_116, %c0_117, %c0_118] : memref<9x1x96xf32, #tpu.memory_space<vmem>>, vector<1x1x96xf32>
    %171 = vector.shape_cast %170 : vector<1x1x96xf32> to vector<1x96xf32>
    %172 = vector.shape_cast %171 : vector<1x96xf32> to vector<1x1x96xf32>
    %173 = vector.broadcast %172 : vector<1x1x96xf32> to vector<8x8x96xf32>
    %174 = arith.mulf %169, %173 : vector<8x8x96xf32>
    %175 = arith.addf %167, %174 : vector<8x8x96xf32>
    %176 = vector.extract_strided_slice %148 {offsets = [0, 0, 0], sizes = [18, 8, 96], strides = [1, 1, 1]} : vector<18x9x96xf32> to vector<18x8x96xf32>
    %177 = vector.shape_cast %176 : vector<18x8x96xf32> to vector<9x2x8x96xf32>
    %178 = vector.extract_strided_slice %177 {offsets = [0, 0, 0, 0], sizes = [8, 1, 8, 96], strides = [1, 1, 1, 1]} : vector<9x2x8x96xf32> to vector<8x1x8x96xf32>
    %179 = vector.shape_cast %178 : vector<8x1x8x96xf32> to vector<8x8x96xf32>
    %c1_119 = arith.constant 1 : index
    %c0_120 = arith.constant 0 : index
    %c0_121 = arith.constant 0 : index
    %180 = vector.load %arg10[%c1_119, %c0_120, %c0_121] : memref<9x1x96xf32, #tpu.memory_space<vmem>>, vector<1x1x96xf32>
    %181 = vector.shape_cast %180 : vector<1x1x96xf32> to vector<1x96xf32>
    %182 = vector.shape_cast %181 : vector<1x96xf32> to vector<1x1x96xf32>
    %183 = vector.broadcast %182 : vector<1x1x96xf32> to vector<8x8x96xf32>
    %184 = arith.mulf %179, %183 : vector<8x8x96xf32>
    %185 = arith.addf %175, %184 : vector<8x8x96xf32>
    %186 = vector.extract_strided_slice %177 {offsets = [0, 1, 0, 0], sizes = [8, 1, 8, 96], strides = [1, 1, 1, 1]} : vector<9x2x8x96xf32> to vector<8x1x8x96xf32>
    %187 = vector.shape_cast %186 : vector<8x1x8x96xf32> to vector<8x8x96xf32>
    %c4_122 = arith.constant 4 : index
    %c0_123 = arith.constant 0 : index
    %c0_124 = arith.constant 0 : index
    %188 = vector.load %arg10[%c4_122, %c0_123, %c0_124] : memref<9x1x96xf32, #tpu.memory_space<vmem>>, vector<1x1x96xf32>
    %189 = vector.shape_cast %188 : vector<1x1x96xf32> to vector<1x96xf32>
    %190 = vector.shape_cast %189 : vector<1x96xf32> to vector<1x1x96xf32>
    %191 = vector.broadcast %190 : vector<1x1x96xf32> to vector<8x8x96xf32>
    %192 = arith.mulf %187, %191 : vector<8x8x96xf32>
    %193 = arith.addf %185, %192 : vector<8x8x96xf32>
    %194 = vector.extract_strided_slice %177 {offsets = [1, 0, 0, 0], sizes = [8, 1, 8, 96], strides = [1, 1, 1, 1]} : vector<9x2x8x96xf32> to vector<8x1x8x96xf32>
    %195 = vector.shape_cast %194 : vector<8x1x8x96xf32> to vector<8x8x96xf32>
    %c7_125 = arith.constant 7 : index
    %c0_126 = arith.constant 0 : index
    %c0_127 = arith.constant 0 : index
    %196 = vector.load %arg10[%c7_125, %c0_126, %c0_127] : memref<9x1x96xf32, #tpu.memory_space<vmem>>, vector<1x1x96xf32>
    %197 = vector.shape_cast %196 : vector<1x1x96xf32> to vector<1x96xf32>
    %198 = vector.shape_cast %197 : vector<1x96xf32> to vector<1x1x96xf32>
    %199 = vector.broadcast %198 : vector<1x1x96xf32> to vector<8x8x96xf32>
    %200 = arith.mulf %195, %199 : vector<8x8x96xf32>
    %201 = arith.addf %193, %200 : vector<8x8x96xf32>
    %202 = vector.extract_strided_slice %146 {offsets = [0, 1, 0], sizes = [18, 8, 96], strides = [1, 1, 1]} : vector<18x9x96xf32> to vector<18x8x96xf32>
    %203 = vector.shape_cast %202 : vector<18x8x96xf32> to vector<9x2x8x96xf32>
    %204 = vector.extract_strided_slice %203 {offsets = [0, 0, 0, 0], sizes = [8, 1, 8, 96], strides = [1, 1, 1, 1]} : vector<9x2x8x96xf32> to vector<8x1x8x96xf32>
    %205 = vector.shape_cast %204 : vector<8x1x8x96xf32> to vector<8x8x96xf32>
    %c2_128 = arith.constant 2 : index
    %c0_129 = arith.constant 0 : index
    %c0_130 = arith.constant 0 : index
    %206 = vector.load %arg10[%c2_128, %c0_129, %c0_130] : memref<9x1x96xf32, #tpu.memory_space<vmem>>, vector<1x1x96xf32>
    %207 = vector.shape_cast %206 : vector<1x1x96xf32> to vector<1x96xf32>
    %208 = vector.shape_cast %207 : vector<1x96xf32> to vector<1x1x96xf32>
    %209 = vector.broadcast %208 : vector<1x1x96xf32> to vector<8x8x96xf32>
    %210 = arith.mulf %205, %209 : vector<8x8x96xf32>
    %211 = arith.addf %201, %210 : vector<8x8x96xf32>
    %212 = vector.extract_strided_slice %203 {offsets = [0, 1, 0, 0], sizes = [8, 1, 8, 96], strides = [1, 1, 1, 1]} : vector<9x2x8x96xf32> to vector<8x1x8x96xf32>
    %213 = vector.shape_cast %212 : vector<8x1x8x96xf32> to vector<8x8x96xf32>
    %c5_131 = arith.constant 5 : index
    %c0_132 = arith.constant 0 : index
    %c0_133 = arith.constant 0 : index
    %214 = vector.load %arg10[%c5_131, %c0_132, %c0_133] : memref<9x1x96xf32, #tpu.memory_space<vmem>>, vector<1x1x96xf32>
    %215 = vector.shape_cast %214 : vector<1x1x96xf32> to vector<1x96xf32>
    %216 = vector.shape_cast %215 : vector<1x96xf32> to vector<1x1x96xf32>
    %217 = vector.broadcast %216 : vector<1x1x96xf32> to vector<8x8x96xf32>
    %218 = arith.mulf %213, %217 : vector<8x8x96xf32>
    %219 = arith.addf %211, %218 : vector<8x8x96xf32>
    %220 = vector.extract_strided_slice %203 {offsets = [1, 0, 0, 0], sizes = [8, 1, 8, 96], strides = [1, 1, 1, 1]} : vector<9x2x8x96xf32> to vector<8x1x8x96xf32>
    %221 = vector.shape_cast %220 : vector<8x1x8x96xf32> to vector<8x8x96xf32>
    %c8_134 = arith.constant 8 : index
    %c0_135 = arith.constant 0 : index
    %c0_136 = arith.constant 0 : index
    %222 = vector.load %arg10[%c8_134, %c0_135, %c0_136] : memref<9x1x96xf32, #tpu.memory_space<vmem>>, vector<1x1x96xf32>
    %223 = vector.shape_cast %222 : vector<1x1x96xf32> to vector<1x96xf32>
    %224 = vector.shape_cast %223 : vector<1x96xf32> to vector<1x1x96xf32>
    %225 = vector.broadcast %224 : vector<1x1x96xf32> to vector<8x8x96xf32>
    %226 = arith.mulf %221, %225 : vector<8x8x96xf32>
    %227 = arith.addf %219, %226 : vector<8x8x96xf32>
    %228 = vector.shape_cast %227 : vector<8x8x96xf32> to vector<64x96xf32>
    %c0_137 = arith.constant 0 : index
    %c0_138 = arith.constant 0 : index
    %229 = vector.load %arg11[%c0_137, %c0_138] : memref<1x96xf32, #tpu.memory_space<vmem>>, vector<1x96xf32>
    %230 = vector.broadcast %229 : vector<1x96xf32> to vector<64x96xf32>
    %231 = arith.addf %228, %230 : vector<64x96xf32>
    %cst_139 = arith.constant 0.000000e+00 : f32
    %cst_140 = arith.constant 6.000000e+00 : f32
    %232 = vector.broadcast %cst_139 : f32 to vector<64x96xf32>
    %233 = arith.maximumf %232, %231 : vector<64x96xf32>
    %234 = vector.broadcast %cst_140 : f32 to vector<64x96xf32>
    %235 = arith.minimumf %234, %233 : vector<64x96xf32>
    %c0_141 = arith.constant 0 : index
    %c0_142 = arith.constant 0 : index
    %236 = vector.load %arg12[%c0_141, %c0_142] : memref<96x24xf32, #tpu.memory_space<vmem>>, vector<96x24xf32>
    %cst_143 = arith.constant dense<0.000000e+00> : vector<64x24xf32>
    %237 = tpu.matmul %235, %236, %cst_143 {dimension_numbers = #tpu.dot_dimension_numbers<[1], [0], [0], [1], [0, 0, 1, 1], [], []>} : vector<64x96xf32>, vector<96x24xf32>, vector<64x24xf32> -> vector<64x24xf32>
    %c0_144 = arith.constant 0 : index
    %c0_145 = arith.constant 0 : index
    %238 = vector.load %arg13[%c0_144, %c0_145] : memref<1x24xf32, #tpu.memory_space<vmem>>, vector<1x24xf32>
    %239 = vector.broadcast %238 : vector<1x24xf32> to vector<64x24xf32>
    %240 = arith.addf %237, %239 : vector<64x24xf32>
    %c0_146 = arith.constant 0 : index
    %c0_147 = arith.constant 0 : index
    %241 = vector.load %arg14[%c0_146, %c0_147] : memref<24x144xf32, #tpu.memory_space<vmem>>, vector<24x144xf32>
    %cst_148 = arith.constant dense<0.000000e+00> : vector<64x144xf32>
    %242 = tpu.matmul %240, %241, %cst_148 {dimension_numbers = #tpu.dot_dimension_numbers<[1], [0], [0], [1], [0, 0, 1, 1], [], []>} : vector<64x24xf32>, vector<24x144xf32>, vector<64x144xf32> -> vector<64x144xf32>
    %c0_149 = arith.constant 0 : index
    %c0_150 = arith.constant 0 : index
    %243 = vector.load %arg15[%c0_149, %c0_150] : memref<1x144xf32, #tpu.memory_space<vmem>>, vector<1x144xf32>
    %244 = vector.broadcast %243 : vector<1x144xf32> to vector<64x144xf32>
    %245 = arith.addf %242, %244 : vector<64x144xf32>
    %cst_151 = arith.constant 0.000000e+00 : f32
    %cst_152 = arith.constant 6.000000e+00 : f32
    %246 = vector.broadcast %cst_151 : f32 to vector<64x144xf32>
    %247 = arith.maximumf %246, %245 : vector<64x144xf32>
    %248 = vector.broadcast %cst_152 : f32 to vector<64x144xf32>
    %249 = arith.minimumf %248, %247 : vector<64x144xf32>
    %cst_153 = arith.constant 0.000000e+00 : f32
    %250 = vector.broadcast %cst_153 : f32 to vector<10x10x144xf32>
    %c0_154 = arith.constant 0 : index
    %c0_155 = arith.constant 0 : index
    %c0_156 = arith.constant 0 : index
    %251 = vector.load %arg36[%c0_154, %c0_155, %c0_156] : memref<10x10x144xf32, #tpu.memory_space<vmem>>, vector<10x10x144xf32>
    tpu.vector_store %arg36[%c0_154, %c0_155, %c0_156], %250 {strides = array<i32>} : memref<10x10x144xf32, #tpu.memory_space<vmem>>, vector<10x10x144xf32>,
    %252 = vector.shape_cast %249 : vector<64x144xf32> to vector<8x8x144xf32>
    %c1_157 = arith.constant 1 : index
    %c1_158 = arith.constant 1 : index
    %c0_159 = arith.constant 0 : index
    %253 = vector.load %arg36[%c1_157, %c1_158, %c0_159] : memref<10x10x144xf32, #tpu.memory_space<vmem>>, vector<8x8x144xf32>
    tpu.vector_store %arg36[%c1_157, %c1_158, %c0_159], %252 {strides = array<i32>} : memref<10x10x144xf32, #tpu.memory_space<vmem>>, vector<8x8x144xf32>,
    %cst_160 = arith.constant 0.000000e+00 : f32
    %254 = vector.broadcast %cst_160 : f32 to vector<8x8x144xf32>
    %c0_161 = arith.constant 0 : index
    %c0_162 = arith.constant 0 : index
    %c0_163 = arith.constant 0 : index
    %255 = vector.load %arg36[%c0_161, %c0_162, %c0_163] : memref<10x10x144xf32, #tpu.memory_space<vmem>>, vector<10x8x144xf32>
    %256 = vector.extract_strided_slice %255 {offsets = [0, 0, 0], sizes = [8, 8, 144], strides = [1, 1, 1]} : vector<10x8x144xf32> to vector<8x8x144xf32>
    %c0_164 = arith.constant 0 : index
    %c0_165 = arith.constant 0 : index
    %c0_166 = arith.constant 0 : index
    %257 = vector.load %arg16[%c0_164, %c0_165, %c0_166] : memref<9x1x144xf32, #tpu.memory_space<vmem>>, vector<1x1x144xf32>
    %258 = vector.shape_cast %257 : vector<1x1x144xf32> to vector<1x144xf32>
    %259 = vector.shape_cast %258 : vector<1x144xf32> to vector<1x1x144xf32>
    %260 = vector.broadcast %259 : vector<1x1x144xf32> to vector<8x8x144xf32>
    %261 = arith.mulf %256, %260 : vector<8x8x144xf32>
    %262 = arith.addf %254, %261 : vector<8x8x144xf32>
    %263 = vector.extract_strided_slice %255 {offsets = [1, 0, 0], sizes = [8, 8, 144], strides = [1, 1, 1]} : vector<10x8x144xf32> to vector<8x8x144xf32>
    %c3_167 = arith.constant 3 : index
    %c0_168 = arith.constant 0 : index
    %c0_169 = arith.constant 0 : index
    %264 = vector.load %arg16[%c3_167, %c0_168, %c0_169] : memref<9x1x144xf32, #tpu.memory_space<vmem>>, vector<1x1x144xf32>
    %265 = vector.shape_cast %264 : vector<1x1x144xf32> to vector<1x144xf32>
    %266 = vector.shape_cast %265 : vector<1x144xf32> to vector<1x1x144xf32>
    %267 = vector.broadcast %266 : vector<1x1x144xf32> to vector<8x8x144xf32>
    %268 = arith.mulf %263, %267 : vector<8x8x144xf32>
    %269 = arith.addf %262, %268 : vector<8x8x144xf32>
    %270 = vector.extract_strided_slice %255 {offsets = [2, 0, 0], sizes = [8, 8, 144], strides = [1, 1, 1]} : vector<10x8x144xf32> to vector<8x8x144xf32>
    %c6_170 = arith.constant 6 : index
    %c0_171 = arith.constant 0 : index
    %c0_172 = arith.constant 0 : index
    %271 = vector.load %arg16[%c6_170, %c0_171, %c0_172] : memref<9x1x144xf32, #tpu.memory_space<vmem>>, vector<1x1x144xf32>
    %272 = vector.shape_cast %271 : vector<1x1x144xf32> to vector<1x144xf32>
    %273 = vector.shape_cast %272 : vector<1x144xf32> to vector<1x1x144xf32>
    %274 = vector.broadcast %273 : vector<1x1x144xf32> to vector<8x8x144xf32>
    %275 = arith.mulf %270, %274 : vector<8x8x144xf32>
    %276 = arith.addf %269, %275 : vector<8x8x144xf32>
    %c0_173 = arith.constant 0 : index
    %c1_174 = arith.constant 1 : index
    %c0_175 = arith.constant 0 : index
    %277 = vector.load %arg36[%c0_173, %c1_174, %c0_175] : memref<10x10x144xf32, #tpu.memory_space<vmem>>, vector<10x8x144xf32>
    %278 = vector.extract_strided_slice %277 {offsets = [0, 0, 0], sizes = [8, 8, 144], strides = [1, 1, 1]} : vector<10x8x144xf32> to vector<8x8x144xf32>
    %c1_176 = arith.constant 1 : index
    %c0_177 = arith.constant 0 : index
    %c0_178 = arith.constant 0 : index
    %279 = vector.load %arg16[%c1_176, %c0_177, %c0_178] : memref<9x1x144xf32, #tpu.memory_space<vmem>>, vector<1x1x144xf32>
    %280 = vector.shape_cast %279 : vector<1x1x144xf32> to vector<1x144xf32>
    %281 = vector.shape_cast %280 : vector<1x144xf32> to vector<1x1x144xf32>
    %282 = vector.broadcast %281 : vector<1x1x144xf32> to vector<8x8x144xf32>
    %283 = arith.mulf %278, %282 : vector<8x8x144xf32>
    %284 = arith.addf %276, %283 : vector<8x8x144xf32>
    %285 = vector.extract_strided_slice %277 {offsets = [1, 0, 0], sizes = [8, 8, 144], strides = [1, 1, 1]} : vector<10x8x144xf32> to vector<8x8x144xf32>
    %c4_179 = arith.constant 4 : index
    %c0_180 = arith.constant 0 : index
    %c0_181 = arith.constant 0 : index
    %286 = vector.load %arg16[%c4_179, %c0_180, %c0_181] : memref<9x1x144xf32, #tpu.memory_space<vmem>>, vector<1x1x144xf32>
    %287 = vector.shape_cast %286 : vector<1x1x144xf32> to vector<1x144xf32>
    %288 = vector.shape_cast %287 : vector<1x144xf32> to vector<1x1x144xf32>
    %289 = vector.broadcast %288 : vector<1x1x144xf32> to vector<8x8x144xf32>
    %290 = arith.mulf %285, %289 : vector<8x8x144xf32>
    %291 = arith.addf %284, %290 : vector<8x8x144xf32>
    %292 = vector.extract_strided_slice %277 {offsets = [2, 0, 0], sizes = [8, 8, 144], strides = [1, 1, 1]} : vector<10x8x144xf32> to vector<8x8x144xf32>
    %c7_182 = arith.constant 7 : index
    %c0_183 = arith.constant 0 : index
    %c0_184 = arith.constant 0 : index
    %293 = vector.load %arg16[%c7_182, %c0_183, %c0_184] : memref<9x1x144xf32, #tpu.memory_space<vmem>>, vector<1x1x144xf32>
    %294 = vector.shape_cast %293 : vector<1x1x144xf32> to vector<1x144xf32>
    %295 = vector.shape_cast %294 : vector<1x144xf32> to vector<1x1x144xf32>
    %296 = vector.broadcast %295 : vector<1x1x144xf32> to vector<8x8x144xf32>
    %297 = arith.mulf %292, %296 : vector<8x8x144xf32>
    %298 = arith.addf %291, %297 : vector<8x8x144xf32>
    %c0_185 = arith.constant 0 : index
    %c2_186 = arith.constant 2 : index
    %c0_187 = arith.constant 0 : index
    %299 = vector.load %arg36[%c0_185, %c2_186, %c0_187] : memref<10x10x144xf32, #tpu.memory_space<vmem>>, vector<10x8x144xf32>
    %300 = vector.extract_strided_slice %299 {offsets = [0, 0, 0], sizes = [8, 8, 144], strides = [1, 1, 1]} : vector<10x8x144xf32> to vector<8x8x144xf32>
    %c2_188 = arith.constant 2 : index
    %c0_189 = arith.constant 0 : index
    %c0_190 = arith.constant 0 : index
    %301 = vector.load %arg16[%c2_188, %c0_189, %c0_190] : memref<9x1x144xf32, #tpu.memory_space<vmem>>, vector<1x1x144xf32>
    %302 = vector.shape_cast %301 : vector<1x1x144xf32> to vector<1x144xf32>
    %303 = vector.shape_cast %302 : vector<1x144xf32> to vector<1x1x144xf32>
    %304 = vector.broadcast %303 : vector<1x1x144xf32> to vector<8x8x144xf32>
    %305 = arith.mulf %300, %304 : vector<8x8x144xf32>
    %306 = arith.addf %298, %305 : vector<8x8x144xf32>
    %307 = vector.extract_strided_slice %299 {offsets = [1, 0, 0], sizes = [8, 8, 144], strides = [1, 1, 1]} : vector<10x8x144xf32> to vector<8x8x144xf32>
    %c5_191 = arith.constant 5 : index
    %c0_192 = arith.constant 0 : index
    %c0_193 = arith.constant 0 : index
    %308 = vector.load %arg16[%c5_191, %c0_192, %c0_193] : memref<9x1x144xf32, #tpu.memory_space<vmem>>, vector<1x1x144xf32>
    %309 = vector.shape_cast %308 : vector<1x1x144xf32> to vector<1x144xf32>
    %310 = vector.shape_cast %309 : vector<1x144xf32> to vector<1x1x144xf32>
    %311 = vector.broadcast %310 : vector<1x1x144xf32> to vector<8x8x144xf32>
    %312 = arith.mulf %307, %311 : vector<8x8x144xf32>
    %313 = arith.addf %306, %312 : vector<8x8x144xf32>
    %314 = vector.extract_strided_slice %299 {offsets = [2, 0, 0], sizes = [8, 8, 144], strides = [1, 1, 1]} : vector<10x8x144xf32> to vector<8x8x144xf32>
    %c8_194 = arith.constant 8 : index
    %c0_195 = arith.constant 0 : index
    %c0_196 = arith.constant 0 : index
    %315 = vector.load %arg16[%c8_194, %c0_195, %c0_196] : memref<9x1x144xf32, #tpu.memory_space<vmem>>, vector<1x1x144xf32>
    %316 = vector.shape_cast %315 : vector<1x1x144xf32> to vector<1x144xf32>
    %317 = vector.shape_cast %316 : vector<1x144xf32> to vector<1x1x144xf32>
    %318 = vector.broadcast %317 : vector<1x1x144xf32> to vector<8x8x144xf32>
    %319 = arith.mulf %314, %318 : vector<8x8x144xf32>
    %320 = arith.addf %313, %319 : vector<8x8x144xf32>
    %321 = vector.shape_cast %320 : vector<8x8x144xf32> to vector<64x144xf32>
    %c0_197 = arith.constant 0 : index
    %c0_198 = arith.constant 0 : index
    %322 = vector.load %arg17[%c0_197, %c0_198] : memref<1x144xf32, #tpu.memory_space<vmem>>, vector<1x144xf32>
    %323 = vector.broadcast %322 : vector<1x144xf32> to vector<64x144xf32>
    %324 = arith.addf %321, %323 : vector<64x144xf32>
    %cst_199 = arith.constant 0.000000e+00 : f32
    %cst_200 = arith.constant 6.000000e+00 : f32
    %325 = vector.broadcast %cst_199 : f32 to vector<64x144xf32>
    %326 = arith.maximumf %325, %324 : vector<64x144xf32>
    %327 = vector.broadcast %cst_200 : f32 to vector<64x144xf32>
    %328 = arith.minimumf %327, %326 : vector<64x144xf32>
    %c0_201 = arith.constant 0 : index
    %c0_202 = arith.constant 0 : index
    %329 = vector.load %arg18[%c0_201, %c0_202] : memref<144x24xf32, #tpu.memory_space<vmem>>, vector<144x24xf32>
    %cst_203 = arith.constant dense<0.000000e+00> : vector<64x24xf32>
    %330 = tpu.matmul %328, %329, %cst_203 {dimension_numbers = #tpu.dot_dimension_numbers<[1], [0], [0], [1], [0, 0, 1, 1], [], []>} : vector<64x144xf32>, vector<144x24xf32>, vector<64x24xf32> -> vector<64x24xf32>
    %c0_204 = arith.constant 0 : index
    %c0_205 = arith.constant 0 : index
    %331 = vector.load %arg19[%c0_204, %c0_205] : memref<1x24xf32, #tpu.memory_space<vmem>>, vector<1x24xf32>
    %332 = vector.broadcast %331 : vector<1x24xf32> to vector<64x24xf32>
    %333 = arith.addf %330, %332 : vector<64x24xf32>
    %334 = arith.addf %333, %240 : vector<64x24xf32>
    %c0_206 = arith.constant 0 : index
    %c0_207 = arith.constant 0 : index
    %335 = vector.load %arg37[%c0_206, %c0_207] : memref<64x24xf32, #tpu.memory_space<vmem>>, vector<64x24xf32>
    tpu.vector_store %arg37[%c0_206, %c0_207], %334 {strides = array<i32>} : memref<64x24xf32, #tpu.memory_space<vmem>>, vector<64x24xf32>,
    %c0_208 = arith.constant 0 : index
    %c0_209 = arith.constant 0 : index
    %336 = tpu.strided_load %arg37[%c0_208, %c0_209] {strides = array<i32: 2, 1>} : memref<64x24xf32, #tpu.memory_space<vmem>>, vector<32x24xf32>
    %c1_210 = arith.constant 1 : index
    %c0_211 = arith.constant 0 : index
    %337 = tpu.strided_load %arg37[%c1_210, %c0_211] {strides = array<i32: 2, 1>} : memref<64x24xf32, #tpu.memory_space<vmem>>, vector<32x24xf32>
    %c0_212 = arith.constant 0 : index
    %c0_213 = arith.constant 0 : index
    %338 = vector.load %arg20[%c0_212, %c0_213] : memref<24x144xf32, #tpu.memory_space<vmem>>, vector<24x144xf32>
    %cst_214 = arith.constant dense<0.000000e+00> : vector<32x144xf32>
    %339 = tpu.matmul %336, %338, %cst_214 {dimension_numbers = #tpu.dot_dimension_numbers<[1], [0], [0], [1], [0, 0, 1, 1], [], []>} : vector<32x24xf32>, vector<24x144xf32>, vector<32x144xf32> -> vector<32x144xf32>
    %c0_215 = arith.constant 0 : index
    %c0_216 = arith.constant 0 : index
    %340 = vector.load %arg21[%c0_215, %c0_216] : memref<1x144xf32, #tpu.memory_space<vmem>>, vector<1x144xf32>
    %341 = vector.broadcast %340 : vector<1x144xf32> to vector<32x144xf32>
    %342 = arith.addf %339, %341 : vector<32x144xf32>
    %cst_217 = arith.constant 0.000000e+00 : f32
    %cst_218 = arith.constant 6.000000e+00 : f32
    %343 = vector.broadcast %cst_217 : f32 to vector<32x144xf32>
    %344 = arith.maximumf %343, %342 : vector<32x144xf32>
    %345 = vector.broadcast %cst_218 : f32 to vector<32x144xf32>
    %346 = arith.minimumf %345, %344 : vector<32x144xf32>
    %c0_219 = arith.constant 0 : index
    %c0_220 = arith.constant 0 : index
    %347 = vector.load %arg20[%c0_219, %c0_220] : memref<24x144xf32, #tpu.memory_space<vmem>>, vector<24x144xf32>
    %cst_221 = arith.constant dense<0.000000e+00> : vector<32x144xf32>
    %348 = tpu.matmul %337, %347, %cst_221 {dimension_numbers = #tpu.dot_dimension_numbers<[1], [0], [0], [1], [0, 0, 1, 1], [], []>} : vector<32x24xf32>, vector<24x144xf32>, vector<32x144xf32> -> vector<32x144xf32>
    %c0_222 = arith.constant 0 : index
    %c0_223 = arith.constant 0 : index
    %349 = vector.load %arg21[%c0_222, %c0_223] : memref<1x144xf32, #tpu.memory_space<vmem>>, vector<1x144xf32>
    %350 = vector.broadcast %349 : vector<1x144xf32> to vector<32x144xf32>
    %351 = arith.addf %348, %350 : vector<32x144xf32>
    %cst_224 = arith.constant 0.000000e+00 : f32
    %cst_225 = arith.constant 6.000000e+00 : f32
    %352 = vector.broadcast %cst_224 : f32 to vector<32x144xf32>
    %353 = arith.maximumf %352, %351 : vector<32x144xf32>
    %354 = vector.broadcast %cst_225 : f32 to vector<32x144xf32>
    %355 = arith.minimumf %354, %353 : vector<32x144xf32>
    %cst_226 = arith.constant 0.000000e+00 : f32
    %356 = vector.broadcast %cst_226 : f32 to vector<2x10x5x144xf32>
    %c0_227 = arith.constant 0 : index
    %c0_228 = arith.constant 0 : index
    %c0_229 = arith.constant 0 : index
    %c0_230 = arith.constant 0 : index
    %357 = vector.load %arg38[%c0_227, %c0_228, %c0_229, %c0_230] : memref<2x10x5x144xf32, #tpu.memory_space<vmem>>, vector<2x10x5x144xf32>
    tpu.vector_store %arg38[%c0_227, %c0_228, %c0_229, %c0_230], %356 {strides = array<i32>} : memref<2x10x5x144xf32, #tpu.memory_space<vmem>>, vector<2x10x5x144xf32>,
    %358 = vector.shape_cast %346 : vector<32x144xf32> to vector<1x8x4x144xf32>
    %c1_231 = arith.constant 1 : index
    %c1_232 = arith.constant 1 : index
    %c0_233 = arith.constant 0 : index
    %c0_234 = arith.constant 0 : index
    %359 = vector.load %arg38[%c1_231, %c1_232, %c0_233, %c0_234] : memref<2x10x5x144xf32, #tpu.memory_space<vmem>>, vector<1x8x4x144xf32>
    tpu.vector_store %arg38[%c1_231, %c1_232, %c0_233, %c0_234], %358 {strides = array<i32>} : memref<2x10x5x144xf32, #tpu.memory_space<vmem>>, vector<1x8x4x144xf32>,
    %360 = vector.shape_cast %355 : vector<32x144xf32> to vector<1x8x4x144xf32>
    %c0_235 = arith.constant 0 : index
    %c1_236 = arith.constant 1 : index
    %c1_237 = arith.constant 1 : index
    %c0_238 = arith.constant 0 : index
    %361 = vector.load %arg38[%c0_235, %c1_236, %c1_237, %c0_238] : memref<2x10x5x144xf32, #tpu.memory_space<vmem>>, vector<1x8x4x144xf32>
    tpu.vector_store %arg38[%c0_235, %c1_236, %c1_237, %c0_238], %360 {strides = array<i32>} : memref<2x10x5x144xf32, #tpu.memory_space<vmem>>, vector<1x8x4x144xf32>,
    %c0_239 = arith.constant 0 : index
    %c0_240 = arith.constant 0 : index
    %c0_241 = arith.constant 0 : index
    %c0_242 = arith.constant 0 : index
    %362 = vector.load %arg38[%c0_239, %c0_240, %c0_241, %c0_242] : memref<2x10x5x144xf32, #tpu.memory_space<vmem>>, vector<1x10x5x144xf32>
    %363 = vector.shape_cast %362 : vector<1x10x5x144xf32> to vector<10x5x144xf32>
    %c1_243 = arith.constant 1 : index
    %c0_244 = arith.constant 0 : index
    %c0_245 = arith.constant 0 : index
    %c0_246 = arith.constant 0 : index
    %364 = vector.load %arg38[%c1_243, %c0_244, %c0_245, %c0_246] : memref<2x10x5x144xf32, #tpu.memory_space<vmem>>, vector<1x10x5x144xf32>
    %365 = vector.shape_cast %364 : vector<1x10x5x144xf32> to vector<10x5x144xf32>
    %cst_247 = arith.constant 0.000000e+00 : f32
    %366 = vector.broadcast %cst_247 : f32 to vector<4x4x144xf32>
    %367 = vector.extract_strided_slice %363 {offsets = [0, 0, 0], sizes = [10, 4, 144], strides = [1, 1, 1]} : vector<10x5x144xf32> to vector<10x4x144xf32>
    %368 = vector.shape_cast %367 : vector<10x4x144xf32> to vector<5x2x4x144xf32>
    %369 = vector.extract_strided_slice %368 {offsets = [0, 0, 0, 0], sizes = [4, 1, 4, 144], strides = [1, 1, 1, 1]} : vector<5x2x4x144xf32> to vector<4x1x4x144xf32>
    %370 = vector.shape_cast %369 : vector<4x1x4x144xf32> to vector<4x4x144xf32>
    %c0_248 = arith.constant 0 : index
    %c0_249 = arith.constant 0 : index
    %c0_250 = arith.constant 0 : index
    %371 = vector.load %arg22[%c0_248, %c0_249, %c0_250] : memref<9x1x144xf32, #tpu.memory_space<vmem>>, vector<1x1x144xf32>
    %372 = vector.shape_cast %371 : vector<1x1x144xf32> to vector<1x144xf32>
    %373 = vector.shape_cast %372 : vector<1x144xf32> to vector<1x1x144xf32>
    %374 = vector.broadcast %373 : vector<1x1x144xf32> to vector<4x4x144xf32>
    %375 = arith.mulf %370, %374 : vector<4x4x144xf32>
    %376 = arith.addf %366, %375 : vector<4x4x144xf32>
    %377 = vector.extract_strided_slice %368 {offsets = [0, 1, 0, 0], sizes = [4, 1, 4, 144], strides = [1, 1, 1, 1]} : vector<5x2x4x144xf32> to vector<4x1x4x144xf32>
    %378 = vector.shape_cast %377 : vector<4x1x4x144xf32> to vector<4x4x144xf32>
    %c3_251 = arith.constant 3 : index
    %c0_252 = arith.constant 0 : index
    %c0_253 = arith.constant 0 : index
    %379 = vector.load %arg22[%c3_251, %c0_252, %c0_253] : memref<9x1x144xf32, #tpu.memory_space<vmem>>, vector<1x1x144xf32>
    %380 = vector.shape_cast %379 : vector<1x1x144xf32> to vector<1x144xf32>
    %381 = vector.shape_cast %380 : vector<1x144xf32> to vector<1x1x144xf32>
    %382 = vector.broadcast %381 : vector<1x1x144xf32> to vector<4x4x144xf32>
    %383 = arith.mulf %378, %382 : vector<4x4x144xf32>
    %384 = arith.addf %376, %383 : vector<4x4x144xf32>
    %385 = vector.extract_strided_slice %368 {offsets = [1, 0, 0, 0], sizes = [4, 1, 4, 144], strides = [1, 1, 1, 1]} : vector<5x2x4x144xf32> to vector<4x1x4x144xf32>
    %386 = vector.shape_cast %385 : vector<4x1x4x144xf32> to vector<4x4x144xf32>
    %c6_254 = arith.constant 6 : index
    %c0_255 = arith.constant 0 : index
    %c0_256 = arith.constant 0 : index
    %387 = vector.load %arg22[%c6_254, %c0_255, %c0_256] : memref<9x1x144xf32, #tpu.memory_space<vmem>>, vector<1x1x144xf32>
    %388 = vector.shape_cast %387 : vector<1x1x144xf32> to vector<1x144xf32>
    %389 = vector.shape_cast %388 : vector<1x144xf32> to vector<1x1x144xf32>
    %390 = vector.broadcast %389 : vector<1x1x144xf32> to vector<4x4x144xf32>
    %391 = arith.mulf %386, %390 : vector<4x4x144xf32>
    %392 = arith.addf %384, %391 : vector<4x4x144xf32>
    %393 = vector.extract_strided_slice %365 {offsets = [0, 0, 0], sizes = [10, 4, 144], strides = [1, 1, 1]} : vector<10x5x144xf32> to vector<10x4x144xf32>
    %394 = vector.shape_cast %393 : vector<10x4x144xf32> to vector<5x2x4x144xf32>
    %395 = vector.extract_strided_slice %394 {offsets = [0, 0, 0, 0], sizes = [4, 1, 4, 144], strides = [1, 1, 1, 1]} : vector<5x2x4x144xf32> to vector<4x1x4x144xf32>
    %396 = vector.shape_cast %395 : vector<4x1x4x144xf32> to vector<4x4x144xf32>
    %c1_257 = arith.constant 1 : index
    %c0_258 = arith.constant 0 : index
    %c0_259 = arith.constant 0 : index
    %397 = vector.load %arg22[%c1_257, %c0_258, %c0_259] : memref<9x1x144xf32, #tpu.memory_space<vmem>>, vector<1x1x144xf32>
    %398 = vector.shape_cast %397 : vector<1x1x144xf32> to vector<1x144xf32>
    %399 = vector.shape_cast %398 : vector<1x144xf32> to vector<1x1x144xf32>
    %400 = vector.broadcast %399 : vector<1x1x144xf32> to vector<4x4x144xf32>
    %401 = arith.mulf %396, %400 : vector<4x4x144xf32>
    %402 = arith.addf %392, %401 : vector<4x4x144xf32>
    %403 = vector.extract_strided_slice %394 {offsets = [0, 1, 0, 0], sizes = [4, 1, 4, 144], strides = [1, 1, 1, 1]} : vector<5x2x4x144xf32> to vector<4x1x4x144xf32>
    %404 = vector.shape_cast %403 : vector<4x1x4x144xf32> to vector<4x4x144xf32>
    %c4_260 = arith.constant 4 : index
    %c0_261 = arith.constant 0 : index
    %c0_262 = arith.constant 0 : index
    %405 = vector.load %arg22[%c4_260, %c0_261, %c0_262] : memref<9x1x144xf32, #tpu.memory_space<vmem>>, vector<1x1x144xf32>
    %406 = vector.shape_cast %405 : vector<1x1x144xf32> to vector<1x144xf32>
    %407 = vector.shape_cast %406 : vector<1x144xf32> to vector<1x1x144xf32>
    %408 = vector.broadcast %407 : vector<1x1x144xf32> to vector<4x4x144xf32>
    %409 = arith.mulf %404, %408 : vector<4x4x144xf32>
    %410 = arith.addf %402, %409 : vector<4x4x144xf32>
    %411 = vector.extract_strided_slice %394 {offsets = [1, 0, 0, 0], sizes = [4, 1, 4, 144], strides = [1, 1, 1, 1]} : vector<5x2x4x144xf32> to vector<4x1x4x144xf32>
    %412 = vector.shape_cast %411 : vector<4x1x4x144xf32> to vector<4x4x144xf32>
    %c7_263 = arith.constant 7 : index
    %c0_264 = arith.constant 0 : index
    %c0_265 = arith.constant 0 : index
    %413 = vector.load %arg22[%c7_263, %c0_264, %c0_265] : memref<9x1x144xf32, #tpu.memory_space<vmem>>, vector<1x1x144xf32>
    %414 = vector.shape_cast %413 : vector<1x1x144xf32> to vector<1x144xf32>
    %415 = vector.shape_cast %414 : vector<1x144xf32> to vector<1x1x144xf32>
    %416 = vector.broadcast %415 : vector<1x1x144xf32> to vector<4x4x144xf32>
    %417 = arith.mulf %412, %416 : vector<4x4x144xf32>
    %418 = arith.addf %410, %417 : vector<4x4x144xf32>
    %419 = vector.extract_strided_slice %363 {offsets = [0, 1, 0], sizes = [10, 4, 144], strides = [1, 1, 1]} : vector<10x5x144xf32> to vector<10x4x144xf32>
    %420 = vector.shape_cast %419 : vector<10x4x144xf32> to vector<5x2x4x144xf32>
    %421 = vector.extract_strided_slice %420 {offsets = [0, 0, 0, 0], sizes = [4, 1, 4, 144], strides = [1, 1, 1, 1]} : vector<5x2x4x144xf32> to vector<4x1x4x144xf32>
    %422 = vector.shape_cast %421 : vector<4x1x4x144xf32> to vector<4x4x144xf32>
    %c2_266 = arith.constant 2 : index
    %c0_267 = arith.constant 0 : index
    %c0_268 = arith.constant 0 : index
    %423 = vector.load %arg22[%c2_266, %c0_267, %c0_268] : memref<9x1x144xf32, #tpu.memory_space<vmem>>, vector<1x1x144xf32>
    %424 = vector.shape_cast %423 : vector<1x1x144xf32> to vector<1x144xf32>
    %425 = vector.shape_cast %424 : vector<1x144xf32> to vector<1x1x144xf32>
    %426 = vector.broadcast %425 : vector<1x1x144xf32> to vector<4x4x144xf32>
    %427 = arith.mulf %422, %426 : vector<4x4x144xf32>
    %428 = arith.addf %418, %427 : vector<4x4x144xf32>
    %429 = vector.extract_strided_slice %420 {offsets = [0, 1, 0, 0], sizes = [4, 1, 4, 144], strides = [1, 1, 1, 1]} : vector<5x2x4x144xf32> to vector<4x1x4x144xf32>
    %430 = vector.shape_cast %429 : vector<4x1x4x144xf32> to vector<4x4x144xf32>
    %c5_269 = arith.constant 5 : index
    %c0_270 = arith.constant 0 : index
    %c0_271 = arith.constant 0 : index
    %431 = vector.load %arg22[%c5_269, %c0_270, %c0_271] : memref<9x1x144xf32, #tpu.memory_space<vmem>>, vector<1x1x144xf32>
    %432 = vector.shape_cast %431 : vector<1x1x144xf32> to vector<1x144xf32>
    %433 = vector.shape_cast %432 : vector<1x144xf32> to vector<1x1x144xf32>
    %434 = vector.broadcast %433 : vector<1x1x144xf32> to vector<4x4x144xf32>
    %435 = arith.mulf %430, %434 : vector<4x4x144xf32>
    %436 = arith.addf %428, %435 : vector<4x4x144xf32>
    %437 = vector.extract_strided_slice %420 {offsets = [1, 0, 0, 0], sizes = [4, 1, 4, 144], strides = [1, 1, 1, 1]} : vector<5x2x4x144xf32> to vector<4x1x4x144xf32>
    %438 = vector.shape_cast %437 : vector<4x1x4x144xf32> to vector<4x4x144xf32>
    %c8_272 = arith.constant 8 : index
    %c0_273 = arith.constant 0 : index
    %c0_274 = arith.constant 0 : index
    %439 = vector.load %arg22[%c8_272, %c0_273, %c0_274] : memref<9x1x144xf32, #tpu.memory_space<vmem>>, vector<1x1x144xf32>
    %440 = vector.shape_cast %439 : vector<1x1x144xf32> to vector<1x144xf32>
    %441 = vector.shape_cast %440 : vector<1x144xf32> to vector<1x1x144xf32>
    %442 = vector.broadcast %441 : vector<1x1x144xf32> to vector<4x4x144xf32>
    %443 = arith.mulf %438, %442 : vector<4x4x144xf32>
    %444 = arith.addf %436, %443 : vector<4x4x144xf32>
    %445 = vector.shape_cast %444 : vector<4x4x144xf32> to vector<16x144xf32>
    %c0_275 = arith.constant 0 : index
    %c0_276 = arith.constant 0 : index
    %446 = vector.load %arg23[%c0_275, %c0_276] : memref<1x144xf32, #tpu.memory_space<vmem>>, vector<1x144xf32>
    %447 = vector.broadcast %446 : vector<1x144xf32> to vector<16x144xf32>
    %448 = arith.addf %445, %447 : vector<16x144xf32>
    %cst_277 = arith.constant 0.000000e+00 : f32
    %cst_278 = arith.constant 6.000000e+00 : f32
    %449 = vector.broadcast %cst_277 : f32 to vector<16x144xf32>
    %450 = arith.maximumf %449, %448 : vector<16x144xf32>
    %451 = vector.broadcast %cst_278 : f32 to vector<16x144xf32>
    %452 = arith.minimumf %451, %450 : vector<16x144xf32>
    %c0_279 = arith.constant 0 : index
    %c0_280 = arith.constant 0 : index
    %453 = vector.load %arg24[%c0_279, %c0_280] : memref<144x32xf32, #tpu.memory_space<vmem>>, vector<144x32xf32>
    %cst_281 = arith.constant dense<0.000000e+00> : vector<16x32xf32>
    %454 = tpu.matmul %452, %453, %cst_281 {dimension_numbers = #tpu.dot_dimension_numbers<[1], [0], [0], [1], [0, 0, 1, 1], [], []>} : vector<16x144xf32>, vector<144x32xf32>, vector<16x32xf32> -> vector<16x32xf32>
    %c0_282 = arith.constant 0 : index
    %c0_283 = arith.constant 0 : index
    %455 = vector.load %arg25[%c0_282, %c0_283] : memref<1x32xf32, #tpu.memory_space<vmem>>, vector<1x32xf32>
    %456 = vector.broadcast %455 : vector<1x32xf32> to vector<16x32xf32>
    %457 = arith.addf %454, %456 : vector<16x32xf32>
    %c0_284 = arith.constant 0 : index
    %c0_285 = arith.constant 0 : index
    %458 = vector.load %arg26[%c0_284, %c0_285] : memref<32x192xf32, #tpu.memory_space<vmem>>, vector<32x192xf32>
    %cst_286 = arith.constant dense<0.000000e+00> : vector<16x192xf32>
    %459 = tpu.matmul %457, %458, %cst_286 {dimension_numbers = #tpu.dot_dimension_numbers<[1], [0], [0], [1], [0, 0, 1, 1], [], []>} : vector<16x32xf32>, vector<32x192xf32>, vector<16x192xf32> -> vector<16x192xf32>
    %c0_287 = arith.constant 0 : index
    %c0_288 = arith.constant 0 : index
    %460 = vector.load %arg27[%c0_287, %c0_288] : memref<1x192xf32, #tpu.memory_space<vmem>>, vector<1x192xf32>
    %461 = vector.broadcast %460 : vector<1x192xf32> to vector<16x192xf32>
    %462 = arith.addf %459, %461 : vector<16x192xf32>
    %cst_289 = arith.constant 0.000000e+00 : f32
    %cst_290 = arith.constant 6.000000e+00 : f32
    %463 = vector.broadcast %cst_289 : f32 to vector<16x192xf32>
    %464 = arith.maximumf %463, %462 : vector<16x192xf32>
    %465 = vector.broadcast %cst_290 : f32 to vector<16x192xf32>
    %466 = arith.minimumf %465, %464 : vector<16x192xf32>
    %cst_291 = arith.constant 0.000000e+00 : f32
    %467 = vector.broadcast %cst_291 : f32 to vector<6x6x192xf32>
    %c0_292 = arith.constant 0 : index
    %c0_293 = arith.constant 0 : index
    %c0_294 = arith.constant 0 : index
    %468 = vector.load %arg39[%c0_292, %c0_293, %c0_294] : memref<6x6x192xf32, #tpu.memory_space<vmem>>, vector<6x6x192xf32>
    tpu.vector_store %arg39[%c0_292, %c0_293, %c0_294], %467 {strides = array<i32>} : memref<6x6x192xf32, #tpu.memory_space<vmem>>, vector<6x6x192xf32>,
    %469 = vector.shape_cast %466 : vector<16x192xf32> to vector<4x4x192xf32>
    %c1_295 = arith.constant 1 : index
    %c1_296 = arith.constant 1 : index
    %c0_297 = arith.constant 0 : index
    %470 = vector.load %arg39[%c1_295, %c1_296, %c0_297] : memref<6x6x192xf32, #tpu.memory_space<vmem>>, vector<4x4x192xf32>
    tpu.vector_store %arg39[%c1_295, %c1_296, %c0_297], %469 {strides = array<i32>} : memref<6x6x192xf32, #tpu.memory_space<vmem>>, vector<4x4x192xf32>,
    %cst_298 = arith.constant 0.000000e+00 : f32
    %471 = vector.broadcast %cst_298 : f32 to vector<4x4x192xf32>
    %c0_299 = arith.constant 0 : index
    %c0_300 = arith.constant 0 : index
    %c0_301 = arith.constant 0 : index
    %472 = vector.load %arg39[%c0_299, %c0_300, %c0_301] : memref<6x6x192xf32, #tpu.memory_space<vmem>>, vector<6x4x192xf32>
    %473 = vector.extract_strided_slice %472 {offsets = [0, 0, 0], sizes = [4, 4, 192], strides = [1, 1, 1]} : vector<6x4x192xf32> to vector<4x4x192xf32>
    %c0_302 = arith.constant 0 : index
    %c0_303 = arith.constant 0 : index
    %c0_304 = arith.constant 0 : index
    %474 = vector.load %arg28[%c0_302, %c0_303, %c0_304] : memref<9x1x192xf32, #tpu.memory_space<vmem>>, vector<1x1x192xf32>
    %475 = vector.shape_cast %474 : vector<1x1x192xf32> to vector<1x192xf32>
    %476 = vector.shape_cast %475 : vector<1x192xf32> to vector<1x1x192xf32>
    %477 = vector.broadcast %476 : vector<1x1x192xf32> to vector<4x4x192xf32>
    %478 = arith.mulf %473, %477 : vector<4x4x192xf32>
    %479 = arith.addf %471, %478 : vector<4x4x192xf32>
    %480 = vector.extract_strided_slice %472 {offsets = [1, 0, 0], sizes = [4, 4, 192], strides = [1, 1, 1]} : vector<6x4x192xf32> to vector<4x4x192xf32>
    %c3_305 = arith.constant 3 : index
    %c0_306 = arith.constant 0 : index
    %c0_307 = arith.constant 0 : index
    %481 = vector.load %arg28[%c3_305, %c0_306, %c0_307] : memref<9x1x192xf32, #tpu.memory_space<vmem>>, vector<1x1x192xf32>
    %482 = vector.shape_cast %481 : vector<1x1x192xf32> to vector<1x192xf32>
    %483 = vector.shape_cast %482 : vector<1x192xf32> to vector<1x1x192xf32>
    %484 = vector.broadcast %483 : vector<1x1x192xf32> to vector<4x4x192xf32>
    %485 = arith.mulf %480, %484 : vector<4x4x192xf32>
    %486 = arith.addf %479, %485 : vector<4x4x192xf32>
    %487 = vector.extract_strided_slice %472 {offsets = [2, 0, 0], sizes = [4, 4, 192], strides = [1, 1, 1]} : vector<6x4x192xf32> to vector<4x4x192xf32>
    %c6_308 = arith.constant 6 : index
    %c0_309 = arith.constant 0 : index
    %c0_310 = arith.constant 0 : index
    %488 = vector.load %arg28[%c6_308, %c0_309, %c0_310] : memref<9x1x192xf32, #tpu.memory_space<vmem>>, vector<1x1x192xf32>
    %489 = vector.shape_cast %488 : vector<1x1x192xf32> to vector<1x192xf32>
    %490 = vector.shape_cast %489 : vector<1x192xf32> to vector<1x1x192xf32>
    %491 = vector.broadcast %490 : vector<1x1x192xf32> to vector<4x4x192xf32>
    %492 = arith.mulf %487, %491 : vector<4x4x192xf32>
    %493 = arith.addf %486, %492 : vector<4x4x192xf32>
    %c0_311 = arith.constant 0 : index
    %c1_312 = arith.constant 1 : index
    %c0_313 = arith.constant 0 : index
    %494 = vector.load %arg39[%c0_311, %c1_312, %c0_313] : memref<6x6x192xf32, #tpu.memory_space<vmem>>, vector<6x4x192xf32>
    %495 = vector.extract_strided_slice %494 {offsets = [0, 0, 0], sizes = [4, 4, 192], strides = [1, 1, 1]} : vector<6x4x192xf32> to vector<4x4x192xf32>
    %c1_314 = arith.constant 1 : index
    %c0_315 = arith.constant 0 : index
    %c0_316 = arith.constant 0 : index
    %496 = vector.load %arg28[%c1_314, %c0_315, %c0_316] : memref<9x1x192xf32, #tpu.memory_space<vmem>>, vector<1x1x192xf32>
    %497 = vector.shape_cast %496 : vector<1x1x192xf32> to vector<1x192xf32>
    %498 = vector.shape_cast %497 : vector<1x192xf32> to vector<1x1x192xf32>
    %499 = vector.broadcast %498 : vector<1x1x192xf32> to vector<4x4x192xf32>
    %500 = arith.mulf %495, %499 : vector<4x4x192xf32>
    %501 = arith.addf %493, %500 : vector<4x4x192xf32>
    %502 = vector.extract_strided_slice %494 {offsets = [1, 0, 0], sizes = [4, 4, 192], strides = [1, 1, 1]} : vector<6x4x192xf32> to vector<4x4x192xf32>
    %c4_317 = arith.constant 4 : index
    %c0_318 = arith.constant 0 : index
    %c0_319 = arith.constant 0 : index
    %503 = vector.load %arg28[%c4_317, %c0_318, %c0_319] : memref<9x1x192xf32, #tpu.memory_space<vmem>>, vector<1x1x192xf32>
    %504 = vector.shape_cast %503 : vector<1x1x192xf32> to vector<1x192xf32>
    %505 = vector.shape_cast %504 : vector<1x192xf32> to vector<1x1x192xf32>
    %506 = vector.broadcast %505 : vector<1x1x192xf32> to vector<4x4x192xf32>
    %507 = arith.mulf %502, %506 : vector<4x4x192xf32>
    %508 = arith.addf %501, %507 : vector<4x4x192xf32>
    %509 = vector.extract_strided_slice %494 {offsets = [2, 0, 0], sizes = [4, 4, 192], strides = [1, 1, 1]} : vector<6x4x192xf32> to vector<4x4x192xf32>
    %c7_320 = arith.constant 7 : index
    %c0_321 = arith.constant 0 : index
    %c0_322 = arith.constant 0 : index
    %510 = vector.load %arg28[%c7_320, %c0_321, %c0_322] : memref<9x1x192xf32, #tpu.memory_space<vmem>>, vector<1x1x192xf32>
    %511 = vector.shape_cast %510 : vector<1x1x192xf32> to vector<1x192xf32>
    %512 = vector.shape_cast %511 : vector<1x192xf32> to vector<1x1x192xf32>
    %513 = vector.broadcast %512 : vector<1x1x192xf32> to vector<4x4x192xf32>
    %514 = arith.mulf %509, %513 : vector<4x4x192xf32>
    %515 = arith.addf %508, %514 : vector<4x4x192xf32>
    %c0_323 = arith.constant 0 : index
    %c2_324 = arith.constant 2 : index
    %c0_325 = arith.constant 0 : index
    %516 = vector.load %arg39[%c0_323, %c2_324, %c0_325] : memref<6x6x192xf32, #tpu.memory_space<vmem>>, vector<6x4x192xf32>
    %517 = vector.extract_strided_slice %516 {offsets = [0, 0, 0], sizes = [4, 4, 192], strides = [1, 1, 1]} : vector<6x4x192xf32> to vector<4x4x192xf32>
    %c2_326 = arith.constant 2 : index
    %c0_327 = arith.constant 0 : index
    %c0_328 = arith.constant 0 : index
    %518 = vector.load %arg28[%c2_326, %c0_327, %c0_328] : memref<9x1x192xf32, #tpu.memory_space<vmem>>, vector<1x1x192xf32>
    %519 = vector.shape_cast %518 : vector<1x1x192xf32> to vector<1x192xf32>
    %520 = vector.shape_cast %519 : vector<1x192xf32> to vector<1x1x192xf32>
    %521 = vector.broadcast %520 : vector<1x1x192xf32> to vector<4x4x192xf32>
    %522 = arith.mulf %517, %521 : vector<4x4x192xf32>
    %523 = arith.addf %515, %522 : vector<4x4x192xf32>
    %524 = vector.extract_strided_slice %516 {offsets = [1, 0, 0], sizes = [4, 4, 192], strides = [1, 1, 1]} : vector<6x4x192xf32> to vector<4x4x192xf32>
    %c5_329 = arith.constant 5 : index
    %c0_330 = arith.constant 0 : index
    %c0_331 = arith.constant 0 : index
    %525 = vector.load %arg28[%c5_329, %c0_330, %c0_331] : memref<9x1x192xf32, #tpu.memory_space<vmem>>, vector<1x1x192xf32>
    %526 = vector.shape_cast %525 : vector<1x1x192xf32> to vector<1x192xf32>
    %527 = vector.shape_cast %526 : vector<1x192xf32> to vector<1x1x192xf32>
    %528 = vector.broadcast %527 : vector<1x1x192xf32> to vector<4x4x192xf32>
    %529 = arith.mulf %524, %528 : vector<4x4x192xf32>
    %530 = arith.addf %523, %529 : vector<4x4x192xf32>
    %531 = vector.extract_strided_slice %516 {offsets = [2, 0, 0], sizes = [4, 4, 192], strides = [1, 1, 1]} : vector<6x4x192xf32> to vector<4x4x192xf32>
    %c8_332 = arith.constant 8 : index
    %c0_333 = arith.constant 0 : index
    %c0_334 = arith.constant 0 : index
    %532 = vector.load %arg28[%c8_332, %c0_333, %c0_334] : memref<9x1x192xf32, #tpu.memory_space<vmem>>, vector<1x1x192xf32>
    %533 = vector.shape_cast %532 : vector<1x1x192xf32> to vector<1x192xf32>
    %534 = vector.shape_cast %533 : vector<1x192xf32> to vector<1x1x192xf32>
    %535 = vector.broadcast %534 : vector<1x1x192xf32> to vector<4x4x192xf32>
    %536 = arith.mulf %531, %535 : vector<4x4x192xf32>
    %537 = arith.addf %530, %536 : vector<4x4x192xf32>
    %538 = vector.shape_cast %537 : vector<4x4x192xf32> to vector<16x192xf32>
    %c0_335 = arith.constant 0 : index
    %c0_336 = arith.constant 0 : index
    %539 = vector.load %arg29[%c0_335, %c0_336] : memref<1x192xf32, #tpu.memory_space<vmem>>, vector<1x192xf32>
    %540 = vector.broadcast %539 : vector<1x192xf32> to vector<16x192xf32>
    %541 = arith.addf %538, %540 : vector<16x192xf32>
    %cst_337 = arith.constant 0.000000e+00 : f32
    %cst_338 = arith.constant 6.000000e+00 : f32
    %542 = vector.broadcast %cst_337 : f32 to vector<16x192xf32>
    %543 = arith.maximumf %542, %541 : vector<16x192xf32>
    %544 = vector.broadcast %cst_338 : f32 to vector<16x192xf32>
    %545 = arith.minimumf %544, %543 : vector<16x192xf32>
    %c0_339 = arith.constant 0 : index
    %c0_340 = arith.constant 0 : index
    %546 = vector.load %arg30[%c0_339, %c0_340] : memref<192x32xf32, #tpu.memory_space<vmem>>, vector<192x32xf32>
    %cst_341 = arith.constant dense<0.000000e+00> : vector<16x32xf32>
    %547 = tpu.matmul %545, %546, %cst_341 {dimension_numbers = #tpu.dot_dimension_numbers<[1], [0], [0], [1], [0, 0, 1, 1], [], []>} : vector<16x192xf32>, vector<192x32xf32>, vector<16x32xf32> -> vector<16x32xf32>
    %c0_342 = arith.constant 0 : index
    %c0_343 = arith.constant 0 : index
    %548 = vector.load %arg31[%c0_342, %c0_343] : memref<1x32xf32, #tpu.memory_space<vmem>>, vector<1x32xf32>
    %549 = vector.broadcast %548 : vector<1x32xf32> to vector<16x32xf32>
    %550 = arith.addf %547, %549 : vector<16x32xf32>
    %551 = arith.addf %550, %457 : vector<16x32xf32>
    %c0_344 = arith.constant 0 : index
    %c0_345 = arith.constant 0 : index
    %c0_346 = arith.constant 0 : index
    %552 = vector.load %arg32[%c0_344, %c0_345, %c0_346] : memref<1x16x32xf32, #tpu.memory_space<vmem>>, vector<1x16x32xf32>
    %553 = vector.shape_cast %552 : vector<1x16x32xf32> to vector<16x32xf32>
    %554 = vector.shape_cast %551 : vector<16x32xf32> to vector<1x16x32xf32>
    tpu.vector_store %arg32[%c0_344, %c0_345, %c0_346], %554 {strides = array<i32>} : memref<1x16x32xf32, #tpu.memory_space<vmem>>, vector<1x16x32xf32>,
    return
  }
  func.func @transform_0(%arg0: i32) -> (i32, i32, i32, i32) {
    %c0_i32 = arith.constant 0 : i32
    %c0_i32_0 = arith.constant 0 : i32
    %c0_i32_1 = arith.constant 0 : i32
    %c0_i32_2 = arith.constant 0 : i32
    return %arg0, %c0_i32, %c0_i32_0, %c0_i32_1 : i32, i32, i32, i32
  }
  func.func @transform_1(%arg0: i32) -> (i32, i32, i32) {
    %c0_i32 = arith.constant 0 : i32
    %c0_i32_0 = arith.constant 0 : i32
    %c0_i32_1 = arith.constant 0 : i32
    %c0_i32_2 = arith.constant 0 : i32
    return %c0_i32, %c0_i32_0, %c0_i32_1 : i32, i32, i32
  }
  func.func @transform_2(%arg0: i32) -> (i32, i32) {
    %c0_i32 = arith.constant 0 : i32
    %c0_i32_0 = arith.constant 0 : i32
    %c0_i32_1 = arith.constant 0 : i32
    return %c0_i32, %c0_i32_0 : i32, i32
  }
  func.func @transform_3(%arg0: i32) -> (i32, i32, i32) {
    %c0_i32 = arith.constant 0 : i32
    %c0_i32_0 = arith.constant 0 : i32
    %c0_i32_1 = arith.constant 0 : i32
    %c0_i32_2 = arith.constant 0 : i32
    return %c0_i32, %c0_i32_0, %c0_i32_1 : i32, i32, i32
  }
  func.func @transform_4(%arg0: i32) -> (i32, i32) {
    %c0_i32 = arith.constant 0 : i32
    %c0_i32_0 = arith.constant 0 : i32
    %c0_i32_1 = arith.constant 0 : i32
    return %c0_i32, %c0_i32_0 : i32, i32
  }
  func.func @transform_5(%arg0: i32) -> (i32, i32) {
    %c0_i32 = arith.constant 0 : i32
    %c0_i32_0 = arith.constant 0 : i32
    %c0_i32_1 = arith.constant 0 : i32
    return %c0_i32, %c0_i32_0 : i32, i32
  }
  func.func @transform_6(%arg0: i32) -> (i32, i32) {
    %c0_i32 = arith.constant 0 : i32
    %c0_i32_0 = arith.constant 0 : i32
    %c0_i32_1 = arith.constant 0 : i32
    return %c0_i32, %c0_i32_0 : i32, i32
  }
  func.func @transform_7(%arg0: i32) -> (i32, i32) {
    %c0_i32 = arith.constant 0 : i32
    %c0_i32_0 = arith.constant 0 : i32
    %c0_i32_1 = arith.constant 0 : i32
    return %c0_i32, %c0_i32_0 : i32, i32
  }
  func.func @transform_8(%arg0: i32) -> (i32, i32) {
    %c0_i32 = arith.constant 0 : i32
    %c0_i32_0 = arith.constant 0 : i32
    %c0_i32_1 = arith.constant 0 : i32
    return %c0_i32, %c0_i32_0 : i32, i32
  }
  func.func @transform_9(%arg0: i32) -> (i32, i32, i32) {
    %c0_i32 = arith.constant 0 : i32
    %c0_i32_0 = arith.constant 0 : i32
    %c0_i32_1 = arith.constant 0 : i32
    %c0_i32_2 = arith.constant 0 : i32
    return %c0_i32, %c0_i32_0, %c0_i32_1 : i32, i32, i32
  }
  func.func @transform_10(%arg0: i32) -> (i32, i32) {
    %c0_i32 = arith.constant 0 : i32
    %c0_i32_0 = arith.constant 0 : i32
    %c0_i32_1 = arith.constant 0 : i32
    return %c0_i32, %c0_i32_0 : i32, i32
  }
  func.func @transform_11(%arg0: i32) -> (i32, i32) {
    %c0_i32 = arith.constant 0 : i32
    %c0_i32_0 = arith.constant 0 : i32
    %c0_i32_1 = arith.constant 0 : i32
    return %c0_i32, %c0_i32_0 : i32, i32
  }
  func.func @transform_12(%arg0: i32) -> (i32, i32) {
    %c0_i32 = arith.constant 0 : i32
    %c0_i32_0 = arith.constant 0 : i32
    %c0_i32_1 = arith.constant 0 : i32
    return %c0_i32, %c0_i32_0 : i32, i32
  }
  func.func @transform_13(%arg0: i32) -> (i32, i32) {
    %c0_i32 = arith.constant 0 : i32
    %c0_i32_0 = arith.constant 0 : i32
    %c0_i32_1 = arith.constant 0 : i32
    return %c0_i32, %c0_i32_0 : i32, i32
  }
  func.func @transform_14(%arg0: i32) -> (i32, i32) {
    %c0_i32 = arith.constant 0 : i32
    %c0_i32_0 = arith.constant 0 : i32
    %c0_i32_1 = arith.constant 0 : i32
    return %c0_i32, %c0_i32_0 : i32, i32
  }
  func.func @transform_15(%arg0: i32) -> (i32, i32, i32) {
    %c0_i32 = arith.constant 0 : i32
    %c0_i32_0 = arith.constant 0 : i32
    %c0_i32_1 = arith.constant 0 : i32
    %c0_i32_2 = arith.constant 0 : i32
    return %c0_i32, %c0_i32_0, %c0_i32_1 : i32, i32, i32
  }
  func.func @transform_16(%arg0: i32) -> (i32, i32) {
    %c0_i32 = arith.constant 0 : i32
    %c0_i32_0 = arith.constant 0 : i32
    %c0_i32_1 = arith.constant 0 : i32
    return %c0_i32, %c0_i32_0 : i32, i32
  }
  func.func @transform_17(%arg0: i32) -> (i32, i32) {
    %c0_i32 = arith.constant 0 : i32
    %c0_i32_0 = arith.constant 0 : i32
    %c0_i32_1 = arith.constant 0 : i32
    return %c0_i32, %c0_i32_0 : i32, i32
  }
  func.func @transform_18(%arg0: i32) -> (i32, i32) {
    %c0_i32 = arith.constant 0 : i32
    %c0_i32_0 = arith.constant 0 : i32
    %c0_i32_1 = arith.constant 0 : i32
    return %c0_i32, %c0_i32_0 : i32, i32
  }
  func.func @transform_19(%arg0: i32) -> (i32, i32) {
    %c0_i32 = arith.constant 0 : i32
    %c0_i32_0 = arith.constant 0 : i32
    %c0_i32_1 = arith.constant 0 : i32
    return %c0_i32, %c0_i32_0 : i32, i32
  }
  func.func @transform_20(%arg0: i32) -> (i32, i32) {
    %c0_i32 = arith.constant 0 : i32
    %c0_i32_0 = arith.constant 0 : i32
    %c0_i32_1 = arith.constant 0 : i32
    return %c0_i32, %c0_i32_0 : i32, i32
  }
  func.func @transform_21(%arg0: i32) -> (i32, i32, i32) {
    %c0_i32 = arith.constant 0 : i32
    %c0_i32_0 = arith.constant 0 : i32
    %c0_i32_1 = arith.constant 0 : i32
    %c0_i32_2 = arith.constant 0 : i32
    return %c0_i32, %c0_i32_0, %c0_i32_1 : i32, i32, i32
  }
  func.func @transform_22(%arg0: i32) -> (i32, i32) {
    %c0_i32 = arith.constant 0 : i32
    %c0_i32_0 = arith.constant 0 : i32
    %c0_i32_1 = arith.constant 0 : i32
    return %c0_i32, %c0_i32_0 : i32, i32
  }
  func.func @transform_23(%arg0: i32) -> (i32, i32) {
    %c0_i32 = arith.constant 0 : i32
    %c0_i32_0 = arith.constant 0 : i32
    %c0_i32_1 = arith.constant 0 : i32
    return %c0_i32, %c0_i32_0 : i32, i32
  }
  func.func @transform_24(%arg0: i32) -> (i32, i32) {
    %c0_i32 = arith.constant 0 : i32
    %c0_i32_0 = arith.constant 0 : i32
    %c0_i32_1 = arith.constant 0 : i32
    return %c0_i32, %c0_i32_0 : i32, i32
  }
  func.func @transform_25(%arg0: i32) -> (i32, i32) {
    %c0_i32 = arith.constant 0 : i32
    %c0_i32_0 = arith.constant 0 : i32
    %c0_i32_1 = arith.constant 0 : i32
    return %c0_i32, %c0_i32_0 : i32, i32
  }
  func.func @transform_26(%arg0: i32) -> (i32, i32) {
    %c0_i32 = arith.constant 0 : i32
    %c0_i32_0 = arith.constant 0 : i32
    %c0_i32_1 = arith.constant 0 : i32
    return %c0_i32, %c0_i32_0 : i32, i32
  }
  func.func @transform_27(%arg0: i32) -> (i32, i32, i32) {
    %c0_i32 = arith.constant 0 : i32
    %c0_i32_0 = arith.constant 0 : i32
    %c0_i32_1 = arith.constant 0 : i32
    %c0_i32_2 = arith.constant 0 : i32
    return %c0_i32, %c0_i32_0, %c0_i32_1 : i32, i32, i32
  }
  func.func @transform_28(%arg0: i32) -> (i32, i32) {
    %c0_i32 = arith.constant 0 : i32
    %c0_i32_0 = arith.constant 0 : i32
    %c0_i32_1 = arith.constant 0 : i32
    return %c0_i32, %c0_i32_0 : i32, i32
  }
  func.func @transform_29(%arg0: i32) -> (i32, i32) {
    %c0_i32 = arith.constant 0 : i32
    %c0_i32_0 = arith.constant 0 : i32
    %c0_i32_1 = arith.constant 0 : i32
    return %c0_i32, %c0_i32_0 : i32, i32
  }
  func.func @transform_30(%arg0: i32) -> (i32, i32) {
    %c0_i32 = arith.constant 0 : i32
    %c0_i32_0 = arith.constant 0 : i32
    %c0_i32_1 = arith.constant 0 : i32
    return %c0_i32, %c0_i32_0 : i32, i32
  }
  func.func @transform_31(%arg0: i32) -> (i32, i32, i32) {
    %c0_i32 = arith.constant 0 : i32
    %c0_i32_0 = arith.constant 0 : i32
    %c0_i32_1 = arith.constant 0 : i32
    return %arg0, %c0_i32, %c0_i32_0 : i32, i32, i32
  }
}

</mosaic_0001>

<llo_original>
// kernel: mobilenet_v2_features.1
$region0: #{mobilenet_v2_features.1}
  #allocation0 [shape = 'u32[]', space=smem, size = 0x4, offset = 0x4, fixed_abs, tag = 'smem constant byte address 0x4 - core index']
  #allocation1 [shape = 'u32[72,128]{1,0:T(1,128)}', space=vmem, size = 0x9000, scoped, tag = 'internal scratch']
  #allocation2 [shape = 'f32[18,18,32]{2,1,0:T(8,128)}', space=vmem, size = 0x36000, scoped, tag = 'scratch operand']
  #allocation3 [shape = 'f32[256,16]{1,0:T(8,128)}', space=vmem, size = 0x20000, scoped, tag = 'scratch operand']
  #allocation4 [shape = 'f32[2,18,9,96]{3,2,1,0:T(8,128)}', space=vmem, size = 0x48000, scoped, tag = 'scratch operand']
  #allocation5 [shape = 'f32[10,10,144]{2,1,0:T(8,128)}', space=vmem, size = 0x28000, scoped, tag = 'scratch operand']
  #allocation6 [shape = 'f32[64,24]{1,0:T(8,128)}', space=vmem, size = 0x8000, scoped, tag = 'scratch operand']
  #allocation7 [shape = 'f32[2,10,5,144]{3,2,1,0:T(8,128)}', space=vmem, size = 0x28000, scoped, tag = 'scratch operand']
  #allocation8 [shape = 'f32[6,6,192]{2,1,0:T(8,128)}', space=vmem, size = 0xc000, scoped, tag = 'scratch operand']
  %s0 = inlined_call_operand.smem [shape: u32[32], index: -1, kind: input, shape index: {}]
  %s1 = sld [smem:[%s0]]
  %s2 = scalar_lea.smem %s0, 1
  %s3 = sld [smem:[%s2]]
  %s4 = scalar_lea.smem %s0, 2
  %s5 = sld [smem:[%s4]]
  %s6 = scalar_lea.smem %s0, 3
  %s7 = sld [smem:[%s6]]
  %s8 = scalar_lea.smem %s0, 4
  %s9 = sld [smem:[%s8]]
  %s10 = scalar_lea.smem %s0, 5
  %s11 = sld [smem:[%s10]]
  %s12 = scalar_lea.smem %s0, 6
  %s13 = sld [smem:[%s12]]
  %s14 = scalar_lea.smem %s0, 7
  %s15 = sld [smem:[%s14]]
  %s16 = scalar_lea.smem %s0, 8
  %s17 = sld [smem:[%s16]]
  %s18 = scalar_lea.smem %s0, 9
  %s19 = sld [smem:[%s18]]
  %s20 = scalar_lea.smem %s0, 10
  %s21 = sld [smem:[%s20]]
  %s22 = scalar_lea.smem %s0, 11
  %s23 = sld [smem:[%s22]]
  %s24 = scalar_lea.smem %s0, 12
  %s25 = sld [smem:[%s24]]
  %s26 = scalar_lea.smem %s0, 13
  %s27 = sld [smem:[%s26]]
  %s28 = scalar_lea.smem %s0, 14
  %s29 = sld [smem:[%s28]]
  %s30 = scalar_lea.smem %s0, 15
  %s31 = sld [smem:[%s30]]
  %s32 = scalar_lea.smem %s0, 16
  %s33 = sld [smem:[%s32]]
  %s34 = scalar_lea.smem %s0, 17
  %s35 = sld [smem:[%s34]]
  %s36 = scalar_lea.smem %s0, 18
  %s37 = sld [smem:[%s36]]
  %s38 = scalar_lea.smem %s0, 19
  %s39 = sld [smem:[%s38]]
  %s40 = scalar_lea.smem %s0, 20
  %s41 = sld [smem:[%s40]]
  %s42 = scalar_lea.smem %s0, 21
  %s43 = sld [smem:[%s42]]
  %s44 = scalar_lea.smem %s0, 22
  %s45 = sld [smem:[%s44]]
  %s46 = scalar_lea.smem %s0, 23
  %s47 = sld [smem:[%s46]]
  %s48 = scalar_lea.smem %s0, 24
  %s49 = sld [smem:[%s48]]
  %s50 = scalar_lea.smem %s0, 25
  %s51 = sld [smem:[%s50]]
  %s52 = scalar_lea.smem %s0, 26
  %s53 = sld [smem:[%s52]]
  %s54 = scalar_lea.smem %s0, 27
  %s55 = sld [smem:[%s54]]
  %s56 = scalar_lea.smem %s0, 28
  %s57 = sld [smem:[%s56]]
  %s58 = scalar_lea.smem %s0, 29
  %s59 = sld [smem:[%s58]]
  %s60 = scalar_lea.smem %s0, 30
  %s61 = sld [smem:[%s60]]
  %s62 = scalar_lea.smem %s0, 31
  %s63 = sld [smem:[%s62]]
  %s64 = sld [smem:[#allocation0]]
  $region157: #{mobilenet_v2_features.1} parent=0
    _
  %s66 = ssub.s32 1, %s64
  %s67 = scalar_select 0, %s66, %s64
  $region1: #{mobilenet_v2_features.1} parent=0
    #allocation9 [shape = 'u8[16384]{0}', space=vmem, size = 0x4000, scoped, tag = 'output window, operand 0']
    #allocation10 [shape = 's32[2]{0}', space=sflag, size = 0x8, scoped, tag = 'scoped memory for mobilenet_v2_features.1']
    %68 = vsyncpa [#allocation10], 0
    %s69 = scalar_lea.sflag [#allocation10], 1
    %70 = vsyncpa %s69, 0
    loop: start=0, step=1, limit=4
    $region2: #{mobilenet_v2_features.1} parent=1 // loop_pre_header
      _
    $region3: #{mobilenet_v2_features.1} parent=1 // loop_header
      %s72 = sphi 0, %s76
      %p73 = scmp.ge.s32.totalorder %s72, 4
      %s82 = sphi 0, %s84
      %s85 = sphi 0, %s82
      %s86 = sphi 0, %s85
      %s102 = sphi 0, %s86
      %s106 = sphi 0, %s106
      %s108 = sphi 0, %s106
      %s109 = sphi 0, %s108
      %s123 = sphi 0, %s109
      %s127 = sphi 0, %s127
      %s129 = sphi 0, %s127
      %s130 = sphi 0, %s129
      %s144 = sphi 0, %s130
      %s148 = sphi 0, %s148
      %s150 = sphi 0, %s148
      %s151 = sphi 0, %s150
      %s165 = sphi 0, %s151
      %s169 = sphi 0, %s169
      %s171 = sphi 0, %s169
      %s172 = sphi 0, %s171
      %s186 = sphi 0, %s172
      %s190 = sphi 0, %s190
      %s192 = sphi 0, %s190
      %s193 = sphi 0, %s192
      %s207 = sphi 0, %s193
      %s211 = sphi 0, %s211
      %s213 = sphi 0, %s211
      %s214 = sphi 0, %s213
      %s228 = sphi 0, %s214
      %s232 = sphi 0, %s232
      %s234 = sphi 0, %s232
      %s235 = sphi 0, %s234
      %s249 = sphi 0, %s235
      %s253 = sphi 0, %s253
      %s255 = sphi 0, %s253
      %s256 = sphi 0, %s255
      %s270 = sphi 0, %s256
      %s274 = sphi 0, %s274
      %s276 = sphi 0, %s274
      %s277 = sphi 0, %s276
      %s291 = sphi 0, %s277
      %s295 = sphi 0, %s295
      %s297 = sphi 0, %s295
      %s298 = sphi 0, %s297
      %s312 = sphi 0, %s298
      %s316 = sphi 0, %s316
      %s318 = sphi 0, %s316
      %s319 = sphi 0, %s318
      %s333 = sphi 0, %s319
      %s337 = sphi 0, %s337
      %s339 = sphi 0, %s337
      %s340 = sphi 0, %s339
      %s354 = sphi 0, %s340
      %s358 = sphi 0, %s358
      %s360 = sphi 0, %s358
      %s361 = sphi 0, %s360
      %s375 = sphi 0, %s361
      %s379 = sphi 0, %s379
      %s381 = sphi 0, %s379
      %s382 = sphi 0, %s381
      %s396 = sphi 0, %s382
      %s400 = sphi 0, %s400
      %s402 = sphi 0, %s400
      %s403 = sphi 0, %s402
      %s417 = sphi 0, %s403
      %s421 = sphi 0, %s421
      %s423 = sphi 0, %s421
      %s424 = sphi 0, %s423
      %s438 = sphi 0, %s424
      %s442 = sphi 0, %s442
      %s444 = sphi 0, %s442
      %s445 = sphi 0, %s444
      %s459 = sphi 0, %s445
      %s463 = sphi 0, %s463
      %s465 = sphi 0, %s463
      %s466 = sphi 0, %s465
      %s480 = sphi 0, %s466
      %s484 = sphi 0, %s484
      %s486 = sphi 0, %s484
      %s487 = sphi 0, %s486
      %s501 = sphi 0, %s487
      %s505 = sphi 0, %s505
      %s507 = sphi 0, %s505
      %s508 = sphi 0, %s507
      %s522 = sphi 0, %s508
      %s526 = sphi 0, %s526
      %s528 = sphi 0, %s526
      %s529 = sphi 0, %s528
      %s543 = sphi 0, %s529
      %s547 = sphi 0, %s547
      %s549 = sphi 0, %s547
      %s550 = sphi 0, %s549
      %s564 = sphi 0, %s550
      %s568 = sphi 0, %s568
      %s570 = sphi 0, %s568
      %s571 = sphi 0, %s570
      %s585 = sphi 0, %s571
      %s589 = sphi 0, %s589
      %s591 = sphi 0, %s589
      %s592 = sphi 0, %s591
      %s606 = sphi 0, %s592
      %s610 = sphi 0, %s610
      %s612 = sphi 0, %s610
      %s613 = sphi 0, %s612
      %s627 = sphi 0, %s613
      %s631 = sphi 0, %s631
      %s633 = sphi 0, %s631
      %s634 = sphi 0, %s633
      %s648 = sphi 0, %s634
      %s652 = sphi 0, %s652
      %s654 = sphi 0, %s652
      %s655 = sphi 0, %s654
      %s669 = sphi 0, %s655
      %s673 = sphi 0, %s673
      %s675 = sphi 0, %s673
      %s676 = sphi 0, %s675
      %s690 = sphi 0, %s676
      %s694 = sphi 0, %s694
      %s696 = sphi 0, %s694
      %s697 = sphi 0, %s696
      %s711 = sphi 0, %s697
      %s715 = sphi 0, %s715
      %s717 = sphi 0, %s715
      %s718 = sphi 0, %s717
      %s732 = sphi 0, %s718
      %s738 = sphi 0, %s740
      %s741 = sphi 0, %s738
      %s742 = sphi 0, %s741
      %s758 = sphi 0, %s742
    $region4: #{mobilenet_v2_features.1} parent=1 // loop_header_branch
      %75 = sbr.rel (%p73) target = $region8
    $region5: #{mobilenet_v2_features.1} parent=1 // loop_body
      %s77 = ssub.s32 %s72, 1
      %s78 = ssub.s32 %s72, 2
      %s79 = sadd.s32 %s72, 1
      %s80 = ssub.s32 %s72, %s79
      %p81 = scmp.eq.s32.totalorder %s80, 0
      %s83 = sadd.s32 %s82, 1
      %s84 = scalar_select %p81, %s82, %s83
      %p87 = pneg %p81
      %p88 = scmp.eq.s32.totalorder %s72, 1
      %p89 = por %p87, %p88
      %p90 = scmp.ne.s32.totalorder %s82, %s85
      %p91 = scmp.eq.s32.totalorder %s72, 0
      %p92 = por %p90, %p91
      %p93 = scmp.ne.s32.totalorder %s82, %s85
      %p94 = scmp.eq.s32.totalorder %s77, 1
      %p95 = por %p93, %p94
      %p96 = scmp.ne.s32.totalorder %s85, %s86
      %p97 = scmp.eq.s32.totalorder %s77, 0
      %p98 = por %p96, %p97
      %p99 = scmp.ne.s32.totalorder %s85, %s86
      %p100 = scmp.eq.s32.totalorder %s78, 1
      %p101 = por %p99, %p100
      %p103 = scmp.ne.s32.totalorder %s86, %s102
      %p104 = scmp.eq.s32.totalorder %s78, 0
      %p105 = por %p103, %p104
      %s107 = sadd.s32 %s106, 1
      %p110 = scmp.eq.s32.totalorder %s72, 1
      %p111 = scmp.ne.s32.totalorder %s106, %s108
      %p112 = scmp.eq.s32.totalorder %s72, 0
      %p113 = por %p111, %p112
      %p114 = scmp.ne.s32.totalorder %s106, %s108
      %p115 = scmp.eq.s32.totalorder %s77, 1
      %p116 = por %p114, %p115
      %p117 = scmp.ne.s32.totalorder %s108, %s109
      %p118 = scmp.eq.s32.totalorder %s77, 0
      %p119 = por %p117, %p118
      %p120 = scmp.ne.s32.totalorder %s108, %s109
      %p121 = scmp.eq.s32.totalorder %s78, 1
      %p122 = por %p120, %p121
      %p124 = scmp.ne.s32.totalorder %s109, %s123
      %p125 = scmp.eq.s32.totalorder %s78, 0
      %p126 = por %p124, %p125
      %s128 = sadd.s32 %s127, 1
      %p131 = scmp.eq.s32.totalorder %s72, 1
      %p132 = scmp.ne.s32.totalorder %s127, %s129
      %p133 = scmp.eq.s32.totalorder %s72, 0
      %p134 = por %p132, %p133
      %p135 = scmp.ne.s32.totalorder %s127, %s129
      %p136 = scmp.eq.s32.totalorder %s77, 1
      %p137 = por %p135, %p136
      %p138 = scmp.ne.s32.totalorder %s129, %s130
      %p139 = scmp.eq.s32.totalorder %s77, 0
      %p140 = por %p138, %p139
      %p141 = scmp.ne.s32.totalorder %s129, %s130
      %p142 = scmp.eq.s32.totalorder %s78, 1
      %p143 = por %p141, %p142
      %p145 = scmp.ne.s32.totalorder %s130, %s144
      %p146 = scmp.eq.s32.totalorder %s78, 0
      %p147 = por %p145, %p146
      %s149 = sadd.s32 %s148, 1
      %p152 = scmp.eq.s32.totalorder %s72, 1
      %p153 = scmp.ne.s32.totalorder %s148, %s150
      %p154 = scmp.eq.s32.totalorder %s72, 0
      %p155 = por %p153, %p154
      %p156 = scmp.ne.s32.totalorder %s148, %s150
      %p157 = scmp.eq.s32.totalorder %s77, 1
      %p158 = por %p156, %p157
      %p159 = scmp.ne.s32.totalorder %s150, %s151
      %p160 = scmp.eq.s32.totalorder %s77, 0
      %p161 = por %p159, %p160
      %p162 = scmp.ne.s32.totalorder %s150, %s151
      %p163 = scmp.eq.s32.totalorder %s78, 1
      %p164 = por %p162, %p163
      %p166 = scmp.ne.s32.totalorder %s151, %s165
      %p167 = scmp.eq.s32.totalorder %s78, 0
      %p168 = por %p166, %p167
      %s170 = sadd.s32 %s169, 1
      %p173 = scmp.eq.s32.totalorder %s72, 1
      %p174 = scmp.ne.s32.totalorder %s169, %s171
      %p175 = scmp.eq.s32.totalorder %s72, 0
      %p176 = por %p174, %p175
      %p177 = scmp.ne.s32.totalorder %s169, %s171
      %p178 = scmp.eq.s32.totalorder %s77, 1
      %p179 = por %p177, %p178
      %p180 = scmp.ne.s32.totalorder %s171, %s172
      %p181 = scmp.eq.s32.totalorder %s77, 0
      %p182 = por %p180, %p181
      %p183 = scmp.ne.s32.totalorder %s171, %s172
      %p184 = scmp.eq.s32.totalorder %s78, 1
      %p185 = por %p183, %p184
      %p187 = scmp.ne.s32.totalorder %s172, %s186
      %p188 = scmp.eq.s32.totalorder %s78, 0
      %p189 = por %p187, %p188
      %s191 = sadd.s32 %s190, 1
      %p194 = scmp.eq.s32.totalorder %s72, 1
      %p195 = scmp.ne.s32.totalorder %s190, %s192
      %p196 = scmp.eq.s32.totalorder %s72, 0
      %p197 = por %p195, %p196
      %p198 = scmp.ne.s32.totalorder %s190, %s192
      %p199 = scmp.eq.s32.totalorder %s77, 1
      %p200 = por %p198, %p199
      %p201 = scmp.ne.s32.totalorder %s192, %s193
      %p202 = scmp.eq.s32.totalorder %s77, 0
      %p203 = por %p201, %p202
      %p204 = scmp.ne.s32.totalorder %s192, %s193
      %p205 = scmp.eq.s32.totalorder %s78, 1
      %p206 = por %p204, %p205
      %p208 = scmp.ne.s32.totalorder %s193, %s207
      %p209 = scmp.eq.s32.totalorder %s78, 0
      %p210 = por %p208, %p209
      %s212 = sadd.s32 %s211, 1
      %p215 = scmp.eq.s32.totalorder %s72, 1
      %p216 = scmp.ne.s32.totalorder %s211, %s213
      %p217 = scmp.eq.s32.totalorder %s72, 0
      %p218 = por %p216, %p217
      %p219 = scmp.ne.s32.totalorder %s211, %s213
      %p220 = scmp.eq.s32.totalorder %s77, 1
      %p221 = por %p219, %p220
      %p222 = scmp.ne.s32.totalorder %s213, %s214
      %p223 = scmp.eq.s32.totalorder %s77, 0
      %p224 = por %p222, %p223
      %p225 = scmp.ne.s32.totalorder %s213, %s214
      %p226 = scmp.eq.s32.totalorder %s78, 1
      %p227 = por %p225, %p226
      %p229 = scmp.ne.s32.totalorder %s214, %s228
      %p230 = scmp.eq.s32.totalorder %s78, 0
      %p231 = por %p229, %p230
      %s233 = sadd.s32 %s232, 1
      %p236 = scmp.eq.s32.totalorder %s72, 1
      %p237 = scmp.ne.s32.totalorder %s232, %s234
      %p238 = scmp.eq.s32.totalorder %s72, 0
      %p239 = por %p237, %p238
      %p240 = scmp.ne.s32.totalorder %s232, %s234
      %p241 = scmp.eq.s32.totalorder %s77, 1
      %p242 = por %p240, %p241
      %p243 = scmp.ne.s32.totalorder %s234, %s235
      %p244 = scmp.eq.s32.totalorder %s77, 0
      %p245 = por %p243, %p244
      %p246 = scmp.ne.s32.totalorder %s234, %s235
      %p247 = scmp.eq.s32.totalorder %s78, 1
      %p248 = por %p246, %p247
      %p250 = scmp.ne.s32.totalorder %s235, %s249
      %p251 = scmp.eq.s32.totalorder %s78, 0
      %p252 = por %p250, %p251
      %s254 = sadd.s32 %s253, 1
      %p257 = scmp.eq.s32.totalorder %s72, 1
      %p258 = scmp.ne.s32.totalorder %s253, %s255
      %p259 = scmp.eq.s32.totalorder %s72, 0
      %p260 = por %p258, %p259
      %p261 = scmp.ne.s32.totalorder %s253, %s255
      %p262 = scmp.eq.s32.totalorder %s77, 1
      %p263 = por %p261, %p262
      %p264 = scmp.ne.s32.totalorder %s255, %s256
      %p265 = scmp.eq.s32.totalorder %s77, 0
      %p266 = por %p264, %p265
      %p267 = scmp.ne.s32.totalorder %s255, %s256
      %p268 = scmp.eq.s32.totalorder %s78, 1
      %p269 = por %p267, %p268
      %p271 = scmp.ne.s32.totalorder %s256, %s270
      %p272 = scmp.eq.s32.totalorder %s78, 0
      %p273 = por %p271, %p272
      %s275 = sadd.s32 %s274, 1
      %p278 = scmp.eq.s32.totalorder %s72, 1
      %p279 = scmp.ne.s32.totalorder %s274, %s276
      %p280 = scmp.eq.s32.totalorder %s72, 0
      %p281 = por %p279, %p280
      %p282 = scmp.ne.s32.totalorder %s274, %s276
      %p283 = scmp.eq.s32.totalorder %s77, 1
      %p284 = por %p282, %p283
      %p285 = scmp.ne.s32.totalorder %s276, %s277
      %p286 = scmp.eq.s32.totalorder %s77, 0
      %p287 = por %p285, %p286
      %p288 = scmp.ne.s32.totalorder %s276, %s277
      %p289 = scmp.eq.s32.totalorder %s78, 1
      %p290 = por %p288, %p289
      %p292 = scmp.ne.s32.totalorder %s277, %s291
      %p293 = scmp.eq.s32.totalorder %s78, 0
      %p294 = por %p292, %p293
      %s296 = sadd.s32 %s295, 1
      %p299 = scmp.eq.s32.totalorder %s72, 1
      %p300 = scmp.ne.s32.totalorder %s295, %s297
      %p301 = scmp.eq.s32.totalorder %s72, 0
      %p302 = por %p300, %p301
      %p303 = scmp.ne.s32.totalorder %s295, %s297
      %p304 = scmp.eq.s32.totalorder %s77, 1
      %p305 = por %p303, %p304
      %p306 = scmp.ne.s32.totalorder %s297, %s298
      %p307 = scmp.eq.s32.totalorder %s77, 0
      %p308 = por %p306, %p307
      %p309 = scmp.ne.s32.totalorder %s297, %s298
      %p310 = scmp.eq.s32.totalorder %s78, 1
      %p311 = por %p309, %p310
      %p313 = scmp.ne.s32.totalorder %s298, %s312
      %p314 = scmp.eq.s32.totalorder %s78, 0
      %p315 = por %p313, %p314
      %s317 = sadd.s32 %s316, 1
      %p320 = scmp.eq.s32.totalorder %s72, 1
      %p321 = scmp.ne.s32.totalorder %s316, %s318
      %p322 = scmp.eq.s32.totalorder %s72, 0
      %p323 = por %p321, %p322
      %p324 = scmp.ne.s32.totalorder %s316, %s318
      %p325 = scmp.eq.s32.totalorder %s77, 1
      %p326 = por %p324, %p325
      %p327 = scmp.ne.s32.totalorder %s318, %s319
      %p328 = scmp.eq.s32.totalorder %s77, 0
      %p329 = por %p327, %p328
      %p330 = scmp.ne.s32.totalorder %s318, %s319
      %p331 = scmp.eq.s32.totalorder %s78, 1
      %p332 = por %p330, %p331
      %p334 = scmp.ne.s32.totalorder %s319, %s333
      %p335 = scmp.eq.s32.totalorder %s78, 0
      %p336 = por %p334, %p335
      %s338 = sadd.s32 %s337, 1
      %p341 = scmp.eq.s32.totalorder %s72, 1
      %p342 = scmp.ne.s32.totalorder %s337, %s339
      %p343 = scmp.eq.s32.totalorder %s72, 0
      %p344 = por %p342, %p343
      %p345 = scmp.ne.s32.totalorder %s337, %s339
      %p346 = scmp.eq.s32.totalorder %s77, 1
      %p347 = por %p345, %p346
      %p348 = scmp.ne.s32.totalorder %s339, %s340
      %p349 = scmp.eq.s32.totalorder %s77, 0
      %p350 = por %p348, %p349
      %p351 = scmp.ne.s32.totalorder %s339, %s340
      %p352 = scmp.eq.s32.totalorder %s78, 1
      %p353 = por %p351, %p352
      %p355 = scmp.ne.s32.totalorder %s340, %s354
      %p356 = scmp.eq.s32.totalorder %s78, 0
      %p357 = por %p355, %p356
      %s359 = sadd.s32 %s358, 1
      %p362 = scmp.eq.s32.totalorder %s72, 1
      %p363 = scmp.ne.s32.totalorder %s358, %s360
      %p364 = scmp.eq.s32.totalorder %s72, 0
      %p365 = por %p363, %p364
      %p366 = scmp.ne.s32.totalorder %s358, %s360
      %p367 = scmp.eq.s32.totalorder %s77, 1
      %p368 = por %p366, %p367
      %p369 = scmp.ne.s32.totalorder %s360, %s361
      %p370 = scmp.eq.s32.totalorder %s77, 0
      %p371 = por %p369, %p370
      %p372 = scmp.ne.s32.totalorder %s360, %s361
      %p373 = scmp.eq.s32.totalorder %s78, 1
      %p374 = por %p372, %p373
      %p376 = scmp.ne.s32.totalorder %s361, %s375
      %p377 = scmp.eq.s32.totalorder %s78, 0
      %p378 = por %p376, %p377
      %s380 = sadd.s32 %s379, 1
      %p383 = scmp.eq.s32.totalorder %s72, 1
      %p384 = scmp.ne.s32.totalorder %s379, %s381
      %p385 = scmp.eq.s32.totalorder %s72, 0
      %p386 = por %p384, %p385
      %p387 = scmp.ne.s32.totalorder %s379, %s381
      %p388 = scmp.eq.s32.totalorder %s77, 1
      %p389 = por %p387, %p388
      %p390 = scmp.ne.s32.totalorder %s381, %s382
      %p391 = scmp.eq.s32.totalorder %s77, 0
      %p392 = por %p390, %p391
      %p393 = scmp.ne.s32.totalorder %s381, %s382
      %p394 = scmp.eq.s32.totalorder %s78, 1
      %p395 = por %p393, %p394
      %p397 = scmp.ne.s32.totalorder %s382, %s396
      %p398 = scmp.eq.s32.totalorder %s78, 0
      %p399 = por %p397, %p398
      %s401 = sadd.s32 %s400, 1
      %p404 = scmp.eq.s32.totalorder %s72, 1
      %p405 = scmp.ne.s32.totalorder %s400, %s402
      %p406 = scmp.eq.s32.totalorder %s72, 0
      %p407 = por %p405, %p406
      %p408 = scmp.ne.s32.totalorder %s400, %s402
      %p409 = scmp.eq.s32.totalorder %s77, 1
      %p410 = por %p408, %p409
      %p411 = scmp.ne.s32.totalorder %s402, %s403
      %p412 = scmp.eq.s32.totalorder %s77, 0
      %p413 = por %p411, %p412
      %p414 = scmp.ne.s32.totalorder %s402, %s403
      %p415 = scmp.eq.s32.totalorder %s78, 1
      %p416 = por %p414, %p415
      %p418 = scmp.ne.s32.totalorder %s403, %s417
      %p419 = scmp.eq.s32.totalorder %s78, 0
      %p420 = por %p418, %p419
      %s422 = sadd.s32 %s421, 1
      %p425 = scmp.eq.s32.totalorder %s72, 1
      %p426 = scmp.ne.s32.totalorder %s421, %s423
      %p427 = scmp.eq.s32.totalorder %s72, 0
      %p428 = por %p426, %p427
      %p429 = scmp.ne.s32.totalorder %s421, %s423
      %p430 = scmp.eq.s32.totalorder %s77, 1
      %p431 = por %p429, %p430
      %p432 = scmp.ne.s32.totalorder %s423, %s424
      %p433 = scmp.eq.s32.totalorder %s77, 0
      %p434 = por %p432, %p433
      %p435 = scmp.ne.s32.totalorder %s423, %s424
      %p436 = scmp.eq.s32.totalorder %s78, 1
      %p437 = por %p435, %p436
      %p439 = scmp.ne.s32.totalorder %s424, %s438
      %p440 = scmp.eq.s32.totalorder %s78, 0
      %p441 = por %p439, %p440
      %s443 = sadd.s32 %s442, 1
      %p446 = scmp.eq.s32.totalorder %s72, 1
      %p447 = scmp.ne.s32.totalorder %s442, %s444
      %p448 = scmp.eq.s32.totalorder %s72, 0
      %p449 = por %p447, %p448
      %p450 = scmp.ne.s32.totalorder %s442, %s444
      %p451 = scmp.eq.s32.totalorder %s77, 1
      %p452 = por %p450, %p451
      %p453 = scmp.ne.s32.totalorder %s444, %s445
      %p454 = scmp.eq.s32.totalorder %s77, 0
      %p455 = por %p453, %p454
      %p456 = scmp.ne.s32.totalorder %s444, %s445
      %p457 = scmp.eq.s32.totalorder %s78, 1
      %p458 = por %p456, %p457
      %p460 = scmp.ne.s32.totalorder %s445, %s459
      %p461 = scmp.eq.s32.totalorder %s78, 0
      %p462 = por %p460, %p461
      %s464 = sadd.s32 %s463, 1
      %p467 = scmp.eq.s32.totalorder %s72, 1
      %p468 = scmp.ne.s32.totalorder %s463, %s465
      %p469 = scmp.eq.s32.totalorder %s72, 0
      %p470 = por %p468, %p469
      %p471 = scmp.ne.s32.totalorder %s463, %s465
      %p472 = scmp.eq.s32.totalorder %s77, 1
      %p473 = por %p471, %p472
      %p474 = scmp.ne.s32.totalorder %s465, %s466
      %p475 = scmp.eq.s32.totalorder %s77, 0
      %p476 = por %p474, %p475
      %p477 = scmp.ne.s32.totalorder %s465, %s466
      %p478 = scmp.eq.s32.totalorder %s78, 1
      %p479 = por %p477, %p478
      %p481 = scmp.ne.s32.totalorder %s466, %s480
      %p482 = scmp.eq.s32.totalorder %s78, 0
      %p483 = por %p481, %p482
      %s485 = sadd.s32 %s484, 1
      %p488 = scmp.eq.s32.totalorder %s72, 1
      %p489 = scmp.ne.s32.totalorder %s484, %s486
      %p490 = scmp.eq.s32.totalorder %s72, 0
      %p491 = por %p489, %p490
      %p492 = scmp.ne.s32.totalorder %s484, %s486
      %p493 = scmp.eq.s32.totalorder %s77, 1
      %p494 = por %p492, %p493
      %p495 = scmp.ne.s32.totalorder %s486, %s487
      %p496 = scmp.eq.s32.totalorder %s77, 0
      %p497 = por %p495, %p496
      %p498 = scmp.ne.s32.totalorder %s486, %s487
      %p499 = scmp.eq.s32.totalorder %s78, 1
      %p500 = por %p498, %p499
      %p502 = scmp.ne.s32.totalorder %s487, %s501
      %p503 = scmp.eq.s32.totalorder %s78, 0
      %p504 = por %p502, %p503
      %s506 = sadd.s32 %s505, 1
      %p509 = scmp.eq.s32.totalorder %s72, 1
      %p510 = scmp.ne.s32.totalorder %s505, %s507
      %p511 = scmp.eq.s32.totalorder %s72, 0
      %p512 = por %p510, %p511
      %p513 = scmp.ne.s32.totalorder %s505, %s507
      %p514 = scmp.eq.s32.totalorder %s77, 1
      %p515 = por %p513, %p514
      %p516 = scmp.ne.s32.totalorder %s507, %s508
      %p517 = scmp.eq.s32.totalorder %s77, 0
      %p518 = por %p516, %p517
      %p519 = scmp.ne.s32.totalorder %s507, %s508
      %p520 = scmp.eq.s32.totalorder %s78, 1
      %p521 = por %p519, %p520
      %p523 = scmp.ne.s32.totalorder %s508, %s522
      %p524 = scmp.eq.s32.totalorder %s78, 0
      %p525 = por %p523, %p524
      %s527 = sadd.s32 %s526, 1
      %p530 = scmp.eq.s32.totalorder %s72, 1
      %p531 = scmp.ne.s32.totalorder %s526, %s528
      %p532 = scmp.eq.s32.totalorder %s72, 0
      %p533 = por %p531, %p532
      %p534 = scmp.ne.s32.totalorder %s526, %s528
      %p535 = scmp.eq.s32.totalorder %s77, 1
      %p536 = por %p534, %p535
      %p537 = scmp.ne.s32.totalorder %s528, %s529
      %p538 = scmp.eq.s32.totalorder %s77, 0
      %p539 = por %p537, %p538
      %p540 = scmp.ne.s32.totalorder %s528, %s529
      %p541 = scmp.eq.s32.totalorder %s78, 1
      %p542 = por %p540, %p541
      %p544 = scmp.ne.s32.totalorder %s529, %s543
      %p545 = scmp.eq.s32.totalorder %s78, 0
      %p546 = por %p544, %p545
      %s548 = sadd.s32 %s547, 1
      %p551 = scmp.eq.s32.totalorder %s72, 1
      %p552 = scmp.ne.s32.totalorder %s547, %s549
      %p553 = scmp.eq.s32.totalorder %s72, 0
      %p554 = por %p552, %p553
      %p555 = scmp.ne.s32.totalorder %s547, %s549
      %p556 = scmp.eq.s32.totalorder %s77, 1
      %p557 = por %p555, %p556
      %p558 = scmp.ne.s32.totalorder %s549, %s550
      %p559 = scmp.eq.s32.totalorder %s77, 0
      %p560 = por %p558, %p559
      %p561 = scmp.ne.s32.totalorder %s549, %s550
      %p562 = scmp.eq.s32.totalorder %s78, 1
      %p563 = por %p561, %p562
      %p565 = scmp.ne.s32.totalorder %s550, %s564
      %p566 = scmp.eq.s32.totalorder %s78, 0
      %p567 = por %p565, %p566
      %s569 = sadd.s32 %s568, 1
      %p572 = scmp.eq.s32.totalorder %s72, 1
      %p573 = scmp.ne.s32.totalorder %s568, %s570
      %p574 = scmp.eq.s32.totalorder %s72, 0
      %p575 = por %p573, %p574
      %p576 = scmp.ne.s32.totalorder %s568, %s570
      %p577 = scmp.eq.s32.totalorder %s77, 1
      %p578 = por %p576, %p577
      %p579 = scmp.ne.s32.totalorder %s570, %s571
      %p580 = scmp.eq.s32.totalorder %s77, 0
      %p581 = por %p579, %p580
      %p582 = scmp.ne.s32.totalorder %s570, %s571
      %p583 = scmp.eq.s32.totalorder %s78, 1
      %p584 = por %p582, %p583
      %p586 = scmp.ne.s32.totalorder %s571, %s585
      %p587 = scmp.eq.s32.totalorder %s78, 0
      %p588 = por %p586, %p587
      %s590 = sadd.s32 %s589, 1
      %p593 = scmp.eq.s32.totalorder %s72, 1
      %p594 = scmp.ne.s32.totalorder %s589, %s591
      %p595 = scmp.eq.s32.totalorder %s72, 0
      %p596 = por %p594, %p595
      %p597 = scmp.ne.s32.totalorder %s589, %s591
      %p598 = scmp.eq.s32.totalorder %s77, 1
      %p599 = por %p597, %p598
      %p600 = scmp.ne.s32.totalorder %s591, %s592
      %p601 = scmp.eq.s32.totalorder %s77, 0
      %p602 = por %p600, %p601
      %p603 = scmp.ne.s32.totalorder %s591, %s592
      %p604 = scmp.eq.s32.totalorder %s78, 1
      %p605 = por %p603, %p604
      %p607 = scmp.ne.s32.totalorder %s592, %s606
      %p608 = scmp.eq.s32.totalorder %s78, 0
      %p609 = por %p607, %p608
      %s611 = sadd.s32 %s610, 1
      %p614 = scmp.eq.s32.totalorder %s72, 1
      %p615 = scmp.ne.s32.totalorder %s610, %s612
      %p616 = scmp.eq.s32.totalorder %s72, 0
      %p617 = por %p615, %p616
      %p618 = scmp.ne.s32.totalorder %s610, %s612
      %p619 = scmp.eq.s32.totalorder %s77, 1
      %p620 = por %p618, %p619
      %p621 = scmp.ne.s32.totalorder %s612, %s613
      %p622 = scmp.eq.s32.totalorder %s77, 0
      %p623 = por %p621, %p622
      %p624 = scmp.ne.s32.totalorder %s612, %s613
      %p625 = scmp.eq.s32.totalorder %s78, 1
      %p626 = por %p624, %p625
      %p628 = scmp.ne.s32.totalorder %s613, %s627
      %p629 = scmp.eq.s32.totalorder %s78, 0
      %p630 = por %p628, %p629
      %s632 = sadd.s32 %s631, 1
      %p635 = scmp.eq.s32.totalorder %s72, 1
      %p636 = scmp.ne.s32.totalorder %s631, %s633
      %p637 = scmp.eq.s32.totalorder %s72, 0
      %p638 = por %p636, %p637
      %p639 = scmp.ne.s32.totalorder %s631, %s633
      %p640 = scmp.eq.s32.totalorder %s77, 1
      %p641 = por %p639, %p640
      %p642 = scmp.ne.s32.totalorder %s633, %s634
      %p643 = scmp.eq.s32.totalorder %s77, 0
      %p644 = por %p642, %p643
      %p645 = scmp.ne.s32.totalorder %s633, %s634
      %p646 = scmp.eq.s32.totalorder %s78, 1
      %p647 = por %p645, %p646
      %p649 = scmp.ne.s32.totalorder %s634, %s648
      %p650 = scmp.eq.s32.totalorder %s78, 0
      %p651 = por %p649, %p650
      %s653 = sadd.s32 %s652, 1
      %p656 = scmp.eq.s32.totalorder %s72, 1
      %p657 = scmp.ne.s32.totalorder %s652, %s654
      %p658 = scmp.eq.s32.totalorder %s72, 0
      %p659 = por %p657, %p658
      %p660 = scmp.ne.s32.totalorder %s652, %s654
      %p661 = scmp.eq.s32.totalorder %s77, 1
      %p662 = por %p660, %p661
      %p663 = scmp.ne.s32.totalorder %s654, %s655
      %p664 = scmp.eq.s32.totalorder %s77, 0
      %p665 = por %p663, %p664
      %p666 = scmp.ne.s32.totalorder %s654, %s655
      %p667 = scmp.eq.s32.totalorder %s78, 1
      %p668 = por %p666, %p667
      %p670 = scmp.ne.s32.totalorder %s655, %s669
      %p671 = scmp.eq.s32.totalorder %s78, 0
      %p672 = por %p670, %p671
      %s674 = sadd.s32 %s673, 1
      %p677 = scmp.eq.s32.totalorder %s72, 1
      %p678 = scmp.ne.s32.totalorder %s673, %s675
      %p679 = scmp.eq.s32.totalorder %s72, 0
      %p680 = por %p678, %p679
      %p681 = scmp.ne.s32.totalorder %s673, %s675
      %p682 = scmp.eq.s32.totalorder %s77, 1
      %p683 = por %p681, %p682
      %p684 = scmp.ne.s32.totalorder %s675, %s676
      %p685 = scmp.eq.s32.totalorder %s77, 0
      %p686 = por %p684, %p685
      %p687 = scmp.ne.s32.totalorder %s675, %s676
      %p688 = scmp.eq.s32.totalorder %s78, 1
      %p689 = por %p687, %p688
      %p691 = scmp.ne.s32.totalorder %s676, %s690
      %p692 = scmp.eq.s32.totalorder %s78, 0
      %p693 = por %p691, %p692
      %s695 = sadd.s32 %s694, 1
      %p698 = scmp.eq.s32.totalorder %s72, 1
      %p699 = scmp.ne.s32.totalorder %s694, %s696
      %p700 = scmp.eq.s32.totalorder %s72, 0
      %p701 = por %p699, %p700
      %p702 = scmp.ne.s32.totalorder %s694, %s696
      %p703 = scmp.eq.s32.totalorder %s77, 1
      %p704 = por %p702, %p703
      %p705 = scmp.ne.s32.totalorder %s696, %s697
      %p706 = scmp.eq.s32.totalorder %s77, 0
      %p707 = por %p705, %p706
      %p708 = scmp.ne.s32.totalorder %s696, %s697
      %p709 = scmp.eq.s32.totalorder %s78, 1
      %p710 = por %p708, %p709
      %p712 = scmp.ne.s32.totalorder %s697, %s711
      %p713 = scmp.eq.s32.totalorder %s78, 0
      %p714 = por %p712, %p713
      %s716 = sadd.s32 %s715, 1
      %p719 = scmp.eq.s32.totalorder %s72, 1
      %p720 = scmp.ne.s32.totalorder %s715, %s717
      %p721 = scmp.eq.s32.totalorder %s72, 0
      %p722 = por %p720, %p721
      %p723 = scmp.ne.s32.totalorder %s715, %s717
      %p724 = scmp.eq.s32.totalorder %s77, 1
      %p725 = por %p723, %p724
      %p726 = scmp.ne.s32.totalorder %s717, %s718
      %p727 = scmp.eq.s32.totalorder %s77, 0
      %p728 = por %p726, %p727
      %p729 = scmp.ne.s32.totalorder %s717, %s718
      %p730 = scmp.eq.s32.totalorder %s78, 1
      %p731 = por %p729, %p730
      %p733 = scmp.ne.s32.totalorder %s718, %s732
      %p734 = scmp.eq.s32.totalorder %s78, 0
      %p735 = por %p733, %p734
      %s736 = ssub.s32 %s72, %s79
      %p737 = scmp.eq.s32.totalorder %s736, 0
      %s739 = sadd.s32 %s738, 1
      %s740 = scalar_select %p737, %s738, %s739
      %p743 = pneg %p737
      %p744 = scmp.eq.s32.totalorder %s72, 1
      %p745 = por %p743, %p744
      %p746 = scmp.ne.s32.totalorder %s738, %s741
      %p747 = scmp.eq.s32.totalorder %s72, 0
      %p748 = por %p746, %p747
      %p749 = scmp.ne.s32.totalorder %s738, %s741
      %p750 = scmp.eq.s32.totalorder %s77, 1
      %p751 = por %p749, %p750
      %p752 = scmp.ne.s32.totalorder %s741, %s742
      %p753 = scmp.eq.s32.totalorder %s77, 0
      %p754 = por %p752, %p753
      %p755 = scmp.ne.s32.totalorder %s741, %s742
      %p756 = scmp.eq.s32.totalorder %s78, 1
      %p757 = por %p755, %p756
      %p759 = scmp.ne.s32.totalorder %s742, %s758
      %p760 = scmp.eq.s32.totalorder %s78, 0
      %p761 = por %p759, %p760
      %p762 = scmp.le.s32.totalorder 1, %s72
      %p763 = scmp.lt.s32.totalorder %s72, 3
      %p764 = pnand %p762, %p763
      %p765 = pneg %p764
      // Predicated region
      $region9: #{mobilenet_v2_features.1} parent=5 // pred_check
        _
      $region10: #{mobilenet_v2_features.1} parent=5 // pred_check_branch
        %767 = sbr.rel (%p764) target = $region12
      $region11: #{mobilenet_v2_features.1} parent=5 // pred_region
        %s768 = ssub.s32 %s72, 1
        // Predicated region
        $region13: #{mobilenet_v2_features.1} parent=11 // pred_check
          %p769 = pneg %p119
        $region14: #{mobilenet_v2_features.1} parent=11 // pred_check_branch
          %771 = sbr.rel (%p769) target = $region16
        $region15: #{mobilenet_v2_features.1} parent=11 // pred_region
          _
        $region16: #{mobilenet_v2_features.1} parent=11 // pred_fallthru
          _
        // Predicated region
        $region17: #{mobilenet_v2_features.1} parent=11 // pred_check
          %p772 = pneg %p140
        $region18: #{mobilenet_v2_features.1} parent=11 // pred_check_branch
          %774 = sbr.rel (%p772) target = $region20
        $region19: #{mobilenet_v2_features.1} parent=11 // pred_region
          _
        $region20: #{mobilenet_v2_features.1} parent=11 // pred_fallthru
          _
        // Predicated region
        $region21: #{mobilenet_v2_features.1} parent=11 // pred_check
          %p775 = pneg %p161
        $region22: #{mobilenet_v2_features.1} parent=11 // pred_check_branch
          %777 = sbr.rel (%p775) target = $region24
        $region23: #{mobilenet_v2_features.1} parent=11 // pred_region
          _
        $region24: #{mobilenet_v2_features.1} parent=11 // pred_fallthru
          _
        // Predicated region
        $region25: #{mobilenet_v2_features.1} parent=11 // pred_check
          %p778 = pneg %p182
        $region26: #{mobilenet_v2_features.1} parent=11 // pred_check_branch
          %780 = sbr.rel (%p778) target = $region28
        $region27: #{mobilenet_v2_features.1} parent=11 // pred_region
          _
        $region28: #{mobilenet_v2_features.1} parent=11 // pred_fallthru
          _
        // Predicated region
        $region29: #{mobilenet_v2_features.1} parent=11 // pred_check
          %p781 = pneg %p203
        $region30: #{mobilenet_v2_features.1} parent=11 // pred_check_branch
          %783 = sbr.rel (%p781) target = $region32
        $region31: #{mobilenet_v2_features.1} parent=11 // pred_region
          _
        $region32: #{mobilenet_v2_features.1} parent=11 // pred_fallthru
          _
        // Predicated region
        $region33: #{mobilenet_v2_features.1} parent=11 // pred_check
          %p784 = pneg %p224
        $region34: #{mobilenet_v2_features.1} parent=11 // pred_check_branch
          %786 = sbr.rel (%p784) target = $region36
        $region35: #{mobilenet_v2_features.1} parent=11 // pred_region
          _
        $region36: #{mobilenet_v2_features.1} parent=11 // pred_fallthru
          _
        // Predicated region
        $region37: #{mobilenet_v2_features.1} parent=11 // pred_check
          %p787 = pneg %p245
        $region38: #{mobilenet_v2_features.1} parent=11 // pred_check_branch
          %789 = sbr.rel (%p787) target = $region40
        $region39: #{mobilenet_v2_features.1} parent=11 // pred_region
          _
        $region40: #{mobilenet_v2_features.1} parent=11 // pred_fallthru
          _
        // Predicated region
        $region41: #{mobilenet_v2_features.1} parent=11 // pred_check
          %p790 = pneg %p266
        $region42: #{mobilenet_v2_features.1} parent=11 // pred_check_branch
          %792 = sbr.rel (%p790) target = $region44
        $region43: #{mobilenet_v2_features.1} parent=11 // pred_region
          _
        $region44: #{mobilenet_v2_features.1} parent=11 // pred_fallthru
          _
        // Predicated region
        $region45: #{mobilenet_v2_features.1} parent=11 // pred_check
          %p793 = pneg %p287
        $region46: #{mobilenet_v2_features.1} parent=11 // pred_check_branch
          %795 = sbr.rel (%p793) target = $region48
        $region47: #{mobilenet_v2_features.1} parent=11 // pred_region
          _
        $region48: #{mobilenet_v2_features.1} parent=11 // pred_fallthru
          _
        // Predicated region
        $region49: #{mobilenet_v2_features.1} parent=11 // pred_check
          %p796 = pneg %p308
        $region50: #{mobilenet_v2_features.1} parent=11 // pred_check_branch
          %798 = sbr.rel (%p796) target = $region52
        $region51: #{mobilenet_v2_features.1} parent=11 // pred_region
          _
        $region52: #{mobilenet_v2_features.1} parent=11 // pred_fallthru
          _
        // Predicated region
        $region53: #{mobilenet_v2_features.1} parent=11 // pred_check
          %p799 = pneg %p329
        $region54: #{mobilenet_v2_features.1} parent=11 // pred_check_branch
          %801 = sbr.rel (%p799) target = $region56
        $region55: #{mobilenet_v2_features.1} parent=11 // pred_region
          _
        $region56: #{mobilenet_v2_features.1} parent=11 // pred_fallthru
          _
        // Predicated region
        $region57: #{mobilenet_v2_features.1} parent=11 // pred_check
          %p802 = pneg %p350
        $region58: #{mobilenet_v2_features.1} parent=11 // pred_check_branch
          %804 = sbr.rel (%p802) target = $region60
        $region59: #{mobilenet_v2_features.1} parent=11 // pred_region
          _
        $region60: #{mobilenet_v2_features.1} parent=11 // pred_fallthru
          _
        // Predicated region
        $region61: #{mobilenet_v2_features.1} parent=11 // pred_check
          %p805 = pneg %p371
        $region62: #{mobilenet_v2_features.1} parent=11 // pred_check_branch
          %807 = sbr.rel (%p805) target = $region64
        $region63: #{mobilenet_v2_features.1} parent=11 // pred_region
          _
        $region64: #{mobilenet_v2_features.1} parent=11 // pred_fallthru
          _
        // Predicated region
        $region65: #{mobilenet_v2_features.1} parent=11 // pred_check
          %p808 = pneg %p392
        $region66: #{mobilenet_v2_features.1} parent=11 // pred_check_branch
          %810 = sbr.rel (%p808) target = $region68
        $region67: #{mobilenet_v2_features.1} parent=11 // pred_region
          _
        $region68: #{mobilenet_v2_features.1} parent=11 // pred_fallthru
          _
        // Predicated region
        $region69: #{mobilenet_v2_features.1} parent=11 // pred_check
          %p811 = pneg %p413
        $region70: #{mobilenet_v2_features.1} parent=11 // pred_check_branch
          %813 = sbr.rel (%p811) target = $region72
        $region71: #{mobilenet_v2_features.1} parent=11 // pred_region
          _
        $region72: #{mobilenet_v2_features.1} parent=11 // pred_fallthru
          _
        // Predicated region
        $region73: #{mobilenet_v2_features.1} parent=11 // pred_check
          %p814 = pneg %p434
        $region74: #{mobilenet_v2_features.1} parent=11 // pred_check_branch
          %816 = sbr.rel (%p814) target = $region76
        $region75: #{mobilenet_v2_features.1} parent=11 // pred_region
          _
        $region76: #{mobilenet_v2_features.1} parent=11 // pred_fallthru
          _
        // Predicated region
        $region77: #{mobilenet_v2_features.1} parent=11 // pred_check
          %p817 = pneg %p455
        $region78: #{mobilenet_v2_features.1} parent=11 // pred_check_branch
          %819 = sbr.rel (%p817) target = $region80
        $region79: #{mobilenet_v2_features.1} parent=11 // pred_region
          _
        $region80: #{mobilenet_v2_features.1} parent=11 // pred_fallthru
          _
        // Predicated region
        $region81: #{mobilenet_v2_features.1} parent=11 // pred_check
          %p820 = pneg %p476
        $region82: #{mobilenet_v2_features.1} parent=11 // pred_check_branch
          %822 = sbr.rel (%p820) target = $region84
        $region83: #{mobilenet_v2_features.1} parent=11 // pred_region
          _
        $region84: #{mobilenet_v2_features.1} parent=11 // pred_fallthru
          _
        // Predicated region
        $region85: #{mobilenet_v2_features.1} parent=11 // pred_check
          %p823 = pneg %p497
        $region86: #{mobilenet_v2_features.1} parent=11 // pred_check_branch
          %825 = sbr.rel (%p823) target = $region88
        $region87: #{mobilenet_v2_features.1} parent=11 // pred_region
          _
        $region88: #{mobilenet_v2_features.1} parent=11 // pred_fallthru
          _
        // Predicated region
        $region89: #{mobilenet_v2_features.1} parent=11 // pred_check
          %p826 = pneg %p518
        $region90: #{mobilenet_v2_features.1} parent=11 // pred_check_branch
          %828 = sbr.rel (%p826) target = $region92
        $region91: #{mobilenet_v2_features.1} parent=11 // pred_region
          _
        $region92: #{mobilenet_v2_features.1} parent=11 // pred_fallthru
          _
        // Predicated region
        $region93: #{mobilenet_v2_features.1} parent=11 // pred_check
          %p829 = pneg %p539
        $region94: #{mobilenet_v2_features.1} parent=11 // pred_check_branch
          %831 = sbr.rel (%p829) target = $region96
        $region95: #{mobilenet_v2_features.1} parent=11 // pred_region
          _
        $region96: #{mobilenet_v2_features.1} parent=11 // pred_fallthru
          _
        // Predicated region
        $region97: #{mobilenet_v2_features.1} parent=11 // pred_check
          %p832 = pneg %p560
        $region98: #{mobilenet_v2_features.1} parent=11 // pred_check_branch
          %834 = sbr.rel (%p832) target = $region100
        $region99: #{mobilenet_v2_features.1} parent=11 // pred_region
          _
        $region100: #{mobilenet_v2_features.1} parent=11 // pred_fallthru
          _
        // Predicated region
        $region101: #{mobilenet_v2_features.1} parent=11 // pred_check
          %p835 = pneg %p581
        $region102: #{mobilenet_v2_features.1} parent=11 // pred_check_branch
          %837 = sbr.rel (%p835) target = $region104
        $region103: #{mobilenet_v2_features.1} parent=11 // pred_region
          _
        $region104: #{mobilenet_v2_features.1} parent=11 // pred_fallthru
          _
        // Predicated region
        $region105: #{mobilenet_v2_features.1} parent=11 // pred_check
          %p838 = pneg %p602
        $region106: #{mobilenet_v2_features.1} parent=11 // pred_check_branch
          %840 = sbr.rel (%p838) target = $region108
        $region107: #{mobilenet_v2_features.1} parent=11 // pred_region
          _
        $region108: #{mobilenet_v2_features.1} parent=11 // pred_fallthru
          _
        // Predicated region
        $region109: #{mobilenet_v2_features.1} parent=11 // pred_check
          %p841 = pneg %p623
        $region110: #{mobilenet_v2_features.1} parent=11 // pred_check_branch
          %843 = sbr.rel (%p841) target = $region112
        $region111: #{mobilenet_v2_features.1} parent=11 // pred_region
          _
        $region112: #{mobilenet_v2_features.1} parent=11 // pred_fallthru
          _
        // Predicated region
        $region113: #{mobilenet_v2_features.1} parent=11 // pred_check
          %p844 = pneg %p644
        $region114: #{mobilenet_v2_features.1} parent=11 // pred_check_branch
          %846 = sbr.rel (%p844) target = $region116
        $region115: #{mobilenet_v2_features.1} parent=11 // pred_region
          _
        $region116: #{mobilenet_v2_features.1} parent=11 // pred_fallthru
          _
        // Predicated region
        $region117: #{mobilenet_v2_features.1} parent=11 // pred_check
          %p847 = pneg %p665
        $region118: #{mobilenet_v2_features.1} parent=11 // pred_check_branch
          %849 = sbr.rel (%p847) target = $region120
        $region119: #{mobilenet_v2_features.1} parent=11 // pred_region
          _
        $region120: #{mobilenet_v2_features.1} parent=11 // pred_fallthru
          _
        // Predicated region
        $region121: #{mobilenet_v2_features.1} parent=11 // pred_check
          %p850 = pneg %p686
        $region122: #{mobilenet_v2_features.1} parent=11 // pred_check_branch
          %852 = sbr.rel (%p850) target = $region124
        $region123: #{mobilenet_v2_features.1} parent=11 // pred_region
          _
        $region124: #{mobilenet_v2_features.1} parent=11 // pred_fallthru
          _
        // Predicated region
        $region125: #{mobilenet_v2_features.1} parent=11 // pred_check
          %p853 = pneg %p707
        $region126: #{mobilenet_v2_features.1} parent=11 // pred_check_branch
          %855 = sbr.rel (%p853) target = $region128
        $region127: #{mobilenet_v2_features.1} parent=11 // pred_region
          _
        $region128: #{mobilenet_v2_features.1} parent=11 // pred_fallthru
          _
        // Predicated region
        $region129: #{mobilenet_v2_features.1} parent=11 // pred_check
          %p856 = pneg %p728
        $region130: #{mobilenet_v2_features.1} parent=11 // pred_check_branch
          %858 = sbr.rel (%p856) target = $region132
        $region131: #{mobilenet_v2_features.1} parent=11 // pred_region
          _
        $region132: #{mobilenet_v2_features.1} parent=11 // pred_fallthru
          _
      $region12: #{mobilenet_v2_features.1} parent=5 // pred_fallthru
        _
      %p859 = scmp.lt.s32.totalorder %s72, 2
      // Predicated region
      $region133: #{mobilenet_v2_features.1} parent=5 // pred_check
        %p860 = pneg %p859
      $region134: #{mobilenet_v2_features.1} parent=5 // pred_check_branch
        %862 = sbr.rel (%p860) target = $region136
      $region135: #{mobilenet_v2_features.1} parent=5 // pred_region
        // Predicated region
        $region137: #{mobilenet_v2_features.1} parent=135 // pred_check
          %p863 = pneg %p92
        $region138: #{mobilenet_v2_features.1} parent=135 // pred_check_branch
          %865 = sbr.rel (%p863) target = $region140
        $region139: #{mobilenet_v2_features.1} parent=135 // pred_region
          %p866 = scmp.lt.s32.totalorder %s72, 1
          %s867 = scalar_select %p866, %s72, 1
          %s868 = smul.addr %s867, 51
          %s869 = smul.addr %s868, 8
          %s870 = scalar_lea.vmem %s1, %s869
        $region140: #{mobilenet_v2_features.1} parent=135 // pred_fallthru
          _
      $region136: #{mobilenet_v2_features.1} parent=5 // pred_fallthru
        _
      %p871 = scmp.le.s32.totalorder 1, %s72
      %p872 = scmp.lt.s32.totalorder %s72, 3
      %p873 = pnand %p871, %p872
      %p874 = pneg %p873
      // Predicated region
      $region141: #{mobilenet_v2_features.1} parent=5 // pred_check
        _
      $region142: #{mobilenet_v2_features.1} parent=5 // pred_check_branch
        %876 = sbr.rel (%p873) target = $region144
      $region143: #{mobilenet_v2_features.1} parent=5 // pred_region
        %s877 = ssub.s32 %s72, 1
        %p878 = scmp.lt.s32.totalorder %s77, 1
        %s879 = scalar_select %p878, %s77, 1
        %s880 = smul.addr %s879, 51
        %s881 = smul.addr %s880, 8
        %s882 = scalar_lea.vmem %s1, %s881
        %p883 = pneg %p98
        %p884 = pneg %p95
        %p885 = pneg %p119
        %p886 = pneg %p116
        %p887 = pneg %p140
        %p888 = pneg %p137
        %p889 = pneg %p161
        %p890 = pneg %p158
        %p891 = pneg %p182
        %p892 = pneg %p179
        %p893 = pneg %p203
        %p894 = pneg %p200
        %p895 = pneg %p224
        %p896 = pneg %p221
        %p897 = pneg %p245
        %p898 = pneg %p242
        %p899 = pneg %p266
        %p900 = pneg %p263
        %p901 = pneg %p287
        %p902 = pneg %p284
        %p903 = pneg %p308
        %p904 = pneg %p305
        %p905 = pneg %p329
        %p906 = pneg %p326
        %p907 = pneg %p350
        %p908 = pneg %p347
        %p909 = pneg %p371
        %p910 = pneg %p368
        %p911 = pneg %p392
        %p912 = pneg %p389
        %p913 = pneg %p413
        %p914 = pneg %p410
        %p915 = pneg %p434
        %p916 = pneg %p431
        %p917 = pneg %p455
        %p918 = pneg %p452
        %p919 = pneg %p476
        %p920 = pneg %p473
        %p921 = pneg %p497
        %p922 = pneg %p494
        %p923 = pneg %p518
        %p924 = pneg %p515
        %p925 = pneg %p539
        %p926 = pneg %p536
        %p927 = pneg %p560
        %p928 = pneg %p557
        %p929 = pneg %p581
        %p930 = pneg %p578
        %p931 = pneg %p602
        %p932 = pneg %p599
        %p933 = pneg %p623
        %p934 = pneg %p620
        %p935 = pneg %p644
        %p936 = pneg %p641
        %p937 = pneg %p665
        %p938 = pneg %p662
        %p939 = pneg %p686
        %p940 = pneg %p683
        %p941 = pneg %p707
        %p942 = pneg %p704
        %p943 = pneg %p728
        %p944 = pneg %p725
        %p945 = pneg %p754
        %p946 = pneg %p751
        %s947 = sand.u32 %s741, 1
        %s948 = scalar_lea.sflag [#allocation10], %s947
        %s949 = sand.u32 %s741, 1
        %s950 = smul.addr %s949, 16
        %s951 = scalar_lea.vmem [#allocation9], %s950
        %p952 = scmp.lt.s32.totalorder %s77, 1
        %s953 = scalar_select %p952, %s77, 1
        %s954 = smul.addr %s953, 51
        %s955 = smul.addr %s954, 8
        %s956 = scalar_lea.vmem %s1, %s955
        %v957 = vld [vmem:[%s956] sm:$0xff]
        %v958 = vld [vmem:[%s956 + $0x8] sm:$0xff]
        %v959 = vld [vmem:[%s956 + $0x10] sm:$0x1]
        %v960 = vld [vmem:[%s956 + $0x18] sm:$0xff]
        %v961 = vld [vmem:[%s956 + $0x20] sm:$0xff]
        %v962 = vld [vmem:[%s956 + $0x28] sm:$0x1]
        %v963 = vld [vmem:[%s956 + $0x30] sm:$0xff]
        %v964 = vld [vmem:[%s956 + $0x38] sm:$0xff]
        %v965 = vld [vmem:[%s956 + $0x40] sm:$0x1]
        %v966 = vld [vmem:[%s956 + $0x48] sm:$0xff]
        %v967 = vld [vmem:[%s956 + $0x50] sm:$0xff]
        %v968 = vld [vmem:[%s956 + $0x58] sm:$0x1]
        %v969 = vld [vmem:[%s956 + $0x60] sm:$0xff]
        %v970 = vld [vmem:[%s956 + $0x68] sm:$0xff]
        %v971 = vld [vmem:[%s956 + $0x70] sm:$0x1]
        %v972 = vld [vmem:[%s956 + $0x78] sm:$0xff]
        %v973 = vld [vmem:[%s956 + $0x80] sm:$0xff]
        %v974 = vld [vmem:[%s956 + $0x88] sm:$0x1]
        %v975 = vld [vmem:[%s956 + $0x90] sm:$0xff]
        %v976 = vld [vmem:[%s956 + $0x98] sm:$0xff]
        %v977 = vld [vmem:[%s956 + $0xa0] sm:$0x1]
        %v978 = vld [vmem:[%s956 + $0xa8] sm:$0xff]
        %v979 = vld [vmem:[%s956 + $0xb0] sm:$0xff]
        %v980 = vld [vmem:[%s956 + $0xb8] sm:$0x1]
        %v981 = vld [vmem:[%s956 + $0xc0] sm:$0xff]
        %v982 = vld [vmem:[%s956 + $0xc8] sm:$0xff]
        %v983 = vld [vmem:[%s956 + $0xd0] sm:$0x1]
        %v984 = vld [vmem:[%s956 + $0xd8] sm:$0xff]
        %v985 = vld [vmem:[%s956 + $0xe0] sm:$0xff]
        %v986 = vld [vmem:[%s956 + $0xe8] sm:$0x1]
        %v987 = vld [vmem:[%s956 + $0xf0] sm:$0xff]
        %v988 = vld [vmem:[%s956 + $0xf8] sm:$0xff]
        %v989 = vld [vmem:[%s956 + $0x100] sm:$0x1]
        %v990 = vld [vmem:[%s956 + $0x108] sm:$0xff]
        %v991 = vld [vmem:[%s956 + $0x110] sm:$0xff]
        %v992 = vld [vmem:[%s956 + $0x118] sm:$0x1]
        %v993 = vld [vmem:[%s956 + $0x120] sm:$0xff]
        %v994 = vld [vmem:[%s956 + $0x128] sm:$0xff]
        %v995 = vld [vmem:[%s956 + $0x130] sm:$0x1]
        %v996 = vld [vmem:[%s956 + $0x138] sm:$0xff]
        %v997 = vld [vmem:[%s956 + $0x140] sm:$0xff]
        %v998 = vld [vmem:[%s956 + $0x148] sm:$0x1]
        %v999 = vld [vmem:[%s956 + $0x150] sm:$0xff]
        %v1000 = vld [vmem:[%s956 + $0x158] sm:$0xff]
        %v1001 = vld [vmem:[%s956 + $0x160] sm:$0x1]
        %v1002 = vld [vmem:[%s956 + $0x168] sm:$0xff]
        %v1003 = vld [vmem:[%s956 + $0x170] sm:$0xff]
        %v1004 = vld [vmem:[%s956 + $0x178] sm:$0x1]
        %v1005 = vld [vmem:[%s956 + $0x180] sm:$0xff]
        %v1006 = vld [vmem:[%s956 + $0x188] sm:$0xff]
        %v1007 = vld [vmem:[%s956 + $0x190] sm:$0x1]
        %v1008 = vld [vmem:[%s3] sm:$0xff]
        %v1009 = vld [vmem:[%s3 + $0x8] sm:$0xf]
        %vm1058 = vcmask 1046528
        %v1059 = vrot.slane %v957, 1
        %v1060 = vrot.slane %v958, 1
        %v1061 = vsel %vm1058, %v1059, %v1060
        %v1062 = vrot.slane %v959, 1
        %v1063 = vsel %vm1058, %v1060, %v1062
        %v1064 = vrot.slane %v960, 1
        %v1065 = vrot.slane %v961, 1
        %v1066 = vsel %vm1058, %v1064, %v1065
        %v1067 = vrot.slane %v962, 1
        %v1068 = vsel %vm1058, %v1065, %v1067
        %v1069 = vrot.slane %v963, 1
        %v1070 = vrot.slane %v964, 1
        %v1071 = vsel %vm1058, %v1069, %v1070
        %v1072 = vrot.slane %v965, 1
        %v1073 = vsel %vm1058, %v1070, %v1072
        %v1074 = vrot.slane %v966, 1
        %v1075 = vrot.slane %v967, 1
        %v1076 = vsel %vm1058, %v1074, %v1075
        %v1077 = vrot.slane %v968, 1
        %v1078 = vsel %vm1058, %v1075, %v1077
        %v1079 = vrot.slane %v969, 1
        %v1080 = vrot.slane %v970, 1
        %v1081 = vsel %vm1058, %v1079, %v1080
        %v1082 = vrot.slane %v971, 1
        %v1083 = vsel %vm1058, %v1080, %v1082
        %v1084 = vrot.slane %v972, 1
        %v1085 = vrot.slane %v973, 1
        %v1086 = vsel %vm1058, %v1084, %v1085
        %v1087 = vrot.slane %v974, 1
        %v1088 = vsel %vm1058, %v1085, %v1087
        %v1089 = vrot.slane %v975, 1
        %v1090 = vrot.slane %v976, 1
        %v1091 = vsel %vm1058, %v1089, %v1090
        %v1092 = vrot.slane %v977, 1
        %v1093 = vsel %vm1058, %v1090, %v1092
        %v1094 = vrot.slane %v978, 1
        %v1095 = vrot.slane %v979, 1
        %v1096 = vsel %vm1058, %v1094, %v1095
        %v1097 = vrot.slane %v980, 1
        %v1098 = vsel %vm1058, %v1095, %v1097
        %v1099 = vrot.slane %v981, 1
        %v1100 = vrot.slane %v982, 1
        %v1101 = vsel %vm1058, %v1099, %v1100
        %v1102 = vrot.slane %v983, 1
        %v1103 = vsel %vm1058, %v1100, %v1102
        %v1104 = vrot.slane %v984, 1
        %v1105 = vrot.slane %v985, 1
        %v1106 = vsel %vm1058, %v1104, %v1105
        %v1107 = vrot.slane %v986, 1
        %v1108 = vsel %vm1058, %v1105, %v1107
        %v1109 = vrot.slane %v987, 1
        %v1110 = vrot.slane %v988, 1
        %v1111 = vsel %vm1058, %v1109, %v1110
        %v1112 = vrot.slane %v989, 1
        %v1113 = vsel %vm1058, %v1110, %v1112
        %v1114 = vrot.slane %v990, 1
        %v1115 = vrot.slane %v991, 1
        %v1116 = vsel %vm1058, %v1114, %v1115
        %v1117 = vrot.slane %v992, 1
        %v1118 = vsel %vm1058, %v1115, %v1117
        %v1119 = vrot.slane %v993, 1
        %v1120 = vrot.slane %v994, 1
        %v1121 = vsel %vm1058, %v1119, %v1120
        %v1122 = vrot.slane %v995, 1
        %v1123 = vsel %vm1058, %v1120, %v1122
        %v1124 = vrot.slane %v996, 1
        %v1125 = vrot.slane %v997, 1
        %v1126 = vsel %vm1058, %v1124, %v1125
        %v1127 = vrot.slane %v998, 1
        %v1128 = vsel %vm1058, %v1125, %v1127
        %v1129 = vrot.slane %v999, 1
        %v1130 = vrot.slane %v1000, 1
        %v1131 = vsel %vm1058, %v1129, %v1130
        %v1132 = vrot.slane %v1001, 1
        %v1133 = vsel %vm1058, %v1130, %v1132
        %v1134 = vrot.slane %v1002, 1
        %v1135 = vrot.slane %v1003, 1
        %v1136 = vsel %vm1058, %v1134, %v1135
        %v1137 = vrot.slane %v1004, 1
        %v1138 = vsel %vm1058, %v1135, %v1137
        %s1139 = scalar_lea.vmem %s3, 16
        %v1140 = vld [vmem:[%s1139] sm:$0xff]
        %v1141 = vld [vmem:[%s1139 + $0x8] sm:$0xf]
        %vm1142 = vcmask 97280
        %v1143 = vsel %vm1142, %v1061, 0
        %v1145 = vsel %vm1142, %v1063, 0
        %v1147 = vsel %vm1142, %v1066, 0
        %v1149 = vsel %vm1142, %v1068, 0
        %v1151 = vsel %vm1142, %v1071, 0
        %v1153 = vsel %vm1142, %v1073, 0
        %v1155 = vsel %vm1142, %v1076, 0
        %v1157 = vsel %vm1142, %v1078, 0
        %v1159 = vsel %vm1142, %v1081, 0
        %v1161 = vsel %vm1142, %v1083, 0
        %v1163 = vsel %vm1142, %v1086, 0
        %v1165 = vsel %vm1142, %v1088, 0
        %v1167 = vsel %vm1142, %v1091, 0
        %v1169 = vsel %vm1142, %v1093, 0
        %v1171 = vsel %vm1142, %v1096, 0
        %v1173 = vsel %vm1142, %v1098, 0
        %v1175 = vsel %vm1142, %v1101, 0
        %v1177 = vsel %vm1142, %v1103, 0
        %v1179 = vsel %vm1142, %v1106, 0
        %v1181 = vsel %vm1142, %v1108, 0
        %v1183 = vsel %vm1142, %v1111, 0
        %v1185 = vsel %vm1142, %v1113, 0
        %v1187 = vsel %vm1142, %v1116, 0
        %v1189 = vsel %vm1142, %v1118, 0
        %v1191 = vsel %vm1142, %v1121, 0
        %v1193 = vsel %vm1142, %v1123, 0
        %v1195 = vsel %vm1142, %v1126, 0
        %v1197 = vsel %vm1142, %v1128, 0
        %v1199 = vsel %vm1142, %v1131, 0
        %v1201 = vsel %vm1142, %v1133, 0
        %v1203 = vsel %vm1142, %v1136, 0
        %v1205 = vsel %vm1142, %v1138, 0
        %vm1207 = vcmask 1043456
        %v1209 = vsel %vm1207, %v1141, 0
        %1211 = vmatpush.msra.mxu0 0.0
        %1212 = vmatpush.msra.mxu0 0.0
        %1213 = vmatpush.msra.mxu0 0.0
        %1214 = vmatpush.msra.mxu0 0.0
        %1215 = vmatpush.msra.mxu0 0.0
        %1216 = vmatpush.msra.mxu0 0.0
        %1217 = vmatpush.msra.mxu0 0.0
        %1218 = vmatpush.msra.mxu0 0.0
        %1219 = vmatpush.msra.mxu0 0.0
        %1220 = vmatpush.msra.mxu0 0.0
        %1221 = vmatpush.msra.mxu0 0.0
        %1222 = vmatpush.msra.mxu0 0.0
        %1223 = vmatpush.msra.mxu0 0.0
        %1224 = vmatpush.msra.mxu0 0.0
        %1225 = vmatpush.msra.mxu0 %v1209
        %1226 = vmatpush.msra.mxu0 %v1140
        %1227 = vmatmul.f32.gmra.mxu0 %v1143
        %v1228 = vpop.f32.mrf.mxu0
        %v1229 = vadd.f32 0.0, %v1228
        %1230 = vmatmul.f32.gmra.mxu0 %v1145
        %v1231 = vpop.f32.mrf.mxu0
        %v1232 = vadd.f32 0.0, %v1231
        %1233 = vmatmul.f32.gmra.mxu0 %v1147
        %v1234 = vpop.f32.mrf.mxu0
        %v1235 = vadd.f32 0.0, %v1234
        %1236 = vmatmul.f32.gmra.mxu0 %v1149
        %v1237 = vpop.f32.mrf.mxu0
        %v1238 = vadd.f32 0.0, %v1237
        %1239 = vmatmul.f32.gmra.mxu0 %v1151
        %v1240 = vpop.f32.mrf.mxu0
        %v1241 = vadd.f32 0.0, %v1240
        %1242 = vmatmul.f32.gmra.mxu0 %v1153
        %v1243 = vpop.f32.mrf.mxu0
        %v1244 = vadd.f32 0.0, %v1243
        %1245 = vmatmul.f32.gmra.mxu0 %v1155
        %v1246 = vpop.f32.mrf.mxu0
        %v1247 = vadd.f32 0.0, %v1246
        %1248 = vmatmul.f32.gmra.mxu0 %v1157
        %v1249 = vpop.f32.mrf.mxu0
        %v1250 = vadd.f32 0.0, %v1249
        %1251 = vmatmul.f32.gmra.mxu0 %v1159
        %v1252 = vpop.f32.mrf.mxu0
        %v1253 = vadd.f32 0.0, %v1252
        %1254 = vmatmul.f32.gmra.mxu0 %v1161
        %v1255 = vpop.f32.mrf.mxu0
        %v1256 = vadd.f32 0.0, %v1255
        %1257 = vmatmul.f32.gmra.mxu0 %v1163
        %v1258 = vpop.f32.mrf.mxu0
        %v1259 = vadd.f32 0.0, %v1258
        %1260 = vmatmul.f32.gmra.mxu0 %v1165
        %v1261 = vpop.f32.mrf.mxu0
        %v1262 = vadd.f32 0.0, %v1261
        %1263 = vmatmul.f32.gmra.mxu0 %v1167
        %v1264 = vpop.f32.mrf.mxu0
        %v1265 = vadd.f32 0.0, %v1264
        %1266 = vmatmul.f32.gmra.mxu0 %v1169
        %v1267 = vpop.f32.mrf.mxu0
        %v1268 = vadd.f32 0.0, %v1267
        %1269 = vmatmul.f32.gmra.mxu0 %v1171
        %v1270 = vpop.f32.mrf.mxu0
        %v1271 = vadd.f32 0.0, %v1270
        %1272 = vmatmul.f32.gmra.mxu0 %v1173
        %v1273 = vpop.f32.mrf.mxu0
        %v1274 = vadd.f32 0.0, %v1273
        %1275 = vmatmul.f32.gmra.mxu0 %v1175
        %v1276 = vpop.f32.mrf.mxu0
        %v1277 = vadd.f32 0.0, %v1276
        %1278 = vmatmul.f32.gmra.mxu0 %v1177
        %v1279 = vpop.f32.mrf.mxu0
        %v1280 = vadd.f32 0.0, %v1279
        %1281 = vmatmul.f32.gmra.mxu0 %v1179
        %v1282 = vpop.f32.mrf.mxu0
        %v1283 = vadd.f32 0.0, %v1282
        %1284 = vmatmul.f32.gmra.mxu0 %v1181
        %v1285 = vpop.f32.mrf.mxu0
        %v1286 = vadd.f32 0.0, %v1285
        %1287 = vmatmul.f32.gmra.mxu0 %v1183
        %v1288 = vpop.f32.mrf.mxu0
        %v1289 = vadd.f32 0.0, %v1288
        %1290 = vmatmul.f32.gmra.mxu0 %v1185
        %v1291 = vpop.f32.mrf.mxu0
        %v1292 = vadd.f32 0.0, %v1291
        %1293 = vmatmul.f32.gmra.mxu0 %v1187
        %v1294 = vpop.f32.mrf.mxu0
        %v1295 = vadd.f32 0.0, %v1294
        %1296 = vmatmul.f32.gmra.mxu0 %v1189
        %v1297 = vpop.f32.mrf.mxu0
        %v1298 = vadd.f32 0.0, %v1297
        %1299 = vmatmul.f32.gmra.mxu0 %v1191
        %v1300 = vpop.f32.mrf.mxu0
        %v1301 = vadd.f32 0.0, %v1300
        %1302 = vmatmul.f32.gmra.mxu0 %v1193
        %v1303 = vpop.f32.mrf.mxu0
        %v1304 = vadd.f32 0.0, %v1303
        %1305 = vmatmul.f32.gmra.mxu0 %v1195
        %v1306 = vpop.f32.mrf.mxu0
        %v1307 = vadd.f32 0.0, %v1306
        %1308 = vmatmul.f32.gmra.mxu0 %v1197
        %v1309 = vpop.f32.mrf.mxu0
        %v1310 = vadd.f32 0.0, %v1309
        %1311 = vmatmul.f32.gmra.mxu0 %v1199
        %v1312 = vpop.f32.mrf.mxu0
        %v1313 = vadd.f32 0.0, %v1312
        %1314 = vmatmul.f32.gmra.mxu0 %v1201
        %v1315 = vpop.f32.mrf.mxu0
        %v1316 = vadd.f32 0.0, %v1315
        %1317 = vmatmul.f32.gmra.mxu0 %v1203
        %v1318 = vpop.f32.mrf.mxu0
        %v1319 = vadd.f32 0.0, %v1318
        %1320 = vmatmul.f32.gmra.mxu0 %v1205
        %v1321 = vpop.f32.mrf.mxu0
        %v1322 = vadd.f32 0.0, %v1321
        %1323 = vdwg.mxu0
        %v1324 = vsel %vm1142, %v957, 0
        %v1326 = vsel %vm1142, %v958, 0
        %v1328 = vsel %vm1142, %v960, 0
        %v1330 = vsel %vm1142, %v961, 0
        %v1332 = vsel %vm1142, %v963, 0
        %v1334 = vsel %vm1142, %v964, 0
        %v1336 = vsel %vm1142, %v966, 0
        %v1338 = vsel %vm1142, %v967, 0
        %v1340 = vsel %vm1142, %v969, 0
        %v1342 = vsel %vm1142, %v970, 0
        %v1344 = vsel %vm1142, %v972, 0
        %v1346 = vsel %vm1142, %v973, 0
        %v1348 = vsel %vm1142, %v975, 0
        %v1350 = vsel %vm1142, %v976, 0
        %v1352 = vsel %vm1142, %v978, 0
        %v1354 = vsel %vm1142, %v979, 0
        %v1356 = vsel %vm1142, %v981, 0
        %v1358 = vsel %vm1142, %v982, 0
        %v1360 = vsel %vm1142, %v984, 0
        %v1362 = vsel %vm1142, %v985, 0
        %v1364 = vsel %vm1142, %v987, 0
        %v1366 = vsel %vm1142, %v988, 0
        %v1368 = vsel %vm1142, %v990, 0
        %v1370 = vsel %vm1142, %v991, 0
        %v1372 = vsel %vm1142, %v993, 0
        %v1374 = vsel %vm1142, %v994, 0
        %v1376 = vsel %vm1142, %v996, 0
        %v1378 = vsel %vm1142, %v997, 0
        %v1380 = vsel %vm1142, %v999, 0
        %v1382 = vsel %vm1142, %v1000, 0
        %v1384 = vsel %vm1142, %v1002, 0
        %v1386 = vsel %vm1142, %v1003, 0
        %v1389 = vsel %vm1207, %v1009, 0
        %1391 = vmatpush.msra.mxu0 0.0
        %1392 = vmatpush.msra.mxu0 0.0
        %1393 = vmatpush.msra.mxu0 0.0
        %1394 = vmatpush.msra.mxu0 0.0
        %1395 = vmatpush.msra.mxu0 0.0
        %1396 = vmatpush.msra.mxu0 0.0
        %1397 = vmatpush.msra.mxu0 0.0
        %1398 = vmatpush.msra.mxu0 0.0
        %1399 = vmatpush.msra.mxu0 0.0
        %1400 = vmatpush.msra.mxu0 0.0
        %1401 = vmatpush.msra.mxu0 0.0
        %1402 = vmatpush.msra.mxu0 0.0
        %1403 = vmatpush.msra.mxu0 0.0
        %1404 = vmatpush.msra.mxu0 0.0
        %1405 = vmatpush.msra.mxu0 %v1389
        %1406 = vmatpush.msra.mxu0 %v1008
        %1407 = vmatmul.f32.gmra.mxu0 %v1324
        %v1408 = vpop.f32.mrf.mxu0
        %v1409 = vadd.f32 %v1229, %v1408
        %1410 = vmatmul.f32.gmra.mxu0 %v1326
        %v1411 = vpop.f32.mrf.mxu0
        %v1412 = vadd.f32 %v1232, %v1411
        %1413 = vmatmul.f32.gmra.mxu0 %v1328
        %v1414 = vpop.f32.mrf.mxu0
        %v1415 = vadd.f32 %v1235, %v1414
        %1416 = vmatmul.f32.gmra.mxu0 %v1330
        %v1417 = vpop.f32.mrf.mxu0
        %v1418 = vadd.f32 %v1238, %v1417
        %1419 = vmatmul.f32.gmra.mxu0 %v1332
        %v1420 = vpop.f32.mrf.mxu0
        %v1421 = vadd.f32 %v1241, %v1420
        %1422 = vmatmul.f32.gmra.mxu0 %v1334
        %v1423 = vpop.f32.mrf.mxu0
        %v1424 = vadd.f32 %v1244, %v1423
        %1425 = vmatmul.f32.gmra.mxu0 %v1336
        %v1426 = vpop.f32.mrf.mxu0
        %v1427 = vadd.f32 %v1247, %v1426
        %1428 = vmatmul.f32.gmra.mxu0 %v1338
        %v1429 = vpop.f32.mrf.mxu0
        %v1430 = vadd.f32 %v1250, %v1429
        %1431 = vmatmul.f32.gmra.mxu0 %v1340
        %v1432 = vpop.f32.mrf.mxu0
        %v1433 = vadd.f32 %v1253, %v1432
        %1434 = vmatmul.f32.gmra.mxu0 %v1342
        %v1435 = vpop.f32.mrf.mxu0
        %v1436 = vadd.f32 %v1256, %v1435
        %1437 = vmatmul.f32.gmra.mxu0 %v1344
        %v1438 = vpop.f32.mrf.mxu0
        %v1439 = vadd.f32 %v1259, %v1438
        %1440 = vmatmul.f32.gmra.mxu0 %v1346
        %v1441 = vpop.f32.mrf.mxu0
        %v1442 = vadd.f32 %v1262, %v1441
        %1443 = vmatmul.f32.gmra.mxu0 %v1348
        %v1444 = vpop.f32.mrf.mxu0
        %v1445 = vadd.f32 %v1265, %v1444
        %1446 = vmatmul.f32.gmra.mxu0 %v1350
        %v1447 = vpop.f32.mrf.mxu0
        %v1448 = vadd.f32 %v1268, %v1447
        %1449 = vmatmul.f32.gmra.mxu0 %v1352
        %v1450 = vpop.f32.mrf.mxu0
        %v1451 = vadd.f32 %v1271, %v1450
        %1452 = vmatmul.f32.gmra.mxu0 %v1354
        %v1453 = vpop.f32.mrf.mxu0
        %v1454 = vadd.f32 %v1274, %v1453
        %1455 = vmatmul.f32.gmra.mxu0 %v1356
        %v1456 = vpop.f32.mrf.mxu0
        %v1457 = vadd.f32 %v1277, %v1456
        %1458 = vmatmul.f32.gmra.mxu0 %v1358
        %v1459 = vpop.f32.mrf.mxu0
        %v1460 = vadd.f32 %v1280, %v1459
        %1461 = vmatmul.f32.gmra.mxu0 %v1360
        %v1462 = vpop.f32.mrf.mxu0
        %v1463 = vadd.f32 %v1283, %v1462
        %1464 = vmatmul.f32.gmra.mxu0 %v1362
        %v1465 = vpop.f32.mrf.mxu0
        %v1466 = vadd.f32 %v1286, %v1465
        %1467 = vmatmul.f32.gmra.mxu0 %v1364
        %v1468 = vpop.f32.mrf.mxu0
        %v1469 = vadd.f32 %v1289, %v1468
        %1470 = vmatmul.f32.gmra.mxu0 %v1366
        %v1471 = vpop.f32.mrf.mxu0
        %v1472 = vadd.f32 %v1292, %v1471
        %1473 = vmatmul.f32.gmra.mxu0 %v1368
        %v1474 = vpop.f32.mrf.mxu0
        %v1475 = vadd.f32 %v1295, %v1474
        %1476 = vmatmul.f32.gmra.mxu0 %v1370
        %v1477 = vpop.f32.mrf.mxu0
        %v1478 = vadd.f32 %v1298, %v1477
        %1479 = vmatmul.f32.gmra.mxu0 %v1372
        %v1480 = vpop.f32.mrf.mxu0
        %v1481 = vadd.f32 %v1301, %v1480
        %1482 = vmatmul.f32.gmra.mxu0 %v1374
        %v1483 = vpop.f32.mrf.mxu0
        %v1484 = vadd.f32 %v1304, %v1483
        %1485 = vmatmul.f32.gmra.mxu0 %v1376
        %v1486 = vpop.f32.mrf.mxu0
        %v1487 = vadd.f32 %v1307, %v1486
        %1488 = vmatmul.f32.gmra.mxu0 %v1378
        %v1489 = vpop.f32.mrf.mxu0
        %v1490 = vadd.f32 %v1310, %v1489
        %1491 = vmatmul.f32.gmra.mxu0 %v1380
        %v1492 = vpop.f32.mrf.mxu0
        %v1493 = vadd.f32 %v1313, %v1492
        %1494 = vmatmul.f32.gmra.mxu0 %v1382
        %v1495 = vpop.f32.mrf.mxu0
        %v1496 = vadd.f32 %v1316, %v1495
        %1497 = vmatmul.f32.gmra.mxu0 %v1384
        %v1498 = vpop.f32.mrf.mxu0
        %v1499 = vadd.f32 %v1319, %v1498
        %1500 = vmatmul.f32.gmra.mxu0 %v1386
        %v1501 = vpop.f32.mrf.mxu0
        %v1502 = vadd.f32 %v1322, %v1501
        %1503 = vdwg.mxu0
        %s1504 = scalar_lea.vmem %s3, 32
        %v1505 = vld [vmem:[%s1504] sm:$0xff]
        %v1506 = vld [vmem:[%s1504 + $0x8] sm:$0xf]
        %v1508 = vsel %vm1142, %v1005, 0
        %v1511 = vsel %vm1142, %v1006, 0
        %v1514 = vsel %vm1207, %v1506, 0
        %1516 = vmatpush.msra.mxu0 0.0
        %1517 = vmatpush.msra.mxu0 0.0
        %1518 = vmatpush.msra.mxu0 0.0
        %1519 = vmatpush.msra.mxu0 0.0
        %1520 = vmatpush.msra.mxu0 0.0
        %1521 = vmatpush.msra.mxu0 0.0
        %1522 = vmatpush.msra.mxu0 0.0
        %1523 = vmatpush.msra.mxu0 0.0
        %1524 = vmatpush.msra.mxu0 0.0
        %1525 = vmatpush.msra.mxu0 0.0
        %1526 = vmatpush.msra.mxu0 0.0
        %1527 = vmatpush.msra.mxu0 0.0
        %1528 = vmatpush.msra.mxu0 0.0
        %1529 = vmatpush.msra.mxu0 0.0
        %1530 = vmatpush.msra.mxu0 %v1514
        %1531 = vmatpush.msra.mxu0 %v1505
        %1532 = vmatmul.f32.gmra.mxu0 %v1328
        %v1533 = vpop.f32.mrf.mxu0
        %v1534 = vadd.f32 0.0, %v1533
        %1535 = vmatmul.f32.gmra.mxu0 %v1330
        %v1536 = vpop.f32.mrf.mxu0
        %v1537 = vadd.f32 0.0, %v1536
        %1538 = vmatmul.f32.gmra.mxu0 %v1332
        %v1539 = vpop.f32.mrf.mxu0
        %v1540 = vadd.f32 0.0, %v1539
        %1541 = vmatmul.f32.gmra.mxu0 %v1334
        %v1542 = vpop.f32.mrf.mxu0
        %v1543 = vadd.f32 0.0, %v1542
        %1544 = vmatmul.f32.gmra.mxu0 %v1336
        %v1545 = vpop.f32.mrf.mxu0
        %v1546 = vadd.f32 0.0, %v1545
        %1547 = vmatmul.f32.gmra.mxu0 %v1338
        %v1548 = vpop.f32.mrf.mxu0
        %v1549 = vadd.f32 0.0, %v1548
        %1550 = vmatmul.f32.gmra.mxu0 %v1340
        %v1551 = vpop.f32.mrf.mxu0
        %v1552 = vadd.f32 0.0, %v1551
        %1553 = vmatmul.f32.gmra.mxu0 %v1342
        %v1554 = vpop.f32.mrf.mxu0
        %v1555 = vadd.f32 0.0, %v1554
        %1556 = vmatmul.f32.gmra.mxu0 %v1344
        %v1557 = vpop.f32.mrf.mxu0
        %v1558 = vadd.f32 0.0, %v1557
        %1559 = vmatmul.f32.gmra.mxu0 %v1346
        %v1560 = vpop.f32.mrf.mxu0
        %v1561 = vadd.f32 0.0, %v1560
        %1562 = vmatmul.f32.gmra.mxu0 %v1348
        %v1563 = vpop.f32.mrf.mxu0
        %v1564 = vadd.f32 0.0, %v1563
        %1565 = vmatmul.f32.gmra.mxu0 %v1350
        %v1566 = vpop.f32.mrf.mxu0
        %v1567 = vadd.f32 0.0, %v1566
        %1568 = vmatmul.f32.gmra.mxu0 %v1352
        %v1569 = vpop.f32.mrf.mxu0
        %v1570 = vadd.f32 0.0, %v1569
        %1571 = vmatmul.f32.gmra.mxu0 %v1354
        %v1572 = vpop.f32.mrf.mxu0
        %v1573 = vadd.f32 0.0, %v1572
        %1574 = vmatmul.f32.gmra.mxu0 %v1356
        %v1575 = vpop.f32.mrf.mxu0
        %v1576 = vadd.f32 0.0, %v1575
        %1577 = vmatmul.f32.gmra.mxu0 %v1358
        %v1578 = vpop.f32.mrf.mxu0
        %v1579 = vadd.f32 0.0, %v1578
        %1580 = vmatmul.f32.gmra.mxu0 %v1360
        %v1581 = vpop.f32.mrf.mxu0
        %v1582 = vadd.f32 0.0, %v1581
        %1583 = vmatmul.f32.gmra.mxu0 %v1362
        %v1584 = vpop.f32.mrf.mxu0
        %v1585 = vadd.f32 0.0, %v1584
        %1586 = vmatmul.f32.gmra.mxu0 %v1364
        %v1587 = vpop.f32.mrf.mxu0
        %v1588 = vadd.f32 0.0, %v1587
        %1589 = vmatmul.f32.gmra.mxu0 %v1366
        %v1590 = vpop.f32.mrf.mxu0
        %v1591 = vadd.f32 0.0, %v1590
        %1592 = vmatmul.f32.gmra.mxu0 %v1368
        %v1593 = vpop.f32.mrf.mxu0
        %v1594 = vadd.f32 0.0, %v1593
        %1595 = vmatmul.f32.gmra.mxu0 %v1370
        %v1596 = vpop.f32.mrf.mxu0
        %v1597 = vadd.f32 0.0, %v1596
        %1598 = vmatmul.f32.gmra.mxu0 %v1372
        %v1599 = vpop.f32.mrf.mxu0
        %v1600 = vadd.f32 0.0, %v1599
        %1601 = vmatmul.f32.gmra.mxu0 %v1374
        %v1602 = vpop.f32.mrf.mxu0
        %v1603 = vadd.f32 0.0, %v1602
        %1604 = vmatmul.f32.gmra.mxu0 %v1376
        %v1605 = vpop.f32.mrf.mxu0
        %v1606 = vadd.f32 0.0, %v1605
        %1607 = vmatmul.f32.gmra.mxu0 %v1378
        %v1608 = vpop.f32.mrf.mxu0
        %v1609 = vadd.f32 0.0, %v1608
        %1610 = vmatmul.f32.gmra.mxu0 %v1380
        %v1611 = vpop.f32.mrf.mxu0
        %v1612 = vadd.f32 0.0, %v1611
        %1613 = vmatmul.f32.gmra.mxu0 %v1382
        %v1614 = vpop.f32.mrf.mxu0
        %v1615 = vadd.f32 0.0, %v1614
        %1616 = vmatmul.f32.gmra.mxu0 %v1384
        %v1617 = vpop.f32.mrf.mxu0
        %v1618 = vadd.f32 0.0, %v1617
        %1619 = vmatmul.f32.gmra.mxu0 %v1386
        %v1620 = vpop.f32.mrf.mxu0
        %v1621 = vadd.f32 0.0, %v1620
        %1622 = vmatmul.f32.gmra.mxu0 %v1508
        %v1623 = vpop.f32.mrf.mxu0
        %v1624 = vadd.f32 0.0, %v1623
        %1625 = vmatmul.f32.gmra.mxu0 %v1511
        %v1626 = vpop.f32.mrf.mxu0
        %v1627 = vadd.f32 0.0, %v1626
        %1628 = vdwg.mxu0
        %v1629 = vadd.f32 %v1409, %v1534
        %v1630 = vadd.f32 %v1412, %v1537
        %v1631 = vadd.f32 %v1415, %v1540
        %v1632 = vadd.f32 %v1418, %v1543
        %v1633 = vadd.f32 %v1421, %v1546
        %v1634 = vadd.f32 %v1424, %v1549
        %v1635 = vadd.f32 %v1427, %v1552
        %v1636 = vadd.f32 %v1430, %v1555
        %v1637 = vadd.f32 %v1433, %v1558
        %v1638 = vadd.f32 %v1436, %v1561
        %v1639 = vadd.f32 %v1439, %v1564
        %v1640 = vadd.f32 %v1442, %v1567
        %v1641 = vadd.f32 %v1445, %v1570
        %v1642 = vadd.f32 %v1448, %v1573
        %v1643 = vadd.f32 %v1451, %v1576
        %v1644 = vadd.f32 %v1454, %v1579
        %v1645 = vadd.f32 %v1457, %v1582
        %v1646 = vadd.f32 %v1460, %v1585
        %v1647 = vadd.f32 %v1463, %v1588
        %v1648 = vadd.f32 %v1466, %v1591
        %v1649 = vadd.f32 %v1469, %v1594
        %v1650 = vadd.f32 %v1472, %v1597
        %v1651 = vadd.f32 %v1475, %v1600
        %v1652 = vadd.f32 %v1478, %v1603
        %v1653 = vadd.f32 %v1481, %v1606
        %v1654 = vadd.f32 %v1484, %v1609
        %v1655 = vadd.f32 %v1487, %v1612
        %v1656 = vadd.f32 %v1490, %v1615
        %v1657 = vadd.f32 %v1493, %v1618
        %v1658 = vadd.f32 %v1496, %v1621
        %v1659 = vadd.f32 %v1499, %v1624
        %v1660 = vadd.f32 %v1502, %v1627
        %v1662 = vrot.slane %v1005, 1
        %v1663 = vrot.slane %v1006, 1
        %v1664 = vsel %vm1058, %v1662, %v1663
        %v1665 = vrot.slane %v1007, 1
        %v1666 = vsel %vm1058, %v1663, %v1665
        %s1667 = scalar_lea.vmem %s3, 48
        %v1668 = vld [vmem:[%s1667] sm:$0xff]
        %v1669 = vld [vmem:[%s1667 + $0x8] sm:$0xf]
        %v1670 = vsel %vm1142, %v1664, 0
        %v1672 = vsel %vm1142, %v1666, 0
        %v1675 = vsel %vm1207, %v1669, 0
        %1677 = vmatpush.msra.mxu0 0.0
        %1678 = vmatpush.msra.mxu0 0.0
        %1679 = vmatpush.msra.mxu0 0.0
        %1680 = vmatpush.msra.mxu0 0.0
        %1681 = vmatpush.msra.mxu0 0.0
        %1682 = vmatpush.msra.mxu0 0.0
        %1683 = vmatpush.msra.mxu0 0.0
        %1684 = vmatpush.msra.mxu0 0.0
        %1685 = vmatpush.msra.mxu0 0.0
        %1686 = vmatpush.msra.mxu0 0.0
        %1687 = vmatpush.msra.mxu0 0.0
        %1688 = vmatpush.msra.mxu0 0.0
        %1689 = vmatpush.msra.mxu0 0.0
        %1690 = vmatpush.msra.mxu0 0.0
        %1691 = vmatpush.msra.mxu0 %v1675
        %1692 = vmatpush.msra.mxu0 %v1668
        %1693 = vmatmul.f32.gmra.mxu0 %v1147
        %v1694 = vpop.f32.mrf.mxu0
        %v1695 = vadd.f32 0.0, %v1694
        %1696 = vmatmul.f32.gmra.mxu0 %v1149
        %v1697 = vpop.f32.mrf.mxu0
        %v1698 = vadd.f32 0.0, %v1697
        %1699 = vmatmul.f32.gmra.mxu0 %v1151
        %v1700 = vpop.f32.mrf.mxu0
        %v1701 = vadd.f32 0.0, %v1700
        %1702 = vmatmul.f32.gmra.mxu0 %v1153
        %v1703 = vpop.f32.mrf.mxu0
        %v1704 = vadd.f32 0.0, %v1703
        %1705 = vmatmul.f32.gmra.mxu0 %v1155
        %v1706 = vpop.f32.mrf.mxu0
        %v1707 = vadd.f32 0.0, %v1706
        %1708 = vmatmul.f32.gmra.mxu0 %v1157
        %v1709 = vpop.f32.mrf.mxu0
        %v1710 = vadd.f32 0.0, %v1709
        %1711 = vmatmul.f32.gmra.mxu0 %v1159
        %v1712 = vpop.f32.mrf.mxu0
        %v1713 = vadd.f32 0.0, %v1712
        %1714 = vmatmul.f32.gmra.mxu0 %v1161
        %v1715 = vpop.f32.mrf.mxu0
        %v1716 = vadd.f32 0.0, %v1715
        %1717 = vmatmul.f32.gmra.mxu0 %v1163
        %v1718 = vpop.f32.mrf.mxu0
        %v1719 = vadd.f32 0.0, %v1718
        %1720 = vmatmul.f32.gmra.mxu0 %v1165
        %v1721 = vpop.f32.mrf.mxu0
        %v1722 = vadd.f32 0.0, %v1721
        %1723 = vmatmul.f32.gmra.mxu0 %v1167
        %v1724 = vpop.f32.mrf.mxu0
        %v1725 = vadd.f32 0.0, %v1724
        %1726 = vmatmul.f32.gmra.mxu0 %v1169
        %v1727 = vpop.f32.mrf.mxu0
        %v1728 = vadd.f32 0.0, %v1727
        %1729 = vmatmul.f32.gmra.mxu0 %v1171
        %v1730 = vpop.f32.mrf.mxu0
        %v1731 = vadd.f32 0.0, %v1730
        %1732 = vmatmul.f32.gmra.mxu0 %v1173
        %v1733 = vpop.f32.mrf.mxu0
        %v1734 = vadd.f32 0.0, %v1733
        %1735 = vmatmul.f32.gmra.mxu0 %v1175
        %v1736 = vpop.f32.mrf.mxu0
        %v1737 = vadd.f32 0.0, %v1736
        %1738 = vmatmul.f32.gmra.mxu0 %v1177
        %v1739 = vpop.f32.mrf.mxu0
        %v1740 = vadd.f32 0.0, %v1739
        %1741 = vmatmul.f32.gmra.mxu0 %v1179
        %v1742 = vpop.f32.mrf.mxu0
        %v1743 = vadd.f32 0.0, %v1742
        %1744 = vmatmul.f32.gmra.mxu0 %v1181
        %v1745 = vpop.f32.mrf.mxu0
        %v1746 = vadd.f32 0.0, %v1745
        %1747 = vmatmul.f32.gmra.mxu0 %v1183
        %v1748 = vpop.f32.mrf.mxu0
        %v1749 = vadd.f32 0.0, %v1748
        %1750 = vmatmul.f32.gmra.mxu0 %v1185
        %v1751 = vpop.f32.mrf.mxu0
        %v1752 = vadd.f32 0.0, %v1751
        %1753 = vmatmul.f32.gmra.mxu0 %v1187
        %v1754 = vpop.f32.mrf.mxu0
        %v1755 = vadd.f32 0.0, %v1754
        %1756 = vmatmul.f32.gmra.mxu0 %v1189
        %v1757 = vpop.f32.mrf.mxu0
        %v1758 = vadd.f32 0.0, %v1757
        %1759 = vmatmul.f32.gmra.mxu0 %v1191
        %v1760 = vpop.f32.mrf.mxu0
        %v1761 = vadd.f32 0.0, %v1760
        %1762 = vmatmul.f32.gmra.mxu0 %v1193
        %v1763 = vpop.f32.mrf.mxu0
        %v1764 = vadd.f32 0.0, %v1763
        %1765 = vmatmul.f32.gmra.mxu0 %v1195
        %v1766 = vpop.f32.mrf.mxu0
        %v1767 = vadd.f32 0.0, %v1766
        %1768 = vmatmul.f32.gmra.mxu0 %v1197
        %v1769 = vpop.f32.mrf.mxu0
        %v1770 = vadd.f32 0.0, %v1769
        %1771 = vmatmul.f32.gmra.mxu0 %v1199
        %v1772 = vpop.f32.mrf.mxu0
        %v1773 = vadd.f32 0.0, %v1772
        %1774 = vmatmul.f32.gmra.mxu0 %v1201
        %v1775 = vpop.f32.mrf.mxu0
        %v1776 = vadd.f32 0.0, %v1775
        %1777 = vmatmul.f32.gmra.mxu0 %v1203
        %v1778 = vpop.f32.mrf.mxu0
        %v1779 = vadd.f32 0.0, %v1778
        %1780 = vmatmul.f32.gmra.mxu0 %v1205
        %v1781 = vpop.f32.mrf.mxu0
        %v1782 = vadd.f32 0.0, %v1781
        %1783 = vmatmul.f32.gmra.mxu0 %v1670
        %v1784 = vpop.f32.mrf.mxu0
        %v1785 = vadd.f32 0.0, %v1784
        %1786 = vmatmul.f32.gmra.mxu0 %v1672
        %v1787 = vpop.f32.mrf.mxu0
        %v1788 = vadd.f32 0.0, %v1787
        %1789 = vdwg.mxu0
        %v1790 = vadd.f32 %v1629, %v1695
        %v1791 = vadd.f32 %v1630, %v1698
        %v1792 = vadd.f32 %v1631, %v1701
        %v1793 = vadd.f32 %v1632, %v1704
        %v1794 = vadd.f32 %v1633, %v1707
        %v1795 = vadd.f32 %v1634, %v1710
        %v1796 = vadd.f32 %v1635, %v1713
        %v1797 = vadd.f32 %v1636, %v1716
        %v1798 = vadd.f32 %v1637, %v1719
        %v1799 = vadd.f32 %v1638, %v1722
        %v1800 = vadd.f32 %v1639, %v1725
        %v1801 = vadd.f32 %v1640, %v1728
        %v1802 = vadd.f32 %v1641, %v1731
        %v1803 = vadd.f32 %v1642, %v1734
        %v1804 = vadd.f32 %v1643, %v1737
        %v1805 = vadd.f32 %v1644, %v1740
        %v1806 = vadd.f32 %v1645, %v1743
        %v1807 = vadd.f32 %v1646, %v1746
        %v1808 = vadd.f32 %v1647, %v1749
        %v1809 = vadd.f32 %v1648, %v1752
        %v1810 = vadd.f32 %v1649, %v1755
        %v1811 = vadd.f32 %v1650, %v1758
        %v1812 = vadd.f32 %v1651, %v1761
        %v1813 = vadd.f32 %v1652, %v1764
        %v1814 = vadd.f32 %v1653, %v1767
        %v1815 = vadd.f32 %v1654, %v1770
        %v1816 = vadd.f32 %v1655, %v1773
        %v1817 = vadd.f32 %v1656, %v1776
        %v1818 = vadd.f32 %v1657, %v1779
        %v1819 = vadd.f32 %v1658, %v1782
        %v1820 = vadd.f32 %v1659, %v1785
        %v1821 = vadd.f32 %v1660, %v1788
        %v1822 = vld [vmem:[%s5] sm:$0x1]
        %v1824 = vperm.slane %v1822, 0
        %v1826 = vadd.f32 %v1790, %v1824
        %v1827 = vadd.f32 %v1791, %v1824
        %v1828 = vadd.f32 %v1792, %v1824
        %v1829 = vadd.f32 %v1793, %v1824
        %v1830 = vadd.f32 %v1794, %v1824
        %v1831 = vadd.f32 %v1795, %v1824
        %v1832 = vadd.f32 %v1796, %v1824
        %v1833 = vadd.f32 %v1797, %v1824
        %v1834 = vadd.f32 %v1798, %v1824
        %v1835 = vadd.f32 %v1799, %v1824
        %v1836 = vadd.f32 %v1800, %v1824
        %v1837 = vadd.f32 %v1801, %v1824
        %v1838 = vadd.f32 %v1802, %v1824
        %v1839 = vadd.f32 %v1803, %v1824
        %v1840 = vadd.f32 %v1804, %v1824
        %v1841 = vadd.f32 %v1805, %v1824
        %v1842 = vadd.f32 %v1806, %v1824
        %v1843 = vadd.f32 %v1807, %v1824
        %v1844 = vadd.f32 %v1808, %v1824
        %v1845 = vadd.f32 %v1809, %v1824
        %v1846 = vadd.f32 %v1810, %v1824
        %v1847 = vadd.f32 %v1811, %v1824
        %v1848 = vadd.f32 %v1812, %v1824
        %v1849 = vadd.f32 %v1813, %v1824
        %v1850 = vadd.f32 %v1814, %v1824
        %v1851 = vadd.f32 %v1815, %v1824
        %v1852 = vadd.f32 %v1816, %v1824
        %v1853 = vadd.f32 %v1817, %v1824
        %v1854 = vadd.f32 %v1818, %v1824
        %v1855 = vadd.f32 %v1819, %v1824
        %v1856 = vadd.f32 %v1820, %v1824
        %v1857 = vadd.f32 %v1821, %v1824
        %v1858 = vmax.f32 %v1826, 0.0
        %v1859 = vmax.f32 %v1827, 0.0
        %v1860 = vmax.f32 %v1828, 0.0
        %v1861 = vmax.f32 %v1829, 0.0
        %v1862 = vmax.f32 %v1830, 0.0
        %v1863 = vmax.f32 %v1831, 0.0
        %v1864 = vmax.f32 %v1832, 0.0
        %v1865 = vmax.f32 %v1833, 0.0
        %v1866 = vmax.f32 %v1834, 0.0
        %v1867 = vmax.f32 %v1835, 0.0
        %v1868 = vmax.f32 %v1836, 0.0
        %v1869 = vmax.f32 %v1837, 0.0
        %v1870 = vmax.f32 %v1838, 0.0
        %v1871 = vmax.f32 %v1839, 0.0
        %v1872 = vmax.f32 %v1840, 0.0
        %v1873 = vmax.f32 %v1841, 0.0
        %v1874 = vmax.f32 %v1842, 0.0
        %v1875 = vmax.f32 %v1843, 0.0
        %v1876 = vmax.f32 %v1844, 0.0
        %v1877 = vmax.f32 %v1845, 0.0
        %v1878 = vmax.f32 %v1846, 0.0
        %v1879 = vmax.f32 %v1847, 0.0
        %v1880 = vmax.f32 %v1848, 0.0
        %v1881 = vmax.f32 %v1849, 0.0
        %v1882 = vmax.f32 %v1850, 0.0
        %v1883 = vmax.f32 %v1851, 0.0
        %v1884 = vmax.f32 %v1852, 0.0
        %v1885 = vmax.f32 %v1853, 0.0
        %v1886 = vmax.f32 %v1854, 0.0
        %v1887 = vmax.f32 %v1855, 0.0
        %v1888 = vmax.f32 %v1856, 0.0
        %v1889 = vmax.f32 %v1857, 0.0
        %v1890 = vmin.f32 %v1858, 6.0
        %v1891 = vmin.f32 %v1859, 6.0
        %v1892 = vmin.f32 %v1860, 6.0
        %v1893 = vmin.f32 %v1861, 6.0
        %v1894 = vmin.f32 %v1862, 6.0
        %v1895 = vmin.f32 %v1863, 6.0
        %v1896 = vmin.f32 %v1864, 6.0
        %v1897 = vmin.f32 %v1865, 6.0
        %v1898 = vmin.f32 %v1866, 6.0
        %v1899 = vmin.f32 %v1867, 6.0
        %v1900 = vmin.f32 %v1868, 6.0
        %v1901 = vmin.f32 %v1869, 6.0
        %v1902 = vmin.f32 %v1870, 6.0
        %v1903 = vmin.f32 %v1871, 6.0
        %v1904 = vmin.f32 %v1872, 6.0
        %v1905 = vmin.f32 %v1873, 6.0
        %v1906 = vmin.f32 %v1874, 6.0
        %v1907 = vmin.f32 %v1875, 6.0
        %v1908 = vmin.f32 %v1876, 6.0
        %v1909 = vmin.f32 %v1877, 6.0
        %v1910 = vmin.f32 %v1878, 6.0
        %v1911 = vmin.f32 %v1879, 6.0
        %v1912 = vmin.f32 %v1880, 6.0
        %v1913 = vmin.f32 %v1881, 6.0
        %v1914 = vmin.f32 %v1882, 6.0
        %v1915 = vmin.f32 %v1883, 6.0
        %v1916 = vmin.f32 %v1884, 6.0
        %v1917 = vmin.f32 %v1885, 6.0
        %v1918 = vmin.f32 %v1886, 6.0
        %v1919 = vmin.f32 %v1887, 6.0
        %v1920 = vmin.f32 %v1888, 6.0
        %v1921 = vmin.f32 %v1889, 6.0
        %vm1922 = vcmask 261120
        %1923 = vst.msk [vmem:[#allocation2] sm:$0xff] %vm1922, 0.0
        %1924 = vst.msk [vmem:[#allocation2 + $0x8] sm:$0xff] %vm1922, 0.0
        %vm1925 = vcmask 254976
        %1926 = vst.msk [vmem:[#allocation2 + $0x10] sm:$0x3] %vm1925, 0.0
        %1927 = vst.msk [vmem:[#allocation2 + $0x18] sm:$0xff] %vm1922, 0.0
        %1928 = vst.msk [vmem:[#allocation2 + $0x20] sm:$0xff] %vm1922, 0.0
        %1929 = vst.msk [vmem:[#allocation2 + $0x28] sm:$0x3] %vm1925, 0.0
        %1930 = vst.msk [vmem:[#allocation2 + $0x30] sm:$0xff] %vm1922, 0.0
        %1931 = vst.msk [vmem:[#allocation2 + $0x38] sm:$0xff] %vm1922, 0.0
        %1932 = vst.msk [vmem:[#allocation2 + $0x40] sm:$0x3] %vm1925, 0.0
        %1933 = vst.msk [vmem:[#allocation2 + $0x48] sm:$0xff] %vm1922, 0.0
        %1934 = vst.msk [vmem:[#allocation2 + $0x50] sm:$0xff] %vm1922, 0.0
        %1935 = vst.msk [vmem:[#allocation2 + $0x58] sm:$0x3] %vm1925, 0.0
        %1936 = vst.msk [vmem:[#allocation2 + $0x60] sm:$0xff] %vm1922, 0.0
        %1937 = vst.msk [vmem:[#allocation2 + $0x68] sm:$0xff] %vm1922, 0.0
        %1938 = vst.msk [vmem:[#allocation2 + $0x70] sm:$0x3] %vm1925, 0.0
        %1939 = vst.msk [vmem:[#allocation2 + $0x78] sm:$0xff] %vm1922, 0.0
        %1940 = vst.msk [vmem:[#allocation2 + $0x80] sm:$0xff] %vm1922, 0.0
        %1941 = vst.msk [vmem:[#allocation2 + $0x88] sm:$0x3] %vm1925, 0.0
        %1942 = vst.msk [vmem:[#allocation2 + $0x90] sm:$0xff] %vm1922, 0.0
        %1943 = vst.msk [vmem:[#allocation2 + $0x98] sm:$0xff] %vm1922, 0.0
        %1944 = vst.msk [vmem:[#allocation2 + $0xa0] sm:$0x3] %vm1925, 0.0
        %1945 = vst.msk [vmem:[#allocation2 + $0xa8] sm:$0xff] %vm1922, 0.0
        %1946 = vst.msk [vmem:[#allocation2 + $0xb0] sm:$0xff] %vm1922, 0.0
        %1947 = vst.msk [vmem:[#allocation2 + $0xb8] sm:$0x3] %vm1925, 0.0
        %1948 = vst.msk [vmem:[#allocation2 + $0xc0] sm:$0xff] %vm1922, 0.0
        %1949 = vst.msk [vmem:[#allocation2 + $0xc8] sm:$0xff] %vm1922, 0.0
        %1950 = vst.msk [vmem:[#allocation2 + $0xd0] sm:$0x3] %vm1925, 0.0
        %1951 = vst.msk [vmem:[#allocation2 + $0xd8] sm:$0xff] %vm1922, 0.0
        %1952 = vst.msk [vmem:[#allocation2 + $0xe0] sm:$0xff] %vm1922, 0.0
        %1953 = vst.msk [vmem:[#allocation2 + $0xe8] sm:$0x3] %vm1925, 0.0
        %1954 = vst.msk [vmem:[#allocation2 + $0xf0] sm:$0xff] %vm1922, 0.0
        %1955 = vst.msk [vmem:[#allocation2 + $0xf8] sm:$0xff] %vm1922, 0.0
        %1956 = vst.msk [vmem:[#allocation2 + $0x100] sm:$0x3] %vm1925, 0.0
        %1957 = vst.msk [vmem:[#allocation2 + $0x108] sm:$0xff] %vm1922, 0.0
        %1958 = vst.msk [vmem:[#allocation2 + $0x110] sm:$0xff] %vm1922, 0.0
        %1959 = vst.msk [vmem:[#allocation2 + $0x118] sm:$0x3] %vm1925, 0.0
        %1960 = vst.msk [vmem:[#allocation2 + $0x120] sm:$0xff] %vm1922, 0.0
        %1961 = vst.msk [vmem:[#allocation2 + $0x128] sm:$0xff] %vm1922, 0.0
        %1962 = vst.msk [vmem:[#allocation2 + $0x130] sm:$0x3] %vm1925, 0.0
        %1963 = vst.msk [vmem:[#allocation2 + $0x138] sm:$0xff] %vm1922, 0.0
        %1964 = vst.msk [vmem:[#allocation2 + $0x140] sm:$0xff] %vm1922, 0.0
        %1965 = vst.msk [vmem:[#allocation2 + $0x148] sm:$0x3] %vm1925, 0.0
        %1966 = vst.msk [vmem:[#allocation2 + $0x150] sm:$0xff] %vm1922, 0.0
        %1967 = vst.msk [vmem:[#allocation2 + $0x158] sm:$0xff] %vm1922, 0.0
        %1968 = vst.msk [vmem:[#allocation2 + $0x160] sm:$0x3] %vm1925, 0.0
        %1969 = vst.msk [vmem:[#allocation2 + $0x168] sm:$0xff] %vm1922, 0.0
        %1970 = vst.msk [vmem:[#allocation2 + $0x170] sm:$0xff] %vm1922, 0.0
        %1971 = vst.msk [vmem:[#allocation2 + $0x178] sm:$0x3] %vm1925, 0.0
        %1972 = vst.msk [vmem:[#allocation2 + $0x180] sm:$0xff] %vm1922, 0.0
        %1973 = vst.msk [vmem:[#allocation2 + $0x188] sm:$0xff] %vm1922, 0.0
        %1974 = vst.msk [vmem:[#allocation2 + $0x190] sm:$0x3] %vm1925, 0.0
        %1975 = vst.msk [vmem:[#allocation2 + $0x198] sm:$0xff] %vm1922, 0.0
        %1976 = vst.msk [vmem:[#allocation2 + $0x1a0] sm:$0xff] %vm1922, 0.0
        %1977 = vst.msk [vmem:[#allocation2 + $0x1a8] sm:$0x3] %vm1925, 0.0
        %s1978 = scalar_lea.vmem [#allocation2], 24
        %1979 = vst.msk [vmem:[%s1978 + $0x1] sm:$0xff] %vm1922, %v1890
        %1980 = vst.msk [vmem:[%s1978 + $0x9] sm:$0xff] %vm1922, %v1891
        %1981 = vst.msk [vmem:[%s1978 + $0x19] sm:$0xff] %vm1922, %v1892
        %1982 = vst.msk [vmem:[%s1978 + $0x21] sm:$0xff] %vm1922, %v1893
        %1983 = vst.msk [vmem:[%s1978 + $0x31] sm:$0xff] %vm1922, %v1894
        %1984 = vst.msk [vmem:[%s1978 + $0x39] sm:$0xff] %vm1922, %v1895
        %1985 = vst.msk [vmem:[%s1978 + $0x49] sm:$0xff] %vm1922, %v1896
        %1986 = vst.msk [vmem:[%s1978 + $0x51] sm:$0xff] %vm1922, %v1897
        %1987 = vst.msk [vmem:[%s1978 + $0x61] sm:$0xff] %vm1922, %v1898
        %1988 = vst.msk [vmem:[%s1978 + $0x69] sm:$0xff] %vm1922, %v1899
        %1989 = vst.msk [vmem:[%s1978 + $0x79] sm:$0xff] %vm1922, %v1900
        %1990 = vst.msk [vmem:[%s1978 + $0x81] sm:$0xff] %vm1922, %v1901
        %1991 = vst.msk [vmem:[%s1978 + $0x91] sm:$0xff] %vm1922, %v1902
        %1992 = vst.msk [vmem:[%s1978 + $0x99] sm:$0xff] %vm1922, %v1903
        %1993 = vst.msk [vmem:[%s1978 + $0xa9] sm:$0xff] %vm1922, %v1904
        %1994 = vst.msk [vmem:[%s1978 + $0xb1] sm:$0xff] %vm1922, %v1905
        %1995 = vst.msk [vmem:[%s1978 + $0xc1] sm:$0xff] %vm1922, %v1906
        %1996 = vst.msk [vmem:[%s1978 + $0xc9] sm:$0xff] %vm1922, %v1907
        %1997 = vst.msk [vmem:[%s1978 + $0xd9] sm:$0xff] %vm1922, %v1908
        %1998 = vst.msk [vmem:[%s1978 + $0xe1] sm:$0xff] %vm1922, %v1909
        %1999 = vst.msk [vmem:[%s1978 + $0xf1] sm:$0xff] %vm1922, %v1910
        %2000 = vst.msk [vmem:[%s1978 + $0xf9] sm:$0xff] %vm1922, %v1911
        %2001 = vst.msk [vmem:[%s1978 + $0x109] sm:$0xff] %vm1922, %v1912
        %2002 = vst.msk [vmem:[%s1978 + $0x111] sm:$0xff] %vm1922, %v1913
        %2003 = vst.msk [vmem:[%s1978 + $0x121] sm:$0xff] %vm1922, %v1914
        %2004 = vst.msk [vmem:[%s1978 + $0x129] sm:$0xff] %vm1922, %v1915
        %2005 = vst.msk [vmem:[%s1978 + $0x139] sm:$0xff] %vm1922, %v1916
        %2006 = vst.msk [vmem:[%s1978 + $0x141] sm:$0xff] %vm1922, %v1917
        %2007 = vst.msk [vmem:[%s1978 + $0x151] sm:$0xff] %vm1922, %v1918
        %2008 = vst.msk [vmem:[%s1978 + $0x159] sm:$0xff] %vm1922, %v1919
        %2009 = vst.msk [vmem:[%s1978 + $0x169] sm:$0xff] %vm1922, %v1920
        %2010 = vst.msk [vmem:[%s1978 + $0x171] sm:$0xff] %vm1922, %v1921
        %v2011 = vld [vmem:[#allocation2] sm:$0xff]
        %v2012 = vld [vmem:[#allocation2 + $0x8] sm:$0xff]
        %v2013 = vld [vmem:[#allocation2 + $0x18] sm:$0xff]
        %v2014 = vld [vmem:[#allocation2 + $0x20] sm:$0xff]
        %v2015 = vld [vmem:[#allocation2 + $0x30] sm:$0xff]
        %v2016 = vld [vmem:[#allocation2 + $0x38] sm:$0xff]
        %v2017 = vld [vmem:[#allocation2 + $0x48] sm:$0xff]
        %v2018 = vld [vmem:[#allocation2 + $0x50] sm:$0xff]
        %v2019 = vld [vmem:[#allocation2 + $0x60] sm:$0xff]
        %v2020 = vld [vmem:[#allocation2 + $0x68] sm:$0xff]
        %v2021 = vld [vmem:[#allocation2 + $0x78] sm:$0xff]
        %v2022 = vld [vmem:[#allocation2 + $0x80] sm:$0xff]
        %v2023 = vld [vmem:[#allocation2 + $0x90] sm:$0xff]
        %v2024 = vld [vmem:[#allocation2 + $0x98] sm:$0xff]
        %v2025 = vld [vmem:[#allocation2 + $0xa8] sm:$0xff]
        %v2026 = vld [vmem:[#allocation2 + $0xb0] sm:$0xff]
        %v2027 = vld [vmem:[#allocation2 + $0xc0] sm:$0xff]
        %v2028 = vld [vmem:[#allocation2 + $0xc8] sm:$0xff]
        %v2029 = vld [vmem:[#allocation2 + $0xd8] sm:$0xff]
        %v2030 = vld [vmem:[#allocation2 + $0xe0] sm:$0xff]
        %v2031 = vld [vmem:[#allocation2 + $0xf0] sm:$0xff]
        %v2032 = vld [vmem:[#allocation2 + $0xf8] sm:$0xff]
        %v2033 = vld [vmem:[#allocation2 + $0x108] sm:$0xff]
        %v2034 = vld [vmem:[#allocation2 + $0x110] sm:$0xff]
        %v2035 = vld [vmem:[#allocation2 + $0x120] sm:$0xff]
        %v2036 = vld [vmem:[#allocation2 + $0x128] sm:$0xff]
        %v2037 = vld [vmem:[#allocation2 + $0x138] sm:$0xff]
        %v2038 = vld [vmem:[#allocation2 + $0x140] sm:$0xff]
        %v2039 = vld [vmem:[#allocation2 + $0x150] sm:$0xff]
        %v2040 = vld [vmem:[#allocation2 + $0x158] sm:$0xff]
        %v2041 = vld [vmem:[#allocation2 + $0x168] sm:$0xff]
        %v2042 = vld [vmem:[#allocation2 + $0x170] sm:$0xff]
        %v2043 = vld [vmem:[#allocation2 + $0x180] sm:$0xff]
        %v2044 = vld [vmem:[#allocation2 + $0x188] sm:$0xff]
        %v2045 = vld [vmem:[#allocation2 + $0x198] sm:$0xff]
        %v2046 = vld [vmem:[#allocation2 + $0x1a0] sm:$0xff]
        %v2047 = vld [vmem:[%s7] sm:$0x1]
        %v2049 = vperm.slane %v2047, 0
        %v2051 = vmul.f32 %v2011, %v2049
        %v2052 = vmul.f32 %v2012, %v2049
        %v2053 = vmul.f32 %v2013, %v2049
        %v2054 = vmul.f32 %v2014, %v2049
        %v2055 = vmul.f32 %v2015, %v2049
        %v2056 = vmul.f32 %v2016, %v2049
        %v2057 = vmul.f32 %v2017, %v2049
        %v2058 = vmul.f32 %v2018, %v2049
        %v2059 = vmul.f32 %v2019, %v2049
        %v2060 = vmul.f32 %v2020, %v2049
        %v2061 = vmul.f32 %v2021, %v2049
        %v2062 = vmul.f32 %v2022, %v2049
        %v2063 = vmul.f32 %v2023, %v2049
        %v2064 = vmul.f32 %v2024, %v2049
        %v2065 = vmul.f32 %v2025, %v2049
        %v2066 = vmul.f32 %v2026, %v2049
        %v2067 = vmul.f32 %v2027, %v2049
        %v2068 = vmul.f32 %v2028, %v2049
        %v2069 = vmul.f32 %v2029, %v2049
        %v2070 = vmul.f32 %v2030, %v2049
        %v2071 = vmul.f32 %v2031, %v2049
        %v2072 = vmul.f32 %v2032, %v2049
        %v2073 = vmul.f32 %v2033, %v2049
        %v2074 = vmul.f32 %v2034, %v2049
        %v2075 = vmul.f32 %v2035, %v2049
        %v2076 = vmul.f32 %v2036, %v2049
        %v2077 = vmul.f32 %v2037, %v2049
        %v2078 = vmul.f32 %v2038, %v2049
        %v2079 = vmul.f32 %v2039, %v2049
        %v2080 = vmul.f32 %v2040, %v2049
        %v2081 = vmul.f32 %v2041, %v2049
        %v2082 = vmul.f32 %v2042, %v2049
        %v2083 = vadd.f32 %v2051, 0.0
        %v2084 = vadd.f32 %v2052, 0.0
        %v2085 = vadd.f32 %v2053, 0.0
        %v2086 = vadd.f32 %v2054, 0.0
        %v2087 = vadd.f32 %v2055, 0.0
        %v2088 = vadd.f32 %v2056, 0.0
        %v2089 = vadd.f32 %v2057, 0.0
        %v2090 = vadd.f32 %v2058, 0.0
        %v2091 = vadd.f32 %v2059, 0.0
        %v2092 = vadd.f32 %v2060, 0.0
        %v2093 = vadd.f32 %v2061, 0.0
        %v2094 = vadd.f32 %v2062, 0.0
        %v2095 = vadd.f32 %v2063, 0.0
        %v2096 = vadd.f32 %v2064, 0.0
        %v2097 = vadd.f32 %v2065, 0.0
        %v2098 = vadd.f32 %v2066, 0.0
        %v2099 = vadd.f32 %v2067, 0.0
        %v2100 = vadd.f32 %v2068, 0.0
        %v2101 = vadd.f32 %v2069, 0.0
        %v2102 = vadd.f32 %v2070, 0.0
        %v2103 = vadd.f32 %v2071, 0.0
        %v2104 = vadd.f32 %v2072, 0.0
        %v2105 = vadd.f32 %v2073, 0.0
        %v2106 = vadd.f32 %v2074, 0.0
        %v2107 = vadd.f32 %v2075, 0.0
        %v2108 = vadd.f32 %v2076, 0.0
        %v2109 = vadd.f32 %v2077, 0.0
        %v2110 = vadd.f32 %v2078, 0.0
        %v2111 = vadd.f32 %v2079, 0.0
        %v2112 = vadd.f32 %v2080, 0.0
        %v2113 = vadd.f32 %v2081, 0.0
        %v2114 = vadd.f32 %v2082, 0.0
        %s2115 = scalar_lea.vmem %s7, 3
        %v2116 = vld [vmem:[%s2115] sm:$0x1]
        %v2118 = vperm.slane %v2116, 0
        %v2120 = vmul.f32 %v2013, %v2118
        %v2121 = vmul.f32 %v2014, %v2118
        %v2122 = vmul.f32 %v2015, %v2118
        %v2123 = vmul.f32 %v2016, %v2118
        %v2124 = vmul.f32 %v2017, %v2118
        %v2125 = vmul.f32 %v2018, %v2118
        %v2126 = vmul.f32 %v2019, %v2118
        %v2127 = vmul.f32 %v2020, %v2118
        %v2128 = vmul.f32 %v2021, %v2118
        %v2129 = vmul.f32 %v2022, %v2118
        %v2130 = vmul.f32 %v2023, %v2118
        %v2131 = vmul.f32 %v2024, %v2118
        %v2132 = vmul.f32 %v2025, %v2118
        %v2133 = vmul.f32 %v2026, %v2118
        %v2134 = vmul.f32 %v2027, %v2118
        %v2135 = vmul.f32 %v2028, %v2118
        %v2136 = vmul.f32 %v2029, %v2118
        %v2137 = vmul.f32 %v2030, %v2118
        %v2138 = vmul.f32 %v2031, %v2118
        %v2139 = vmul.f32 %v2032, %v2118
        %v2140 = vmul.f32 %v2033, %v2118
        %v2141 = vmul.f32 %v2034, %v2118
        %v2142 = vmul.f32 %v2035, %v2118
        %v2143 = vmul.f32 %v2036, %v2118
        %v2144 = vmul.f32 %v2037, %v2118
        %v2145 = vmul.f32 %v2038, %v2118
        %v2146 = vmul.f32 %v2039, %v2118
        %v2147 = vmul.f32 %v2040, %v2118
        %v2148 = vmul.f32 %v2041, %v2118
        %v2149 = vmul.f32 %v2042, %v2118
        %v2150 = vmul.f32 %v2043, %v2118
        %v2151 = vmul.f32 %v2044, %v2118
        %v2152 = vadd.f32 %v2083, %v2120
        %v2153 = vadd.f32 %v2084, %v2121
        %v2154 = vadd.f32 %v2085, %v2122
        %v2155 = vadd.f32 %v2086, %v2123
        %v2156 = vadd.f32 %v2087, %v2124
        %v2157 = vadd.f32 %v2088, %v2125
        %v2158 = vadd.f32 %v2089, %v2126
        %v2159 = vadd.f32 %v2090, %v2127
        %v2160 = vadd.f32 %v2091, %v2128
        %v2161 = vadd.f32 %v2092, %v2129
        %v2162 = vadd.f32 %v2093, %v2130
        %v2163 = vadd.f32 %v2094, %v2131
        %v2164 = vadd.f32 %v2095, %v2132
        %v2165 = vadd.f32 %v2096, %v2133
        %v2166 = vadd.f32 %v2097, %v2134
        %v2167 = vadd.f32 %v2098, %v2135
        %v2168 = vadd.f32 %v2099, %v2136
        %v2169 = vadd.f32 %v2100, %v2137
        %v2170 = vadd.f32 %v2101, %v2138
        %v2171 = vadd.f32 %v2102, %v2139
        %v2172 = vadd.f32 %v2103, %v2140
        %v2173 = vadd.f32 %v2104, %v2141
        %v2174 = vadd.f32 %v2105, %v2142
        %v2175 = vadd.f32 %v2106, %v2143
        %v2176 = vadd.f32 %v2107, %v2144
        %v2177 = vadd.f32 %v2108, %v2145
        %v2178 = vadd.f32 %v2109, %v2146
        %v2179 = vadd.f32 %v2110, %v2147
        %v2180 = vadd.f32 %v2111, %v2148
        %v2181 = vadd.f32 %v2112, %v2149
        %v2182 = vadd.f32 %v2113, %v2150
        %v2183 = vadd.f32 %v2114, %v2151
        %s2184 = scalar_lea.vmem %s7, 6
        %v2185 = vld [vmem:[%s2184] sm:$0x1]
        %v2187 = vperm.slane %v2185, 0
        %v2189 = vmul.f32 %v2015, %v2187
        %v2190 = vmul.f32 %v2016, %v2187
        %v2191 = vmul.f32 %v2017, %v2187
        %v2192 = vmul.f32 %v2018, %v2187
        %v2193 = vmul.f32 %v2019, %v2187
        %v2194 = vmul.f32 %v2020, %v2187
        %v2195 = vmul.f32 %v2021, %v2187
        %v2196 = vmul.f32 %v2022, %v2187
        %v2197 = vmul.f32 %v2023, %v2187
        %v2198 = vmul.f32 %v2024, %v2187
        %v2199 = vmul.f32 %v2025, %v2187
        %v2200 = vmul.f32 %v2026, %v2187
        %v2201 = vmul.f32 %v2027, %v2187
        %v2202 = vmul.f32 %v2028, %v2187
        %v2203 = vmul.f32 %v2029, %v2187
        %v2204 = vmul.f32 %v2030, %v2187
        %v2205 = vmul.f32 %v2031, %v2187
        %v2206 = vmul.f32 %v2032, %v2187
        %v2207 = vmul.f32 %v2033, %v2187
        %v2208 = vmul.f32 %v2034, %v2187
        %v2209 = vmul.f32 %v2035, %v2187
        %v2210 = vmul.f32 %v2036, %v2187
        %v2211 = vmul.f32 %v2037, %v2187
        %v2212 = vmul.f32 %v2038, %v2187
        %v2213 = vmul.f32 %v2039, %v2187
        %v2214 = vmul.f32 %v2040, %v2187
        %v2215 = vmul.f32 %v2041, %v2187
        %v2216 = vmul.f32 %v2042, %v2187
        %v2217 = vmul.f32 %v2043, %v2187
        %v2218 = vmul.f32 %v2044, %v2187
        %v2219 = vmul.f32 %v2045, %v2187
        %v2220 = vmul.f32 %v2046, %v2187
        %v2221 = vadd.f32 %v2152, %v2189
        %v2222 = vadd.f32 %v2153, %v2190
        %v2223 = vadd.f32 %v2154, %v2191
        %v2224 = vadd.f32 %v2155, %v2192
        %v2225 = vadd.f32 %v2156, %v2193
        %v2226 = vadd.f32 %v2157, %v2194
        %v2227 = vadd.f32 %v2158, %v2195
        %v2228 = vadd.f32 %v2159, %v2196
        %v2229 = vadd.f32 %v2160, %v2197
        %v2230 = vadd.f32 %v2161, %v2198
        %v2231 = vadd.f32 %v2162, %v2199
        %v2232 = vadd.f32 %v2163, %v2200
        %v2233 = vadd.f32 %v2164, %v2201
        %v2234 = vadd.f32 %v2165, %v2202
        %v2235 = vadd.f32 %v2166, %v2203
        %v2236 = vadd.f32 %v2167, %v2204
        %v2237 = vadd.f32 %v2168, %v2205
        %v2238 = vadd.f32 %v2169, %v2206
        %v2239 = vadd.f32 %v2170, %v2207
        %v2240 = vadd.f32 %v2171, %v2208
        %v2241 = vadd.f32 %v2172, %v2209
        %v2242 = vadd.f32 %v2173, %v2210
        %v2243 = vadd.f32 %v2174, %v2211
        %v2244 = vadd.f32 %v2175, %v2212
        %v2245 = vadd.f32 %v2176, %v2213
        %v2246 = vadd.f32 %v2177, %v2214
        %v2247 = vadd.f32 %v2178, %v2215
        %v2248 = vadd.f32 %v2179, %v2216
        %v2249 = vadd.f32 %v2180, %v2217
        %v2250 = vadd.f32 %v2181, %v2218
        %v2251 = vadd.f32 %v2182, %v2219
        %v2252 = vadd.f32 %v2183, %v2220
        %v2253 = vld [vmem:[#allocation2 + $0x1] sm:$0xff]
        %v2254 = vld [vmem:[#allocation2 + $0x9] sm:$0xff]
        %v2255 = vld [vmem:[#allocation2 + $0x19] sm:$0xff]
        %v2256 = vld [vmem:[#allocation2 + $0x21] sm:$0xff]
        %v2257 = vld [vmem:[#allocation2 + $0x31] sm:$0xff]
        %v2258 = vld [vmem:[#allocation2 + $0x39] sm:$0xff]
        %v2259 = vld [vmem:[#allocation2 + $0x49] sm:$0xff]
        %v2260 = vld [vmem:[#allocation2 + $0x51] sm:$0xff]
        %v2261 = vld [vmem:[#allocation2 + $0x61] sm:$0xff]
        %v2262 = vld [vmem:[#allocation2 + $0x69] sm:$0xff]
        %v2263 = vld [vmem:[#allocation2 + $0x79] sm:$0xff]
        %v2264 = vld [vmem:[#allocation2 + $0x81] sm:$0xff]
        %v2265 = vld [vmem:[#allocation2 + $0x91] sm:$0xff]
        %v2266 = vld [vmem:[#allocation2 + $0x99] sm:$0xff]
        %v2267 = vld [vmem:[#allocation2 + $0xa9] sm:$0xff]
        %v2268 = vld [vmem:[#allocation2 + $0xb1] sm:$0xff]
        %v2269 = vld [vmem:[#allocation2 + $0xc1] sm:$0xff]
        %v2270 = vld [vmem:[#allocation2 + $0xc9] sm:$0xff]
        %v2271 = vld [vmem:[#allocation2 + $0xd9] sm:$0xff]
        %v2272 = vld [vmem:[#allocation2 + $0xe1] sm:$0xff]
        %v2273 = vld [vmem:[#allocation2 + $0xf1] sm:$0xff]
        %v2274 = vld [vmem:[#allocation2 + $0xf9] sm:$0xff]
        %v2275 = vld [vmem:[#allocation2 + $0x109] sm:$0xff]
        %v2276 = vld [vmem:[#allocation2 + $0x111] sm:$0xff]
        %v2277 = vld [vmem:[#allocation2 + $0x121] sm:$0xff]
        %v2278 = vld [vmem:[#allocation2 + $0x129] sm:$0xff]
        %v2279 = vld [vmem:[#allocation2 + $0x139] sm:$0xff]
        %v2280 = vld [vmem:[#allocation2 + $0x141] sm:$0xff]
        %v2281 = vld [vmem:[#allocation2 + $0x151] sm:$0xff]
        %v2282 = vld [vmem:[#allocation2 + $0x159] sm:$0xff]
        %v2283 = vld [vmem:[#allocation2 + $0x169] sm:$0xff]
        %v2284 = vld [vmem:[#allocation2 + $0x171] sm:$0xff]
        %v2285 = vld [vmem:[#allocation2 + $0x181] sm:$0xff]
        %v2286 = vld [vmem:[#allocation2 + $0x189] sm:$0xff]
        %v2287 = vld [vmem:[#allocation2 + $0x199] sm:$0xff]
        %v2288 = vld [vmem:[#allocation2 + $0x1a1] sm:$0xff]
        %s2289 = scalar_lea.vmem %s7, 1
        %v2290 = vld [vmem:[%s2289] sm:$0x1]
        %v2292 = vperm.slane %v2290, 0
        %v2294 = vmul.f32 %v2253, %v2292
        %v2295 = vmul.f32 %v2254, %v2292
        %v2296 = vmul.f32 %v2255, %v2292
        %v2297 = vmul.f32 %v2256, %v2292
        %v2298 = vmul.f32 %v2257, %v2292
        %v2299 = vmul.f32 %v2258, %v2292
        %v2300 = vmul.f32 %v2259, %v2292
        %v2301 = vmul.f32 %v2260, %v2292
        %v2302 = vmul.f32 %v2261, %v2292
        %v2303 = vmul.f32 %v2262, %v2292
        %v2304 = vmul.f32 %v2263, %v2292
        %v2305 = vmul.f32 %v2264, %v2292
        %v2306 = vmul.f32 %v2265, %v2292
        %v2307 = vmul.f32 %v2266, %v2292
        %v2308 = vmul.f32 %v2267, %v2292
        %v2309 = vmul.f32 %v2268, %v2292
        %v2310 = vmul.f32 %v2269, %v2292
        %v2311 = vmul.f32 %v2270, %v2292
        %v2312 = vmul.f32 %v2271, %v2292
        %v2313 = vmul.f32 %v2272, %v2292
        %v2314 = vmul.f32 %v2273, %v2292
        %v2315 = vmul.f32 %v2274, %v2292
        %v2316 = vmul.f32 %v2275, %v2292
        %v2317 = vmul.f32 %v2276, %v2292
        %v2318 = vmul.f32 %v2277, %v2292
        %v2319 = vmul.f32 %v2278, %v2292
        %v2320 = vmul.f32 %v2279, %v2292
        %v2321 = vmul.f32 %v2280, %v2292
        %v2322 = vmul.f32 %v2281, %v2292
        %v2323 = vmul.f32 %v2282, %v2292
        %v2324 = vmul.f32 %v2283, %v2292
        %v2325 = vmul.f32 %v2284, %v2292
        %v2326 = vadd.f32 %v2221, %v2294
        %v2327 = vadd.f32 %v2222, %v2295
        %v2328 = vadd.f32 %v2223, %v2296
        %v2329 = vadd.f32 %v2224, %v2297
        %v2330 = vadd.f32 %v2225, %v2298
        %v2331 = vadd.f32 %v2226, %v2299
        %v2332 = vadd.f32 %v2227, %v2300
        %v2333 = vadd.f32 %v2228, %v2301
        %v2334 = vadd.f32 %v2229, %v2302
        %v2335 = vadd.f32 %v2230, %v2303
        %v2336 = vadd.f32 %v2231, %v2304
        %v2337 = vadd.f32 %v2232, %v2305
        %v2338 = vadd.f32 %v2233, %v2306
        %v2339 = vadd.f32 %v2234, %v2307
        %v2340 = vadd.f32 %v2235, %v2308
        %v2341 = vadd.f32 %v2236, %v2309
        %v2342 = vadd.f32 %v2237, %v2310
        %v2343 = vadd.f32 %v2238, %v2311
        %v2344 = vadd.f32 %v2239, %v2312
        %v2345 = vadd.f32 %v2240, %v2313
        %v2346 = vadd.f32 %v2241, %v2314
        %v2347 = vadd.f32 %v2242, %v2315
        %v2348 = vadd.f32 %v2243, %v2316
        %v2349 = vadd.f32 %v2244, %v2317
        %v2350 = vadd.f32 %v2245, %v2318
        %v2351 = vadd.f32 %v2246, %v2319
        %v2352 = vadd.f32 %v2247, %v2320
        %v2353 = vadd.f32 %v2248, %v2321
        %v2354 = vadd.f32 %v2249, %v2322
        %v2355 = vadd.f32 %v2250, %v2323
        %v2356 = vadd.f32 %v2251, %v2324
        %v2357 = vadd.f32 %v2252, %v2325
        %s2358 = scalar_lea.vmem %s7, 4
        %v2359 = vld [vmem:[%s2358] sm:$0x1]
        %v2361 = vperm.slane %v2359, 0
        %v2363 = vmul.f32 %v2255, %v2361
        %v2364 = vmul.f32 %v2256, %v2361
        %v2365 = vmul.f32 %v2257, %v2361
        %v2366 = vmul.f32 %v2258, %v2361
        %v2367 = vmul.f32 %v2259, %v2361
        %v2368 = vmul.f32 %v2260, %v2361
        %v2369 = vmul.f32 %v2261, %v2361
        %v2370 = vmul.f32 %v2262, %v2361
        %v2371 = vmul.f32 %v2263, %v2361
        %v2372 = vmul.f32 %v2264, %v2361
        %v2373 = vmul.f32 %v2265, %v2361
        %v2374 = vmul.f32 %v2266, %v2361
        %v2375 = vmul.f32 %v2267, %v2361
        %v2376 = vmul.f32 %v2268, %v2361
        %v2377 = vmul.f32 %v2269, %v2361
        %v2378 = vmul.f32 %v2270, %v2361
        %v2379 = vmul.f32 %v2271, %v2361
        %v2380 = vmul.f32 %v2272, %v2361
        %v2381 = vmul.f32 %v2273, %v2361
        %v2382 = vmul.f32 %v2274, %v2361
        %v2383 = vmul.f32 %v2275, %v2361
        %v2384 = vmul.f32 %v2276, %v2361
        %v2385 = vmul.f32 %v2277, %v2361
        %v2386 = vmul.f32 %v2278, %v2361
        %v2387 = vmul.f32 %v2279, %v2361
        %v2388 = vmul.f32 %v2280, %v2361
        %v2389 = vmul.f32 %v2281, %v2361
        %v2390 = vmul.f32 %v2282, %v2361
        %v2391 = vmul.f32 %v2283, %v2361
        %v2392 = vmul.f32 %v2284, %v2361
        %v2393 = vmul.f32 %v2285, %v2361
        %v2394 = vmul.f32 %v2286, %v2361
        %v2395 = vadd.f32 %v2326, %v2363
        %v2396 = vadd.f32 %v2327, %v2364
        %v2397 = vadd.f32 %v2328, %v2365
        %v2398 = vadd.f32 %v2329, %v2366
        %v2399 = vadd.f32 %v2330, %v2367
        %v2400 = vadd.f32 %v2331, %v2368
        %v2401 = vadd.f32 %v2332, %v2369
        %v2402 = vadd.f32 %v2333, %v2370
        %v2403 = vadd.f32 %v2334, %v2371
        %v2404 = vadd.f32 %v2335, %v2372
        %v2405 = vadd.f32 %v2336, %v2373
        %v2406 = vadd.f32 %v2337, %v2374
        %v2407 = vadd.f32 %v2338, %v2375
        %v2408 = vadd.f32 %v2339, %v2376
        %v2409 = vadd.f32 %v2340, %v2377
        %v2410 = vadd.f32 %v2341, %v2378
        %v2411 = vadd.f32 %v2342, %v2379
        %v2412 = vadd.f32 %v2343, %v2380
        %v2413 = vadd.f32 %v2344, %v2381
        %v2414 = vadd.f32 %v2345, %v2382
        %v2415 = vadd.f32 %v2346, %v2383
        %v2416 = vadd.f32 %v2347, %v2384
        %v2417 = vadd.f32 %v2348, %v2385
        %v2418 = vadd.f32 %v2349, %v2386
        %v2419 = vadd.f32 %v2350, %v2387
        %v2420 = vadd.f32 %v2351, %v2388
        %v2421 = vadd.f32 %v2352, %v2389
        %v2422 = vadd.f32 %v2353, %v2390
        %v2423 = vadd.f32 %v2354, %v2391
        %v2424 = vadd.f32 %v2355, %v2392
        %v2425 = vadd.f32 %v2356, %v2393
        %v2426 = vadd.f32 %v2357, %v2394
        %s2427 = scalar_lea.vmem %s7, 7
        %v2428 = vld [vmem:[%s2427] sm:$0x1]
        %v2430 = vperm.slane %v2428, 0
        %v2432 = vmul.f32 %v2257, %v2430
        %v2433 = vmul.f32 %v2258, %v2430
        %v2434 = vmul.f32 %v2259, %v2430
        %v2435 = vmul.f32 %v2260, %v2430
        %v2436 = vmul.f32 %v2261, %v2430
        %v2437 = vmul.f32 %v2262, %v2430
        %v2438 = vmul.f32 %v2263, %v2430
        %v2439 = vmul.f32 %v2264, %v2430
        %v2440 = vmul.f32 %v2265, %v2430
        %v2441 = vmul.f32 %v2266, %v2430
        %v2442 = vmul.f32 %v2267, %v2430
        %v2443 = vmul.f32 %v2268, %v2430
        %v2444 = vmul.f32 %v2269, %v2430
        %v2445 = vmul.f32 %v2270, %v2430
        %v2446 = vmul.f32 %v2271, %v2430
        %v2447 = vmul.f32 %v2272, %v2430
        %v2448 = vmul.f32 %v2273, %v2430
        %v2449 = vmul.f32 %v2274, %v2430
        %v2450 = vmul.f32 %v2275, %v2430
        %v2451 = vmul.f32 %v2276, %v2430
        %v2452 = vmul.f32 %v2277, %v2430
        %v2453 = vmul.f32 %v2278, %v2430
        %v2454 = vmul.f32 %v2279, %v2430
        %v2455 = vmul.f32 %v2280, %v2430
        %v2456 = vmul.f32 %v2281, %v2430
        %v2457 = vmul.f32 %v2282, %v2430
        %v2458 = vmul.f32 %v2283, %v2430
        %v2459 = vmul.f32 %v2284, %v2430
        %v2460 = vmul.f32 %v2285, %v2430
        %v2461 = vmul.f32 %v2286, %v2430
        %v2462 = vmul.f32 %v2287, %v2430
        %v2463 = vmul.f32 %v2288, %v2430
        %v2464 = vadd.f32 %v2395, %v2432
        %v2465 = vadd.f32 %v2396, %v2433
        %v2466 = vadd.f32 %v2397, %v2434
        %v2467 = vadd.f32 %v2398, %v2435
        %v2468 = vadd.f32 %v2399, %v2436
        %v2469 = vadd.f32 %v2400, %v2437
        %v2470 = vadd.f32 %v2401, %v2438
        %v2471 = vadd.f32 %v2402, %v2439
        %v2472 = vadd.f32 %v2403, %v2440
        %v2473 = vadd.f32 %v2404, %v2441
        %v2474 = vadd.f32 %v2405, %v2442
        %v2475 = vadd.f32 %v2406, %v2443
        %v2476 = vadd.f32 %v2407, %v2444
        %v2477 = vadd.f32 %v2408, %v2445
        %v2478 = vadd.f32 %v2409, %v2446
        %v2479 = vadd.f32 %v2410, %v2447
        %v2480 = vadd.f32 %v2411, %v2448
        %v2481 = vadd.f32 %v2412, %v2449
        %v2482 = vadd.f32 %v2413, %v2450
        %v2483 = vadd.f32 %v2414, %v2451
        %v2484 = vadd.f32 %v2415, %v2452
        %v2485 = vadd.f32 %v2416, %v2453
        %v2486 = vadd.f32 %v2417, %v2454
        %v2487 = vadd.f32 %v2418, %v2455
        %v2488 = vadd.f32 %v2419, %v2456
        %v2489 = vadd.f32 %v2420, %v2457
        %v2490 = vadd.f32 %v2421, %v2458
        %v2491 = vadd.f32 %v2422, %v2459
        %v2492 = vadd.f32 %v2423, %v2460
        %v2493 = vadd.f32 %v2424, %v2461
        %v2494 = vadd.f32 %v2425, %v2462
        %v2495 = vadd.f32 %v2426, %v2463
        %v2496 = vld [vmem:[#allocation2 + $0x2] sm:$0xff]
        %v2497 = vld [vmem:[#allocation2 + $0xa] sm:$0xff]
        %v2498 = vld [vmem:[#allocation2 + $0x1a] sm:$0xff]
        %v2499 = vld [vmem:[#allocation2 + $0x22] sm:$0xff]
        %v2500 = vld [vmem:[#allocation2 + $0x32] sm:$0xff]
        %v2501 = vld [vmem:[#allocation2 + $0x3a] sm:$0xff]
        %v2502 = vld [vmem:[#allocation2 + $0x4a] sm:$0xff]
        %v2503 = vld [vmem:[#allocation2 + $0x52] sm:$0xff]
        %v2504 = vld [vmem:[#allocation2 + $0x62] sm:$0xff]
        %v2505 = vld [vmem:[#allocation2 + $0x6a] sm:$0xff]
        %v2506 = vld [vmem:[#allocation2 + $0x7a] sm:$0xff]
        %v2507 = vld [vmem:[#allocation2 + $0x82] sm:$0xff]
        %v2508 = vld [vmem:[#allocation2 + $0x92] sm:$0xff]
        %v2509 = vld [vmem:[#allocation2 + $0x9a] sm:$0xff]
        %v2510 = vld [vmem:[#allocation2 + $0xaa] sm:$0xff]
        %v2511 = vld [vmem:[#allocation2 + $0xb2] sm:$0xff]
        %v2512 = vld [vmem:[#allocation2 + $0xc2] sm:$0xff]
        %v2513 = vld [vmem:[#allocation2 + $0xca] sm:$0xff]
        %v2514 = vld [vmem:[#allocation2 + $0xda] sm:$0xff]
        %v2515 = vld [vmem:[#allocation2 + $0xe2] sm:$0xff]
        %v2516 = vld [vmem:[#allocation2 + $0xf2] sm:$0xff]
        %v2517 = vld [vmem:[#allocation2 + $0xfa] sm:$0xff]
        %v2518 = vld [vmem:[#allocation2 + $0x10a] sm:$0xff]
        %v2519 = vld [vmem:[#allocation2 + $0x112] sm:$0xff]
        %v2520 = vld [vmem:[#allocation2 + $0x122] sm:$0xff]
        %v2521 = vld [vmem:[#allocation2 + $0x12a] sm:$0xff]
        %v2522 = vld [vmem:[#allocation2 + $0x13a] sm:$0xff]
        %v2523 = vld [vmem:[#allocation2 + $0x142] sm:$0xff]
        %v2524 = vld [vmem:[#allocation2 + $0x152] sm:$0xff]
        %v2525 = vld [vmem:[#allocation2 + $0x15a] sm:$0xff]
        %v2526 = vld [vmem:[#allocation2 + $0x16a] sm:$0xff]
        %v2527 = vld [vmem:[#allocation2 + $0x172] sm:$0xff]
        %v2528 = vld [vmem:[#allocation2 + $0x182] sm:$0xff]
        %v2529 = vld [vmem:[#allocation2 + $0x18a] sm:$0xff]
        %v2530 = vld [vmem:[#allocation2 + $0x19a] sm:$0xff]
        %v2531 = vld [vmem:[#allocation2 + $0x1a2] sm:$0xff]
        %s2532 = scalar_lea.vmem %s7, 2
        %v2533 = vld [vmem:[%s2532] sm:$0x1]
        %v2535 = vperm.slane %v2533, 0
        %v2537 = vmul.f32 %v2496, %v2535
        %v2538 = vmul.f32 %v2497, %v2535
        %v2539 = vmul.f32 %v2498, %v2535
        %v2540 = vmul.f32 %v2499, %v2535
        %v2541 = vmul.f32 %v2500, %v2535
        %v2542 = vmul.f32 %v2501, %v2535
        %v2543 = vmul.f32 %v2502, %v2535
        %v2544 = vmul.f32 %v2503, %v2535
        %v2545 = vmul.f32 %v2504, %v2535
        %v2546 = vmul.f32 %v2505, %v2535
        %v2547 = vmul.f32 %v2506, %v2535
        %v2548 = vmul.f32 %v2507, %v2535
        %v2549 = vmul.f32 %v2508, %v2535
        %v2550 = vmul.f32 %v2509, %v2535
        %v2551 = vmul.f32 %v2510, %v2535
        %v2552 = vmul.f32 %v2511, %v2535
        %v2553 = vmul.f32 %v2512, %v2535
        %v2554 = vmul.f32 %v2513, %v2535
        %v2555 = vmul.f32 %v2514, %v2535
        %v2556 = vmul.f32 %v2515, %v2535
        %v2557 = vmul.f32 %v2516, %v2535
        %v2558 = vmul.f32 %v2517, %v2535
        %v2559 = vmul.f32 %v2518, %v2535
        %v2560 = vmul.f32 %v2519, %v2535
        %v2561 = vmul.f32 %v2520, %v2535
        %v2562 = vmul.f32 %v2521, %v2535
        %v2563 = vmul.f32 %v2522, %v2535
        %v2564 = vmul.f32 %v2523, %v2535
        %v2565 = vmul.f32 %v2524, %v2535
        %v2566 = vmul.f32 %v2525, %v2535
        %v2567 = vmul.f32 %v2526, %v2535
        %v2568 = vmul.f32 %v2527, %v2535
        %v2569 = vadd.f32 %v2464, %v2537
        %v2570 = vadd.f32 %v2465, %v2538
        %v2571 = vadd.f32 %v2466, %v2539
        %v2572 = vadd.f32 %v2467, %v2540
        %v2573 = vadd.f32 %v2468, %v2541
        %v2574 = vadd.f32 %v2469, %v2542
        %v2575 = vadd.f32 %v2470, %v2543
        %v2576 = vadd.f32 %v2471, %v2544
        %v2577 = vadd.f32 %v2472, %v2545
        %v2578 = vadd.f32 %v2473, %v2546
        %v2579 = vadd.f32 %v2474, %v2547
        %v2580 = vadd.f32 %v2475, %v2548
        %v2581 = vadd.f32 %v2476, %v2549
        %v2582 = vadd.f32 %v2477, %v2550
        %v2583 = vadd.f32 %v2478, %v2551
        %v2584 = vadd.f32 %v2479, %v2552
        %v2585 = vadd.f32 %v2480, %v2553
        %v2586 = vadd.f32 %v2481, %v2554
        %v2587 = vadd.f32 %v2482, %v2555
        %v2588 = vadd.f32 %v2483, %v2556
        %v2589 = vadd.f32 %v2484, %v2557
        %v2590 = vadd.f32 %v2485, %v2558
        %v2591 = vadd.f32 %v2486, %v2559
        %v2592 = vadd.f32 %v2487, %v2560
        %v2593 = vadd.f32 %v2488, %v2561
        %v2594 = vadd.f32 %v2489, %v2562
        %v2595 = vadd.f32 %v2490, %v2563
        %v2596 = vadd.f32 %v2491, %v2564
        %v2597 = vadd.f32 %v2492, %v2565
        %v2598 = vadd.f32 %v2493, %v2566
        %v2599 = vadd.f32 %v2494, %v2567
        %v2600 = vadd.f32 %v2495, %v2568
        %s2601 = scalar_lea.vmem %s7, 5
        %v2602 = vld [vmem:[%s2601] sm:$0x1]
        %v2604 = vperm.slane %v2602, 0
        %v2606 = vmul.f32 %v2498, %v2604
        %v2607 = vmul.f32 %v2499, %v2604
        %v2608 = vmul.f32 %v2500, %v2604
        %v2609 = vmul.f32 %v2501, %v2604
        %v2610 = vmul.f32 %v2502, %v2604
        %v2611 = vmul.f32 %v2503, %v2604
        %v2612 = vmul.f32 %v2504, %v2604
        %v2613 = vmul.f32 %v2505, %v2604
        %v2614 = vmul.f32 %v2506, %v2604
        %v2615 = vmul.f32 %v2507, %v2604
        %v2616 = vmul.f32 %v2508, %v2604
        %v2617 = vmul.f32 %v2509, %v2604
        %v2618 = vmul.f32 %v2510, %v2604
        %v2619 = vmul.f32 %v2511, %v2604
        %v2620 = vmul.f32 %v2512, %v2604
        %v2621 = vmul.f32 %v2513, %v2604
        %v2622 = vmul.f32 %v2514, %v2604
        %v2623 = vmul.f32 %v2515, %v2604
        %v2624 = vmul.f32 %v2516, %v2604
        %v2625 = vmul.f32 %v2517, %v2604
        %v2626 = vmul.f32 %v2518, %v2604
        %v2627 = vmul.f32 %v2519, %v2604
        %v2628 = vmul.f32 %v2520, %v2604
        %v2629 = vmul.f32 %v2521, %v2604
        %v2630 = vmul.f32 %v2522, %v2604
        %v2631 = vmul.f32 %v2523, %v2604
        %v2632 = vmul.f32 %v2524, %v2604
        %v2633 = vmul.f32 %v2525, %v2604
        %v2634 = vmul.f32 %v2526, %v2604
        %v2635 = vmul.f32 %v2527, %v2604
        %v2636 = vmul.f32 %v2528, %v2604
        %v2637 = vmul.f32 %v2529, %v2604
        %v2638 = vadd.f32 %v2569, %v2606
        %v2639 = vadd.f32 %v2570, %v2607
        %v2640 = vadd.f32 %v2571, %v2608
        %v2641 = vadd.f32 %v2572, %v2609
        %v2642 = vadd.f32 %v2573, %v2610
        %v2643 = vadd.f32 %v2574, %v2611
        %v2644 = vadd.f32 %v2575, %v2612
        %v2645 = vadd.f32 %v2576, %v2613
        %v2646 = vadd.f32 %v2577, %v2614
        %v2647 = vadd.f32 %v2578, %v2615
        %v2648 = vadd.f32 %v2579, %v2616
        %v2649 = vadd.f32 %v2580, %v2617
        %v2650 = vadd.f32 %v2581, %v2618
        %v2651 = vadd.f32 %v2582, %v2619
        %v2652 = vadd.f32 %v2583, %v2620
        %v2653 = vadd.f32 %v2584, %v2621
        %v2654 = vadd.f32 %v2585, %v2622
        %v2655 = vadd.f32 %v2586, %v2623
        %v2656 = vadd.f32 %v2587, %v2624
        %v2657 = vadd.f32 %v2588, %v2625
        %v2658 = vadd.f32 %v2589, %v2626
        %v2659 = vadd.f32 %v2590, %v2627
        %v2660 = vadd.f32 %v2591, %v2628
        %v2661 = vadd.f32 %v2592, %v2629
        %v2662 = vadd.f32 %v2593, %v2630
        %v2663 = vadd.f32 %v2594, %v2631
        %v2664 = vadd.f32 %v2595, %v2632
        %v2665 = vadd.f32 %v2596, %v2633
        %v2666 = vadd.f32 %v2597, %v2634
        %v2667 = vadd.f32 %v2598, %v2635
        %v2668 = vadd.f32 %v2599, %v2636
        %v2669 = vadd.f32 %v2600, %v2637
        %s2670 = scalar_lea.vmem %s7, 8
        %v2671 = vld [vmem:[%s2670] sm:$0x1]
        %v2673 = vperm.slane %v2671, 0
        %v2675 = vmul.f32 %v2500, %v2673
        %v2676 = vmul.f32 %v2501, %v2673
        %v2677 = vmul.f32 %v2502, %v2673
        %v2678 = vmul.f32 %v2503, %v2673
        %v2679 = vmul.f32 %v2504, %v2673
        %v2680 = vmul.f32 %v2505, %v2673
        %v2681 = vmul.f32 %v2506, %v2673
        %v2682 = vmul.f32 %v2507, %v2673
        %v2683 = vmul.f32 %v2508, %v2673
        %v2684 = vmul.f32 %v2509, %v2673
        %v2685 = vmul.f32 %v2510, %v2673
        %v2686 = vmul.f32 %v2511, %v2673
        %v2687 = vmul.f32 %v2512, %v2673
        %v2688 = vmul.f32 %v2513, %v2673
        %v2689 = vmul.f32 %v2514, %v2673
        %v2690 = vmul.f32 %v2515, %v2673
        %v2691 = vmul.f32 %v2516, %v2673
        %v2692 = vmul.f32 %v2517, %v2673
        %v2693 = vmul.f32 %v2518, %v2673
        %v2694 = vmul.f32 %v2519, %v2673
        %v2695 = vmul.f32 %v2520, %v2673
        %v2696 = vmul.f32 %v2521, %v2673
        %v2697 = vmul.f32 %v2522, %v2673
        %v2698 = vmul.f32 %v2523, %v2673
        %v2699 = vmul.f32 %v2524, %v2673
        %v2700 = vmul.f32 %v2525, %v2673
        %v2701 = vmul.f32 %v2526, %v2673
        %v2702 = vmul.f32 %v2527, %v2673
        %v2703 = vmul.f32 %v2528, %v2673
        %v2704 = vmul.f32 %v2529, %v2673
        %v2705 = vmul.f32 %v2530, %v2673
        %v2706 = vmul.f32 %v2531, %v2673
        %v2707 = vadd.f32 %v2638, %v2675
        %v2708 = vadd.f32 %v2639, %v2676
        %v2709 = vadd.f32 %v2640, %v2677
        %v2710 = vadd.f32 %v2641, %v2678
        %v2711 = vadd.f32 %v2642, %v2679
        %v2712 = vadd.f32 %v2643, %v2680
        %v2713 = vadd.f32 %v2644, %v2681
        %v2714 = vadd.f32 %v2645, %v2682
        %v2715 = vadd.f32 %v2646, %v2683
        %v2716 = vadd.f32 %v2647, %v2684
        %v2717 = vadd.f32 %v2648, %v2685
        %v2718 = vadd.f32 %v2649, %v2686
        %v2719 = vadd.f32 %v2650, %v2687
        %v2720 = vadd.f32 %v2651, %v2688
        %v2721 = vadd.f32 %v2652, %v2689
        %v2722 = vadd.f32 %v2653, %v2690
        %v2723 = vadd.f32 %v2654, %v2691
        %v2724 = vadd.f32 %v2655, %v2692
        %v2725 = vadd.f32 %v2656, %v2693
        %v2726 = vadd.f32 %v2657, %v2694
        %v2727 = vadd.f32 %v2658, %v2695
        %v2728 = vadd.f32 %v2659, %v2696
        %v2729 = vadd.f32 %v2660, %v2697
        %v2730 = vadd.f32 %v2661, %v2698
        %v2731 = vadd.f32 %v2662, %v2699
        %v2732 = vadd.f32 %v2663, %v2700
        %v2733 = vadd.f32 %v2664, %v2701
        %v2734 = vadd.f32 %v2665, %v2702
        %v2735 = vadd.f32 %v2666, %v2703
        %v2736 = vadd.f32 %v2667, %v2704
        %v2737 = vadd.f32 %v2668, %v2705
        %v2738 = vadd.f32 %v2669, %v2706
        %v2739 = vld [vmem:[%s9] sm:$0x1]
        %v2741 = vperm.slane %v2739, 0
        %v2743 = vadd.f32 %v2707, %v2741
        %v2744 = vadd.f32 %v2708, %v2741
        %v2745 = vadd.f32 %v2709, %v2741
        %v2746 = vadd.f32 %v2710, %v2741
        %v2747 = vadd.f32 %v2711, %v2741
        %v2748 = vadd.f32 %v2712, %v2741
        %v2749 = vadd.f32 %v2713, %v2741
        %v2750 = vadd.f32 %v2714, %v2741
        %v2751 = vadd.f32 %v2715, %v2741
        %v2752 = vadd.f32 %v2716, %v2741
        %v2753 = vadd.f32 %v2717, %v2741
        %v2754 = vadd.f32 %v2718, %v2741
        %v2755 = vadd.f32 %v2719, %v2741
        %v2756 = vadd.f32 %v2720, %v2741
        %v2757 = vadd.f32 %v2721, %v2741
        %v2758 = vadd.f32 %v2722, %v2741
        %v2759 = vadd.f32 %v2723, %v2741
        %v2760 = vadd.f32 %v2724, %v2741
        %v2761 = vadd.f32 %v2725, %v2741
        %v2762 = vadd.f32 %v2726, %v2741
        %v2763 = vadd.f32 %v2727, %v2741
        %v2764 = vadd.f32 %v2728, %v2741
        %v2765 = vadd.f32 %v2729, %v2741
        %v2766 = vadd.f32 %v2730, %v2741
        %v2767 = vadd.f32 %v2731, %v2741
        %v2768 = vadd.f32 %v2732, %v2741
        %v2769 = vadd.f32 %v2733, %v2741
        %v2770 = vadd.f32 %v2734, %v2741
        %v2771 = vadd.f32 %v2735, %v2741
        %v2772 = vadd.f32 %v2736, %v2741
        %v2773 = vadd.f32 %v2737, %v2741
        %v2774 = vadd.f32 %v2738, %v2741
        %v2775 = vmax.f32 %v2743, 0.0
        %v2776 = vmax.f32 %v2744, 0.0
        %v2777 = vmax.f32 %v2745, 0.0
        %v2778 = vmax.f32 %v2746, 0.0
        %v2779 = vmax.f32 %v2747, 0.0
        %v2780 = vmax.f32 %v2748, 0.0
        %v2781 = vmax.f32 %v2749, 0.0
        %v2782 = vmax.f32 %v2750, 0.0
        %v2783 = vmax.f32 %v2751, 0.0
        %v2784 = vmax.f32 %v2752, 0.0
        %v2785 = vmax.f32 %v2753, 0.0
        %v2786 = vmax.f32 %v2754, 0.0
        %v2787 = vmax.f32 %v2755, 0.0
        %v2788 = vmax.f32 %v2756, 0.0
        %v2789 = vmax.f32 %v2757, 0.0
        %v2790 = vmax.f32 %v2758, 0.0
        %v2791 = vmax.f32 %v2759, 0.0
        %v2792 = vmax.f32 %v2760, 0.0
        %v2793 = vmax.f32 %v2761, 0.0
        %v2794 = vmax.f32 %v2762, 0.0
        %v2795 = vmax.f32 %v2763, 0.0
        %v2796 = vmax.f32 %v2764, 0.0
        %v2797 = vmax.f32 %v2765, 0.0
        %v2798 = vmax.f32 %v2766, 0.0
        %v2799 = vmax.f32 %v2767, 0.0
        %v2800 = vmax.f32 %v2768, 0.0
        %v2801 = vmax.f32 %v2769, 0.0
        %v2802 = vmax.f32 %v2770, 0.0
        %v2803 = vmax.f32 %v2771, 0.0
        %v2804 = vmax.f32 %v2772, 0.0
        %v2805 = vmax.f32 %v2773, 0.0
        %v2806 = vmax.f32 %v2774, 0.0
        %v2807 = vmin.f32 %v2775, 6.0
        %v2808 = vmin.f32 %v2776, 6.0
        %v2809 = vmin.f32 %v2777, 6.0
        %v2810 = vmin.f32 %v2778, 6.0
        %v2811 = vmin.f32 %v2779, 6.0
        %v2812 = vmin.f32 %v2780, 6.0
        %v2813 = vmin.f32 %v2781, 6.0
        %v2814 = vmin.f32 %v2782, 6.0
        %v2815 = vmin.f32 %v2783, 6.0
        %v2816 = vmin.f32 %v2784, 6.0
        %v2817 = vmin.f32 %v2785, 6.0
        %v2818 = vmin.f32 %v2786, 6.0
        %v2819 = vmin.f32 %v2787, 6.0
        %v2820 = vmin.f32 %v2788, 6.0
        %v2821 = vmin.f32 %v2789, 6.0
        %v2822 = vmin.f32 %v2790, 6.0
        %v2823 = vmin.f32 %v2791, 6.0
        %v2824 = vmin.f32 %v2792, 6.0
        %v2825 = vmin.f32 %v2793, 6.0
        %v2826 = vmin.f32 %v2794, 6.0
        %v2827 = vmin.f32 %v2795, 6.0
        %v2828 = vmin.f32 %v2796, 6.0
        %v2829 = vmin.f32 %v2797, 6.0
        %v2830 = vmin.f32 %v2798, 6.0
        %v2831 = vmin.f32 %v2799, 6.0
        %v2832 = vmin.f32 %v2800, 6.0
        %v2833 = vmin.f32 %v2801, 6.0
        %v2834 = vmin.f32 %v2802, 6.0
        %v2835 = vmin.f32 %v2803, 6.0
        %v2836 = vmin.f32 %v2804, 6.0
        %v2837 = vmin.f32 %v2805, 6.0
        %v2838 = vmin.f32 %v2806, 6.0
        %v2839 = vld [vmem:[%s11] sm:$0xff]
        %v2840 = vld [vmem:[%s11 + $0x8] sm:$0xff]
        %v2841 = vld [vmem:[%s11 + $0x10] sm:$0xff]
        %v2842 = vld [vmem:[%s11 + $0x18] sm:$0xff]
        %v2843 = vld [vmem:[%s13] sm:$0x1]
        %v2845 = vperm.slane %v2843, 0
        %v2848 = vsel %vm1922, %v2807, 0
        %v2851 = vsel %vm1922, %v2808, 0
        %v2854 = vsel %vm1922, %v2809, 0
        %v2857 = vsel %vm1922, %v2810, 0
        %v2860 = vsel %vm1922, %v2811, 0
        %v2863 = vsel %vm1922, %v2812, 0
        %v2866 = vsel %vm1922, %v2813, 0
        %v2869 = vsel %vm1922, %v2814, 0
        %v2872 = vsel %vm1922, %v2815, 0
        %v2875 = vsel %vm1922, %v2816, 0
        %v2878 = vsel %vm1922, %v2817, 0
        %v2881 = vsel %vm1922, %v2818, 0
        %v2884 = vsel %vm1922, %v2819, 0
        %v2887 = vsel %vm1922, %v2820, 0
        %v2890 = vsel %vm1922, %v2821, 0
        %v2893 = vsel %vm1922, %v2822, 0
        %v2896 = vsel %vm1922, %v2823, 0
        %v2899 = vsel %vm1922, %v2824, 0
        %v2902 = vsel %vm1922, %v2825, 0
        %v2905 = vsel %vm1922, %v2826, 0
        %v2908 = vsel %vm1922, %v2827, 0
        %v2911 = vsel %vm1922, %v2828, 0
        %v2914 = vsel %vm1922, %v2829, 0
        %v2917 = vsel %vm1922, %v2830, 0
        %v2920 = vsel %vm1922, %v2831, 0
        %v2923 = vsel %vm1922, %v2832, 0
        %v2926 = vsel %vm1922, %v2833, 0
        %v2929 = vsel %vm1922, %v2834, 0
        %v2932 = vsel %vm1922, %v2835, 0
        %v2935 = vsel %vm1922, %v2836, 0
        %v2938 = vsel %vm1922, %v2837, 0
        %v2941 = vsel %vm1922, %v2838, 0
        %2943 = vmatpush.msra.mxu0 0.0
        %2944 = vmatpush.msra.mxu0 0.0
        %2945 = vmatpush.msra.mxu0 0.0
        %2946 = vmatpush.msra.mxu0 0.0
        %2947 = vmatpush.msra.mxu0 0.0
        %2948 = vmatpush.msra.mxu0 0.0
        %2949 = vmatpush.msra.mxu0 0.0
        %2950 = vmatpush.msra.mxu0 0.0
        %2951 = vmatpush.msra.mxu0 0.0
        %2952 = vmatpush.msra.mxu0 0.0
        %2953 = vmatpush.msra.mxu0 0.0
        %2954 = vmatpush.msra.mxu0 0.0
        %2955 = vmatpush.msra.mxu0 %v2842
        %2956 = vmatpush.msra.mxu0 %v2841
        %2957 = vmatpush.msra.mxu0 %v2840
        %2958 = vmatpush.msra.mxu0 %v2839
        %2959 = vmatmul.f32.gmra.mxu0 %v2848
        %v2960 = vpop.f32.mrf.mxu0
        %v2961 = vadd.f32 %v2845, %v2960
        %2962 = vmatmul.f32.gmra.mxu0 %v2851
        %v2963 = vpop.f32.mrf.mxu0
        %v2964 = vadd.f32 %v2845, %v2963
        %2965 = vmatmul.f32.gmra.mxu0 %v2854
        %v2966 = vpop.f32.mrf.mxu0
        %v2967 = vadd.f32 %v2845, %v2966
        %2968 = vmatmul.f32.gmra.mxu0 %v2857
        %v2969 = vpop.f32.mrf.mxu0
        %v2970 = vadd.f32 %v2845, %v2969
        %2971 = vmatmul.f32.gmra.mxu0 %v2860
        %v2972 = vpop.f32.mrf.mxu0
        %v2973 = vadd.f32 %v2845, %v2972
        %2974 = vmatmul.f32.gmra.mxu0 %v2863
        %v2975 = vpop.f32.mrf.mxu0
        %v2976 = vadd.f32 %v2845, %v2975
        %2977 = vmatmul.f32.gmra.mxu0 %v2866
        %v2978 = vpop.f32.mrf.mxu0
        %v2979 = vadd.f32 %v2845, %v2978
        %2980 = vmatmul.f32.gmra.mxu0 %v2869
        %v2981 = vpop.f32.mrf.mxu0
        %v2982 = vadd.f32 %v2845, %v2981
        %2983 = vmatmul.f32.gmra.mxu0 %v2872
        %v2984 = vpop.f32.mrf.mxu0
        %v2985 = vadd.f32 %v2845, %v2984
        %2986 = vmatmul.f32.gmra.mxu0 %v2875
        %v2987 = vpop.f32.mrf.mxu0
        %v2988 = vadd.f32 %v2845, %v2987
        %2989 = vmatmul.f32.gmra.mxu0 %v2878
        %v2990 = vpop.f32.mrf.mxu0
        %v2991 = vadd.f32 %v2845, %v2990
        %2992 = vmatmul.f32.gmra.mxu0 %v2881
        %v2993 = vpop.f32.mrf.mxu0
        %v2994 = vadd.f32 %v2845, %v2993
        %2995 = vmatmul.f32.gmra.mxu0 %v2884
        %v2996 = vpop.f32.mrf.mxu0
        %v2997 = vadd.f32 %v2845, %v2996
        %2998 = vmatmul.f32.gmra.mxu0 %v2887
        %v2999 = vpop.f32.mrf.mxu0
        %v3000 = vadd.f32 %v2845, %v2999
        %3001 = vmatmul.f32.gmra.mxu0 %v2890
        %v3002 = vpop.f32.mrf.mxu0
        %v3003 = vadd.f32 %v2845, %v3002
        %3004 = vmatmul.f32.gmra.mxu0 %v2893
        %v3005 = vpop.f32.mrf.mxu0
        %v3006 = vadd.f32 %v2845, %v3005
        %3007 = vmatmul.f32.gmra.mxu0 %v2896
        %v3008 = vpop.f32.mrf.mxu0
        %v3009 = vadd.f32 %v2845, %v3008
        %3010 = vmatmul.f32.gmra.mxu0 %v2899
        %v3011 = vpop.f32.mrf.mxu0
        %v3012 = vadd.f32 %v2845, %v3011
        %3013 = vmatmul.f32.gmra.mxu0 %v2902
        %v3014 = vpop.f32.mrf.mxu0
        %v3015 = vadd.f32 %v2845, %v3014
        %3016 = vmatmul.f32.gmra.mxu0 %v2905
        %v3017 = vpop.f32.mrf.mxu0
        %v3018 = vadd.f32 %v2845, %v3017
        %3019 = vmatmul.f32.gmra.mxu0 %v2908
        %v3020 = vpop.f32.mrf.mxu0
        %v3021 = vadd.f32 %v2845, %v3020
        %3022 = vmatmul.f32.gmra.mxu0 %v2911
        %v3023 = vpop.f32.mrf.mxu0
        %v3024 = vadd.f32 %v2845, %v3023
        %3025 = vmatmul.f32.gmra.mxu0 %v2914
        %v3026 = vpop.f32.mrf.mxu0
        %v3027 = vadd.f32 %v2845, %v3026
        %3028 = vmatmul.f32.gmra.mxu0 %v2917
        %v3029 = vpop.f32.mrf.mxu0
        %v3030 = vadd.f32 %v2845, %v3029
        %3031 = vmatmul.f32.gmra.mxu0 %v2920
        %v3032 = vpop.f32.mrf.mxu0
        %v3033 = vadd.f32 %v2845, %v3032
        %3034 = vmatmul.f32.gmra.mxu0 %v2923
        %v3035 = vpop.f32.mrf.mxu0
        %v3036 = vadd.f32 %v2845, %v3035
        %3037 = vmatmul.f32.gmra.mxu0 %v2926
        %v3038 = vpop.f32.mrf.mxu0
        %v3039 = vadd.f32 %v2845, %v3038
        %3040 = vmatmul.f32.gmra.mxu0 %v2929
        %v3041 = vpop.f32.mrf.mxu0
        %v3042 = vadd.f32 %v2845, %v3041
        %3043 = vmatmul.f32.gmra.mxu0 %v2932
        %v3044 = vpop.f32.mrf.mxu0
        %v3045 = vadd.f32 %v2845, %v3044
        %3046 = vmatmul.f32.gmra.mxu0 %v2935
        %v3047 = vpop.f32.mrf.mxu0
        %v3048 = vadd.f32 %v2845, %v3047
        %3049 = vmatmul.f32.gmra.mxu0 %v2938
        %v3050 = vpop.f32.mrf.mxu0
        %v3051 = vadd.f32 %v2845, %v3050
        %3052 = vmatmul.f32.gmra.mxu0 %v2941
        %v3053 = vpop.f32.mrf.mxu0
        %v3054 = vadd.f32 %v2845, %v3053
        %3055 = vdwg.mxu0
        %vm3056 = vcmask 130048
        %3057 = vst.msk [vmem:[#allocation3] sm:$0xff] %vm3056, %v2961
        %3058 = vst.msk [vmem:[#allocation3 + $0x8] sm:$0xff] %vm3056, %v2964
        %3059 = vst.msk [vmem:[#allocation3 + $0x10] sm:$0xff] %vm3056, %v2967
        %3060 = vst.msk [vmem:[#allocation3 + $0x18] sm:$0xff] %vm3056, %v2970
        %3061 = vst.msk [vmem:[#allocation3 + $0x20] sm:$0xff] %vm3056, %v2973
        %3062 = vst.msk [vmem:[#allocation3 + $0x28] sm:$0xff] %vm3056, %v2976
        %3063 = vst.msk [vmem:[#allocation3 + $0x30] sm:$0xff] %vm3056, %v2979
        %3064 = vst.msk [vmem:[#allocation3 + $0x38] sm:$0xff] %vm3056, %v2982
        %3065 = vst.msk [vmem:[#allocation3 + $0x40] sm:$0xff] %vm3056, %v2985
        %3066 = vst.msk [vmem:[#allocation3 + $0x48] sm:$0xff] %vm3056, %v2988
        %3067 = vst.msk [vmem:[#allocation3 + $0x50] sm:$0xff] %vm3056, %v2991
        %3068 = vst.msk [vmem:[#allocation3 + $0x58] sm:$0xff] %vm3056, %v2994
        %3069 = vst.msk [vmem:[#allocation3 + $0x60] sm:$0xff] %vm3056, %v2997
        %3070 = vst.msk [vmem:[#allocation3 + $0x68] sm:$0xff] %vm3056, %v3000
        %3071 = vst.msk [vmem:[#allocation3 + $0x70] sm:$0xff] %vm3056, %v3003
        %3072 = vst.msk [vmem:[#allocation3 + $0x78] sm:$0xff] %vm3056, %v3006
        %3073 = vst.msk [vmem:[#allocation3 + $0x80] sm:$0xff] %vm3056, %v3009
        %3074 = vst.msk [vmem:[#allocation3 + $0x88] sm:$0xff] %vm3056, %v3012
        %3075 = vst.msk [vmem:[#allocation3 + $0x90] sm:$0xff] %vm3056, %v3015
        %3076 = vst.msk [vmem:[#allocation3 + $0x98] sm:$0xff] %vm3056, %v3018
        %3077 = vst.msk [vmem:[#allocation3 + $0xa0] sm:$0xff] %vm3056, %v3021
        %3078 = vst.msk [vmem:[#allocation3 + $0xa8] sm:$0xff] %vm3056, %v3024
        %3079 = vst.msk [vmem:[#allocation3 + $0xb0] sm:$0xff] %vm3056, %v3027
        %3080 = vst.msk [vmem:[#allocation3 + $0xb8] sm:$0xff] %vm3056, %v3030
        %3081 = vst.msk [vmem:[#allocation3 + $0xc0] sm:$0xff] %vm3056, %v3033
        %3082 = vst.msk [vmem:[#allocation3 + $0xc8] sm:$0xff] %vm3056, %v3036
        %3083 = vst.msk [vmem:[#allocation3 + $0xd0] sm:$0xff] %vm3056, %v3039
        %3084 = vst.msk [vmem:[#allocation3 + $0xd8] sm:$0xff] %vm3056, %v3042
        %3085 = vst.msk [vmem:[#allocation3 + $0xe0] sm:$0xff] %vm3056, %v3045
        %3086 = vst.msk [vmem:[#allocation3 + $0xe8] sm:$0xff] %vm3056, %v3048
        %3087 = vst.msk [vmem:[#allocation3 + $0xf0] sm:$0xff] %vm3056, %v3051
        %3088 = vst.msk [vmem:[#allocation3 + $0xf8] sm:$0xff] %vm3056, %v3054
        %v3089 = vld [vmem:[#allocation3] ss:$2 sm:$0xff]
        %s3090 = scalar_lea.vmem [#allocation3], 16
        %v3091 = vld [vmem:[%s3090] ss:$2 sm:$0xff]
        %s3092 = scalar_lea.vmem [#allocation3], 32
        %v3093 = vld [vmem:[%s3092] ss:$2 sm:$0xff]
        %s3094 = scalar_lea.vmem [#allocation3], 48
        %v3095 = vld [vmem:[%s3094] ss:$2 sm:$0xff]
        %s3096 = scalar_lea.vmem [#allocation3], 64
        %v3097 = vld [vmem:[%s3096] ss:$2 sm:$0xff]
        %s3098 = scalar_lea.vmem [#allocation3], 80
        %v3099 = vld [vmem:[%s3098] ss:$2 sm:$0xff]
        %s3100 = scalar_lea.vmem [#allocation3], 96
        %v3101 = vld [vmem:[%s3100] ss:$2 sm:$0xff]
        %s3102 = scalar_lea.vmem [#allocation3], 112
        %v3103 = vld [vmem:[%s3102] ss:$2 sm:$0xff]
        %s3104 = scalar_lea.vmem [#allocation3], 128
        %v3105 = vld [vmem:[%s3104] ss:$2 sm:$0xff]
        %s3106 = scalar_lea.vmem [#allocation3], 144
        %v3107 = vld [vmem:[%s3106] ss:$2 sm:$0xff]
        %s3108 = scalar_lea.vmem [#allocation3], 160
        %v3109 = vld [vmem:[%s3108] ss:$2 sm:$0xff]
        %s3110 = scalar_lea.vmem [#allocation3], 176
        %v3111 = vld [vmem:[%s3110] ss:$2 sm:$0xff]
        %s3112 = scalar_lea.vmem [#allocation3], 192
        %v3113 = vld [vmem:[%s3112] ss:$2 sm:$0xff]
        %s3114 = scalar_lea.vmem [#allocation3], 208
        %v3115 = vld [vmem:[%s3114] ss:$2 sm:$0xff]
        %s3116 = scalar_lea.vmem [#allocation3], 224
        %v3117 = vld [vmem:[%s3116] ss:$2 sm:$0xff]
        %s3118 = scalar_lea.vmem [#allocation3], 240
        %v3119 = vld [vmem:[%s3118] ss:$2 sm:$0xff]
        %s3120 = scalar_lea.vmem [#allocation3], 1
        %v3121 = vld [vmem:[%s3120] ss:$2 sm:$0xff]
        %s3122 = scalar_lea.vmem [#allocation3], 17
        %v3123 = vld [vmem:[%s3122] ss:$2 sm:$0xff]
        %s3124 = scalar_lea.vmem [#allocation3], 33
        %v3125 = vld [vmem:[%s3124] ss:$2 sm:$0xff]
        %s3126 = scalar_lea.vmem [#allocation3], 49
        %v3127 = vld [vmem:[%s3126] ss:$2 sm:$0xff]
        %s3128 = scalar_lea.vmem [#allocation3], 65
        %v3129 = vld [vmem:[%s3128] ss:$2 sm:$0xff]
        %s3130 = scalar_lea.vmem [#allocation3], 81
        %v3131 = vld [vmem:[%s3130] ss:$2 sm:$0xff]
        %s3132 = scalar_lea.vmem [#allocation3], 97
        %v3133 = vld [vmem:[%s3132] ss:$2 sm:$0xff]
        %s3134 = scalar_lea.vmem [#allocation3], 113
        %v3135 = vld [vmem:[%s3134] ss:$2 sm:$0xff]
        %s3136 = scalar_lea.vmem [#allocation3], 129
        %v3137 = vld [vmem:[%s3136] ss:$2 sm:$0xff]
        %s3138 = scalar_lea.vmem [#allocation3], 145
        %v3139 = vld [vmem:[%s3138] ss:$2 sm:$0xff]
        %s3140 = scalar_lea.vmem [#allocation3], 161
        %v3141 = vld [vmem:[%s3140] ss:$2 sm:$0xff]
        %s3142 = scalar_lea.vmem [#allocation3], 177
        %v3143 = vld [vmem:[%s3142] ss:$2 sm:$0xff]
        %s3144 = scalar_lea.vmem [#allocation3], 193
        %v3145 = vld [vmem:[%s3144] ss:$2 sm:$0xff]
        %s3146 = scalar_lea.vmem [#allocation3], 209
        %v3147 = vld [vmem:[%s3146] ss:$2 sm:$0xff]
        %s3148 = scalar_lea.vmem [#allocation3], 225
        %v3149 = vld [vmem:[%s3148] ss:$2 sm:$0xff]
        %s3150 = scalar_lea.vmem [#allocation3], 241
        %v3151 = vld [vmem:[%s3150] ss:$2 sm:$0xff]
        %v3152 = vld [vmem:[%s15] sm:$0xff]
        %v3153 = vld [vmem:[%s15 + $0x8] sm:$0xff]
        %v3154 = vld [vmem:[%s17] sm:$0x1]
        %v3156 = vperm.slane %v3154, 0
        %v3159 = vsel %vm3056, %v3089, 0
        %v3162 = vsel %vm3056, %v3091, 0
        %v3165 = vsel %vm3056, %v3093, 0
        %v3168 = vsel %vm3056, %v3095, 0
        %v3171 = vsel %vm3056, %v3097, 0
        %v3174 = vsel %vm3056, %v3099, 0
        %v3177 = vsel %vm3056, %v3101, 0
        %v3180 = vsel %vm3056, %v3103, 0
        %v3183 = vsel %vm3056, %v3105, 0
        %v3186 = vsel %vm3056, %v3107, 0
        %v3189 = vsel %vm3056, %v3109, 0
        %v3192 = vsel %vm3056, %v3111, 0
        %v3195 = vsel %vm3056, %v3113, 0
        %v3198 = vsel %vm3056, %v3115, 0
        %v3201 = vsel %vm3056, %v3117, 0
        %v3204 = vsel %vm3056, %v3119, 0
        %3206 = vmatpush.msra.mxu0 0.0
        %3207 = vmatpush.msra.mxu0 0.0
        %3208 = vmatpush.msra.mxu0 0.0
        %3209 = vmatpush.msra.mxu0 0.0
        %3210 = vmatpush.msra.mxu0 0.0
        %3211 = vmatpush.msra.mxu0 0.0
        %3212 = vmatpush.msra.mxu0 0.0
        %3213 = vmatpush.msra.mxu0 0.0
        %3214 = vmatpush.msra.mxu0 0.0
        %3215 = vmatpush.msra.mxu0 0.0
        %3216 = vmatpush.msra.mxu0 0.0
        %3217 = vmatpush.msra.mxu0 0.0
        %3218 = vmatpush.msra.mxu0 0.0
        %3219 = vmatpush.msra.mxu0 0.0
        %3220 = vmatpush.msra.mxu0 %v3153
        %3221 = vmatpush.msra.mxu0 %v3152
        %3222 = vmatmul.f32.gmra.mxu0 %v3159
        %v3223 = vpop.f32.mrf.mxu0
        %v3224 = vadd.f32 %v3156, %v3223
        %3225 = vmatmul.f32.gmra.mxu0 %v3162
        %v3226 = vpop.f32.mrf.mxu0
        %v3227 = vadd.f32 %v3156, %v3226
        %3228 = vmatmul.f32.gmra.mxu0 %v3165
        %v3229 = vpop.f32.mrf.mxu0
        %v3230 = vadd.f32 %v3156, %v3229
        %3231 = vmatmul.f32.gmra.mxu0 %v3168
        %v3232 = vpop.f32.mrf.mxu0
        %v3233 = vadd.f32 %v3156, %v3232
        %3234 = vmatmul.f32.gmra.mxu0 %v3171
        %v3235 = vpop.f32.mrf.mxu0
        %v3236 = vadd.f32 %v3156, %v3235
        %3237 = vmatmul.f32.gmra.mxu0 %v3174
        %v3238 = vpop.f32.mrf.mxu0
        %v3239 = vadd.f32 %v3156, %v3238
        %3240 = vmatmul.f32.gmra.mxu0 %v3177
        %v3241 = vpop.f32.mrf.mxu0
        %v3242 = vadd.f32 %v3156, %v3241
        %3243 = vmatmul.f32.gmra.mxu0 %v3180
        %v3244 = vpop.f32.mrf.mxu0
        %v3245 = vadd.f32 %v3156, %v3244
        %3246 = vmatmul.f32.gmra.mxu0 %v3183
        %v3247 = vpop.f32.mrf.mxu0
        %v3248 = vadd.f32 %v3156, %v3247
        %3249 = vmatmul.f32.gmra.mxu0 %v3186
        %v3250 = vpop.f32.mrf.mxu0
        %v3251 = vadd.f32 %v3156, %v3250
        %3252 = vmatmul.f32.gmra.mxu0 %v3189
        %v3253 = vpop.f32.mrf.mxu0
        %v3254 = vadd.f32 %v3156, %v3253
        %3255 = vmatmul.f32.gmra.mxu0 %v3192
        %v3256 = vpop.f32.mrf.mxu0
        %v3257 = vadd.f32 %v3156, %v3256
        %3258 = vmatmul.f32.gmra.mxu0 %v3195
        %v3259 = vpop.f32.mrf.mxu0
        %v3260 = vadd.f32 %v3156, %v3259
        %3261 = vmatmul.f32.gmra.mxu0 %v3198
        %v3262 = vpop.f32.mrf.mxu0
        %v3263 = vadd.f32 %v3156, %v3262
        %3264 = vmatmul.f32.gmra.mxu0 %v3201
        %v3265 = vpop.f32.mrf.mxu0
        %v3266 = vadd.f32 %v3156, %v3265
        %3267 = vmatmul.f32.gmra.mxu0 %v3204
        %v3268 = vpop.f32.mrf.mxu0
        %v3269 = vadd.f32 %v3156, %v3268
        %3270 = vdwg.mxu0
        %v3271 = vmax.f32 %v3224, 0.0
        %v3272 = vmax.f32 %v3227, 0.0
        %v3273 = vmax.f32 %v3230, 0.0
        %v3274 = vmax.f32 %v3233, 0.0
        %v3275 = vmax.f32 %v3236, 0.0
        %v3276 = vmax.f32 %v3239, 0.0
        %v3277 = vmax.f32 %v3242, 0.0
        %v3278 = vmax.f32 %v3245, 0.0
        %v3279 = vmax.f32 %v3248, 0.0
        %v3280 = vmax.f32 %v3251, 0.0
        %v3281 = vmax.f32 %v3254, 0.0
        %v3282 = vmax.f32 %v3257, 0.0
        %v3283 = vmax.f32 %v3260, 0.0
        %v3284 = vmax.f32 %v3263, 0.0
        %v3285 = vmax.f32 %v3266, 0.0
        %v3286 = vmax.f32 %v3269, 0.0
        %v3287 = vmin.f32 %v3271, 6.0
        %v3288 = vmin.f32 %v3272, 6.0
        %v3289 = vmin.f32 %v3273, 6.0
        %v3290 = vmin.f32 %v3274, 6.0
        %v3291 = vmin.f32 %v3275, 6.0
        %v3292 = vmin.f32 %v3276, 6.0
        %v3293 = vmin.f32 %v3277, 6.0
        %v3294 = vmin.f32 %v3278, 6.0
        %v3295 = vmin.f32 %v3279, 6.0
        %v3296 = vmin.f32 %v3280, 6.0
        %v3297 = vmin.f32 %v3281, 6.0
        %v3298 = vmin.f32 %v3282, 6.0
        %v3299 = vmin.f32 %v3283, 6.0
        %v3300 = vmin.f32 %v3284, 6.0
        %v3301 = vmin.f32 %v3285, 6.0
        %v3302 = vmin.f32 %v3286, 6.0
        %v3304 = vsel %vm3056, %v3121, 0
        %v3307 = vsel %vm3056, %v3123, 0
        %v3310 = vsel %vm3056, %v3125, 0
        %v3313 = vsel %vm3056, %v3127, 0
        %v3316 = vsel %vm3056, %v3129, 0
        %v3319 = vsel %vm3056, %v3131, 0
        %v3322 = vsel %vm3056, %v3133, 0
        %v3325 = vsel %vm3056, %v3135, 0
        %v3328 = vsel %vm3056, %v3137, 0
        %v3331 = vsel %vm3056, %v3139, 0
        %v3334 = vsel %vm3056, %v3141, 0
        %v3337 = vsel %vm3056, %v3143, 0
        %v3340 = vsel %vm3056, %v3145, 0
        %v3343 = vsel %vm3056, %v3147, 0
        %v3346 = vsel %vm3056, %v3149, 0
        %v3349 = vsel %vm3056, %v3151, 0
        %3351 = vmatpush.msra.mxu0 0.0
        %3352 = vmatpush.msra.mxu0 0.0
        %3353 = vmatpush.msra.mxu0 0.0
        %3354 = vmatpush.msra.mxu0 0.0
        %3355 = vmatpush.msra.mxu0 0.0
        %3356 = vmatpush.msra.mxu0 0.0
        %3357 = vmatpush.msra.mxu0 0.0
        %3358 = vmatpush.msra.mxu0 0.0
        %3359 = vmatpush.msra.mxu0 0.0
        %3360 = vmatpush.msra.mxu0 0.0
        %3361 = vmatpush.msra.mxu0 0.0
        %3362 = vmatpush.msra.mxu0 0.0
        %3363 = vmatpush.msra.mxu0 0.0
        %3364 = vmatpush.msra.mxu0 0.0
        %3365 = vmatpush.msra.mxu0 %v3153
        %3366 = vmatpush.msra.mxu0 %v3152
        %3367 = vmatmul.f32.gmra.mxu0 %v3304
        %v3368 = vpop.f32.mrf.mxu0
        %v3369 = vadd.f32 %v3156, %v3368
        %3370 = vmatmul.f32.gmra.mxu0 %v3307
        %v3371 = vpop.f32.mrf.mxu0
        %v3372 = vadd.f32 %v3156, %v3371
        %3373 = vmatmul.f32.gmra.mxu0 %v3310
        %v3374 = vpop.f32.mrf.mxu0
        %v3375 = vadd.f32 %v3156, %v3374
        %3376 = vmatmul.f32.gmra.mxu0 %v3313
        %v3377 = vpop.f32.mrf.mxu0
        %v3378 = vadd.f32 %v3156, %v3377
        %3379 = vmatmul.f32.gmra.mxu0 %v3316
        %v3380 = vpop.f32.mrf.mxu0
        %v3381 = vadd.f32 %v3156, %v3380
        %3382 = vmatmul.f32.gmra.mxu0 %v3319
        %v3383 = vpop.f32.mrf.mxu0
        %v3384 = vadd.f32 %v3156, %v3383
        %3385 = vmatmul.f32.gmra.mxu0 %v3322
        %v3386 = vpop.f32.mrf.mxu0
        %v3387 = vadd.f32 %v3156, %v3386
        %3388 = vmatmul.f32.gmra.mxu0 %v3325
        %v3389 = vpop.f32.mrf.mxu0
        %v3390 = vadd.f32 %v3156, %v3389
        %3391 = vmatmul.f32.gmra.mxu0 %v3328
        %v3392 = vpop.f32.mrf.mxu0
        %v3393 = vadd.f32 %v3156, %v3392
        %3394 = vmatmul.f32.gmra.mxu0 %v3331
        %v3395 = vpop.f32.mrf.mxu0
        %v3396 = vadd.f32 %v3156, %v3395
        %3397 = vmatmul.f32.gmra.mxu0 %v3334
        %v3398 = vpop.f32.mrf.mxu0
        %v3399 = vadd.f32 %v3156, %v3398
        %3400 = vmatmul.f32.gmra.mxu0 %v3337
        %v3401 = vpop.f32.mrf.mxu0
        %v3402 = vadd.f32 %v3156, %v3401
        %3403 = vmatmul.f32.gmra.mxu0 %v3340
        %v3404 = vpop.f32.mrf.mxu0
        %v3405 = vadd.f32 %v3156, %v3404
        %3406 = vmatmul.f32.gmra.mxu0 %v3343
        %v3407 = vpop.f32.mrf.mxu0
        %v3408 = vadd.f32 %v3156, %v3407
        %3409 = vmatmul.f32.gmra.mxu0 %v3346
        %v3410 = vpop.f32.mrf.mxu0
        %v3411 = vadd.f32 %v3156, %v3410
        %3412 = vmatmul.f32.gmra.mxu0 %v3349
        %v3413 = vpop.f32.mrf.mxu0
        %v3414 = vadd.f32 %v3156, %v3413
        %3415 = vdwg.mxu0
        %v3416 = vmax.f32 %v3369, 0.0
        %v3417 = vmax.f32 %v3372, 0.0
        %v3418 = vmax.f32 %v3375, 0.0
        %v3419 = vmax.f32 %v3378, 0.0
        %v3420 = vmax.f32 %v3381, 0.0
        %v3421 = vmax.f32 %v3384, 0.0
        %v3422 = vmax.f32 %v3387, 0.0
        %v3423 = vmax.f32 %v3390, 0.0
        %v3424 = vmax.f32 %v3393, 0.0
        %v3425 = vmax.f32 %v3396, 0.0
        %v3426 = vmax.f32 %v3399, 0.0
        %v3427 = vmax.f32 %v3402, 0.0
        %v3428 = vmax.f32 %v3405, 0.0
        %v3429 = vmax.f32 %v3408, 0.0
        %v3430 = vmax.f32 %v3411, 0.0
        %v3431 = vmax.f32 %v3414, 0.0
        %v3432 = vmin.f32 %v3416, 6.0
        %v3433 = vmin.f32 %v3417, 6.0
        %v3434 = vmin.f32 %v3418, 6.0
        %v3435 = vmin.f32 %v3419, 6.0
        %v3436 = vmin.f32 %v3420, 6.0
        %v3437 = vmin.f32 %v3421, 6.0
        %v3438 = vmin.f32 %v3422, 6.0
        %v3439 = vmin.f32 %v3423, 6.0
        %v3440 = vmin.f32 %v3424, 6.0
        %v3441 = vmin.f32 %v3425, 6.0
        %v3442 = vmin.f32 %v3426, 6.0
        %v3443 = vmin.f32 %v3427, 6.0
        %v3444 = vmin.f32 %v3428, 6.0
        %v3445 = vmin.f32 %v3429, 6.0
        %v3446 = vmin.f32 %v3430, 6.0
        %v3447 = vmin.f32 %v3431, 6.0
        %vm3448 = vcmask 785408
        %3449 = vst.msk [vmem:[#allocation4] sm:$0xff] %vm3448, 0.0
        %vm3450 = vcmask 778240
        %3451 = vst.msk [vmem:[#allocation4 + $0x8] sm:$0x1] %vm3450, 0.0
        %3452 = vst.msk [vmem:[#allocation4 + $0x10] sm:$0xff] %vm3448, 0.0
        %3453 = vst.msk [vmem:[#allocation4 + $0x18] sm:$0x1] %vm3450, 0.0
        %3454 = vst.msk [vmem:[#allocation4 + $0x20] sm:$0xff] %vm3448, 0.0
        %3455 = vst.msk [vmem:[#allocation4 + $0x28] sm:$0x1] %vm3450, 0.0
        %3456 = vst.msk [vmem:[#allocation4 + $0x30] sm:$0xff] %vm3448, 0.0
        %3457 = vst.msk [vmem:[#allocation4 + $0x38] sm:$0x1] %vm3450, 0.0
        %3458 = vst.msk [vmem:[#allocation4 + $0x40] sm:$0xff] %vm3448, 0.0
        %3459 = vst.msk [vmem:[#allocation4 + $0x48] sm:$0x1] %vm3450, 0.0
        %3460 = vst.msk [vmem:[#allocation4 + $0x50] sm:$0xff] %vm3448, 0.0
        %3461 = vst.msk [vmem:[#allocation4 + $0x58] sm:$0x1] %vm3450, 0.0
        %3462 = vst.msk [vmem:[#allocation4 + $0x60] sm:$0xff] %vm3448, 0.0
        %3463 = vst.msk [vmem:[#allocation4 + $0x68] sm:$0x1] %vm3450, 0.0
        %3464 = vst.msk [vmem:[#allocation4 + $0x70] sm:$0xff] %vm3448, 0.0
        %3465 = vst.msk [vmem:[#allocation4 + $0x78] sm:$0x1] %vm3450, 0.0
        %3466 = vst.msk [vmem:[#allocation4 + $0x80] sm:$0xff] %vm3448, 0.0
        %3467 = vst.msk [vmem:[#allocation4 + $0x88] sm:$0x1] %vm3450, 0.0
        %3468 = vst.msk [vmem:[#allocation4 + $0x90] sm:$0xff] %vm3448, 0.0
        %3469 = vst.msk [vmem:[#allocation4 + $0x98] sm:$0x1] %vm3450, 0.0
        %3470 = vst.msk [vmem:[#allocation4 + $0xa0] sm:$0xff] %vm3448, 0.0
        %3471 = vst.msk [vmem:[#allocation4 + $0xa8] sm:$0x1] %vm3450, 0.0
        %3472 = vst.msk [vmem:[#allocation4 + $0xb0] sm:$0xff] %vm3448, 0.0
        %3473 = vst.msk [vmem:[#allocation4 + $0xb8] sm:$0x1] %vm3450, 0.0
        %3474 = vst.msk [vmem:[#allocation4 + $0xc0] sm:$0xff] %vm3448, 0.0
        %3475 = vst.msk [vmem:[#allocation4 + $0xc8] sm:$0x1] %vm3450, 0.0
        %3476 = vst.msk [vmem:[#allocation4 + $0xd0] sm:$0xff] %vm3448, 0.0
        %3477 = vst.msk [vmem:[#allocation4 + $0xd8] sm:$0x1] %vm3450, 0.0
        %3478 = vst.msk [vmem:[#allocation4 + $0xe0] sm:$0xff] %vm3448, 0.0
        %3479 = vst.msk [vmem:[#allocation4 + $0xe8] sm:$0x1] %vm3450, 0.0
        %3480 = vst.msk [vmem:[#allocation4 + $0xf0] sm:$0xff] %vm3448, 0.0
        %3481 = vst.msk [vmem:[#allocation4 + $0xf8] sm:$0x1] %vm3450, 0.0
        %3482 = vst.msk [vmem:[#allocation4 + $0x100] sm:$0xff] %vm3448, 0.0
        %3483 = vst.msk [vmem:[#allocation4 + $0x108] sm:$0x1] %vm3450, 0.0
        %3484 = vst.msk [vmem:[#allocation4 + $0x110] sm:$0xff] %vm3448, 0.0
        %3485 = vst.msk [vmem:[#allocation4 + $0x118] sm:$0x1] %vm3450, 0.0
        %3486 = vst.msk [vmem:[#allocation4 + $0x120] sm:$0xff] %vm3448, 0.0
        %3487 = vst.msk [vmem:[#allocation4 + $0x128] sm:$0x1] %vm3450, 0.0
        %3488 = vst.msk [vmem:[#allocation4 + $0x130] sm:$0xff] %vm3448, 0.0
        %3489 = vst.msk [vmem:[#allocation4 + $0x138] sm:$0x1] %vm3450, 0.0
        %3490 = vst.msk [vmem:[#allocation4 + $0x140] sm:$0xff] %vm3448, 0.0
        %3491 = vst.msk [vmem:[#allocation4 + $0x148] sm:$0x1] %vm3450, 0.0
        %3492 = vst.msk [vmem:[#allocation4 + $0x150] sm:$0xff] %vm3448, 0.0
        %3493 = vst.msk [vmem:[#allocation4 + $0x158] sm:$0x1] %vm3450, 0.0
        %3494 = vst.msk [vmem:[#allocation4 + $0x160] sm:$0xff] %vm3448, 0.0
        %3495 = vst.msk [vmem:[#allocation4 + $0x168] sm:$0x1] %vm3450, 0.0
        %3496 = vst.msk [vmem:[#allocation4 + $0x170] sm:$0xff] %vm3448, 0.0
        %3497 = vst.msk [vmem:[#allocation4 + $0x178] sm:$0x1] %vm3450, 0.0
        %3498 = vst.msk [vmem:[#allocation4 + $0x180] sm:$0xff] %vm3448, 0.0
        %3499 = vst.msk [vmem:[#allocation4 + $0x188] sm:$0x1] %vm3450, 0.0
        %3500 = vst.msk [vmem:[#allocation4 + $0x190] sm:$0xff] %vm3448, 0.0
        %3501 = vst.msk [vmem:[#allocation4 + $0x198] sm:$0x1] %vm3450, 0.0
        %3502 = vst.msk [vmem:[#allocation4 + $0x1a0] sm:$0xff] %vm3448, 0.0
        %3503 = vst.msk [vmem:[#allocation4 + $0x1a8] sm:$0x1] %vm3450, 0.0
        %3504 = vst.msk [vmem:[#allocation4 + $0x1b0] sm:$0xff] %vm3448, 0.0
        %3505 = vst.msk [vmem:[#allocation4 + $0x1b8] sm:$0x1] %vm3450, 0.0
        %3506 = vst.msk [vmem:[#allocation4 + $0x1c0] sm:$0xff] %vm3448, 0.0
        %3507 = vst.msk [vmem:[#allocation4 + $0x1c8] sm:$0x1] %vm3450, 0.0
        %3508 = vst.msk [vmem:[#allocation4 + $0x1d0] sm:$0xff] %vm3448, 0.0
        %3509 = vst.msk [vmem:[#allocation4 + $0x1d8] sm:$0x1] %vm3450, 0.0
        %3510 = vst.msk [vmem:[#allocation4 + $0x1e0] sm:$0xff] %vm3448, 0.0
        %3511 = vst.msk [vmem:[#allocation4 + $0x1e8] sm:$0x1] %vm3450, 0.0
        %3512 = vst.msk [vmem:[#allocation4 + $0x1f0] sm:$0xff] %vm3448, 0.0
        %3513 = vst.msk [vmem:[#allocation4 + $0x1f8] sm:$0x1] %vm3450, 0.0
        %3514 = vst.msk [vmem:[#allocation4 + $0x200] sm:$0xff] %vm3448, 0.0
        %3515 = vst.msk [vmem:[#allocation4 + $0x208] sm:$0x1] %vm3450, 0.0
        %3516 = vst.msk [vmem:[#allocation4 + $0x210] sm:$0xff] %vm3448, 0.0
        %3517 = vst.msk [vmem:[#allocation4 + $0x218] sm:$0x1] %vm3450, 0.0
        %3518 = vst.msk [vmem:[#allocation4 + $0x220] sm:$0xff] %vm3448, 0.0
        %3519 = vst.msk [vmem:[#allocation4 + $0x228] sm:$0x1] %vm3450, 0.0
        %3520 = vst.msk [vmem:[#allocation4 + $0x230] sm:$0xff] %vm3448, 0.0
        %3521 = vst.msk [vmem:[#allocation4 + $0x238] sm:$0x1] %vm3450, 0.0
        %s3522 = scalar_lea.vmem [#allocation4], 304
        %3523 = vst.msk [vmem:[%s3522] sm:$0xff] %vm3448, %v3287
        %3524 = vst.msk [vmem:[%s3522 + $0x10] sm:$0xff] %vm3448, %v3288
        %3525 = vst.msk [vmem:[%s3522 + $0x20] sm:$0xff] %vm3448, %v3289
        %3526 = vst.msk [vmem:[%s3522 + $0x30] sm:$0xff] %vm3448, %v3290
        %3527 = vst.msk [vmem:[%s3522 + $0x40] sm:$0xff] %vm3448, %v3291
        %3528 = vst.msk [vmem:[%s3522 + $0x50] sm:$0xff] %vm3448, %v3292
        %3529 = vst.msk [vmem:[%s3522 + $0x60] sm:$0xff] %vm3448, %v3293
        %3530 = vst.msk [vmem:[%s3522 + $0x70] sm:$0xff] %vm3448, %v3294
        %3531 = vst.msk [vmem:[%s3522 + $0x80] sm:$0xff] %vm3448, %v3295
        %3532 = vst.msk [vmem:[%s3522 + $0x90] sm:$0xff] %vm3448, %v3296
        %3533 = vst.msk [vmem:[%s3522 + $0xa0] sm:$0xff] %vm3448, %v3297
        %3534 = vst.msk [vmem:[%s3522 + $0xb0] sm:$0xff] %vm3448, %v3298
        %3535 = vst.msk [vmem:[%s3522 + $0xc0] sm:$0xff] %vm3448, %v3299
        %3536 = vst.msk [vmem:[%s3522 + $0xd0] sm:$0xff] %vm3448, %v3300
        %3537 = vst.msk [vmem:[%s3522 + $0xe0] sm:$0xff] %vm3448, %v3301
        %3538 = vst.msk [vmem:[%s3522 + $0xf0] sm:$0xff] %vm3448, %v3302
        %s3539 = scalar_lea.vmem [#allocation4], 16
        %3540 = vst.msk [vmem:[%s3539 + $0x1] sm:$0xff] %vm3448, %v3432
        %3541 = vst.msk [vmem:[%s3539 + $0x11] sm:$0xff] %vm3448, %v3433
        %3542 = vst.msk [vmem:[%s3539 + $0x21] sm:$0xff] %vm3448, %v3434
        %3543 = vst.msk [vmem:[%s3539 + $0x31] sm:$0xff] %vm3448, %v3435
        %3544 = vst.msk [vmem:[%s3539 + $0x41] sm:$0xff] %vm3448, %v3436
        %3545 = vst.msk [vmem:[%s3539 + $0x51] sm:$0xff] %vm3448, %v3437
        %3546 = vst.msk [vmem:[%s3539 + $0x61] sm:$0xff] %vm3448, %v3438
        %3547 = vst.msk [vmem:[%s3539 + $0x71] sm:$0xff] %vm3448, %v3439
        %3548 = vst.msk [vmem:[%s3539 + $0x81] sm:$0xff] %vm3448, %v3440
        %3549 = vst.msk [vmem:[%s3539 + $0x91] sm:$0xff] %vm3448, %v3441
        %3550 = vst.msk [vmem:[%s3539 + $0xa1] sm:$0xff] %vm3448, %v3442
        %3551 = vst.msk [vmem:[%s3539 + $0xb1] sm:$0xff] %vm3448, %v3443
        %3552 = vst.msk [vmem:[%s3539 + $0xc1] sm:$0xff] %vm3448, %v3444
        %3553 = vst.msk [vmem:[%s3539 + $0xd1] sm:$0xff] %vm3448, %v3445
        %3554 = vst.msk [vmem:[%s3539 + $0xe1] sm:$0xff] %vm3448, %v3446
        %3555 = vst.msk [vmem:[%s3539 + $0xf1] sm:$0xff] %vm3448, %v3447
        %v3556 = vld [vmem:[#allocation4] sm:$0xff]
        %v3557 = vld [vmem:[#allocation4 + $0x8] sm:$0x1]
        %v3558 = vld [vmem:[#allocation4 + $0x10] sm:$0xff]
        %v3559 = vld [vmem:[#allocation4 + $0x18] sm:$0x1]
        %v3560 = vld [vmem:[#allocation4 + $0x20] sm:$0xff]
        %v3561 = vld [vmem:[#allocation4 + $0x28] sm:$0x1]
        %v3562 = vld [vmem:[#allocation4 + $0x30] sm:$0xff]
        %v3563 = vld [vmem:[#allocation4 + $0x38] sm:$0x1]
        %v3564 = vld [vmem:[#allocation4 + $0x40] sm:$0xff]
        %v3565 = vld [vmem:[#allocation4 + $0x48] sm:$0x1]
        %v3566 = vld [vmem:[#allocation4 + $0x50] sm:$0xff]
        %v3567 = vld [vmem:[#allocation4 + $0x58] sm:$0x1]
        %v3568 = vld [vmem:[#allocation4 + $0x60] sm:$0xff]
        %v3569 = vld [vmem:[#allocation4 + $0x68] sm:$0x1]
        %v3570 = vld [vmem:[#allocation4 + $0x70] sm:$0xff]
        %v3571 = vld [vmem:[#allocation4 + $0x78] sm:$0x1]
        %v3572 = vld [vmem:[#allocation4 + $0x80] sm:$0xff]
        %v3573 = vld [vmem:[#allocation4 + $0x88] sm:$0x1]
        %v3574 = vld [vmem:[#allocation4 + $0x90] sm:$0xff]
        %v3575 = vld [vmem:[#allocation4 + $0x98] sm:$0x1]
        %v3576 = vld [vmem:[#allocation4 + $0xa0] sm:$0xff]
        %v3577 = vld [vmem:[#allocation4 + $0xa8] sm:$0x1]
        %v3578 = vld [vmem:[#allocation4 + $0xb0] sm:$0xff]
        %v3579 = vld [vmem:[#allocation4 + $0xb8] sm:$0x1]
        %v3580 = vld [vmem:[#allocation4 + $0xc0] sm:$0xff]
        %v3581 = vld [vmem:[#allocation4 + $0xc8] sm:$0x1]
        %v3582 = vld [vmem:[#allocation4 + $0xd0] sm:$0xff]
        %v3583 = vld [vmem:[#allocation4 + $0xd8] sm:$0x1]
        %v3584 = vld [vmem:[#allocation4 + $0xe0] sm:$0xff]
        %v3585 = vld [vmem:[#allocation4 + $0xe8] sm:$0x1]
        %v3586 = vld [vmem:[#allocation4 + $0xf0] sm:$0xff]
        %v3587 = vld [vmem:[#allocation4 + $0xf8] sm:$0x1]
        %v3588 = vld [vmem:[#allocation4 + $0x100] sm:$0xff]
        %v3589 = vld [vmem:[#allocation4 + $0x108] sm:$0x1]
        %s3590 = scalar_lea.vmem [#allocation4], 288
        %v3591 = vld [vmem:[%s3590] sm:$0xff]
        %v3592 = vld [vmem:[%s3590 + $0x10] sm:$0xff]
        %v3593 = vld [vmem:[%s3590 + $0x20] sm:$0xff]
        %v3594 = vld [vmem:[%s3590 + $0x30] sm:$0xff]
        %v3595 = vld [vmem:[%s3590 + $0x40] sm:$0xff]
        %v3596 = vld [vmem:[%s3590 + $0x50] sm:$0xff]
        %v3597 = vld [vmem:[%s3590 + $0x60] sm:$0xff]
        %v3598 = vld [vmem:[%s3590 + $0x70] sm:$0xff]
        %v3599 = vld [vmem:[%s3590 + $0x80] sm:$0xff]
        %v3600 = vld [vmem:[%s3590 + $0x90] sm:$0xff]
        %v3601 = vld [vmem:[%s3590 + $0xa0] sm:$0xff]
        %v3602 = vld [vmem:[%s3590 + $0xb0] sm:$0xff]
        %v3603 = vld [vmem:[%s3590 + $0xc0] sm:$0xff]
        %v3604 = vld [vmem:[%s3590 + $0xd0] sm:$0xff]
        %v3605 = vld [vmem:[%s3590 + $0xe0] sm:$0xff]
        %v3606 = vld [vmem:[%s3590 + $0xf0] sm:$0xff]
        %v3607 = vld [vmem:[%s3590 + $0x100] sm:$0xff]
        %v3608 = vld [vmem:[%s19] sm:$0x1]
        %v3610 = vperm.slane %v3608, 0
        %v3612 = vmul.f32 %v3556, %v3610
        %v3613 = vmul.f32 %v3560, %v3610
        %v3614 = vmul.f32 %v3564, %v3610
        %v3615 = vmul.f32 %v3568, %v3610
        %v3616 = vmul.f32 %v3572, %v3610
        %v3617 = vmul.f32 %v3576, %v3610
        %v3618 = vmul.f32 %v3580, %v3610
        %v3619 = vmul.f32 %v3584, %v3610
        %v3620 = vadd.f32 %v3612, 0.0
        %v3621 = vadd.f32 %v3613, 0.0
        %v3622 = vadd.f32 %v3614, 0.0
        %v3623 = vadd.f32 %v3615, 0.0
        %v3624 = vadd.f32 %v3616, 0.0
        %v3625 = vadd.f32 %v3617, 0.0
        %v3626 = vadd.f32 %v3618, 0.0
        %v3627 = vadd.f32 %v3619, 0.0
        %s3628 = scalar_lea.vmem %s19, 3
        %v3629 = vld [vmem:[%s3628] sm:$0x1]
        %v3631 = vperm.slane %v3629, 0
        %v3633 = vmul.f32 %v3558, %v3631
        %v3634 = vmul.f32 %v3562, %v3631
        %v3635 = vmul.f32 %v3566, %v3631
        %v3636 = vmul.f32 %v3570, %v3631
        %v3637 = vmul.f32 %v3574, %v3631
        %v3638 = vmul.f32 %v3578, %v3631
        %v3639 = vmul.f32 %v3582, %v3631
        %v3640 = vmul.f32 %v3586, %v3631
        %v3641 = vadd.f32 %v3620, %v3633
        %v3642 = vadd.f32 %v3621, %v3634
        %v3643 = vadd.f32 %v3622, %v3635
        %v3644 = vadd.f32 %v3623, %v3636
        %v3645 = vadd.f32 %v3624, %v3637
        %v3646 = vadd.f32 %v3625, %v3638
        %v3647 = vadd.f32 %v3626, %v3639
        %v3648 = vadd.f32 %v3627, %v3640
        %s3649 = scalar_lea.vmem %s19, 6
        %v3650 = vld [vmem:[%s3649] sm:$0x1]
        %v3652 = vperm.slane %v3650, 0
        %v3654 = vmul.f32 %v3560, %v3652
        %v3655 = vmul.f32 %v3564, %v3652
        %v3656 = vmul.f32 %v3568, %v3652
        %v3657 = vmul.f32 %v3572, %v3652
        %v3658 = vmul.f32 %v3576, %v3652
        %v3659 = vmul.f32 %v3580, %v3652
        %v3660 = vmul.f32 %v3584, %v3652
        %v3661 = vmul.f32 %v3588, %v3652
        %v3662 = vadd.f32 %v3641, %v3654
        %v3663 = vadd.f32 %v3642, %v3655
        %v3664 = vadd.f32 %v3643, %v3656
        %v3665 = vadd.f32 %v3644, %v3657
        %v3666 = vadd.f32 %v3645, %v3658
        %v3667 = vadd.f32 %v3646, %v3659
        %v3668 = vadd.f32 %v3647, %v3660
        %v3669 = vadd.f32 %v3648, %v3661
        %s3670 = scalar_lea.vmem %s19, 1
        %v3671 = vld [vmem:[%s3670] sm:$0x1]
        %v3673 = vperm.slane %v3671, 0
        %v3675 = vmul.f32 %v3591, %v3673
        %v3676 = vmul.f32 %v3593, %v3673
        %v3677 = vmul.f32 %v3595, %v3673
        %v3678 = vmul.f32 %v3597, %v3673
        %v3679 = vmul.f32 %v3599, %v3673
        %v3680 = vmul.f32 %v3601, %v3673
        %v3681 = vmul.f32 %v3603, %v3673
        %v3682 = vmul.f32 %v3605, %v3673
        %v3683 = vadd.f32 %v3662, %v3675
        %v3684 = vadd.f32 %v3663, %v3676
        %v3685 = vadd.f32 %v3664, %v3677
        %v3686 = vadd.f32 %v3665, %v3678
        %v3687 = vadd.f32 %v3666, %v3679
        %v3688 = vadd.f32 %v3667, %v3680
        %v3689 = vadd.f32 %v3668, %v3681
        %v3690 = vadd.f32 %v3669, %v3682
        %s3691 = scalar_lea.vmem %s19, 4
        %v3692 = vld [vmem:[%s3691] sm:$0x1]
        %v3694 = vperm.slane %v3692, 0
        %v3696 = vmul.f32 %v3592, %v3694
        %v3697 = vmul.f32 %v3594, %v3694
        %v3698 = vmul.f32 %v3596, %v3694
        %v3699 = vmul.f32 %v3598, %v3694
        %v3700 = vmul.f32 %v3600, %v3694
        %v3701 = vmul.f32 %v3602, %v3694
        %v3702 = vmul.f32 %v3604, %v3694
        %v3703 = vmul.f32 %v3606, %v3694
        %v3704 = vadd.f32 %v3683, %v3696
        %v3705 = vadd.f32 %v3684, %v3697
        %v3706 = vadd.f32 %v3685, %v3698
        %v3707 = vadd.f32 %v3686, %v3699
        %v3708 = vadd.f32 %v3687, %v3700
        %v3709 = vadd.f32 %v3688, %v3701
        %v3710 = vadd.f32 %v3689, %v3702
        %v3711 = vadd.f32 %v3690, %v3703
        %s3712 = scalar_lea.vmem %s19, 7
        %v3713 = vld [vmem:[%s3712] sm:$0x1]
        %v3715 = vperm.slane %v3713, 0
        %v3717 = vmul.f32 %v3593, %v3715
        %v3718 = vmul.f32 %v3595, %v3715
        %v3719 = vmul.f32 %v3597, %v3715
        %v3720 = vmul.f32 %v3599, %v3715
        %v3721 = vmul.f32 %v3601, %v3715
        %v3722 = vmul.f32 %v3603, %v3715
        %v3723 = vmul.f32 %v3605, %v3715
        %v3724 = vmul.f32 %v3607, %v3715
        %v3725 = vadd.f32 %v3704, %v3717
        %v3726 = vadd.f32 %v3705, %v3718
        %v3727 = vadd.f32 %v3706, %v3719
        %v3728 = vadd.f32 %v3707, %v3720
        %v3729 = vadd.f32 %v3708, %v3721
        %v3730 = vadd.f32 %v3709, %v3722
        %v3731 = vadd.f32 %v3710, %v3723
        %v3732 = vadd.f32 %v3711, %v3724
        %s3733 = scalar_lea.vmem %s19, 2
        %v3734 = vld [vmem:[%s3733] sm:$0x1]
        %v3736 = vperm.slane %v3734, 0
        %v3738 = vmul.f32 %v3556, %v3736
        %v3739 = vmul.f32 %v3557, %v3736
        %v3740 = vmul.f32 %v3560, %v3736
        %v3741 = vmul.f32 %v3561, %v3736
        %v3742 = vmul.f32 %v3564, %v3736
        %v3743 = vmul.f32 %v3565, %v3736
        %v3744 = vmul.f32 %v3568, %v3736
        %v3745 = vmul.f32 %v3569, %v3736
        %v3746 = vmul.f32 %v3572, %v3736
        %v3747 = vmul.f32 %v3573, %v3736
        %v3748 = vmul.f32 %v3576, %v3736
        %v3749 = vmul.f32 %v3577, %v3736
        %v3750 = vmul.f32 %v3580, %v3736
        %v3751 = vmul.f32 %v3581, %v3736
        %v3752 = vmul.f32 %v3584, %v3736
        %v3753 = vmul.f32 %v3585, %v3736
        %v3770 = vrot.slane %v3738, 1
        %v3771 = vrot.slane %v3739, 1
        %v3772 = vsel %vm1058, %v3770, %v3771
        %v3773 = vrot.slane %v3740, 1
        %v3774 = vrot.slane %v3741, 1
        %v3775 = vsel %vm1058, %v3773, %v3774
        %v3776 = vrot.slane %v3742, 1
        %v3777 = vrot.slane %v3743, 1
        %v3778 = vsel %vm1058, %v3776, %v3777
        %v3779 = vrot.slane %v3744, 1
        %v3780 = vrot.slane %v3745, 1
        %v3781 = vsel %vm1058, %v3779, %v3780
        %v3782 = vrot.slane %v3746, 1
        %v3783 = vrot.slane %v3747, 1
        %v3784 = vsel %vm1058, %v3782, %v3783
        %v3785 = vrot.slane %v3748, 1
        %v3786 = vrot.slane %v3749, 1
        %v3787 = vsel %vm1058, %v3785, %v3786
        %v3788 = vrot.slane %v3750, 1
        %v3789 = vrot.slane %v3751, 1
        %v3790 = vsel %vm1058, %v3788, %v3789
        %v3791 = vrot.slane %v3752, 1
        %v3792 = vrot.slane %v3753, 1
        %v3793 = vsel %vm1058, %v3791, %v3792
        %v3802 = vadd.f32 %v3725, %v3772
        %v3803 = vadd.f32 %v3726, %v3775
        %v3804 = vadd.f32 %v3727, %v3778
        %v3805 = vadd.f32 %v3728, %v3781
        %v3806 = vadd.f32 %v3729, %v3784
        %v3807 = vadd.f32 %v3730, %v3787
        %v3808 = vadd.f32 %v3731, %v3790
        %v3809 = vadd.f32 %v3732, %v3793
        %s3810 = scalar_lea.vmem %s19, 5
        %v3811 = vld [vmem:[%s3810] sm:$0x1]
        %v3813 = vperm.slane %v3811, 0
        %v3815 = vmul.f32 %v3558, %v3813
        %v3816 = vmul.f32 %v3559, %v3813
        %v3817 = vmul.f32 %v3562, %v3813
        %v3818 = vmul.f32 %v3563, %v3813
        %v3819 = vmul.f32 %v3566, %v3813
        %v3820 = vmul.f32 %v3567, %v3813
        %v3821 = vmul.f32 %v3570, %v3813
        %v3822 = vmul.f32 %v3571, %v3813
        %v3823 = vmul.f32 %v3574, %v3813
        %v3824 = vmul.f32 %v3575, %v3813
        %v3825 = vmul.f32 %v3578, %v3813
        %v3826 = vmul.f32 %v3579, %v3813
        %v3827 = vmul.f32 %v3582, %v3813
        %v3828 = vmul.f32 %v3583, %v3813
        %v3829 = vmul.f32 %v3586, %v3813
        %v3830 = vmul.f32 %v3587, %v3813
        %v3847 = vrot.slane %v3815, 1
        %v3848 = vrot.slane %v3816, 1
        %v3849 = vsel %vm1058, %v3847, %v3848
        %v3850 = vrot.slane %v3817, 1
        %v3851 = vrot.slane %v3818, 1
        %v3852 = vsel %vm1058, %v3850, %v3851
        %v3853 = vrot.slane %v3819, 1
        %v3854 = vrot.slane %v3820, 1
        %v3855 = vsel %vm1058, %v3853, %v3854
        %v3856 = vrot.slane %v3821, 1
        %v3857 = vrot.slane %v3822, 1
        %v3858 = vsel %vm1058, %v3856, %v3857
        %v3859 = vrot.slane %v3823, 1
        %v3860 = vrot.slane %v3824, 1
        %v3861 = vsel %vm1058, %v3859, %v3860
        %v3862 = vrot.slane %v3825, 1
        %v3863 = vrot.slane %v3826, 1
        %v3864 = vsel %vm1058, %v3862, %v3863
        %v3865 = vrot.slane %v3827, 1
        %v3866 = vrot.slane %v3828, 1
        %v3867 = vsel %vm1058, %v3865, %v3866
        %v3868 = vrot.slane %v3829, 1
        %v3869 = vrot.slane %v3830, 1
        %v3870 = vsel %vm1058, %v3868, %v3869
        %v3879 = vadd.f32 %v3802, %v3849
        %v3880 = vadd.f32 %v3803, %v3852
        %v3881 = vadd.f32 %v3804, %v3855
        %v3882 = vadd.f32 %v3805, %v3858
        %v3883 = vadd.f32 %v3806, %v3861
        %v3884 = vadd.f32 %v3807, %v3864
        %v3885 = vadd.f32 %v3808, %v3867
        %v3886 = vadd.f32 %v3809, %v3870
        %s3887 = scalar_lea.vmem %s19, 8
        %v3888 = vld [vmem:[%s3887] sm:$0x1]
        %v3890 = vperm.slane %v3888, 0
        %v3892 = vmul.f32 %v3560, %v3890
        %v3893 = vmul.f32 %v3561, %v3890
        %v3894 = vmul.f32 %v3564, %v3890
        %v3895 = vmul.f32 %v3565, %v3890
        %v3896 = vmul.f32 %v3568, %v3890
        %v3897 = vmul.f32 %v3569, %v3890
        %v3898 = vmul.f32 %v3572, %v3890
        %v3899 = vmul.f32 %v3573, %v3890
        %v3900 = vmul.f32 %v3576, %v3890
        %v3901 = vmul.f32 %v3577, %v3890
        %v3902 = vmul.f32 %v3580, %v3890
        %v3903 = vmul.f32 %v3581, %v3890
        %v3904 = vmul.f32 %v3584, %v3890
        %v3905 = vmul.f32 %v3585, %v3890
        %v3906 = vmul.f32 %v3588, %v3890
        %v3907 = vmul.f32 %v3589, %v3890
        %v3924 = vrot.slane %v3892, 1
        %v3925 = vrot.slane %v3893, 1
        %v3926 = vsel %vm1058, %v3924, %v3925
        %v3927 = vrot.slane %v3894, 1
        %v3928 = vrot.slane %v3895, 1
        %v3929 = vsel %vm1058, %v3927, %v3928
        %v3930 = vrot.slane %v3896, 1
        %v3931 = vrot.slane %v3897, 1
        %v3932 = vsel %vm1058, %v3930, %v3931
        %v3933 = vrot.slane %v3898, 1
        %v3934 = vrot.slane %v3899, 1
        %v3935 = vsel %vm1058, %v3933, %v3934
        %v3936 = vrot.slane %v3900, 1
        %v3937 = vrot.slane %v3901, 1
        %v3938 = vsel %vm1058, %v3936, %v3937
        %v3939 = vrot.slane %v3902, 1
        %v3940 = vrot.slane %v3903, 1
        %v3941 = vsel %vm1058, %v3939, %v3940
        %v3942 = vrot.slane %v3904, 1
        %v3943 = vrot.slane %v3905, 1
        %v3944 = vsel %vm1058, %v3942, %v3943
        %v3945 = vrot.slane %v3906, 1
        %v3946 = vrot.slane %v3907, 1
        %v3947 = vsel %vm1058, %v3945, %v3946
        %v3956 = vadd.f32 %v3879, %v3926
        %v3957 = vadd.f32 %v3880, %v3929
        %v3958 = vadd.f32 %v3881, %v3932
        %v3959 = vadd.f32 %v3882, %v3935
        %v3960 = vadd.f32 %v3883, %v3938
        %v3961 = vadd.f32 %v3884, %v3941
        %v3962 = vadd.f32 %v3885, %v3944
        %v3963 = vadd.f32 %v3886, %v3947
        %v3964 = vld [vmem:[%s21] sm:$0x1]
        %v3966 = vperm.slane %v3964, 0
        %v3968 = vadd.f32 %v3956, %v3966
        %v3969 = vadd.f32 %v3957, %v3966
        %v3970 = vadd.f32 %v3958, %v3966
        %v3971 = vadd.f32 %v3959, %v3966
        %v3972 = vadd.f32 %v3960, %v3966
        %v3973 = vadd.f32 %v3961, %v3966
        %v3974 = vadd.f32 %v3962, %v3966
        %v3975 = vadd.f32 %v3963, %v3966
        %v3976 = vmax.f32 %v3968, 0.0
        %v3977 = vmax.f32 %v3969, 0.0
        %v3978 = vmax.f32 %v3970, 0.0
        %v3979 = vmax.f32 %v3971, 0.0
        %v3980 = vmax.f32 %v3972, 0.0
        %v3981 = vmax.f32 %v3973, 0.0
        %v3982 = vmax.f32 %v3974, 0.0
        %v3983 = vmax.f32 %v3975, 0.0
        %v3984 = vmin.f32 %v3976, 6.0
        %v3985 = vmin.f32 %v3977, 6.0
        %v3986 = vmin.f32 %v3978, 6.0
        %v3987 = vmin.f32 %v3979, 6.0
        %v3988 = vmin.f32 %v3980, 6.0
        %v3989 = vmin.f32 %v3981, 6.0
        %v3990 = vmin.f32 %v3982, 6.0
        %v3991 = vmin.f32 %v3983, 6.0
        %v3992 = vld [vmem:[%s23] sm:$0xff]
        %v3993 = vld [vmem:[%s23 + $0x8] sm:$0xff]
        %v3994 = vld [vmem:[%s23 + $0x10] sm:$0xff]
        %v3995 = vld [vmem:[%s23 + $0x18] sm:$0xff]
        %v3996 = vld [vmem:[%s23 + $0x20] sm:$0xff]
        %v3997 = vld [vmem:[%s23 + $0x28] sm:$0xff]
        %v3998 = vld [vmem:[%s23 + $0x30] sm:$0xff]
        %v3999 = vld [vmem:[%s23 + $0x38] sm:$0xff]
        %v4000 = vld [vmem:[%s23 + $0x40] sm:$0xff]
        %v4001 = vld [vmem:[%s23 + $0x48] sm:$0xff]
        %v4002 = vld [vmem:[%s23 + $0x50] sm:$0xff]
        %v4003 = vld [vmem:[%s23 + $0x58] sm:$0xff]
        %v4004 = vld [vmem:[%s25] sm:$0x1]
        %v4006 = vperm.slane %v4004, 0
        %v4009 = vsel %vm3448, %v3984, 0
        %v4012 = vsel %vm3448, %v3985, 0
        %v4015 = vsel %vm3448, %v3986, 0
        %v4018 = vsel %vm3448, %v3987, 0
        %v4021 = vsel %vm3448, %v3988, 0
        %v4024 = vsel %vm3448, %v3989, 0
        %v4027 = vsel %vm3448, %v3990, 0
        %v4030 = vsel %vm3448, %v3991, 0
        %4032 = vmatpush.msra.mxu0 0.0
        %4033 = vmatpush.msra.mxu0 0.0
        %4034 = vmatpush.msra.mxu0 0.0
        %4035 = vmatpush.msra.mxu0 0.0
        %4036 = vmatpush.msra.mxu0 %v4003
        %4037 = vmatpush.msra.mxu0 %v4002
        %4038 = vmatpush.msra.mxu0 %v4001
        %4039 = vmatpush.msra.mxu0 %v4000
        %4040 = vmatpush.msra.mxu0 %v3999
        %4041 = vmatpush.msra.mxu0 %v3998
        %4042 = vmatpush.msra.mxu0 %v3997
        %4043 = vmatpush.msra.mxu0 %v3996
        %4044 = vmatpush.msra.mxu0 %v3995
        %4045 = vmatpush.msra.mxu0 %v3994
        %4046 = vmatpush.msra.mxu0 %v3993
        %4047 = vmatpush.msra.mxu0 %v3992
        %4048 = vmatmul.f32.gmra.mxu0 %v4009
        %v4049 = vpop.f32.mrf.mxu0
        %v4050 = vadd.f32 %v4006, %v4049
        %4051 = vmatmul.f32.gmra.mxu0 %v4012
        %v4052 = vpop.f32.mrf.mxu0
        %v4053 = vadd.f32 %v4006, %v4052
        %4054 = vmatmul.f32.gmra.mxu0 %v4015
        %v4055 = vpop.f32.mrf.mxu0
        %v4056 = vadd.f32 %v4006, %v4055
        %4057 = vmatmul.f32.gmra.mxu0 %v4018
        %v4058 = vpop.f32.mrf.mxu0
        %v4059 = vadd.f32 %v4006, %v4058
        %4060 = vmatmul.f32.gmra.mxu0 %v4021
        %v4061 = vpop.f32.mrf.mxu0
        %v4062 = vadd.f32 %v4006, %v4061
        %4063 = vmatmul.f32.gmra.mxu0 %v4024
        %v4064 = vpop.f32.mrf.mxu0
        %v4065 = vadd.f32 %v4006, %v4064
        %4066 = vmatmul.f32.gmra.mxu0 %v4027
        %v4067 = vpop.f32.mrf.mxu0
        %v4068 = vadd.f32 %v4006, %v4067
        %4069 = vmatmul.f32.gmra.mxu0 %v4030
        %v4070 = vpop.f32.mrf.mxu0
        %v4071 = vadd.f32 %v4006, %v4070
        %4072 = vdwg.mxu0
        %v4073 = vld [vmem:[%s27] sm:$0xff]
        %v4074 = vld [vmem:[%s27 + $0x8] sm:$0xff]
        %v4075 = vld [vmem:[%s27 + $0x10] sm:$0xff]
        %v4076 = vld [vmem:[%s27 + $0x18] sm:$0xff]
        %v4077 = vld [vmem:[%s27 + $0x20] sm:$0xff]
        %v4078 = vld [vmem:[%s27 + $0x28] sm:$0xff]
        %v4079 = vld [vmem:[%s29] sm:$0x3]
        %v4081 = vperm.slane %v4079, 0
        %v4082 = vperm.slane %v4079, 1
        %vm4085 = vcmask 195584
        %v4087 = vsel %vm4085, %v4050, 0
        %v4090 = vsel %vm4085, %v4053, 0
        %v4093 = vsel %vm4085, %v4056, 0
        %v4096 = vsel %vm4085, %v4059, 0
        %v4099 = vsel %vm4085, %v4062, 0
        %v4102 = vsel %vm4085, %v4065, 0
        %v4105 = vsel %vm4085, %v4068, 0
        %v4108 = vsel %vm4085, %v4071, 0
        %4110 = vmatpush.msra.mxu0 0.0
        %4111 = vmatpush.msra.mxu0 0.0
        %4112 = vmatpush.msra.mxu0 0.0
        %4113 = vmatpush.msra.mxu0 0.0
        %4114 = vmatpush.msra.mxu0 0.0
        %4115 = vmatpush.msra.mxu0 0.0
        %4116 = vmatpush.msra.mxu0 0.0
        %4117 = vmatpush.msra.mxu0 0.0
        %4118 = vmatpush.msra.mxu0 0.0
        %4119 = vmatpush.msra.mxu0 0.0
        %4120 = vmatpush.msra.mxu0 0.0
        %4121 = vmatpush.msra.mxu0 0.0
        %4122 = vmatpush.msra.mxu0 0.0
        %4123 = vmatpush.msra.mxu0 %v4077
        %4124 = vmatpush.msra.mxu0 %v4075
        %4125 = vmatpush.msra.mxu0 %v4073
        %4126 = vmatmul.f32.gmra.mxu0 %v4087
        %v4127 = vpop.f32.mrf.mxu0
        %v4128 = vadd.f32 %v4081, %v4127
        %4129 = vmatmul.f32.gmra.mxu0 %v4090
        %v4130 = vpop.f32.mrf.mxu0
        %v4131 = vadd.f32 %v4081, %v4130
        %4132 = vmatmul.f32.gmra.mxu0 %v4093
        %v4133 = vpop.f32.mrf.mxu0
        %v4134 = vadd.f32 %v4081, %v4133
        %4135 = vmatmul.f32.gmra.mxu0 %v4096
        %v4136 = vpop.f32.mrf.mxu0
        %v4137 = vadd.f32 %v4081, %v4136
        %4138 = vmatmul.f32.gmra.mxu0 %v4099
        %v4139 = vpop.f32.mrf.mxu0
        %v4140 = vadd.f32 %v4081, %v4139
        %4141 = vmatmul.f32.gmra.mxu0 %v4102
        %v4142 = vpop.f32.mrf.mxu0
        %v4143 = vadd.f32 %v4081, %v4142
        %4144 = vmatmul.f32.gmra.mxu0 %v4105
        %v4145 = vpop.f32.mrf.mxu0
        %v4146 = vadd.f32 %v4081, %v4145
        %4147 = vmatmul.f32.gmra.mxu0 %v4108
        %v4148 = vpop.f32.mrf.mxu0
        %v4149 = vadd.f32 %v4081, %v4148
        %4150 = vdwg.mxu0
        %4151 = vmatpush.msra.mxu0 0.0
        %4152 = vmatpush.msra.mxu0 0.0
        %4153 = vmatpush.msra.mxu0 0.0
        %4154 = vmatpush.msra.mxu0 0.0
        %4155 = vmatpush.msra.mxu0 0.0
        %4156 = vmatpush.msra.mxu0 0.0
        %4157 = vmatpush.msra.mxu0 0.0
        %4158 = vmatpush.msra.mxu0 0.0
        %4159 = vmatpush.msra.mxu0 0.0
        %4160 = vmatpush.msra.mxu0 0.0
        %4161 = vmatpush.msra.mxu0 0.0
        %4162 = vmatpush.msra.mxu0 0.0
        %4163 = vmatpush.msra.mxu0 0.0
        %4164 = vmatpush.msra.mxu0 %v4078
        %4165 = vmatpush.msra.mxu0 %v4076
        %4166 = vmatpush.msra.mxu0 %v4074
        %4167 = vmatmul.f32.gmra.mxu0 %v4087
        %v4168 = vpop.f32.mrf.mxu0
        %v4169 = vadd.f32 %v4082, %v4168
        %4170 = vmatmul.f32.gmra.mxu0 %v4090
        %v4171 = vpop.f32.mrf.mxu0
        %v4172 = vadd.f32 %v4082, %v4171
        %4173 = vmatmul.f32.gmra.mxu0 %v4093
        %v4174 = vpop.f32.mrf.mxu0
        %v4175 = vadd.f32 %v4082, %v4174
        %4176 = vmatmul.f32.gmra.mxu0 %v4096
        %v4177 = vpop.f32.mrf.mxu0
        %v4178 = vadd.f32 %v4082, %v4177
        %4179 = vmatmul.f32.gmra.mxu0 %v4099
        %v4180 = vpop.f32.mrf.mxu0
        %v4181 = vadd.f32 %v4082, %v4180
        %4182 = vmatmul.f32.gmra.mxu0 %v4102
        %v4183 = vpop.f32.mrf.mxu0
        %v4184 = vadd.f32 %v4082, %v4183
        %4185 = vmatmul.f32.gmra.mxu0 %v4105
        %v4186 = vpop.f32.mrf.mxu0
        %v4187 = vadd.f32 %v4082, %v4186
        %4188 = vmatmul.f32.gmra.mxu0 %v4108
        %v4189 = vpop.f32.mrf.mxu0
        %v4190 = vadd.f32 %v4082, %v4189
        %4191 = vdwg.mxu0
        %v4192 = vmax.f32 %v4128, 0.0
        %v4193 = vmax.f32 %v4169, 0.0
        %v4194 = vmax.f32 %v4131, 0.0
        %v4195 = vmax.f32 %v4172, 0.0
        %v4196 = vmax.f32 %v4134, 0.0
        %v4197 = vmax.f32 %v4175, 0.0
        %v4198 = vmax.f32 %v4137, 0.0
        %v4199 = vmax.f32 %v4178, 0.0
        %v4200 = vmax.f32 %v4140, 0.0
        %v4201 = vmax.f32 %v4181, 0.0
        %v4202 = vmax.f32 %v4143, 0.0
        %v4203 = vmax.f32 %v4184, 0.0
        %v4204 = vmax.f32 %v4146, 0.0
        %v4205 = vmax.f32 %v4187, 0.0
        %v4206 = vmax.f32 %v4149, 0.0
        %v4207 = vmax.f32 %v4190, 0.0
        %v4208 = vmin.f32 %v4192, 6.0
        %v4209 = vmin.f32 %v4193, 6.0
        %v4210 = vmin.f32 %v4194, 6.0
        %v4211 = vmin.f32 %v4195, 6.0
        %v4212 = vmin.f32 %v4196, 6.0
        %v4213 = vmin.f32 %v4197, 6.0
        %v4214 = vmin.f32 %v4198, 6.0
        %v4215 = vmin.f32 %v4199, 6.0
        %v4216 = vmin.f32 %v4200, 6.0
        %v4217 = vmin.f32 %v4201, 6.0
        %v4218 = vmin.f32 %v4202, 6.0
        %v4219 = vmin.f32 %v4203, 6.0
        %v4220 = vmin.f32 %v4204, 6.0
        %v4221 = vmin.f32 %v4205, 6.0
        %v4222 = vmin.f32 %v4206, 6.0
        %v4223 = vmin.f32 %v4207, 6.0
        %4224 = vst [vmem:[#allocation5] sm:$0xff] 0.0
        %4225 = vst.msk [vmem:[#allocation5 + $0x8] sm:$0xff] %vm3056, 0.0
        %4226 = vst [vmem:[#allocation5 + $0x10] sm:$0x3] 0.0
        %vm4227 = vcmask 123904
        %4228 = vst.msk [vmem:[#allocation5 + $0x18] sm:$0x3] %vm4227, 0.0
        %4229 = vst [vmem:[#allocation5 + $0x20] sm:$0xff] 0.0
        %4230 = vst.msk [vmem:[#allocation5 + $0x28] sm:$0xff] %vm3056, 0.0
        %4231 = vst [vmem:[#allocation5 + $0x30] sm:$0x3] 0.0
        %4232 = vst.msk [vmem:[#allocation5 + $0x38] sm:$0x3] %vm4227, 0.0
        %4233 = vst [vmem:[#allocation5 + $0x40] sm:$0xff] 0.0
        %4234 = vst.msk [vmem:[#allocation5 + $0x48] sm:$0xff] %vm3056, 0.0
        %4235 = vst [vmem:[#allocation5 + $0x50] sm:$0x3] 0.0
        %4236 = vst.msk [vmem:[#allocation5 + $0x58] sm:$0x3] %vm4227, 0.0
        %4237 = vst [vmem:[#allocation5 + $0x60] sm:$0xff] 0.0
        %4238 = vst.msk [vmem:[#allocation5 + $0x68] sm:$0xff] %vm3056, 0.0
        %4239 = vst [vmem:[#allocation5 + $0x70] sm:$0x3] 0.0
        %4240 = vst.msk [vmem:[#allocation5 + $0x78] sm:$0x3] %vm4227, 0.0
        %4241 = vst [vmem:[#allocation5 + $0x80] sm:$0xff] 0.0
        %4242 = vst.msk [vmem:[#allocation5 + $0x88] sm:$0xff] %vm3056, 0.0
        %4243 = vst [vmem:[#allocation5 + $0x90] sm:$0x3] 0.0
        %4244 = vst.msk [vmem:[#allocation5 + $0x98] sm:$0x3] %vm4227, 0.0
        %4245 = vst [vmem:[#allocation5 + $0xa0] sm:$0xff] 0.0
        %4246 = vst.msk [vmem:[#allocation5 + $0xa8] sm:$0xff] %vm3056, 0.0
        %4247 = vst [vmem:[#allocation5 + $0xb0] sm:$0x3] 0.0
        %4248 = vst.msk [vmem:[#allocation5 + $0xb8] sm:$0x3] %vm4227, 0.0
        %4249 = vst [vmem:[#allocation5 + $0xc0] sm:$0xff] 0.0
        %4250 = vst.msk [vmem:[#allocation5 + $0xc8] sm:$0xff] %vm3056, 0.0
        %4251 = vst [vmem:[#allocation5 + $0xd0] sm:$0x3] 0.0
        %4252 = vst.msk [vmem:[#allocation5 + $0xd8] sm:$0x3] %vm4227, 0.0
        %4253 = vst [vmem:[#allocation5 + $0xe0] sm:$0xff] 0.0
        %4254 = vst.msk [vmem:[#allocation5 + $0xe8] sm:$0xff] %vm3056, 0.0
        %4255 = vst [vmem:[#allocation5 + $0xf0] sm:$0x3] 0.0
        %4256 = vst.msk [vmem:[#allocation5 + $0xf8] sm:$0x3] %vm4227, 0.0
        %4257 = vst [vmem:[#allocation5 + $0x100] sm:$0xff] 0.0
        %4258 = vst.msk [vmem:[#allocation5 + $0x108] sm:$0xff] %vm3056, 0.0
        %4259 = vst [vmem:[#allocation5 + $0x110] sm:$0x3] 0.0
        %4260 = vst.msk [vmem:[#allocation5 + $0x118] sm:$0x3] %vm4227, 0.0
        %4261 = vst [vmem:[#allocation5 + $0x120] sm:$0xff] 0.0
        %4262 = vst.msk [vmem:[#allocation5 + $0x128] sm:$0xff] %vm3056, 0.0
        %4263 = vst [vmem:[#allocation5 + $0x130] sm:$0x3] 0.0
        %4264 = vst.msk [vmem:[#allocation5 + $0x138] sm:$0x3] %vm4227, 0.0
        %v4281 = vrot.slane %v4208, 7
        %v4282 = vrot.slane %v4209, 7
        %v4283 = vrot.slane %v4210, 7
        %v4284 = vrot.slane %v4211, 7
        %v4285 = vrot.slane %v4212, 7
        %v4286 = vrot.slane %v4213, 7
        %v4287 = vrot.slane %v4214, 7
        %v4288 = vrot.slane %v4215, 7
        %v4289 = vrot.slane %v4216, 7
        %v4290 = vrot.slane %v4217, 7
        %v4291 = vrot.slane %v4218, 7
        %v4292 = vrot.slane %v4219, 7
        %v4293 = vrot.slane %v4220, 7
        %v4294 = vrot.slane %v4221, 7
        %v4295 = vrot.slane %v4222, 7
        %v4296 = vrot.slane %v4223, 7
        %s4313 = scalar_lea.vmem [#allocation5], 32
        %4314 = vst [vmem:[%s4313] sm:$0xfe] %v4281
        %vm4315 = vcmask 130049
        %4316 = vst.msk [vmem:[%s4313 + $0x8] sm:$0xfe] %vm4315, %v4282
        %4317 = vst [vmem:[%s4313 + $0x10] sm:$0x1] %v4281
        %vm4318 = vcmask 122880
        %4319 = vst.msk [vmem:[%s4313 + $0x18] sm:$0x1] %vm4318, %v4282
        %4320 = vst [vmem:[%s4313 + $0x20] sm:$0xfe] %v4283
        %4321 = vst.msk [vmem:[%s4313 + $0x28] sm:$0xfe] %vm4315, %v4284
        %4322 = vst [vmem:[%s4313 + $0x30] sm:$0x1] %v4283
        %4323 = vst.msk [vmem:[%s4313 + $0x38] sm:$0x1] %vm4318, %v4284
        %4324 = vst [vmem:[%s4313 + $0x40] sm:$0xfe] %v4285
        %4325 = vst.msk [vmem:[%s4313 + $0x48] sm:$0xfe] %vm4315, %v4286
        %4326 = vst [vmem:[%s4313 + $0x50] sm:$0x1] %v4285
        %4327 = vst.msk [vmem:[%s4313 + $0x58] sm:$0x1] %vm4318, %v4286
        %4328 = vst [vmem:[%s4313 + $0x60] sm:$0xfe] %v4287
        %4329 = vst.msk [vmem:[%s4313 + $0x68] sm:$0xfe] %vm4315, %v4288
        %4330 = vst [vmem:[%s4313 + $0x70] sm:$0x1] %v4287
        %4331 = vst.msk [vmem:[%s4313 + $0x78] sm:$0x1] %vm4318, %v4288
        %4332 = vst [vmem:[%s4313 + $0x80] sm:$0xfe] %v4289
        %4333 = vst.msk [vmem:[%s4313 + $0x88] sm:$0xfe] %vm4315, %v4290
        %4334 = vst [vmem:[%s4313 + $0x90] sm:$0x1] %v4289
        %4335 = vst.msk [vmem:[%s4313 + $0x98] sm:$0x1] %vm4318, %v4290
        %4336 = vst [vmem:[%s4313 + $0xa0] sm:$0xfe] %v4291
        %4337 = vst.msk [vmem:[%s4313 + $0xa8] sm:$0xfe] %vm4315, %v4292
        %4338 = vst [vmem:[%s4313 + $0xb0] sm:$0x1] %v4291
        %4339 = vst.msk [vmem:[%s4313 + $0xb8] sm:$0x1] %vm4318, %v4292
        %4340 = vst [vmem:[%s4313 + $0xc0] sm:$0xfe] %v4293
        %4341 = vst.msk [vmem:[%s4313 + $0xc8] sm:$0xfe] %vm4315, %v4294
        %4342 = vst [vmem:[%s4313 + $0xd0] sm:$0x1] %v4293
        %4343 = vst.msk [vmem:[%s4313 + $0xd8] sm:$0x1] %vm4318, %v4294
        %4344 = vst [vmem:[%s4313 + $0xe0] sm:$0xfe] %v4295
        %4345 = vst.msk [vmem:[%s4313 + $0xe8] sm:$0xfe] %vm4315, %v4296
        %4346 = vst [vmem:[%s4313 + $0xf0] sm:$0x1] %v4295
        %4347 = vst.msk [vmem:[%s4313 + $0xf8] sm:$0x1] %vm4318, %v4296
        %v4348 = vld [vmem:[#allocation5] sm:$0xff]
        %v4349 = vld [vmem:[#allocation5 + $0x8] sm:$0xff]
        %v4350 = vld [vmem:[#allocation5 + $0x20] sm:$0xff]
        %v4351 = vld [vmem:[#allocation5 + $0x28] sm:$0xff]
        %v4352 = vld [vmem:[#allocation5 + $0x40] sm:$0xff]
        %v4353 = vld [vmem:[#allocation5 + $0x48] sm:$0xff]
        %v4354 = vld [vmem:[#allocation5 + $0x60] sm:$0xff]
        %v4355 = vld [vmem:[#allocation5 + $0x68] sm:$0xff]
        %v4356 = vld [vmem:[#allocation5 + $0x80] sm:$0xff]
        %v4357 = vld [vmem:[#allocation5 + $0x88] sm:$0xff]
        %v4358 = vld [vmem:[#allocation5 + $0xa0] sm:$0xff]
        %v4359 = vld [vmem:[#allocation5 + $0xa8] sm:$0xff]
        %v4360 = vld [vmem:[#allocation5 + $0xc0] sm:$0xff]
        %v4361 = vld [vmem:[#allocation5 + $0xc8] sm:$0xff]
        %v4362 = vld [vmem:[#allocation5 + $0xe0] sm:$0xff]
        %v4363 = vld [vmem:[#allocation5 + $0xe8] sm:$0xff]
        %v4364 = vld [vmem:[#allocation5 + $0x100] sm:$0xff]
        %v4365 = vld [vmem:[#allocation5 + $0x108] sm:$0xff]
        %v4366 = vld [vmem:[#allocation5 + $0x120] sm:$0xff]
        %v4367 = vld [vmem:[#allocation5 + $0x128] sm:$0xff]
        %v4368 = vld [vmem:[%s31] sm:$0x3]
        %v4370 = vperm.slane %v4368, 0
        %v4371 = vperm.slane %v4368, 1
        %v4374 = vmul.f32 %v4348, %v4370
        %v4375 = vmul.f32 %v4349, %v4371
        %v4376 = vmul.f32 %v4350, %v4370
        %v4377 = vmul.f32 %v4351, %v4371
        %v4378 = vmul.f32 %v4352, %v4370
        %v4379 = vmul.f32 %v4353, %v4371
        %v4380 = vmul.f32 %v4354, %v4370
        %v4381 = vmul.f32 %v4355, %v4371
        %v4382 = vmul.f32 %v4356, %v4370
        %v4383 = vmul.f32 %v4357, %v4371
        %v4384 = vmul.f32 %v4358, %v4370
        %v4385 = vmul.f32 %v4359, %v4371
        %v4386 = vmul.f32 %v4360, %v4370
        %v4387 = vmul.f32 %v4361, %v4371
        %v4388 = vmul.f32 %v4362, %v4370
        %v4389 = vmul.f32 %v4363, %v4371
        %v4390 = vadd.f32 %v4374, 0.0
        %v4391 = vadd.f32 %v4375, 0.0
        %v4392 = vadd.f32 %v4376, 0.0
        %v4393 = vadd.f32 %v4377, 0.0
        %v4394 = vadd.f32 %v4378, 0.0
        %v4395 = vadd.f32 %v4379, 0.0
        %v4396 = vadd.f32 %v4380, 0.0
        %v4397 = vadd.f32 %v4381, 0.0
        %v4398 = vadd.f32 %v4382, 0.0
        %v4399 = vadd.f32 %v4383, 0.0
        %v4400 = vadd.f32 %v4384, 0.0
        %v4401 = vadd.f32 %v4385, 0.0
        %v4402 = vadd.f32 %v4386, 0.0
        %v4403 = vadd.f32 %v4387, 0.0
        %v4404 = vadd.f32 %v4388, 0.0
        %v4405 = vadd.f32 %v4389, 0.0
        %s4406 = scalar_lea.vmem %s31, 6
        %v4407 = vld [vmem:[%s4406] sm:$0x3]
        %v4409 = vperm.slane %v4407, 0
        %v4410 = vperm.slane %v4407, 1
        %v4413 = vmul.f32 %v4350, %v4409
        %v4414 = vmul.f32 %v4351, %v4410
        %v4415 = vmul.f32 %v4352, %v4409
        %v4416 = vmul.f32 %v4353, %v4410
        %v4417 = vmul.f32 %v4354, %v4409
        %v4418 = vmul.f32 %v4355, %v4410
        %v4419 = vmul.f32 %v4356, %v4409
        %v4420 = vmul.f32 %v4357, %v4410
        %v4421 = vmul.f32 %v4358, %v4409
        %v4422 = vmul.f32 %v4359, %v4410
        %v4423 = vmul.f32 %v4360, %v4409
        %v4424 = vmul.f32 %v4361, %v4410
        %v4425 = vmul.f32 %v4362, %v4409
        %v4426 = vmul.f32 %v4363, %v4410
        %v4427 = vmul.f32 %v4364, %v4409
        %v4428 = vmul.f32 %v4365, %v4410
        %v4429 = vadd.f32 %v4390, %v4413
        %v4430 = vadd.f32 %v4391, %v4414
        %v4431 = vadd.f32 %v4392, %v4415
        %v4432 = vadd.f32 %v4393, %v4416
        %v4433 = vadd.f32 %v4394, %v4417
        %v4434 = vadd.f32 %v4395, %v4418
        %v4435 = vadd.f32 %v4396, %v4419
        %v4436 = vadd.f32 %v4397, %v4420
        %v4437 = vadd.f32 %v4398, %v4421
        %v4438 = vadd.f32 %v4399, %v4422
        %v4439 = vadd.f32 %v4400, %v4423
        %v4440 = vadd.f32 %v4401, %v4424
        %v4441 = vadd.f32 %v4402, %v4425
        %v4442 = vadd.f32 %v4403, %v4426
        %v4443 = vadd.f32 %v4404, %v4427
        %v4444 = vadd.f32 %v4405, %v4428
        %s4445 = scalar_lea.vmem %s31, 12
        %v4446 = vld [vmem:[%s4445] sm:$0x3]
        %v4448 = vperm.slane %v4446, 0
        %v4449 = vperm.slane %v4446, 1
        %v4452 = vmul.f32 %v4352, %v4448
        %v4453 = vmul.f32 %v4353, %v4449
        %v4454 = vmul.f32 %v4354, %v4448
        %v4455 = vmul.f32 %v4355, %v4449
        %v4456 = vmul.f32 %v4356, %v4448
        %v4457 = vmul.f32 %v4357, %v4449
        %v4458 = vmul.f32 %v4358, %v4448
        %v4459 = vmul.f32 %v4359, %v4449
        %v4460 = vmul.f32 %v4360, %v4448
        %v4461 = vmul.f32 %v4361, %v4449
        %v4462 = vmul.f32 %v4362, %v4448
        %v4463 = vmul.f32 %v4363, %v4449
        %v4464 = vmul.f32 %v4364, %v4448
        %v4465 = vmul.f32 %v4365, %v4449
        %v4466 = vmul.f32 %v4366, %v4448
        %v4467 = vmul.f32 %v4367, %v4449
        %v4468 = vadd.f32 %v4429, %v4452
        %v4469 = vadd.f32 %v4430, %v4453
        %v4470 = vadd.f32 %v4431, %v4454
        %v4471 = vadd.f32 %v4432, %v4455
        %v4472 = vadd.f32 %v4433, %v4456
        %v4473 = vadd.f32 %v4434, %v4457
        %v4474 = vadd.f32 %v4435, %v4458
        %v4475 = vadd.f32 %v4436, %v4459
        %v4476 = vadd.f32 %v4437, %v4460
        %v4477 = vadd.f32 %v4438, %v4461
        %v4478 = vadd.f32 %v4439, %v4462
        %v4479 = vadd.f32 %v4440, %v4463
        %v4480 = vadd.f32 %v4441, %v4464
        %v4481 = vadd.f32 %v4442, %v4465
        %v4482 = vadd.f32 %v4443, %v4466
        %v4483 = vadd.f32 %v4444, %v4467
        %v4484 = vld [vmem:[#allocation5] sm:$0xfe]
        %v4485 = vld [vmem:[#allocation5 + $0x8] sm:$0xfe]
        %v4486 = vld [vmem:[#allocation5 + $0x10] sm:$0x1]
        %v4487 = vld [vmem:[#allocation5 + $0x18] sm:$0x1]
        %v4488 = vld [vmem:[#allocation5 + $0x20] sm:$0xfe]
        %v4489 = vld [vmem:[#allocation5 + $0x28] sm:$0xfe]
        %v4490 = vld [vmem:[#allocation5 + $0x30] sm:$0x1]
        %v4491 = vld [vmem:[#allocation5 + $0x38] sm:$0x1]
        %v4492 = vld [vmem:[#allocation5 + $0x40] sm:$0xfe]
        %v4493 = vld [vmem:[#allocation5 + $0x48] sm:$0xfe]
        %v4494 = vld [vmem:[#allocation5 + $0x50] sm:$0x1]
        %v4495 = vld [vmem:[#allocation5 + $0x58] sm:$0x1]
        %v4496 = vld [vmem:[#allocation5 + $0x60] sm:$0xfe]
        %v4497 = vld [vmem:[#allocation5 + $0x68] sm:$0xfe]
        %v4498 = vld [vmem:[#allocation5 + $0x70] sm:$0x1]
        %v4499 = vld [vmem:[#allocation5 + $0x78] sm:$0x1]
        %v4500 = vld [vmem:[#allocation5 + $0x80] sm:$0xfe]
        %v4501 = vld [vmem:[#allocation5 + $0x88] sm:$0xfe]
        %v4502 = vld [vmem:[#allocation5 + $0x90] sm:$0x1]
        %v4503 = vld [vmem:[#allocation5 + $0x98] sm:$0x1]
        %v4504 = vld [vmem:[#allocation5 + $0xa0] sm:$0xfe]
        %v4505 = vld [vmem:[#allocation5 + $0xa8] sm:$0xfe]
        %v4506 = vld [vmem:[#allocation5 + $0xb0] sm:$0x1]
        %v4507 = vld [vmem:[#allocation5 + $0xb8] sm:$0x1]
        %v4508 = vld [vmem:[#allocation5 + $0xc0] sm:$0xfe]
        %v4509 = vld [vmem:[#allocation5 + $0xc8] sm:$0xfe]
        %v4510 = vld [vmem:[#allocation5 + $0xd0] sm:$0x1]
        %v4511 = vld [vmem:[#allocation5 + $0xd8] sm:$0x1]
        %v4512 = vld [vmem:[#allocation5 + $0xe0] sm:$0xfe]
        %v4513 = vld [vmem:[#allocation5 + $0xe8] sm:$0xfe]
        %v4514 = vld [vmem:[#allocation5 + $0xf0] sm:$0x1]
        %v4515 = vld [vmem:[#allocation5 + $0xf8] sm:$0x1]
        %v4516 = vld [vmem:[#allocation5 + $0x100] sm:$0xfe]
        %v4517 = vld [vmem:[#allocation5 + $0x108] sm:$0xfe]
        %v4518 = vld [vmem:[#allocation5 + $0x110] sm:$0x1]
        %v4519 = vld [vmem:[#allocation5 + $0x118] sm:$0x1]
        %v4520 = vld [vmem:[#allocation5 + $0x120] sm:$0xfe]
        %v4521 = vld [vmem:[#allocation5 + $0x128] sm:$0xfe]
        %v4522 = vld [vmem:[#allocation5 + $0x130] sm:$0x1]
        %v4523 = vld [vmem:[#allocation5 + $0x138] sm:$0x1]
        %s4524 = scalar_lea.vmem %s31, 2
        %v4525 = vld [vmem:[%s4524] sm:$0x3]
        %v4527 = vperm.slane %v4525, 0
        %v4528 = vperm.slane %v4525, 1
        %v4531 = vmul.f32 %v4484, %v4527
        %v4532 = vmul.f32 %v4485, %v4528
        %v4533 = vmul.f32 %v4486, %v4527
        %v4534 = vmul.f32 %v4487, %v4528
        %v4535 = vmul.f32 %v4488, %v4527
        %v4536 = vmul.f32 %v4489, %v4528
        %v4537 = vmul.f32 %v4490, %v4527
        %v4538 = vmul.f32 %v4491, %v4528
        %v4539 = vmul.f32 %v4492, %v4527
        %v4540 = vmul.f32 %v4493, %v4528
        %v4541 = vmul.f32 %v4494, %v4527
        %v4542 = vmul.f32 %v4495, %v4528
        %v4543 = vmul.f32 %v4496, %v4527
        %v4544 = vmul.f32 %v4497, %v4528
        %v4545 = vmul.f32 %v4498, %v4527
        %v4546 = vmul.f32 %v4499, %v4528
        %v4547 = vmul.f32 %v4500, %v4527
        %v4548 = vmul.f32 %v4501, %v4528
        %v4549 = vmul.f32 %v4502, %v4527
        %v4550 = vmul.f32 %v4503, %v4528
        %v4551 = vmul.f32 %v4504, %v4527
        %v4552 = vmul.f32 %v4505, %v4528
        %v4553 = vmul.f32 %v4506, %v4527
        %v4554 = vmul.f32 %v4507, %v4528
        %v4555 = vmul.f32 %v4508, %v4527
        %v4556 = vmul.f32 %v4509, %v4528
        %v4557 = vmul.f32 %v4510, %v4527
        %v4558 = vmul.f32 %v4511, %v4528
        %v4559 = vmul.f32 %v4512, %v4527
        %v4560 = vmul.f32 %v4513, %v4528
        %v4561 = vmul.f32 %v4514, %v4527
        %v4562 = vmul.f32 %v4515, %v4528
        %v4595 = vrot.slane %v4531, 1
        %v4596 = vrot.slane %v4533, 1
        %v4597 = vsel %vm1058, %v4595, %v4596
        %v4598 = vrot.slane %v4532, 1
        %v4599 = vrot.slane %v4534, 1
        %v4600 = vsel %vm1058, %v4598, %v4599
        %v4601 = vrot.slane %v4535, 1
        %v4602 = vrot.slane %v4537, 1
        %v4603 = vsel %vm1058, %v4601, %v4602
        %v4604 = vrot.slane %v4536, 1
        %v4605 = vrot.slane %v4538, 1
        %v4606 = vsel %vm1058, %v4604, %v4605
        %v4607 = vrot.slane %v4539, 1
        %v4608 = vrot.slane %v4541, 1
        %v4609 = vsel %vm1058, %v4607, %v4608
        %v4610 = vrot.slane %v4540, 1
        %v4611 = vrot.slane %v4542, 1
        %v4612 = vsel %vm1058, %v4610, %v4611
        %v4613 = vrot.slane %v4543, 1
        %v4614 = vrot.slane %v4545, 1
        %v4615 = vsel %vm1058, %v4613, %v4614
        %v4616 = vrot.slane %v4544, 1
        %v4617 = vrot.slane %v4546, 1
        %v4618 = vsel %vm1058, %v4616, %v4617
        %v4619 = vrot.slane %v4547, 1
        %v4620 = vrot.slane %v4549, 1
        %v4621 = vsel %vm1058, %v4619, %v4620
        %v4622 = vrot.slane %v4548, 1
        %v4623 = vrot.slane %v4550, 1
        %v4624 = vsel %vm1058, %v4622, %v4623
        %v4625 = vrot.slane %v4551, 1
        %v4626 = vrot.slane %v4553, 1
        %v4627 = vsel %vm1058, %v4625, %v4626
        %v4628 = vrot.slane %v4552, 1
        %v4629 = vrot.slane %v4554, 1
        %v4630 = vsel %vm1058, %v4628, %v4629
        %v4631 = vrot.slane %v4555, 1
        %v4632 = vrot.slane %v4557, 1
        %v4633 = vsel %vm1058, %v4631, %v4632
        %v4634 = vrot.slane %v4556, 1
        %v4635 = vrot.slane %v4558, 1
        %v4636 = vsel %vm1058, %v4634, %v4635
        %v4637 = vrot.slane %v4559, 1
        %v4638 = vrot.slane %v4561, 1
        %v4639 = vsel %vm1058, %v4637, %v4638
        %v4640 = vrot.slane %v4560, 1
        %v4641 = vrot.slane %v4562, 1
        %v4642 = vsel %vm1058, %v4640, %v4641
        %v4659 = vadd.f32 %v4468, %v4597
        %v4660 = vadd.f32 %v4469, %v4600
        %v4661 = vadd.f32 %v4470, %v4603
        %v4662 = vadd.f32 %v4471, %v4606
        %v4663 = vadd.f32 %v4472, %v4609
        %v4664 = vadd.f32 %v4473, %v4612
        %v4665 = vadd.f32 %v4474, %v4615
        %v4666 = vadd.f32 %v4475, %v4618
        %v4667 = vadd.f32 %v4476, %v4621
        %v4668 = vadd.f32 %v4477, %v4624
        %v4669 = vadd.f32 %v4478, %v4627
        %v4670 = vadd.f32 %v4479, %v4630
        %v4671 = vadd.f32 %v4480, %v4633
        %v4672 = vadd.f32 %v4481, %v4636
        %v4673 = vadd.f32 %v4482, %v4639
        %v4674 = vadd.f32 %v4483, %v4642
        %s4675 = scalar_lea.vmem %s31, 8
        %v4676 = vld [vmem:[%s4675] sm:$0x3]
        %v4678 = vperm.slane %v4676, 0
        %v4679 = vperm.slane %v4676, 1
        %v4682 = vmul.f32 %v4488, %v4678
        %v4683 = vmul.f32 %v4489, %v4679
        %v4684 = vmul.f32 %v4490, %v4678
        %v4685 = vmul.f32 %v4491, %v4679
        %v4686 = vmul.f32 %v4492, %v4678
        %v4687 = vmul.f32 %v4493, %v4679
        %v4688 = vmul.f32 %v4494, %v4678
        %v4689 = vmul.f32 %v4495, %v4679
        %v4690 = vmul.f32 %v4496, %v4678
        %v4691 = vmul.f32 %v4497, %v4679
        %v4692 = vmul.f32 %v4498, %v4678
        %v4693 = vmul.f32 %v4499, %v4679
        %v4694 = vmul.f32 %v4500, %v4678
        %v4695 = vmul.f32 %v4501, %v4679
        %v4696 = vmul.f32 %v4502, %v4678
        %v4697 = vmul.f32 %v4503, %v4679
        %v4698 = vmul.f32 %v4504, %v4678
        %v4699 = vmul.f32 %v4505, %v4679
        %v4700 = vmul.f32 %v4506, %v4678
        %v4701 = vmul.f32 %v4507, %v4679
        %v4702 = vmul.f32 %v4508, %v4678
        %v4703 = vmul.f32 %v4509, %v4679
        %v4704 = vmul.f32 %v4510, %v4678
        %v4705 = vmul.f32 %v4511, %v4679
        %v4706 = vmul.f32 %v4512, %v4678
        %v4707 = vmul.f32 %v4513, %v4679
        %v4708 = vmul.f32 %v4514, %v4678
        %v4709 = vmul.f32 %v4515, %v4679
        %v4710 = vmul.f32 %v4516, %v4678
        %v4711 = vmul.f32 %v4517, %v4679
        %v4712 = vmul.f32 %v4518, %v4678
        %v4713 = vmul.f32 %v4519, %v4679
        %v4746 = vrot.slane %v4682, 1
        %v4747 = vrot.slane %v4684, 1
        %v4748 = vsel %vm1058, %v4746, %v4747
        %v4749 = vrot.slane %v4683, 1
        %v4750 = vrot.slane %v4685, 1
        %v4751 = vsel %vm1058, %v4749, %v4750
        %v4752 = vrot.slane %v4686, 1
        %v4753 = vrot.slane %v4688, 1
        %v4754 = vsel %vm1058, %v4752, %v4753
        %v4755 = vrot.slane %v4687, 1
        %v4756 = vrot.slane %v4689, 1
        %v4757 = vsel %vm1058, %v4755, %v4756
        %v4758 = vrot.slane %v4690, 1
        %v4759 = vrot.slane %v4692, 1
        %v4760 = vsel %vm1058, %v4758, %v4759
        %v4761 = vrot.slane %v4691, 1
        %v4762 = vrot.slane %v4693, 1
        %v4763 = vsel %vm1058, %v4761, %v4762
        %v4764 = vrot.slane %v4694, 1
        %v4765 = vrot.slane %v4696, 1
        %v4766 = vsel %vm1058, %v4764, %v4765
        %v4767 = vrot.slane %v4695, 1
        %v4768 = vrot.slane %v4697, 1
        %v4769 = vsel %vm1058, %v4767, %v4768
        %v4770 = vrot.slane %v4698, 1
        %v4771 = vrot.slane %v4700, 1
        %v4772 = vsel %vm1058, %v4770, %v4771
        %v4773 = vrot.slane %v4699, 1
        %v4774 = vrot.slane %v4701, 1
        %v4775 = vsel %vm1058, %v4773, %v4774
        %v4776 = vrot.slane %v4702, 1
        %v4777 = vrot.slane %v4704, 1
        %v4778 = vsel %vm1058, %v4776, %v4777
        %v4779 = vrot.slane %v4703, 1
        %v4780 = vrot.slane %v4705, 1
        %v4781 = vsel %vm1058, %v4779, %v4780
        %v4782 = vrot.slane %v4706, 1
        %v4783 = vrot.slane %v4708, 1
        %v4784 = vsel %vm1058, %v4782, %v4783
        %v4785 = vrot.slane %v4707, 1
        %v4786 = vrot.slane %v4709, 1
        %v4787 = vsel %vm1058, %v4785, %v4786
        %v4788 = vrot.slane %v4710, 1
        %v4789 = vrot.slane %v4712, 1
        %v4790 = vsel %vm1058, %v4788, %v4789
        %v4791 = vrot.slane %v4711, 1
        %v4792 = vrot.slane %v4713, 1
        %v4793 = vsel %vm1058, %v4791, %v4792
        %v4810 = vadd.f32 %v4659, %v4748
        %v4811 = vadd.f32 %v4660, %v4751
        %v4812 = vadd.f32 %v4661, %v4754
        %v4813 = vadd.f32 %v4662, %v4757
        %v4814 = vadd.f32 %v4663, %v4760
        %v4815 = vadd.f32 %v4664, %v4763
        %v4816 = vadd.f32 %v4665, %v4766
        %v4817 = vadd.f32 %v4666, %v4769
        %v4818 = vadd.f32 %v4667, %v4772
        %v4819 = vadd.f32 %v4668, %v4775
        %v4820 = vadd.f32 %v4669, %v4778
        %v4821 = vadd.f32 %v4670, %v4781
        %v4822 = vadd.f32 %v4671, %v4784
        %v4823 = vadd.f32 %v4672, %v4787
        %v4824 = vadd.f32 %v4673, %v4790
        %v4825 = vadd.f32 %v4674, %v4793
        %s4826 = scalar_lea.vmem %s31, 14
        %v4827 = vld [vmem:[%s4826] sm:$0x3]
        %v4829 = vperm.slane %v4827, 0
        %v4830 = vperm.slane %v4827, 1
        %v4833 = vmul.f32 %v4492, %v4829
        %v4834 = vmul.f32 %v4493, %v4830
        %v4835 = vmul.f32 %v4494, %v4829
        %v4836 = vmul.f32 %v4495, %v4830
        %v4837 = vmul.f32 %v4496, %v4829
        %v4838 = vmul.f32 %v4497, %v4830
        %v4839 = vmul.f32 %v4498, %v4829
        %v4840 = vmul.f32 %v4499, %v4830
        %v4841 = vmul.f32 %v4500, %v4829
        %v4842 = vmul.f32 %v4501, %v4830
        %v4843 = vmul.f32 %v4502, %v4829
        %v4844 = vmul.f32 %v4503, %v4830
        %v4845 = vmul.f32 %v4504, %v4829
        %v4846 = vmul.f32 %v4505, %v4830
        %v4847 = vmul.f32 %v4506, %v4829
        %v4848 = vmul.f32 %v4507, %v4830
        %v4849 = vmul.f32 %v4508, %v4829
        %v4850 = vmul.f32 %v4509, %v4830
        %v4851 = vmul.f32 %v4510, %v4829
        %v4852 = vmul.f32 %v4511, %v4830
        %v4853 = vmul.f32 %v4512, %v4829
        %v4854 = vmul.f32 %v4513, %v4830
        %v4855 = vmul.f32 %v4514, %v4829
        %v4856 = vmul.f32 %v4515, %v4830
        %v4857 = vmul.f32 %v4516, %v4829
        %v4858 = vmul.f32 %v4517, %v4830
        %v4859 = vmul.f32 %v4518, %v4829
        %v4860 = vmul.f32 %v4519, %v4830
        %v4861 = vmul.f32 %v4520, %v4829
        %v4862 = vmul.f32 %v4521, %v4830
        %v4863 = vmul.f32 %v4522, %v4829
        %v4864 = vmul.f32 %v4523, %v4830
        %v4897 = vrot.slane %v4833, 1
        %v4898 = vrot.slane %v4835, 1
        %v4899 = vsel %vm1058, %v4897, %v4898
        %v4900 = vrot.slane %v4834, 1
        %v4901 = vrot.slane %v4836, 1
        %v4902 = vsel %vm1058, %v4900, %v4901
        %v4903 = vrot.slane %v4837, 1
        %v4904 = vrot.slane %v4839, 1
        %v4905 = vsel %vm1058, %v4903, %v4904
        %v4906 = vrot.slane %v4838, 1
        %v4907 = vrot.slane %v4840, 1
        %v4908 = vsel %vm1058, %v4906, %v4907
        %v4909 = vrot.slane %v4841, 1
        %v4910 = vrot.slane %v4843, 1
        %v4911 = vsel %vm1058, %v4909, %v4910
        %v4912 = vrot.slane %v4842, 1
        %v4913 = vrot.slane %v4844, 1
        %v4914 = vsel %vm1058, %v4912, %v4913
        %v4915 = vrot.slane %v4845, 1
        %v4916 = vrot.slane %v4847, 1
        %v4917 = vsel %vm1058, %v4915, %v4916
        %v4918 = vrot.slane %v4846, 1
        %v4919 = vrot.slane %v4848, 1
        %v4920 = vsel %vm1058, %v4918, %v4919
        %v4921 = vrot.slane %v4849, 1
        %v4922 = vrot.slane %v4851, 1
        %v4923 = vsel %vm1058, %v4921, %v4922
        %v4924 = vrot.slane %v4850, 1
        %v4925 = vrot.slane %v4852, 1
        %v4926 = vsel %vm1058, %v4924, %v4925
        %v4927 = vrot.slane %v4853, 1
        %v4928 = vrot.slane %v4855, 1
        %v4929 = vsel %vm1058, %v4927, %v4928
        %v4930 = vrot.slane %v4854, 1
        %v4931 = vrot.slane %v4856, 1
        %v4932 = vsel %vm1058, %v4930, %v4931
        %v4933 = vrot.slane %v4857, 1
        %v4934 = vrot.slane %v4859, 1
        %v4935 = vsel %vm1058, %v4933, %v4934
        %v4936 = vrot.slane %v4858, 1
        %v4937 = vrot.slane %v4860, 1
        %v4938 = vsel %vm1058, %v4936, %v4937
        %v4939 = vrot.slane %v4861, 1
        %v4940 = vrot.slane %v4863, 1
        %v4941 = vsel %vm1058, %v4939, %v4940
        %v4942 = vrot.slane %v4862, 1
        %v4943 = vrot.slane %v4864, 1
        %v4944 = vsel %vm1058, %v4942, %v4943
        %v4961 = vadd.f32 %v4810, %v4899
        %v4962 = vadd.f32 %v4811, %v4902
        %v4963 = vadd.f32 %v4812, %v4905
        %v4964 = vadd.f32 %v4813, %v4908
        %v4965 = vadd.f32 %v4814, %v4911
        %v4966 = vadd.f32 %v4815, %v4914
        %v4967 = vadd.f32 %v4816, %v4917
        %v4968 = vadd.f32 %v4817, %v4920
        %v4969 = vadd.f32 %v4818, %v4923
        %v4970 = vadd.f32 %v4819, %v4926
        %v4971 = vadd.f32 %v4820, %v4929
        %v4972 = vadd.f32 %v4821, %v4932
        %v4973 = vadd.f32 %v4822, %v4935
        %v4974 = vadd.f32 %v4823, %v4938
        %v4975 = vadd.f32 %v4824, %v4941
        %v4976 = vadd.f32 %v4825, %v4944
        %v4977 = vld [vmem:[#allocation5] sm:$0xfc]
        %v4978 = vld [vmem:[#allocation5 + $0x8] sm:$0xfc]
        %v4979 = vld [vmem:[#allocation5 + $0x10] sm:$0x3]
        %v4980 = vld [vmem:[#allocation5 + $0x18] sm:$0x3]
        %v4981 = vld [vmem:[#allocation5 + $0x20] sm:$0xfc]
        %v4982 = vld [vmem:[#allocation5 + $0x28] sm:$0xfc]
        %v4983 = vld [vmem:[#allocation5 + $0x30] sm:$0x3]
        %v4984 = vld [vmem:[#allocation5 + $0x38] sm:$0x3]
        %v4985 = vld [vmem:[#allocation5 + $0x40] sm:$0xfc]
        %v4986 = vld [vmem:[#allocation5 + $0x48] sm:$0xfc]
        %v4987 = vld [vmem:[#allocation5 + $0x50] sm:$0x3]
        %v4988 = vld [vmem:[#allocation5 + $0x58] sm:$0x3]
        %v4989 = vld [vmem:[#allocation5 + $0x60] sm:$0xfc]
        %v4990 = vld [vmem:[#allocation5 + $0x68] sm:$0xfc]
        %v4991 = vld [vmem:[#allocation5 + $0x70] sm:$0x3]
        %v4992 = vld [vmem:[#allocation5 + $0x78] sm:$0x3]
        %v4993 = vld [vmem:[#allocation5 + $0x80] sm:$0xfc]
        %v4994 = vld [vmem:[#allocation5 + $0x88] sm:$0xfc]
        %v4995 = vld [vmem:[#allocation5 + $0x90] sm:$0x3]
        %v4996 = vld [vmem:[#allocation5 + $0x98] sm:$0x3]
        %v4997 = vld [vmem:[#allocation5 + $0xa0] sm:$0xfc]
        %v4998 = vld [vmem:[#allocation5 + $0xa8] sm:$0xfc]
        %v4999 = vld [vmem:[#allocation5 + $0xb0] sm:$0x3]
        %v5000 = vld [vmem:[#allocation5 + $0xb8] sm:$0x3]
        %v5001 = vld [vmem:[#allocation5 + $0xc0] sm:$0xfc]
        %v5002 = vld [vmem:[#allocation5 + $0xc8] sm:$0xfc]
        %v5003 = vld [vmem:[#allocation5 + $0xd0] sm:$0x3]
        %v5004 = vld [vmem:[#allocation5 + $0xd8] sm:$0x3]
        %v5005 = vld [vmem:[#allocation5 + $0xe0] sm:$0xfc]
        %v5006 = vld [vmem:[#allocation5 + $0xe8] sm:$0xfc]
        %v5007 = vld [vmem:[#allocation5 + $0xf0] sm:$0x3]
        %v5008 = vld [vmem:[#allocation5 + $0xf8] sm:$0x3]
        %v5009 = vld [vmem:[#allocation5 + $0x100] sm:$0xfc]
        %v5010 = vld [vmem:[#allocation5 + $0x108] sm:$0xfc]
        %v5011 = vld [vmem:[#allocation5 + $0x110] sm:$0x3]
        %v5012 = vld [vmem:[#allocation5 + $0x118] sm:$0x3]
        %v5013 = vld [vmem:[#allocation5 + $0x120] sm:$0xfc]
        %v5014 = vld [vmem:[#allocation5 + $0x128] sm:$0xfc]
        %v5015 = vld [vmem:[#allocation5 + $0x130] sm:$0x3]
        %v5016 = vld [vmem:[#allocation5 + $0x138] sm:$0x3]
        %s5017 = scalar_lea.vmem %s31, 4
        %v5018 = vld [vmem:[%s5017] sm:$0x3]
        %v5020 = vperm.slane %v5018, 0
        %v5021 = vperm.slane %v5018, 1
        %v5024 = vmul.f32 %v4977, %v5020
        %v5025 = vmul.f32 %v4978, %v5021
        %v5026 = vmul.f32 %v4979, %v5020
        %v5027 = vmul.f32 %v4980, %v5021
        %v5028 = vmul.f32 %v4981, %v5020
        %v5029 = vmul.f32 %v4982, %v5021
        %v5030 = vmul.f32 %v4983, %v5020
        %v5031 = vmul.f32 %v4984, %v5021
        %v5032 = vmul.f32 %v4985, %v5020
        %v5033 = vmul.f32 %v4986, %v5021
        %v5034 = vmul.f32 %v4987, %v5020
        %v5035 = vmul.f32 %v4988, %v5021
        %v5036 = vmul.f32 %v4989, %v5020
        %v5037 = vmul.f32 %v4990, %v5021
        %v5038 = vmul.f32 %v4991, %v5020
        %v5039 = vmul.f32 %v4992, %v5021
        %v5040 = vmul.f32 %v4993, %v5020
        %v5041 = vmul.f32 %v4994, %v5021
        %v5042 = vmul.f32 %v4995, %v5020
        %v5043 = vmul.f32 %v4996, %v5021
        %v5044 = vmul.f32 %v4997, %v5020
        %v5045 = vmul.f32 %v4998, %v5021
        %v5046 = vmul.f32 %v4999, %v5020
        %v5047 = vmul.f32 %v5000, %v5021
        %v5048 = vmul.f32 %v5001, %v5020
        %v5049 = vmul.f32 %v5002, %v5021
        %v5050 = vmul.f32 %v5003, %v5020
        %v5051 = vmul.f32 %v5004, %v5021
        %v5052 = vmul.f32 %v5005, %v5020
        %v5053 = vmul.f32 %v5006, %v5021
        %v5054 = vmul.f32 %v5007, %v5020
        %v5055 = vmul.f32 %v5008, %v5021
        %vm5088 = vcmask 1045504
        %v5089 = vrot.slane %v5024, 2
        %v5090 = vrot.slane %v5026, 2
        %v5091 = vsel %vm5088, %v5089, %v5090
        %v5092 = vrot.slane %v5025, 2
        %v5093 = vrot.slane %v5027, 2
        %v5094 = vsel %vm5088, %v5092, %v5093
        %v5095 = vrot.slane %v5028, 2
        %v5096 = vrot.slane %v5030, 2
        %v5097 = vsel %vm5088, %v5095, %v5096
        %v5098 = vrot.slane %v5029, 2
        %v5099 = vrot.slane %v5031, 2
        %v5100 = vsel %vm5088, %v5098, %v5099
        %v5101 = vrot.slane %v5032, 2
        %v5102 = vrot.slane %v5034, 2
        %v5103 = vsel %vm5088, %v5101, %v5102
        %v5104 = vrot.slane %v5033, 2
        %v5105 = vrot.slane %v5035, 2
        %v5106 = vsel %vm5088, %v5104, %v5105
        %v5107 = vrot.slane %v5036, 2
        %v5108 = vrot.slane %v5038, 2
        %v5109 = vsel %vm5088, %v5107, %v5108
        %v5110 = vrot.slane %v5037, 2
        %v5111 = vrot.slane %v5039, 2
        %v5112 = vsel %vm5088, %v5110, %v5111
        %v5113 = vrot.slane %v5040, 2
        %v5114 = vrot.slane %v5042, 2
        %v5115 = vsel %vm5088, %v5113, %v5114
        %v5116 = vrot.slane %v5041, 2
        %v5117 = vrot.slane %v5043, 2
        %v5118 = vsel %vm5088, %v5116, %v5117
        %v5119 = vrot.slane %v5044, 2
        %v5120 = vrot.slane %v5046, 2
        %v5121 = vsel %vm5088, %v5119, %v5120
        %v5122 = vrot.slane %v5045, 2
        %v5123 = vrot.slane %v5047, 2
        %v5124 = vsel %vm5088, %v5122, %v5123
        %v5125 = vrot.slane %v5048, 2
        %v5126 = vrot.slane %v5050, 2
        %v5127 = vsel %vm5088, %v5125, %v5126
        %v5128 = vrot.slane %v5049, 2
        %v5129 = vrot.slane %v5051, 2
        %v5130 = vsel %vm5088, %v5128, %v5129
        %v5131 = vrot.slane %v5052, 2
        %v5132 = vrot.slane %v5054, 2
        %v5133 = vsel %vm5088, %v5131, %v5132
        %v5134 = vrot.slane %v5053, 2
        %v5135 = vrot.slane %v5055, 2
        %v5136 = vsel %vm5088, %v5134, %v5135
        %v5153 = vadd.f32 %v4961, %v5091
        %v5154 = vadd.f32 %v4962, %v5094
        %v5155 = vadd.f32 %v4963, %v5097
        %v5156 = vadd.f32 %v4964, %v5100
        %v5157 = vadd.f32 %v4965, %v5103
        %v5158 = vadd.f32 %v4966, %v5106
        %v5159 = vadd.f32 %v4967, %v5109
        %v5160 = vadd.f32 %v4968, %v5112
        %v5161 = vadd.f32 %v4969, %v5115
        %v5162 = vadd.f32 %v4970, %v5118
        %v5163 = vadd.f32 %v4971, %v5121
        %v5164 = vadd.f32 %v4972, %v5124
        %v5165 = vadd.f32 %v4973, %v5127
        %v5166 = vadd.f32 %v4974, %v5130
        %v5167 = vadd.f32 %v4975, %v5133
        %v5168 = vadd.f32 %v4976, %v5136
        %s5169 = scalar_lea.vmem %s31, 10
        %v5170 = vld [vmem:[%s5169] sm:$0x3]
        %v5172 = vperm.slane %v5170, 0
        %v5173 = vperm.slane %v5170, 1
        %v5176 = vmul.f32 %v4981, %v5172
        %v5177 = vmul.f32 %v4982, %v5173
        %v5178 = vmul.f32 %v4983, %v5172
        %v5179 = vmul.f32 %v4984, %v5173
        %v5180 = vmul.f32 %v4985, %v5172
        %v5181 = vmul.f32 %v4986, %v5173
        %v5182 = vmul.f32 %v4987, %v5172
        %v5183 = vmul.f32 %v4988, %v5173
        %v5184 = vmul.f32 %v4989, %v5172
        %v5185 = vmul.f32 %v4990, %v5173
        %v5186 = vmul.f32 %v4991, %v5172
        %v5187 = vmul.f32 %v4992, %v5173
        %v5188 = vmul.f32 %v4993, %v5172
        %v5189 = vmul.f32 %v4994, %v5173
        %v5190 = vmul.f32 %v4995, %v5172
        %v5191 = vmul.f32 %v4996, %v5173
        %v5192 = vmul.f32 %v4997, %v5172
        %v5193 = vmul.f32 %v4998, %v5173
        %v5194 = vmul.f32 %v4999, %v5172
        %v5195 = vmul.f32 %v5000, %v5173
        %v5196 = vmul.f32 %v5001, %v5172
        %v5197 = vmul.f32 %v5002, %v5173
        %v5198 = vmul.f32 %v5003, %v5172
        %v5199 = vmul.f32 %v5004, %v5173
        %v5200 = vmul.f32 %v5005, %v5172
        %v5201 = vmul.f32 %v5006, %v5173
        %v5202 = vmul.f32 %v5007, %v5172
        %v5203 = vmul.f32 %v5008, %v5173
        %v5204 = vmul.f32 %v5009, %v5172
        %v5205 = vmul.f32 %v5010, %v5173
        %v5206 = vmul.f32 %v5011, %v5172
        %v5207 = vmul.f32 %v5012, %v5173
        %v5240 = vrot.slane %v5176, 2
        %v5241 = vrot.slane %v5178, 2
        %v5242 = vsel %vm5088, %v5240, %v5241
        %v5243 = vrot.slane %v5177, 2
        %v5244 = vrot.slane %v5179, 2
        %v5245 = vsel %vm5088, %v5243, %v5244
        %v5246 = vrot.slane %v5180, 2
        %v5247 = vrot.slane %v5182, 2
        %v5248 = vsel %vm5088, %v5246, %v5247
        %v5249 = vrot.slane %v5181, 2
        %v5250 = vrot.slane %v5183, 2
        %v5251 = vsel %vm5088, %v5249, %v5250
        %v5252 = vrot.slane %v5184, 2
        %v5253 = vrot.slane %v5186, 2
        %v5254 = vsel %vm5088, %v5252, %v5253
        %v5255 = vrot.slane %v5185, 2
        %v5256 = vrot.slane %v5187, 2
        %v5257 = vsel %vm5088, %v5255, %v5256
        %v5258 = vrot.slane %v5188, 2
        %v5259 = vrot.slane %v5190, 2
        %v5260 = vsel %vm5088, %v5258, %v5259
        %v5261 = vrot.slane %v5189, 2
        %v5262 = vrot.slane %v5191, 2
        %v5263 = vsel %vm5088, %v5261, %v5262
        %v5264 = vrot.slane %v5192, 2
        %v5265 = vrot.slane %v5194, 2
        %v5266 = vsel %vm5088, %v5264, %v5265
        %v5267 = vrot.slane %v5193, 2
        %v5268 = vrot.slane %v5195, 2
        %v5269 = vsel %vm5088, %v5267, %v5268
        %v5270 = vrot.slane %v5196, 2
        %v5271 = vrot.slane %v5198, 2
        %v5272 = vsel %vm5088, %v5270, %v5271
        %v5273 = vrot.slane %v5197, 2
        %v5274 = vrot.slane %v5199, 2
        %v5275 = vsel %vm5088, %v5273, %v5274
        %v5276 = vrot.slane %v5200, 2
        %v5277 = vrot.slane %v5202, 2
        %v5278 = vsel %vm5088, %v5276, %v5277
        %v5279 = vrot.slane %v5201, 2
        %v5280 = vrot.slane %v5203, 2
        %v5281 = vsel %vm5088, %v5279, %v5280
        %v5282 = vrot.slane %v5204, 2
        %v5283 = vrot.slane %v5206, 2
        %v5284 = vsel %vm5088, %v5282, %v5283
        %v5285 = vrot.slane %v5205, 2
        %v5286 = vrot.slane %v5207, 2
        %v5287 = vsel %vm5088, %v5285, %v5286
        %v5304 = vadd.f32 %v5153, %v5242
        %v5305 = vadd.f32 %v5154, %v5245
        %v5306 = vadd.f32 %v5155, %v5248
        %v5307 = vadd.f32 %v5156, %v5251
        %v5308 = vadd.f32 %v5157, %v5254
        %v5309 = vadd.f32 %v5158, %v5257
        %v5310 = vadd.f32 %v5159, %v5260
        %v5311 = vadd.f32 %v5160, %v5263
        %v5312 = vadd.f32 %v5161, %v5266
        %v5313 = vadd.f32 %v5162, %v5269
        %v5314 = vadd.f32 %v5163, %v5272
        %v5315 = vadd.f32 %v5164, %v5275
        %v5316 = vadd.f32 %v5165, %v5278
        %v5317 = vadd.f32 %v5166, %v5281
        %v5318 = vadd.f32 %v5167, %v5284
        %v5319 = vadd.f32 %v5168, %v5287
        %s5320 = scalar_lea.vmem %s31, 16
        %v5321 = vld [vmem:[%s5320] sm:$0x3]
        %v5323 = vperm.slane %v5321, 0
        %v5324 = vperm.slane %v5321, 1
        %v5327 = vmul.f32 %v4985, %v5323
        %v5328 = vmul.f32 %v4986, %v5324
        %v5329 = vmul.f32 %v4987, %v5323
        %v5330 = vmul.f32 %v4988, %v5324
        %v5331 = vmul.f32 %v4989, %v5323
        %v5332 = vmul.f32 %v4990, %v5324
        %v5333 = vmul.f32 %v4991, %v5323
        %v5334 = vmul.f32 %v4992, %v5324
        %v5335 = vmul.f32 %v4993, %v5323
        %v5336 = vmul.f32 %v4994, %v5324
        %v5337 = vmul.f32 %v4995, %v5323
        %v5338 = vmul.f32 %v4996, %v5324
        %v5339 = vmul.f32 %v4997, %v5323
        %v5340 = vmul.f32 %v4998, %v5324
        %v5341 = vmul.f32 %v4999, %v5323
        %v5342 = vmul.f32 %v5000, %v5324
        %v5343 = vmul.f32 %v5001, %v5323
        %v5344 = vmul.f32 %v5002, %v5324
        %v5345 = vmul.f32 %v5003, %v5323
        %v5346 = vmul.f32 %v5004, %v5324
        %v5347 = vmul.f32 %v5005, %v5323
        %v5348 = vmul.f32 %v5006, %v5324
        %v5349 = vmul.f32 %v5007, %v5323
        %v5350 = vmul.f32 %v5008, %v5324
        %v5351 = vmul.f32 %v5009, %v5323
        %v5352 = vmul.f32 %v5010, %v5324
        %v5353 = vmul.f32 %v5011, %v5323
        %v5354 = vmul.f32 %v5012, %v5324
        %v5355 = vmul.f32 %v5013, %v5323
        %v5356 = vmul.f32 %v5014, %v5324
        %v5357 = vmul.f32 %v5015, %v5323
        %v5358 = vmul.f32 %v5016, %v5324
        %v5391 = vrot.slane %v5327, 2
        %v5392 = vrot.slane %v5329, 2
        %v5393 = vsel %vm5088, %v5391, %v5392
        %v5394 = vrot.slane %v5328, 2
        %v5395 = vrot.slane %v5330, 2
        %v5396 = vsel %vm5088, %v5394, %v5395
        %v5397 = vrot.slane %v5331, 2
        %v5398 = vrot.slane %v5333, 2
        %v5399 = vsel %vm5088, %v5397, %v5398
        %v5400 = vrot.slane %v5332, 2
        %v5401 = vrot.slane %v5334, 2
        %v5402 = vsel %vm5088, %v5400, %v5401
        %v5403 = vrot.slane %v5335, 2
        %v5404 = vrot.slane %v5337, 2
        %v5405 = vsel %vm5088, %v5403, %v5404
        %v5406 = vrot.slane %v5336, 2
        %v5407 = vrot.slane %v5338, 2
        %v5408 = vsel %vm5088, %v5406, %v5407
        %v5409 = vrot.slane %v5339, 2
        %v5410 = vrot.slane %v5341, 2
        %v5411 = vsel %vm5088, %v5409, %v5410
        %v5412 = vrot.slane %v5340, 2
        %v5413 = vrot.slane %v5342, 2
        %v5414 = vsel %vm5088, %v5412, %v5413
        %v5415 = vrot.slane %v5343, 2
        %v5416 = vrot.slane %v5345, 2
        %v5417 = vsel %vm5088, %v5415, %v5416
        %v5418 = vrot.slane %v5344, 2
        %v5419 = vrot.slane %v5346, 2
        %v5420 = vsel %vm5088, %v5418, %v5419
        %v5421 = vrot.slane %v5347, 2
        %v5422 = vrot.slane %v5349, 2
        %v5423 = vsel %vm5088, %v5421, %v5422
        %v5424 = vrot.slane %v5348, 2
        %v5425 = vrot.slane %v5350, 2
        %v5426 = vsel %vm5088, %v5424, %v5425
        %v5427 = vrot.slane %v5351, 2
        %v5428 = vrot.slane %v5353, 2
        %v5429 = vsel %vm5088, %v5427, %v5428
        %v5430 = vrot.slane %v5352, 2
        %v5431 = vrot.slane %v5354, 2
        %v5432 = vsel %vm5088, %v5430, %v5431
        %v5433 = vrot.slane %v5355, 2
        %v5434 = vrot.slane %v5357, 2
        %v5435 = vsel %vm5088, %v5433, %v5434
        %v5436 = vrot.slane %v5356, 2
        %v5437 = vrot.slane %v5358, 2
        %v5438 = vsel %vm5088, %v5436, %v5437
        %v5455 = vadd.f32 %v5304, %v5393
        %v5456 = vadd.f32 %v5305, %v5396
        %v5457 = vadd.f32 %v5306, %v5399
        %v5458 = vadd.f32 %v5307, %v5402
        %v5459 = vadd.f32 %v5308, %v5405
        %v5460 = vadd.f32 %v5309, %v5408
        %v5461 = vadd.f32 %v5310, %v5411
        %v5462 = vadd.f32 %v5311, %v5414
        %v5463 = vadd.f32 %v5312, %v5417
        %v5464 = vadd.f32 %v5313, %v5420
        %v5465 = vadd.f32 %v5314, %v5423
        %v5466 = vadd.f32 %v5315, %v5426
        %v5467 = vadd.f32 %v5316, %v5429
        %v5468 = vadd.f32 %v5317, %v5432
        %v5469 = vadd.f32 %v5318, %v5435
        %v5470 = vadd.f32 %v5319, %v5438
        %v5471 = vld [vmem:[%s33] sm:$0x3]
        %v5473 = vperm.slane %v5471, 0
        %v5474 = vperm.slane %v5471, 1
        %v5477 = vadd.f32 %v5455, %v5473
        %v5478 = vadd.f32 %v5456, %v5474
        %v5479 = vadd.f32 %v5457, %v5473
        %v5480 = vadd.f32 %v5458, %v5474
        %v5481 = vadd.f32 %v5459, %v5473
        %v5482 = vadd.f32 %v5460, %v5474
        %v5483 = vadd.f32 %v5461, %v5473
        %v5484 = vadd.f32 %v5462, %v5474
        %v5485 = vadd.f32 %v5463, %v5473
        %v5486 = vadd.f32 %v5464, %v5474
        %v5487 = vadd.f32 %v5465, %v5473
        %v5488 = vadd.f32 %v5466, %v5474
        %v5489 = vadd.f32 %v5467, %v5473
        %v5490 = vadd.f32 %v5468, %v5474
        %v5491 = vadd.f32 %v5469, %v5473
        %v5492 = vadd.f32 %v5470, %v5474
        %v5493 = vmax.f32 %v5477, 0.0
        %v5494 = vmax.f32 %v5478, 0.0
        %v5495 = vmax.f32 %v5479, 0.0
        %v5496 = vmax.f32 %v5480, 0.0
        %v5497 = vmax.f32 %v5481, 0.0
        %v5498 = vmax.f32 %v5482, 0.0
        %v5499 = vmax.f32 %v5483, 0.0
        %v5500 = vmax.f32 %v5484, 0.0
        %v5501 = vmax.f32 %v5485, 0.0
        %v5502 = vmax.f32 %v5486, 0.0
        %v5503 = vmax.f32 %v5487, 0.0
        %v5504 = vmax.f32 %v5488, 0.0
        %v5505 = vmax.f32 %v5489, 0.0
        %v5506 = vmax.f32 %v5490, 0.0
        %v5507 = vmax.f32 %v5491, 0.0
        %v5508 = vmax.f32 %v5492, 0.0
        %v5509 = vmin.f32 %v5493, 6.0
        %v5510 = vmin.f32 %v5494, 6.0
        %v5511 = vmin.f32 %v5495, 6.0
        %v5512 = vmin.f32 %v5496, 6.0
        %v5513 = vmin.f32 %v5497, 6.0
        %v5514 = vmin.f32 %v5498, 6.0
        %v5515 = vmin.f32 %v5499, 6.0
        %v5516 = vmin.f32 %v5500, 6.0
        %v5517 = vmin.f32 %v5501, 6.0
        %v5518 = vmin.f32 %v5502, 6.0
        %v5519 = vmin.f32 %v5503, 6.0
        %v5520 = vmin.f32 %v5504, 6.0
        %v5521 = vmin.f32 %v5505, 6.0
        %v5522 = vmin.f32 %v5506, 6.0
        %v5523 = vmin.f32 %v5507, 6.0
        %v5524 = vmin.f32 %v5508, 6.0
        %v5525 = vld [vmem:[%s35] sm:$0xff]
        %v5526 = vld [vmem:[%s35 + $0x8] sm:$0xff]
        %v5527 = vld [vmem:[%s35 + $0x10] sm:$0xff]
        %v5528 = vld [vmem:[%s35 + $0x18] sm:$0xff]
        %v5529 = vld [vmem:[%s35 + $0x20] sm:$0xff]
        %v5530 = vld [vmem:[%s35 + $0x28] sm:$0xff]
        %v5531 = vld [vmem:[%s35 + $0x30] sm:$0xff]
        %v5532 = vld [vmem:[%s35 + $0x38] sm:$0xff]
        %v5533 = vld [vmem:[%s35 + $0x40] sm:$0xff]
        %v5534 = vld [vmem:[%s35 + $0x48] sm:$0xff]
        %v5535 = vld [vmem:[%s35 + $0x50] sm:$0xff]
        %v5536 = vld [vmem:[%s35 + $0x58] sm:$0xff]
        %v5537 = vld [vmem:[%s35 + $0x60] sm:$0xff]
        %v5538 = vld [vmem:[%s35 + $0x68] sm:$0xff]
        %v5539 = vld [vmem:[%s35 + $0x70] sm:$0xff]
        %v5540 = vld [vmem:[%s35 + $0x78] sm:$0xff]
        %v5541 = vld [vmem:[%s35 + $0x80] sm:$0xff]
        %v5542 = vld [vmem:[%s35 + $0x88] sm:$0xff]
        %v5543 = vld [vmem:[%s37] sm:$0x1]
        %v5545 = vperm.slane %v5543, 0
        %v5548 = vsel %vm3056, %v5510, 0
        %v5551 = vsel %vm3056, %v5512, 0
        %v5554 = vsel %vm3056, %v5514, 0
        %v5557 = vsel %vm3056, %v5516, 0
        %v5560 = vsel %vm3056, %v5518, 0
        %v5563 = vsel %vm3056, %v5520, 0
        %v5566 = vsel %vm3056, %v5522, 0
        %v5569 = vsel %vm3056, %v5524, 0
        %5571 = vmatpush.msra.mxu0 %v5540
        %5572 = vmatpush.msra.mxu0 %v5539
        %5573 = vmatpush.msra.mxu0 %v5538
        %5574 = vmatpush.msra.mxu0 %v5537
        %5575 = vmatpush.msra.mxu0 %v5536
        %5576 = vmatpush.msra.mxu0 %v5535
        %5577 = vmatpush.msra.mxu0 %v5534
        %5578 = vmatpush.msra.mxu0 %v5533
        %5579 = vmatpush.msra.mxu0 %v5532
        %5580 = vmatpush.msra.mxu0 %v5531
        %5581 = vmatpush.msra.mxu0 %v5530
        %5582 = vmatpush.msra.mxu0 %v5529
        %5583 = vmatpush.msra.mxu0 %v5528
        %5584 = vmatpush.msra.mxu0 %v5527
        %5585 = vmatpush.msra.mxu0 %v5526
        %5586 = vmatpush.msra.mxu0 %v5525
        %5587 = vmatmul.f32.gmra.mxu0 %v5509
        %v5588 = vpop.f32.mrf.mxu0
        %v5589 = vadd.f32 %v5545, %v5588
        %5590 = vmatmul.f32.gmra.mxu0 %v5511
        %v5591 = vpop.f32.mrf.mxu0
        %v5592 = vadd.f32 %v5545, %v5591
        %5593 = vmatmul.f32.gmra.mxu0 %v5513
        %v5594 = vpop.f32.mrf.mxu0
        %v5595 = vadd.f32 %v5545, %v5594
        %5596 = vmatmul.f32.gmra.mxu0 %v5515
        %v5597 = vpop.f32.mrf.mxu0
        %v5598 = vadd.f32 %v5545, %v5597
        %5599 = vmatmul.f32.gmra.mxu0 %v5517
        %v5600 = vpop.f32.mrf.mxu0
        %v5601 = vadd.f32 %v5545, %v5600
        %5602 = vmatmul.f32.gmra.mxu0 %v5519
        %v5603 = vpop.f32.mrf.mxu0
        %v5604 = vadd.f32 %v5545, %v5603
        %5605 = vmatmul.f32.gmra.mxu0 %v5521
        %v5606 = vpop.f32.mrf.mxu0
        %v5607 = vadd.f32 %v5545, %v5606
        %5608 = vmatmul.f32.gmra.mxu0 %v5523
        %v5609 = vpop.f32.mrf.mxu0
        %v5610 = vadd.f32 %v5545, %v5609
        %5611 = vdwg.mxu0
        %5612 = vmatpush.msra.mxu0 0.0
        %5613 = vmatpush.msra.mxu0 0.0
        %5614 = vmatpush.msra.mxu0 0.0
        %5615 = vmatpush.msra.mxu0 0.0
        %5616 = vmatpush.msra.mxu0 0.0
        %5617 = vmatpush.msra.mxu0 0.0
        %5618 = vmatpush.msra.mxu0 0.0
        %5619 = vmatpush.msra.mxu0 0.0
        %5620 = vmatpush.msra.mxu0 0.0
        %5621 = vmatpush.msra.mxu0 0.0
        %5622 = vmatpush.msra.mxu0 0.0
        %5623 = vmatpush.msra.mxu0 0.0
        %5624 = vmatpush.msra.mxu0 0.0
        %5625 = vmatpush.msra.mxu0 0.0
        %5626 = vmatpush.msra.mxu0 %v5542
        %5627 = vmatpush.msra.mxu0 %v5541
        %5628 = vmatmul.f32.gmra.mxu0 %v5548
        %v5629 = vpop.f32.mrf.mxu0
        %v5630 = vadd.f32 %v5589, %v5629
        %5631 = vmatmul.f32.gmra.mxu0 %v5551
        %v5632 = vpop.f32.mrf.mxu0
        %v5633 = vadd.f32 %v5592, %v5632
        %5634 = vmatmul.f32.gmra.mxu0 %v5554
        %v5635 = vpop.f32.mrf.mxu0
        %v5636 = vadd.f32 %v5595, %v5635
        %5637 = vmatmul.f32.gmra.mxu0 %v5557
        %v5638 = vpop.f32.mrf.mxu0
        %v5639 = vadd.f32 %v5598, %v5638
        %5640 = vmatmul.f32.gmra.mxu0 %v5560
        %v5641 = vpop.f32.mrf.mxu0
        %v5642 = vadd.f32 %v5601, %v5641
        %5643 = vmatmul.f32.gmra.mxu0 %v5563
        %v5644 = vpop.f32.mrf.mxu0
        %v5645 = vadd.f32 %v5604, %v5644
        %5646 = vmatmul.f32.gmra.mxu0 %v5566
        %v5647 = vpop.f32.mrf.mxu0
        %v5648 = vadd.f32 %v5607, %v5647
        %5649 = vmatmul.f32.gmra.mxu0 %v5569
        %v5650 = vpop.f32.mrf.mxu0
        %v5651 = vadd.f32 %v5610, %v5650
        %5652 = vdwg.mxu0
        %v5653 = vadd.f32 %v5630, %v4050
        %v5654 = vadd.f32 %v5633, %v4053
        %v5655 = vadd.f32 %v5636, %v4056
        %v5656 = vadd.f32 %v5639, %v4059
        %v5657 = vadd.f32 %v5642, %v4062
        %v5658 = vadd.f32 %v5645, %v4065
        %v5659 = vadd.f32 %v5648, %v4068
        %v5660 = vadd.f32 %v5651, %v4071
        %5661 = vst.msk [vmem:[#allocation6] sm:$0xff] %vm4085, %v5653
        %5662 = vst.msk [vmem:[#allocation6 + $0x8] sm:$0xff] %vm4085, %v5654
        %5663 = vst.msk [vmem:[#allocation6 + $0x10] sm:$0xff] %vm4085, %v5655
        %5664 = vst.msk [vmem:[#allocation6 + $0x18] sm:$0xff] %vm4085, %v5656
        %5665 = vst.msk [vmem:[#allocation6 + $0x20] sm:$0xff] %vm4085, %v5657
        %5666 = vst.msk [vmem:[#allocation6 + $0x28] sm:$0xff] %vm4085, %v5658
        %5667 = vst.msk [vmem:[#allocation6 + $0x30] sm:$0xff] %vm4085, %v5659
        %5668 = vst.msk [vmem:[#allocation6 + $0x38] sm:$0xff] %vm4085, %v5660
        %v5669 = vld [vmem:[#allocation6] ss:$2 sm:$0xff]
        %s5670 = scalar_lea.vmem [#allocation6], 16
        %v5671 = vld [vmem:[%s5670] ss:$2 sm:$0xff]
        %s5672 = scalar_lea.vmem [#allocation6], 32
        %v5673 = vld [vmem:[%s5672] ss:$2 sm:$0xff]
        %s5674 = scalar_lea.vmem [#allocation6], 48
        %v5675 = vld [vmem:[%s5674] ss:$2 sm:$0xff]
        %s5676 = scalar_lea.vmem [#allocation6], 1
        %v5677 = vld [vmem:[%s5676] ss:$2 sm:$0xff]
        %s5678 = scalar_lea.vmem [#allocation6], 17
        %v5679 = vld [vmem:[%s5678] ss:$2 sm:$0xff]
        %s5680 = scalar_lea.vmem [#allocation6], 33
        %v5681 = vld [vmem:[%s5680] ss:$2 sm:$0xff]
        %s5682 = scalar_lea.vmem [#allocation6], 49
        %v5683 = vld [vmem:[%s5682] ss:$2 sm:$0xff]
        %v5684 = vld [vmem:[%s39] sm:$0xff]
        %v5685 = vld [vmem:[%s39 + $0x8] sm:$0xff]
        %v5686 = vld [vmem:[%s39 + $0x10] sm:$0xff]
        %v5687 = vld [vmem:[%s39 + $0x18] sm:$0xff]
        %v5688 = vld [vmem:[%s39 + $0x20] sm:$0xff]
        %v5689 = vld [vmem:[%s39 + $0x28] sm:$0xff]
        %v5690 = vld [vmem:[%s41] sm:$0x3]
        %v5692 = vperm.slane %v5690, 0
        %v5693 = vperm.slane %v5690, 1
        %v5697 = vsel %vm4085, %v5669, 0
        %v5700 = vsel %vm4085, %v5671, 0
        %v5703 = vsel %vm4085, %v5673, 0
        %v5706 = vsel %vm4085, %v5675, 0
        %5708 = vmatpush.msra.mxu0 0.0
        %5709 = vmatpush.msra.mxu0 0.0
        %5710 = vmatpush.msra.mxu0 0.0
        %5711 = vmatpush.msra.mxu0 0.0
        %5712 = vmatpush.msra.mxu0 0.0
        %5713 = vmatpush.msra.mxu0 0.0
        %5714 = vmatpush.msra.mxu0 0.0
        %5715 = vmatpush.msra.mxu0 0.0
        %5716 = vmatpush.msra.mxu0 0.0
        %5717 = vmatpush.msra.mxu0 0.0
        %5718 = vmatpush.msra.mxu0 0.0
        %5719 = vmatpush.msra.mxu0 0.0
        %5720 = vmatpush.msra.mxu0 0.0
        %5721 = vmatpush.msra.mxu0 %v5688
        %5722 = vmatpush.msra.mxu0 %v5686
        %5723 = vmatpush.msra.mxu0 %v5684
        %5724 = vmatmul.f32.gmra.mxu0 %v5697
        %v5725 = vpop.f32.mrf.mxu0
        %v5726 = vadd.f32 %v5692, %v5725
        %5727 = vmatmul.f32.gmra.mxu0 %v5700
        %v5728 = vpop.f32.mrf.mxu0
        %v5729 = vadd.f32 %v5692, %v5728
        %5730 = vmatmul.f32.gmra.mxu0 %v5703
        %v5731 = vpop.f32.mrf.mxu0
        %v5732 = vadd.f32 %v5692, %v5731
        %5733 = vmatmul.f32.gmra.mxu0 %v5706
        %v5734 = vpop.f32.mrf.mxu0
        %v5735 = vadd.f32 %v5692, %v5734
        %5736 = vdwg.mxu0
        %5737 = vmatpush.msra.mxu0 0.0
        %5738 = vmatpush.msra.mxu0 0.0
        %5739 = vmatpush.msra.mxu0 0.0
        %5740 = vmatpush.msra.mxu0 0.0
        %5741 = vmatpush.msra.mxu0 0.0
        %5742 = vmatpush.msra.mxu0 0.0
        %5743 = vmatpush.msra.mxu0 0.0
        %5744 = vmatpush.msra.mxu0 0.0
        %5745 = vmatpush.msra.mxu0 0.0
        %5746 = vmatpush.msra.mxu0 0.0
        %5747 = vmatpush.msra.mxu0 0.0
        %5748 = vmatpush.msra.mxu0 0.0
        %5749 = vmatpush.msra.mxu0 0.0
        %5750 = vmatpush.msra.mxu0 %v5689
        %5751 = vmatpush.msra.mxu0 %v5687
        %5752 = vmatpush.msra.mxu0 %v5685
        %5753 = vmatmul.f32.gmra.mxu0 %v5697
        %v5754 = vpop.f32.mrf.mxu0
        %v5755 = vadd.f32 %v5693, %v5754
        %5756 = vmatmul.f32.gmra.mxu0 %v5700
        %v5757 = vpop.f32.mrf.mxu0
        %v5758 = vadd.f32 %v5693, %v5757
        %5759 = vmatmul.f32.gmra.mxu0 %v5703
        %v5760 = vpop.f32.mrf.mxu0
        %v5761 = vadd.f32 %v5693, %v5760
        %5762 = vmatmul.f32.gmra.mxu0 %v5706
        %v5763 = vpop.f32.mrf.mxu0
        %v5764 = vadd.f32 %v5693, %v5763
        %5765 = vdwg.mxu0
        %v5766 = vmax.f32 %v5726, 0.0
        %v5767 = vmax.f32 %v5755, 0.0
        %v5768 = vmax.f32 %v5729, 0.0
        %v5769 = vmax.f32 %v5758, 0.0
        %v5770 = vmax.f32 %v5732, 0.0
        %v5771 = vmax.f32 %v5761, 0.0
        %v5772 = vmax.f32 %v5735, 0.0
        %v5773 = vmax.f32 %v5764, 0.0
        %v5774 = vmin.f32 %v5766, 6.0
        %v5775 = vmin.f32 %v5767, 6.0
        %v5776 = vmin.f32 %v5768, 6.0
        %v5777 = vmin.f32 %v5769, 6.0
        %v5778 = vmin.f32 %v5770, 6.0
        %v5779 = vmin.f32 %v5771, 6.0
        %v5780 = vmin.f32 %v5772, 6.0
        %v5781 = vmin.f32 %v5773, 6.0
        %v5783 = vsel %vm4085, %v5677, 0
        %v5786 = vsel %vm4085, %v5679, 0
        %v5789 = vsel %vm4085, %v5681, 0
        %v5792 = vsel %vm4085, %v5683, 0
        %5794 = vmatpush.msra.mxu0 0.0
        %5795 = vmatpush.msra.mxu0 0.0
        %5796 = vmatpush.msra.mxu0 0.0
        %5797 = vmatpush.msra.mxu0 0.0
        %5798 = vmatpush.msra.mxu0 0.0
        %5799 = vmatpush.msra.mxu0 0.0
        %5800 = vmatpush.msra.mxu0 0.0
        %5801 = vmatpush.msra.mxu0 0.0
        %5802 = vmatpush.msra.mxu0 0.0
        %5803 = vmatpush.msra.mxu0 0.0
        %5804 = vmatpush.msra.mxu0 0.0
        %5805 = vmatpush.msra.mxu0 0.0
        %5806 = vmatpush.msra.mxu0 0.0
        %5807 = vmatpush.msra.mxu0 %v5688
        %5808 = vmatpush.msra.mxu0 %v5686
        %5809 = vmatpush.msra.mxu0 %v5684
        %5810 = vmatmul.f32.gmra.mxu0 %v5783
        %v5811 = vpop.f32.mrf.mxu0
        %v5812 = vadd.f32 %v5692, %v5811
        %5813 = vmatmul.f32.gmra.mxu0 %v5786
        %v5814 = vpop.f32.mrf.mxu0
        %v5815 = vadd.f32 %v5692, %v5814
        %5816 = vmatmul.f32.gmra.mxu0 %v5789
        %v5817 = vpop.f32.mrf.mxu0
        %v5818 = vadd.f32 %v5692, %v5817
        %5819 = vmatmul.f32.gmra.mxu0 %v5792
        %v5820 = vpop.f32.mrf.mxu0
        %v5821 = vadd.f32 %v5692, %v5820
        %5822 = vdwg.mxu0
        %5823 = vmatpush.msra.mxu0 0.0
        %5824 = vmatpush.msra.mxu0 0.0
        %5825 = vmatpush.msra.mxu0 0.0
        %5826 = vmatpush.msra.mxu0 0.0
        %5827 = vmatpush.msra.mxu0 0.0
        %5828 = vmatpush.msra.mxu0 0.0
        %5829 = vmatpush.msra.mxu0 0.0
        %5830 = vmatpush.msra.mxu0 0.0
        %5831 = vmatpush.msra.mxu0 0.0
        %5832 = vmatpush.msra.mxu0 0.0
        %5833 = vmatpush.msra.mxu0 0.0
        %5834 = vmatpush.msra.mxu0 0.0
        %5835 = vmatpush.msra.mxu0 0.0
        %5836 = vmatpush.msra.mxu0 %v5689
        %5837 = vmatpush.msra.mxu0 %v5687
        %5838 = vmatpush.msra.mxu0 %v5685
        %5839 = vmatmul.f32.gmra.mxu0 %v5783
        %v5840 = vpop.f32.mrf.mxu0
        %v5841 = vadd.f32 %v5693, %v5840
        %5842 = vmatmul.f32.gmra.mxu0 %v5786
        %v5843 = vpop.f32.mrf.mxu0
        %v5844 = vadd.f32 %v5693, %v5843
        %5845 = vmatmul.f32.gmra.mxu0 %v5789
        %v5846 = vpop.f32.mrf.mxu0
        %v5847 = vadd.f32 %v5693, %v5846
        %5848 = vmatmul.f32.gmra.mxu0 %v5792
        %v5849 = vpop.f32.mrf.mxu0
        %v5850 = vadd.f32 %v5693, %v5849
        %5851 = vdwg.mxu0
        %v5852 = vmax.f32 %v5812, 0.0
        %v5853 = vmax.f32 %v5841, 0.0
        %v5854 = vmax.f32 %v5815, 0.0
        %v5855 = vmax.f32 %v5844, 0.0
        %v5856 = vmax.f32 %v5818, 0.0
        %v5857 = vmax.f32 %v5847, 0.0
        %v5858 = vmax.f32 %v5821, 0.0
        %v5859 = vmax.f32 %v5850, 0.0
        %v5860 = vmin.f32 %v5852, 6.0
        %v5861 = vmin.f32 %v5853, 6.0
        %v5862 = vmin.f32 %v5854, 6.0
        %v5863 = vmin.f32 %v5855, 6.0
        %v5864 = vmin.f32 %v5856, 6.0
        %v5865 = vmin.f32 %v5857, 6.0
        %v5866 = vmin.f32 %v5858, 6.0
        %v5867 = vmin.f32 %v5859, 6.0
        %5868 = vst [vmem:[#allocation7] sm:$0x1f] 0.0
        %vm5869 = vcmask 126976
        %5870 = vst.msk [vmem:[#allocation7 + $0x8] sm:$0x1f] %vm5869, 0.0
        %5871 = vst [vmem:[#allocation7 + $0x10] sm:$0x1f] 0.0
        %5872 = vst.msk [vmem:[#allocation7 + $0x18] sm:$0x1f] %vm5869, 0.0
        %5873 = vst [vmem:[#allocation7 + $0x20] sm:$0x1f] 0.0
        %5874 = vst.msk [vmem:[#allocation7 + $0x28] sm:$0x1f] %vm5869, 0.0
        %5875 = vst [vmem:[#allocation7 + $0x30] sm:$0x1f] 0.0
        %5876 = vst.msk [vmem:[#allocation7 + $0x38] sm:$0x1f] %vm5869, 0.0
        %5877 = vst [vmem:[#allocation7 + $0x40] sm:$0x1f] 0.0
        %5878 = vst.msk [vmem:[#allocation7 + $0x48] sm:$0x1f] %vm5869, 0.0
        %5879 = vst [vmem:[#allocation7 + $0x50] sm:$0x1f] 0.0
        %5880 = vst.msk [vmem:[#allocation7 + $0x58] sm:$0x1f] %vm5869, 0.0
        %5881 = vst [vmem:[#allocation7 + $0x60] sm:$0x1f] 0.0
        %5882 = vst.msk [vmem:[#allocation7 + $0x68] sm:$0x1f] %vm5869, 0.0
        %5883 = vst [vmem:[#allocation7 + $0x70] sm:$0x1f] 0.0
        %5884 = vst.msk [vmem:[#allocation7 + $0x78] sm:$0x1f] %vm5869, 0.0
        %5885 = vst [vmem:[#allocation7 + $0x80] sm:$0x1f] 0.0
        %5886 = vst.msk [vmem:[#allocation7 + $0x88] sm:$0x1f] %vm5869, 0.0
        %5887 = vst [vmem:[#allocation7 + $0x90] sm:$0x1f] 0.0
        %5888 = vst.msk [vmem:[#allocation7 + $0x98] sm:$0x1f] %vm5869, 0.0
        %5889 = vst [vmem:[#allocation7 + $0xa0] sm:$0x1f] 0.0
        %5890 = vst.msk [vmem:[#allocation7 + $0xa8] sm:$0x1f] %vm5869, 0.0
        %5891 = vst [vmem:[#allocation7 + $0xb0] sm:$0x1f] 0.0
        %5892 = vst.msk [vmem:[#allocation7 + $0xb8] sm:$0x1f] %vm5869, 0.0
        %5893 = vst [vmem:[#allocation7 + $0xc0] sm:$0x1f] 0.0
        %5894 = vst.msk [vmem:[#allocation7 + $0xc8] sm:$0x1f] %vm5869, 0.0
        %5895 = vst [vmem:[#allocation7 + $0xd0] sm:$0x1f] 0.0
        %5896 = vst.msk [vmem:[#allocation7 + $0xd8] sm:$0x1f] %vm5869, 0.0
        %5897 = vst [vmem:[#allocation7 + $0xe0] sm:$0x1f] 0.0
        %5898 = vst.msk [vmem:[#allocation7 + $0xe8] sm:$0x1f] %vm5869, 0.0
        %5899 = vst [vmem:[#allocation7 + $0xf0] sm:$0x1f] 0.0
        %5900 = vst.msk [vmem:[#allocation7 + $0xf8] sm:$0x1f] %vm5869, 0.0
        %5901 = vst [vmem:[#allocation7 + $0x100] sm:$0x1f] 0.0
        %5902 = vst.msk [vmem:[#allocation7 + $0x108] sm:$0x1f] %vm5869, 0.0
        %5903 = vst [vmem:[#allocation7 + $0x110] sm:$0x1f] 0.0
        %5904 = vst.msk [vmem:[#allocation7 + $0x118] sm:$0x1f] %vm5869, 0.0
        %5905 = vst [vmem:[#allocation7 + $0x120] sm:$0x1f] 0.0
        %5906 = vst.msk [vmem:[#allocation7 + $0x128] sm:$0x1f] %vm5869, 0.0
        %5907 = vst [vmem:[#allocation7 + $0x130] sm:$0x1f] 0.0
        %5908 = vst.msk [vmem:[#allocation7 + $0x138] sm:$0x1f] %vm5869, 0.0
        %v5917 = vrot.slane %v5775, 4
        %v5918 = vrot.slane %v5777, 4
        %v5919 = vrot.slane %v5779, 4
        %v5920 = vrot.slane %v5781, 4
        %v5921 = vsel %vm1207, %v5774, %v5917
        %v5922 = vsel %vm1207, %v5917, %v5774
        %v5923 = vrot.slane %v5922, 4
        %v5924 = vsel %vm1207, %v5776, %v5918
        %v5925 = vsel %vm1207, %v5918, %v5776
        %v5926 = vrot.slane %v5925, 4
        %v5927 = vsel %vm1207, %v5778, %v5919
        %v5928 = vsel %vm1207, %v5919, %v5778
        %v5929 = vrot.slane %v5928, 4
        %v5930 = vsel %vm1207, %v5780, %v5920
        %v5931 = vsel %vm1207, %v5920, %v5780
        %v5932 = vrot.slane %v5931, 4
        %5933 = vst [vmem:[#allocation1] ss:$2 sm:$0xff] %v5921
        %v5934 = vld.sshfl [vmem:[#allocation1] sm:$0xff pattern:$0x75316420]
        %v5935 = vld.sshfl [vmem:[#allocation1 + $0x8] sm:$0xff pattern:$0x75316420]
        %s5936 = scalar_lea.vmem [#allocation1], 16
        %5937 = vst [vmem:[%s5936] ss:$2 sm:$0xff] %v5923
        %v5938 = vld.sshfl [vmem:[#allocation1 + $0x10] sm:$0xff pattern:$0x75316420]
        %v5939 = vld.sshfl [vmem:[#allocation1 + $0x18] sm:$0xff pattern:$0x75316420]
        %s5940 = scalar_lea.vmem [#allocation1], 32
        %5941 = vst [vmem:[%s5940] ss:$2 sm:$0xff] %v5924
        %v5942 = vld.sshfl [vmem:[#allocation1 + $0x20] sm:$0xff pattern:$0x75316420]
        %v5943 = vld.sshfl [vmem:[#allocation1 + $0x28] sm:$0xff pattern:$0x75316420]
        %s5944 = scalar_lea.vmem [#allocation1], 48
        %5945 = vst [vmem:[%s5944] ss:$2 sm:$0xff] %v5926
        %v5946 = vld.sshfl [vmem:[#allocation1 + $0x30] sm:$0xff pattern:$0x75316420]
        %v5947 = vld.sshfl [vmem:[#allocation1 + $0x38] sm:$0xff pattern:$0x75316420]
        %5948 = vst [vmem:[#allocation1] ss:$2 sm:$0xff] %v5927
        %v5949 = vld.sshfl [vmem:[#allocation1] sm:$0xff pattern:$0x75316420]
        %v5950 = vld.sshfl [vmem:[#allocation1 + $0x8] sm:$0xff pattern:$0x75316420]
        %5951 = vst [vmem:[%s5936] ss:$2 sm:$0xff] %v5929
        %v5952 = vld.sshfl [vmem:[#allocation1 + $0x10] sm:$0xff pattern:$0x75316420]
        %v5953 = vld.sshfl [vmem:[#allocation1 + $0x18] sm:$0xff pattern:$0x75316420]
        %5954 = vst [vmem:[%s5940] ss:$2 sm:$0xff] %v5930
        %v5955 = vld.sshfl [vmem:[#allocation1 + $0x20] sm:$0xff pattern:$0x75316420]
        %v5956 = vld.sshfl [vmem:[#allocation1 + $0x28] sm:$0xff pattern:$0x75316420]
        %5957 = vst [vmem:[%s5944] ss:$2 sm:$0xff] %v5932
        %v5958 = vld.sshfl [vmem:[#allocation1 + $0x30] sm:$0xff pattern:$0x75316420]
        %v5959 = vld.sshfl [vmem:[#allocation1 + $0x38] sm:$0xff pattern:$0x75316420]
        %s5976 = scalar_lea.vmem [#allocation7], 176
        %5977 = vst [vmem:[%s5976] sm:$0xf] %v5934
        %vm5978 = vcmask 125952
        %5979 = vst.msk [vmem:[%s5976 + $0x8] sm:$0xf] %vm5978, %v5935
        %5980 = vst [vmem:[%s5976 + $0x10] sm:$0xf] %v5938
        %5981 = vst.msk [vmem:[%s5976 + $0x18] sm:$0xf] %vm5978, %v5939
        %5982 = vst [vmem:[%s5976 + $0x20] sm:$0xf] %v5942
        %5983 = vst.msk [vmem:[%s5976 + $0x28] sm:$0xf] %vm5978, %v5943
        %5984 = vst [vmem:[%s5976 + $0x30] sm:$0xf] %v5946
        %5985 = vst.msk [vmem:[%s5976 + $0x38] sm:$0xf] %vm5978, %v5947
        %5986 = vst [vmem:[%s5976 + $0x40] sm:$0xf] %v5949
        %5987 = vst.msk [vmem:[%s5976 + $0x48] sm:$0xf] %vm5978, %v5950
        %5988 = vst [vmem:[%s5976 + $0x50] sm:$0xf] %v5952
        %5989 = vst.msk [vmem:[%s5976 + $0x58] sm:$0xf] %vm5978, %v5953
        %5990 = vst [vmem:[%s5976 + $0x60] sm:$0xf] %v5955
        %5991 = vst.msk [vmem:[%s5976 + $0x68] sm:$0xf] %vm5978, %v5956
        %5992 = vst [vmem:[%s5976 + $0x70] sm:$0xf] %v5958
        %5993 = vst.msk [vmem:[%s5976 + $0x78] sm:$0xf] %vm5978, %v5959
        %v6002 = vrot.slane %v5861, 4
        %v6003 = vrot.slane %v5863, 4
        %v6004 = vrot.slane %v5865, 4
        %v6005 = vrot.slane %v5867, 4
        %v6006 = vsel %vm1207, %v5860, %v6002
        %v6007 = vsel %vm1207, %v6002, %v5860
        %v6008 = vrot.slane %v6007, 4
        %v6009 = vsel %vm1207, %v5862, %v6003
        %v6010 = vsel %vm1207, %v6003, %v5862
        %v6011 = vrot.slane %v6010, 4
        %v6012 = vsel %vm1207, %v5864, %v6004
        %v6013 = vsel %vm1207, %v6004, %v5864
        %v6014 = vrot.slane %v6013, 4
        %v6015 = vsel %vm1207, %v5866, %v6005
        %v6016 = vsel %vm1207, %v6005, %v5866
        %v6017 = vrot.slane %v6016, 4
        %6018 = vst [vmem:[#allocation1] ss:$2 sm:$0xff] %v6006
        %v6019 = vld.sshfl [vmem:[#allocation1] sm:$0xff pattern:$0x75316420]
        %v6020 = vld.sshfl [vmem:[#allocation1 + $0x8] sm:$0xff pattern:$0x75316420]
        %s6021 = scalar_lea.vmem [#allocation1], 16
        %6022 = vst [vmem:[%s6021] ss:$2 sm:$0xff] %v6008
        %v6023 = vld.sshfl [vmem:[#allocation1 + $0x10] sm:$0xff pattern:$0x75316420]
        %v6024 = vld.sshfl [vmem:[#allocation1 + $0x18] sm:$0xff pattern:$0x75316420]
        %s6025 = scalar_lea.vmem [#allocation1], 32
        %6026 = vst [vmem:[%s6025] ss:$2 sm:$0xff] %v6009
        %v6027 = vld.sshfl [vmem:[#allocation1 + $0x20] sm:$0xff pattern:$0x75316420]
        %v6028 = vld.sshfl [vmem:[#allocation1 + $0x28] sm:$0xff pattern:$0x75316420]
        %s6029 = scalar_lea.vmem [#allocation1], 48
        %6030 = vst [vmem:[%s6029] ss:$2 sm:$0xff] %v6011
        %v6031 = vld.sshfl [vmem:[#allocation1 + $0x30] sm:$0xff pattern:$0x75316420]
        %v6032 = vld.sshfl [vmem:[#allocation1 + $0x38] sm:$0xff pattern:$0x75316420]
        %6033 = vst [vmem:[#allocation1] ss:$2 sm:$0xff] %v6012
        %v6034 = vld.sshfl [vmem:[#allocation1] sm:$0xff pattern:$0x75316420]
        %v6035 = vld.sshfl [vmem:[#allocation1 + $0x8] sm:$0xff pattern:$0x75316420]
        %6036 = vst [vmem:[%s6021] ss:$2 sm:$0xff] %v6014
        %v6037 = vld.sshfl [vmem:[#allocation1 + $0x10] sm:$0xff pattern:$0x75316420]
        %v6038 = vld.sshfl [vmem:[#allocation1 + $0x18] sm:$0xff pattern:$0x75316420]
        %6039 = vst [vmem:[%s6025] ss:$2 sm:$0xff] %v6015
        %v6040 = vld.sshfl [vmem:[#allocation1 + $0x20] sm:$0xff pattern:$0x75316420]
        %v6041 = vld.sshfl [vmem:[#allocation1 + $0x28] sm:$0xff pattern:$0x75316420]
        %6042 = vst [vmem:[%s6029] ss:$2 sm:$0xff] %v6017
        %v6043 = vld.sshfl [vmem:[#allocation1 + $0x30] sm:$0xff pattern:$0x75316420]
        %v6044 = vld.sshfl [vmem:[#allocation1 + $0x38] sm:$0xff pattern:$0x75316420]
        %v6045 = vrot.slane %v6019, 7
        %v6046 = vrot.slane %v6020, 7
        %v6047 = vrot.slane %v6023, 7
        %v6048 = vrot.slane %v6024, 7
        %v6049 = vrot.slane %v6027, 7
        %v6050 = vrot.slane %v6028, 7
        %v6051 = vrot.slane %v6031, 7
        %v6052 = vrot.slane %v6032, 7
        %v6053 = vrot.slane %v6034, 7
        %v6054 = vrot.slane %v6035, 7
        %v6055 = vrot.slane %v6037, 7
        %v6056 = vrot.slane %v6038, 7
        %v6057 = vrot.slane %v6040, 7
        %v6058 = vrot.slane %v6041, 7
        %v6059 = vrot.slane %v6043, 7
        %v6060 = vrot.slane %v6044, 7
        %s6077 = scalar_lea.vmem [#allocation7], 16
        %6078 = vst [vmem:[%s6077] sm:$0x1e] %v6045
        %vm6079 = vcmask 126977
        %6080 = vst.msk [vmem:[%s6077 + $0x8] sm:$0x1e] %vm6079, %v6046
        %6081 = vst [vmem:[%s6077 + $0x10] sm:$0x1e] %v6047
        %6082 = vst.msk [vmem:[%s6077 + $0x18] sm:$0x1e] %vm6079, %v6048
        %6083 = vst [vmem:[%s6077 + $0x20] sm:$0x1e] %v6049
        %6084 = vst.msk [vmem:[%s6077 + $0x28] sm:$0x1e] %vm6079, %v6050
        %6085 = vst [vmem:[%s6077 + $0x30] sm:$0x1e] %v6051
        %6086 = vst.msk [vmem:[%s6077 + $0x38] sm:$0x1e] %vm6079, %v6052
        %6087 = vst [vmem:[%s6077 + $0x40] sm:$0x1e] %v6053
        %6088 = vst.msk [vmem:[%s6077 + $0x48] sm:$0x1e] %vm6079, %v6054
        %6089 = vst [vmem:[%s6077 + $0x50] sm:$0x1e] %v6055
        %6090 = vst.msk [vmem:[%s6077 + $0x58] sm:$0x1e] %vm6079, %v6056
        %6091 = vst [vmem:[%s6077 + $0x60] sm:$0x1e] %v6057
        %6092 = vst.msk [vmem:[%s6077 + $0x68] sm:$0x1e] %vm6079, %v6058
        %6093 = vst [vmem:[%s6077 + $0x70] sm:$0x1e] %v6059
        %6094 = vst.msk [vmem:[%s6077 + $0x78] sm:$0x1e] %vm6079, %v6060
        %v6095 = vld [vmem:[#allocation7] sm:$0x1f]
        %v6096 = vld [vmem:[#allocation7 + $0x8] sm:$0x1f]
        %v6097 = vld [vmem:[#allocation7 + $0x10] sm:$0x1f]
        %v6098 = vld [vmem:[#allocation7 + $0x18] sm:$0x1f]
        %v6099 = vld [vmem:[#allocation7 + $0x20] sm:$0x1f]
        %v6100 = vld [vmem:[#allocation7 + $0x28] sm:$0x1f]
        %v6101 = vld [vmem:[#allocation7 + $0x30] sm:$0x1f]
        %v6102 = vld [vmem:[#allocation7 + $0x38] sm:$0x1f]
        %v6103 = vld [vmem:[#allocation7 + $0x40] sm:$0x1f]
        %v6104 = vld [vmem:[#allocation7 + $0x48] sm:$0x1f]
        %v6105 = vld [vmem:[#allocation7 + $0x50] sm:$0x1f]
        %v6106 = vld [vmem:[#allocation7 + $0x58] sm:$0x1f]
        %v6107 = vld [vmem:[#allocation7 + $0x60] sm:$0x1f]
        %v6108 = vld [vmem:[#allocation7 + $0x68] sm:$0x1f]
        %v6109 = vld [vmem:[#allocation7 + $0x70] sm:$0x1f]
        %v6110 = vld [vmem:[#allocation7 + $0x78] sm:$0x1f]
        %v6111 = vld [vmem:[#allocation7 + $0x80] sm:$0x1f]
        %v6112 = vld [vmem:[#allocation7 + $0x88] sm:$0x1f]
        %s6113 = scalar_lea.vmem [#allocation7], 160
        %v6114 = vld [vmem:[%s6113] sm:$0x1f]
        %v6115 = vld [vmem:[%s6113 + $0x8] sm:$0x1f]
        %v6116 = vld [vmem:[%s6113 + $0x10] sm:$0x1f]
        %v6117 = vld [vmem:[%s6113 + $0x18] sm:$0x1f]
        %v6118 = vld [vmem:[%s6113 + $0x20] sm:$0x1f]
        %v6119 = vld [vmem:[%s6113 + $0x28] sm:$0x1f]
        %v6120 = vld [vmem:[%s6113 + $0x30] sm:$0x1f]
        %v6121 = vld [vmem:[%s6113 + $0x38] sm:$0x1f]
        %v6122 = vld [vmem:[%s6113 + $0x40] sm:$0x1f]
        %v6123 = vld [vmem:[%s6113 + $0x48] sm:$0x1f]
        %v6124 = vld [vmem:[%s6113 + $0x50] sm:$0x1f]
        %v6125 = vld [vmem:[%s6113 + $0x58] sm:$0x1f]
        %v6126 = vld [vmem:[%s6113 + $0x60] sm:$0x1f]
        %v6127 = vld [vmem:[%s6113 + $0x68] sm:$0x1f]
        %v6128 = vld [vmem:[%s6113 + $0x70] sm:$0x1f]
        %v6129 = vld [vmem:[%s6113 + $0x78] sm:$0x1f]
        %v6130 = vld [vmem:[%s6113 + $0x80] sm:$0x1f]
        %v6131 = vld [vmem:[%s6113 + $0x88] sm:$0x1f]
        %v6132 = vld [vmem:[%s43] sm:$0x3]
        %v6134 = vperm.slane %v6132, 0
        %v6135 = vperm.slane %v6132, 1
        %v6138 = vmul.f32 %v6095, %v6134
        %v6139 = vmul.f32 %v6096, %v6135
        %v6140 = vmul.f32 %v6099, %v6134
        %v6141 = vmul.f32 %v6100, %v6135
        %v6142 = vmul.f32 %v6103, %v6134
        %v6143 = vmul.f32 %v6104, %v6135
        %v6144 = vmul.f32 %v6107, %v6134
        %v6145 = vmul.f32 %v6108, %v6135
        %v6146 = vadd.f32 %v6138, 0.0
        %v6147 = vadd.f32 %v6139, 0.0
        %v6148 = vadd.f32 %v6140, 0.0
        %v6149 = vadd.f32 %v6141, 0.0
        %v6150 = vadd.f32 %v6142, 0.0
        %v6151 = vadd.f32 %v6143, 0.0
        %v6152 = vadd.f32 %v6144, 0.0
        %v6153 = vadd.f32 %v6145, 0.0
        %s6154 = scalar_lea.vmem %s43, 6
        %v6155 = vld [vmem:[%s6154] sm:$0x3]
        %v6157 = vperm.slane %v6155, 0
        %v6158 = vperm.slane %v6155, 1
        %v6161 = vmul.f32 %v6097, %v6157
        %v6162 = vmul.f32 %v6098, %v6158
        %v6163 = vmul.f32 %v6101, %v6157
        %v6164 = vmul.f32 %v6102, %v6158
        %v6165 = vmul.f32 %v6105, %v6157
        %v6166 = vmul.f32 %v6106, %v6158
        %v6167 = vmul.f32 %v6109, %v6157
        %v6168 = vmul.f32 %v6110, %v6158
        %v6169 = vadd.f32 %v6146, %v6161
        %v6170 = vadd.f32 %v6147, %v6162
        %v6171 = vadd.f32 %v6148, %v6163
        %v6172 = vadd.f32 %v6149, %v6164
        %v6173 = vadd.f32 %v6150, %v6165
        %v6174 = vadd.f32 %v6151, %v6166
        %v6175 = vadd.f32 %v6152, %v6167
        %v6176 = vadd.f32 %v6153, %v6168
        %s6177 = scalar_lea.vmem %s43, 12
        %v6178 = vld [vmem:[%s6177] sm:$0x3]
        %v6180 = vperm.slane %v6178, 0
        %v6181 = vperm.slane %v6178, 1
        %v6184 = vmul.f32 %v6099, %v6180
        %v6185 = vmul.f32 %v6100, %v6181
        %v6186 = vmul.f32 %v6103, %v6180
        %v6187 = vmul.f32 %v6104, %v6181
        %v6188 = vmul.f32 %v6107, %v6180
        %v6189 = vmul.f32 %v6108, %v6181
        %v6190 = vmul.f32 %v6111, %v6180
        %v6191 = vmul.f32 %v6112, %v6181
        %v6192 = vadd.f32 %v6169, %v6184
        %v6193 = vadd.f32 %v6170, %v6185
        %v6194 = vadd.f32 %v6171, %v6186
        %v6195 = vadd.f32 %v6172, %v6187
        %v6196 = vadd.f32 %v6173, %v6188
        %v6197 = vadd.f32 %v6174, %v6189
        %v6198 = vadd.f32 %v6175, %v6190
        %v6199 = vadd.f32 %v6176, %v6191
        %s6200 = scalar_lea.vmem %s43, 2
        %v6201 = vld [vmem:[%s6200] sm:$0x3]
        %v6203 = vperm.slane %v6201, 0
        %v6204 = vperm.slane %v6201, 1
        %v6207 = vmul.f32 %v6114, %v6203
        %v6208 = vmul.f32 %v6115, %v6204
        %v6209 = vmul.f32 %v6118, %v6203
        %v6210 = vmul.f32 %v6119, %v6204
        %v6211 = vmul.f32 %v6122, %v6203
        %v6212 = vmul.f32 %v6123, %v6204
        %v6213 = vmul.f32 %v6126, %v6203
        %v6214 = vmul.f32 %v6127, %v6204
        %v6215 = vadd.f32 %v6192, %v6207
        %v6216 = vadd.f32 %v6193, %v6208
        %v6217 = vadd.f32 %v6194, %v6209
        %v6218 = vadd.f32 %v6195, %v6210
        %v6219 = vadd.f32 %v6196, %v6211
        %v6220 = vadd.f32 %v6197, %v6212
        %v6221 = vadd.f32 %v6198, %v6213
        %v6222 = vadd.f32 %v6199, %v6214
        %s6223 = scalar_lea.vmem %s43, 8
        %v6224 = vld [vmem:[%s6223] sm:$0x3]
        %v6226 = vperm.slane %v6224, 0
        %v6227 = vperm.slane %v6224, 1
        %v6230 = vmul.f32 %v6116, %v6226
        %v6231 = vmul.f32 %v6117, %v6227
        %v6232 = vmul.f32 %v6120, %v6226
        %v6233 = vmul.f32 %v6121, %v6227
        %v6234 = vmul.f32 %v6124, %v6226
        %v6235 = vmul.f32 %v6125, %v6227
        %v6236 = vmul.f32 %v6128, %v6226
        %v6237 = vmul.f32 %v6129, %v6227
        %v6238 = vadd.f32 %v6215, %v6230
        %v6239 = vadd.f32 %v6216, %v6231
        %v6240 = vadd.f32 %v6217, %v6232
        %v6241 = vadd.f32 %v6218, %v6233
        %v6242 = vadd.f32 %v6219, %v6234
        %v6243 = vadd.f32 %v6220, %v6235
        %v6244 = vadd.f32 %v6221, %v6236
        %v6245 = vadd.f32 %v6222, %v6237
        %s6246 = scalar_lea.vmem %s43, 14
        %v6247 = vld [vmem:[%s6246] sm:$0x3]
        %v6249 = vperm.slane %v6247, 0
        %v6250 = vperm.slane %v6247, 1
        %v6253 = vmul.f32 %v6118, %v6249
        %v6254 = vmul.f32 %v6119, %v6250
        %v6255 = vmul.f32 %v6122, %v6249
        %v6256 = vmul.f32 %v6123, %v6250
        %v6257 = vmul.f32 %v6126, %v6249
        %v6258 = vmul.f32 %v6127, %v6250
        %v6259 = vmul.f32 %v6130, %v6249
        %v6260 = vmul.f32 %v6131, %v6250
        %v6261 = vadd.f32 %v6238, %v6253
        %v6262 = vadd.f32 %v6239, %v6254
        %v6263 = vadd.f32 %v6240, %v6255
        %v6264 = vadd.f32 %v6241, %v6256
        %v6265 = vadd.f32 %v6242, %v6257
        %v6266 = vadd.f32 %v6243, %v6258
        %v6267 = vadd.f32 %v6244, %v6259
        %v6268 = vadd.f32 %v6245, %v6260
        %s6269 = scalar_lea.vmem %s43, 4
        %v6270 = vld [vmem:[%s6269] sm:$0x3]
        %v6272 = vperm.slane %v6270, 0
        %v6273 = vperm.slane %v6270, 1
        %v6276 = vmul.f32 %v6095, %v6272
        %v6277 = vmul.f32 %v6096, %v6273
        %v6278 = vmul.f32 %v6099, %v6272
        %v6279 = vmul.f32 %v6100, %v6273
        %v6280 = vmul.f32 %v6103, %v6272
        %v6281 = vmul.f32 %v6104, %v6273
        %v6282 = vmul.f32 %v6107, %v6272
        %v6283 = vmul.f32 %v6108, %v6273
        %v6292 = vrot.slane %v6276, 1
        %v6293 = vrot.slane %v6277, 1
        %v6294 = vrot.slane %v6278, 1
        %v6295 = vrot.slane %v6279, 1
        %v6296 = vrot.slane %v6280, 1
        %v6297 = vrot.slane %v6281, 1
        %v6298 = vrot.slane %v6282, 1
        %v6299 = vrot.slane %v6283, 1
        %v6308 = vadd.f32 %v6261, %v6292
        %v6309 = vadd.f32 %v6262, %v6293
        %v6310 = vadd.f32 %v6263, %v6294
        %v6311 = vadd.f32 %v6264, %v6295
        %v6312 = vadd.f32 %v6265, %v6296
        %v6313 = vadd.f32 %v6266, %v6297
        %v6314 = vadd.f32 %v6267, %v6298
        %v6315 = vadd.f32 %v6268, %v6299
        %s6316 = scalar_lea.vmem %s43, 10
        %v6317 = vld [vmem:[%s6316] sm:$0x3]
        %v6319 = vperm.slane %v6317, 0
        %v6320 = vperm.slane %v6317, 1
        %v6323 = vmul.f32 %v6097, %v6319
        %v6324 = vmul.f32 %v6098, %v6320
        %v6325 = vmul.f32 %v6101, %v6319
        %v6326 = vmul.f32 %v6102, %v6320
        %v6327 = vmul.f32 %v6105, %v6319
        %v6328 = vmul.f32 %v6106, %v6320
        %v6329 = vmul.f32 %v6109, %v6319
        %v6330 = vmul.f32 %v6110, %v6320
        %v6339 = vrot.slane %v6323, 1
        %v6340 = vrot.slane %v6324, 1
        %v6341 = vrot.slane %v6325, 1
        %v6342 = vrot.slane %v6326, 1
        %v6343 = vrot.slane %v6327, 1
        %v6344 = vrot.slane %v6328, 1
        %v6345 = vrot.slane %v6329, 1
        %v6346 = vrot.slane %v6330, 1
        %v6355 = vadd.f32 %v6308, %v6339
        %v6356 = vadd.f32 %v6309, %v6340
        %v6357 = vadd.f32 %v6310, %v6341
        %v6358 = vadd.f32 %v6311, %v6342
        %v6359 = vadd.f32 %v6312, %v6343
        %v6360 = vadd.f32 %v6313, %v6344
        %v6361 = vadd.f32 %v6314, %v6345
        %v6362 = vadd.f32 %v6315, %v6346
        %s6363 = scalar_lea.vmem %s43, 16
        %v6364 = vld [vmem:[%s6363] sm:$0x3]
        %v6366 = vperm.slane %v6364, 0
        %v6367 = vperm.slane %v6364, 1
        %v6370 = vmul.f32 %v6099, %v6366
        %v6371 = vmul.f32 %v6100, %v6367
        %v6372 = vmul.f32 %v6103, %v6366
        %v6373 = vmul.f32 %v6104, %v6367
        %v6374 = vmul.f32 %v6107, %v6366
        %v6375 = vmul.f32 %v6108, %v6367
        %v6376 = vmul.f32 %v6111, %v6366
        %v6377 = vmul.f32 %v6112, %v6367
        %v6386 = vrot.slane %v6370, 1
        %v6387 = vrot.slane %v6371, 1
        %v6388 = vrot.slane %v6372, 1
        %v6389 = vrot.slane %v6373, 1
        %v6390 = vrot.slane %v6374, 1
        %v6391 = vrot.slane %v6375, 1
        %v6392 = vrot.slane %v6376, 1
        %v6393 = vrot.slane %v6377, 1
        %v6402 = vadd.f32 %v6355, %v6386
        %v6403 = vadd.f32 %v6356, %v6387
        %v6404 = vadd.f32 %v6357, %v6388
        %v6405 = vadd.f32 %v6358, %v6389
        %v6406 = vadd.f32 %v6359, %v6390
        %v6407 = vadd.f32 %v6360, %v6391
        %v6408 = vadd.f32 %v6361, %v6392
        %v6409 = vadd.f32 %v6362, %v6393
        %v6418 = vrot.slane %v6403, 4
        %v6419 = vrot.slane %v6405, 4
        %v6420 = vrot.slane %v6407, 4
        %v6421 = vrot.slane %v6409, 4
        %v6422 = vsel %vm1207, %v6402, %v6418
        %v6423 = vsel %vm1207, %v6404, %v6419
        %v6424 = vsel %vm1207, %v6406, %v6420
        %v6425 = vsel %vm1207, %v6408, %v6421
        %v6430 = vld [vmem:[%s45] sm:$0x3]
        %v6432 = vperm.slane %v6430, 0
        %v6433 = vperm.slane %v6430, 1
        %v6434 = vrot.slane %v6433, 4
        %v6435 = vsel %vm1207, %v6432, %v6434
        %v6436 = vsel %vm1207, %v6434, %v6432
        %v6437 = vrot.slane %v6436, 4
        %v6440 = vadd.f32 %v6422, %v6435
        %v6441 = vadd.f32 %v6423, %v6437
        %v6442 = vadd.f32 %v6424, %v6435
        %v6443 = vadd.f32 %v6425, %v6437
        %v6444 = vmax.f32 %v6440, 0.0
        %v6445 = vmax.f32 %v6441, 0.0
        %v6446 = vmax.f32 %v6442, 0.0
        %v6447 = vmax.f32 %v6443, 0.0
        %v6448 = vmin.f32 %v6444, 6.0
        %v6449 = vmin.f32 %v6445, 6.0
        %v6450 = vmin.f32 %v6446, 6.0
        %v6451 = vmin.f32 %v6447, 6.0
        %v6452 = vld [vmem:[%s47] sm:$0xff]
        %v6453 = vld [vmem:[%s47 + $0x8] sm:$0xff]
        %v6454 = vld [vmem:[%s47 + $0x10] sm:$0xff]
        %v6455 = vld [vmem:[%s47 + $0x18] sm:$0xff]
        %v6456 = vld [vmem:[%s47 + $0x20] sm:$0xff]
        %v6457 = vld [vmem:[%s47 + $0x28] sm:$0xff]
        %v6458 = vld [vmem:[%s47 + $0x30] sm:$0xff]
        %v6459 = vld [vmem:[%s47 + $0x38] sm:$0xff]
        %v6460 = vld [vmem:[%s47 + $0x40] sm:$0xff]
        %v6461 = vld [vmem:[%s47 + $0x48] sm:$0xff]
        %v6462 = vld [vmem:[%s47 + $0x50] sm:$0xff]
        %v6463 = vld [vmem:[%s47 + $0x58] sm:$0xff]
        %v6464 = vld [vmem:[%s47 + $0x60] sm:$0xff]
        %v6465 = vld [vmem:[%s47 + $0x68] sm:$0xff]
        %v6466 = vld [vmem:[%s47 + $0x70] sm:$0xff]
        %v6467 = vld [vmem:[%s47 + $0x78] sm:$0xff]
        %v6468 = vld [vmem:[%s47 + $0x80] sm:$0xff]
        %v6469 = vld [vmem:[%s47 + $0x88] sm:$0xff]
        %v6470 = vld [vmem:[%s49] sm:$0x1]
        %v6472 = vperm.slane %v6470, 0
        %6478 = vst [vmem:[#allocation1] ss:$2 sm:$0xff] %v6448
        %s6479 = scalar_lea.vmem [#allocation1], 1
        %6480 = vst [vmem:[%s6479] ss:$2 sm:$0xff] %v6449
        %s6481 = scalar_lea.vmem [#allocation1], 16
        %6482 = vst [vmem:[%s6481] ss:$2 sm:$0xff] %v6450
        %s6483 = scalar_lea.vmem [#allocation1], 17
        %6484 = vst [vmem:[%s6483] ss:$2 sm:$0xff] %v6451
        %v6485 = vld.sshfl [vmem:[#allocation1] sm:$0xff pattern:$0x75316420]
        %v6486 = vld.sshfl [vmem:[#allocation1 + $0x8] sm:$0xff pattern:$0x75316420]
        %v6487 = vld.sshfl [vmem:[#allocation1 + $0x10] sm:$0xff pattern:$0x75316420]
        %v6488 = vld.sshfl [vmem:[#allocation1 + $0x18] sm:$0xff pattern:$0x75316420]
        %v6491 = vsel %vm3056, %v6486, 0
        %v6493 = vsel %vm3056, %v6488, 0
        %6495 = vmatpush.msra.mxu0 %v6467
        %6496 = vmatpush.msra.mxu0 %v6466
        %6497 = vmatpush.msra.mxu0 %v6465
        %6498 = vmatpush.msra.mxu0 %v6464
        %6499 = vmatpush.msra.mxu0 %v6463
        %6500 = vmatpush.msra.mxu0 %v6462
        %6501 = vmatpush.msra.mxu0 %v6461
        %6502 = vmatpush.msra.mxu0 %v6460
        %6503 = vmatpush.msra.mxu0 %v6459
        %6504 = vmatpush.msra.mxu0 %v6458
        %6505 = vmatpush.msra.mxu0 %v6457
        %6506 = vmatpush.msra.mxu0 %v6456
        %6507 = vmatpush.msra.mxu0 %v6455
        %6508 = vmatpush.msra.mxu0 %v6454
        %6509 = vmatpush.msra.mxu0 %v6453
        %6510 = vmatpush.msra.mxu0 %v6452
        %6511 = vmatmul.f32.gmra.mxu0 %v6485
        %v6512 = vpop.f32.mrf.mxu0
        %v6513 = vadd.f32 %v6472, %v6512
        %6514 = vmatmul.f32.gmra.mxu0 %v6487
        %v6515 = vpop.f32.mrf.mxu0
        %v6516 = vadd.f32 %v6472, %v6515
        %6517 = vdwg.mxu0
        %6518 = vmatpush.msra.mxu0 0.0
        %6519 = vmatpush.msra.mxu0 0.0
        %6520 = vmatpush.msra.mxu0 0.0
        %6521 = vmatpush.msra.mxu0 0.0
        %6522 = vmatpush.msra.mxu0 0.0
        %6523 = vmatpush.msra.mxu0 0.0
        %6524 = vmatpush.msra.mxu0 0.0
        %6525 = vmatpush.msra.mxu0 0.0
        %6526 = vmatpush.msra.mxu0 0.0
        %6527 = vmatpush.msra.mxu0 0.0
        %6528 = vmatpush.msra.mxu0 0.0
        %6529 = vmatpush.msra.mxu0 0.0
        %6530 = vmatpush.msra.mxu0 0.0
        %6531 = vmatpush.msra.mxu0 0.0
        %6532 = vmatpush.msra.mxu0 %v6469
        %6533 = vmatpush.msra.mxu0 %v6468
        %6534 = vmatmul.f32.gmra.mxu0 %v6491
        %v6535 = vpop.f32.mrf.mxu0
        %v6536 = vadd.f32 %v6513, %v6535
        %6537 = vmatmul.f32.gmra.mxu0 %v6493
        %v6538 = vpop.f32.mrf.mxu0
        %v6539 = vadd.f32 %v6516, %v6538
        %6540 = vdwg.mxu0
        %v6541 = vld [vmem:[%s51] sm:$0xff]
        %v6542 = vld [vmem:[%s51 + $0x8] sm:$0xff]
        %v6543 = vld [vmem:[%s51 + $0x10] sm:$0xff]
        %v6544 = vld [vmem:[%s51 + $0x18] sm:$0xff]
        %v6545 = vld [vmem:[%s51 + $0x20] sm:$0xff]
        %v6546 = vld [vmem:[%s51 + $0x28] sm:$0xff]
        %v6547 = vld [vmem:[%s51 + $0x30] sm:$0xff]
        %v6548 = vld [vmem:[%s51 + $0x38] sm:$0xff]
        %v6549 = vld [vmem:[%s53] sm:$0x3]
        %v6551 = vperm.slane %v6549, 0
        %v6552 = vperm.slane %v6549, 1
        %v6556 = vsel %vm1922, %v6536, 0
        %v6559 = vsel %vm1922, %v6539, 0
        %6561 = vmatpush.msra.mxu0 0.0
        %6562 = vmatpush.msra.mxu0 0.0
        %6563 = vmatpush.msra.mxu0 0.0
        %6564 = vmatpush.msra.mxu0 0.0
        %6565 = vmatpush.msra.mxu0 0.0
        %6566 = vmatpush.msra.mxu0 0.0
        %6567 = vmatpush.msra.mxu0 0.0
        %6568 = vmatpush.msra.mxu0 0.0
        %6569 = vmatpush.msra.mxu0 0.0
        %6570 = vmatpush.msra.mxu0 0.0
        %6571 = vmatpush.msra.mxu0 0.0
        %6572 = vmatpush.msra.mxu0 0.0
        %6573 = vmatpush.msra.mxu0 %v6547
        %6574 = vmatpush.msra.mxu0 %v6545
        %6575 = vmatpush.msra.mxu0 %v6543
        %6576 = vmatpush.msra.mxu0 %v6541
        %6577 = vmatmul.f32.gmra.mxu0 %v6556
        %v6578 = vpop.f32.mrf.mxu0
        %v6579 = vadd.f32 %v6551, %v6578
        %6580 = vmatmul.f32.gmra.mxu0 %v6559
        %v6581 = vpop.f32.mrf.mxu0
        %v6582 = vadd.f32 %v6551, %v6581
        %6583 = vdwg.mxu0
        %6584 = vmatpush.msra.mxu0 0.0
        %6585 = vmatpush.msra.mxu0 0.0
        %6586 = vmatpush.msra.mxu0 0.0
        %6587 = vmatpush.msra.mxu0 0.0
        %6588 = vmatpush.msra.mxu0 0.0
        %6589 = vmatpush.msra.mxu0 0.0
        %6590 = vmatpush.msra.mxu0 0.0
        %6591 = vmatpush.msra.mxu0 0.0
        %6592 = vmatpush.msra.mxu0 0.0
        %6593 = vmatpush.msra.mxu0 0.0
        %6594 = vmatpush.msra.mxu0 0.0
        %6595 = vmatpush.msra.mxu0 0.0
        %6596 = vmatpush.msra.mxu0 %v6548
        %6597 = vmatpush.msra.mxu0 %v6546
        %6598 = vmatpush.msra.mxu0 %v6544
        %6599 = vmatpush.msra.mxu0 %v6542
        %6600 = vmatmul.f32.gmra.mxu0 %v6556
        %v6601 = vpop.f32.mrf.mxu0
        %v6602 = vadd.f32 %v6552, %v6601
        %6603 = vmatmul.f32.gmra.mxu0 %v6559
        %v6604 = vpop.f32.mrf.mxu0
        %v6605 = vadd.f32 %v6552, %v6604
        %6606 = vdwg.mxu0
        %v6607 = vmax.f32 %v6579, 0.0
        %v6608 = vmax.f32 %v6602, 0.0
        %v6609 = vmax.f32 %v6582, 0.0
        %v6610 = vmax.f32 %v6605, 0.0
        %v6611 = vmin.f32 %v6607, 6.0
        %v6612 = vmin.f32 %v6608, 6.0
        %v6613 = vmin.f32 %v6609, 6.0
        %v6614 = vmin.f32 %v6610, 6.0
        %6615 = vst [vmem:[#allocation8] sm:$0x3f] 0.0
        %vm6616 = vcmask 521216
        %6617 = vst.msk [vmem:[#allocation8 + $0x8] sm:$0x3f] %vm6616, 0.0
        %6618 = vst [vmem:[#allocation8 + $0x10] sm:$0x3f] 0.0
        %6619 = vst.msk [vmem:[#allocation8 + $0x18] sm:$0x3f] %vm6616, 0.0
        %6620 = vst [vmem:[#allocation8 + $0x20] sm:$0x3f] 0.0
        %6621 = vst.msk [vmem:[#allocation8 + $0x28] sm:$0x3f] %vm6616, 0.0
        %6622 = vst [vmem:[#allocation8 + $0x30] sm:$0x3f] 0.0
        %6623 = vst.msk [vmem:[#allocation8 + $0x38] sm:$0x3f] %vm6616, 0.0
        %6624 = vst [vmem:[#allocation8 + $0x40] sm:$0x3f] 0.0
        %6625 = vst.msk [vmem:[#allocation8 + $0x48] sm:$0x3f] %vm6616, 0.0
        %6626 = vst [vmem:[#allocation8 + $0x50] sm:$0x3f] 0.0
        %6627 = vst.msk [vmem:[#allocation8 + $0x58] sm:$0x3f] %vm6616, 0.0
        %v6632 = vrot.slane %v6612, 4
        %v6633 = vrot.slane %v6614, 4
        %v6634 = vsel %vm1207, %v6611, %v6632
        %v6635 = vsel %vm1207, %v6632, %v6611
        %v6636 = vrot.slane %v6635, 4
        %v6637 = vsel %vm1207, %v6613, %v6633
        %v6638 = vsel %vm1207, %v6633, %v6613
        %v6639 = vrot.slane %v6638, 4
        %6640 = vst [vmem:[#allocation1] ss:$2 sm:$0xff] %v6634
        %v6641 = vld.sshfl [vmem:[#allocation1] sm:$0xff pattern:$0x75316420]
        %v6642 = vld.sshfl [vmem:[#allocation1 + $0x8] sm:$0xff pattern:$0x75316420]
        %s6643 = scalar_lea.vmem [#allocation1], 16
        %6644 = vst [vmem:[%s6643] ss:$2 sm:$0xff] %v6636
        %v6645 = vld.sshfl [vmem:[#allocation1 + $0x10] sm:$0xff pattern:$0x75316420]
        %v6646 = vld.sshfl [vmem:[#allocation1 + $0x18] sm:$0xff pattern:$0x75316420]
        %s6647 = scalar_lea.vmem [#allocation1], 32
        %6648 = vst [vmem:[%s6647] ss:$2 sm:$0xff] %v6637
        %v6649 = vld.sshfl [vmem:[#allocation1 + $0x20] sm:$0xff pattern:$0x75316420]
        %v6650 = vld.sshfl [vmem:[#allocation1 + $0x28] sm:$0xff pattern:$0x75316420]
        %s6651 = scalar_lea.vmem [#allocation1], 48
        %6652 = vst [vmem:[%s6651] ss:$2 sm:$0xff] %v6639
        %v6653 = vld.sshfl [vmem:[#allocation1 + $0x30] sm:$0xff pattern:$0x75316420]
        %v6654 = vld.sshfl [vmem:[#allocation1 + $0x38] sm:$0xff pattern:$0x75316420]
        %v6655 = vrot.slane %v6641, 7
        %v6656 = vrot.slane %v6642, 7
        %v6657 = vrot.slane %v6645, 7
        %v6658 = vrot.slane %v6646, 7
        %v6659 = vrot.slane %v6649, 7
        %v6660 = vrot.slane %v6650, 7
        %v6661 = vrot.slane %v6653, 7
        %v6662 = vrot.slane %v6654, 7
        %s6671 = scalar_lea.vmem [#allocation8], 16
        %6672 = vst [vmem:[%s6671] sm:$0x1e] %v6655
        %vm6673 = vcmask 520193
        %6674 = vst.msk [vmem:[%s6671 + $0x8] sm:$0x1e] %vm6673, %v6656
        %6675 = vst [vmem:[%s6671 + $0x10] sm:$0x1e] %v6657
        %6676 = vst.msk [vmem:[%s6671 + $0x18] sm:$0x1e] %vm6673, %v6658
        %6677 = vst [vmem:[%s6671 + $0x20] sm:$0x1e] %v6659
        %6678 = vst.msk [vmem:[%s6671 + $0x28] sm:$0x1e] %vm6673, %v6660
        %6679 = vst [vmem:[%s6671 + $0x30] sm:$0x1e] %v6661
        %6680 = vst.msk [vmem:[%s6671 + $0x38] sm:$0x1e] %vm6673, %v6662
        %v6681 = vld [vmem:[#allocation8] sm:$0xf]
        %v6682 = vld [vmem:[#allocation8 + $0x8] sm:$0xf]
        %v6683 = vld [vmem:[#allocation8 + $0x10] sm:$0xf]
        %v6684 = vld [vmem:[#allocation8 + $0x18] sm:$0xf]
        %v6685 = vld [vmem:[#allocation8 + $0x20] sm:$0xf]
        %v6686 = vld [vmem:[#allocation8 + $0x28] sm:$0xf]
        %v6687 = vld [vmem:[#allocation8 + $0x30] sm:$0xf]
        %v6688 = vld [vmem:[#allocation8 + $0x38] sm:$0xf]
        %v6689 = vld [vmem:[#allocation8 + $0x40] sm:$0xf]
        %v6690 = vld [vmem:[#allocation8 + $0x48] sm:$0xf]
        %v6691 = vld [vmem:[#allocation8 + $0x50] sm:$0xf]
        %v6692 = vld [vmem:[#allocation8 + $0x58] sm:$0xf]
        %v6693 = vld [vmem:[%s55] sm:$0x3]
        %v6695 = vperm.slane %v6693, 0
        %v6696 = vperm.slane %v6693, 1
        %v6699 = vmul.f32 %v6681, %v6695
        %v6700 = vmul.f32 %v6682, %v6696
        %v6701 = vmul.f32 %v6683, %v6695
        %v6702 = vmul.f32 %v6684, %v6696
        %v6703 = vmul.f32 %v6685, %v6695
        %v6704 = vmul.f32 %v6686, %v6696
        %v6705 = vmul.f32 %v6687, %v6695
        %v6706 = vmul.f32 %v6688, %v6696
        %v6707 = vadd.f32 %v6699, 0.0
        %v6708 = vadd.f32 %v6700, 0.0
        %v6709 = vadd.f32 %v6701, 0.0
        %v6710 = vadd.f32 %v6702, 0.0
        %v6711 = vadd.f32 %v6703, 0.0
        %v6712 = vadd.f32 %v6704, 0.0
        %v6713 = vadd.f32 %v6705, 0.0
        %v6714 = vadd.f32 %v6706, 0.0
        %s6715 = scalar_lea.vmem %s55, 6
        %v6716 = vld [vmem:[%s6715] sm:$0x3]
        %v6718 = vperm.slane %v6716, 0
        %v6719 = vperm.slane %v6716, 1
        %v6722 = vmul.f32 %v6683, %v6718
        %v6723 = vmul.f32 %v6684, %v6719
        %v6724 = vmul.f32 %v6685, %v6718
        %v6725 = vmul.f32 %v6686, %v6719
        %v6726 = vmul.f32 %v6687, %v6718
        %v6727 = vmul.f32 %v6688, %v6719
        %v6728 = vmul.f32 %v6689, %v6718
        %v6729 = vmul.f32 %v6690, %v6719
        %v6730 = vadd.f32 %v6707, %v6722
        %v6731 = vadd.f32 %v6708, %v6723
        %v6732 = vadd.f32 %v6709, %v6724
        %v6733 = vadd.f32 %v6710, %v6725
        %v6734 = vadd.f32 %v6711, %v6726
        %v6735 = vadd.f32 %v6712, %v6727
        %v6736 = vadd.f32 %v6713, %v6728
        %v6737 = vadd.f32 %v6714, %v6729
        %s6738 = scalar_lea.vmem %s55, 12
        %v6739 = vld [vmem:[%s6738] sm:$0x3]
        %v6741 = vperm.slane %v6739, 0
        %v6742 = vperm.slane %v6739, 1
        %v6745 = vmul.f32 %v6685, %v6741
        %v6746 = vmul.f32 %v6686, %v6742
        %v6747 = vmul.f32 %v6687, %v6741
        %v6748 = vmul.f32 %v6688, %v6742
        %v6749 = vmul.f32 %v6689, %v6741
        %v6750 = vmul.f32 %v6690, %v6742
        %v6751 = vmul.f32 %v6691, %v6741
        %v6752 = vmul.f32 %v6692, %v6742
        %v6753 = vadd.f32 %v6730, %v6745
        %v6754 = vadd.f32 %v6731, %v6746
        %v6755 = vadd.f32 %v6732, %v6747
        %v6756 = vadd.f32 %v6733, %v6748
        %v6757 = vadd.f32 %v6734, %v6749
        %v6758 = vadd.f32 %v6735, %v6750
        %v6759 = vadd.f32 %v6736, %v6751
        %v6760 = vadd.f32 %v6737, %v6752
        %v6761 = vld [vmem:[#allocation8] sm:$0x1e]
        %v6762 = vld [vmem:[#allocation8 + $0x8] sm:$0x1e]
        %v6763 = vld [vmem:[#allocation8 + $0x10] sm:$0x1e]
        %v6764 = vld [vmem:[#allocation8 + $0x18] sm:$0x1e]
        %v6765 = vld [vmem:[#allocation8 + $0x20] sm:$0x1e]
        %v6766 = vld [vmem:[#allocation8 + $0x28] sm:$0x1e]
        %v6767 = vld [vmem:[#allocation8 + $0x30] sm:$0x1e]
        %v6768 = vld [vmem:[#allocation8 + $0x38] sm:$0x1e]
        %v6769 = vld [vmem:[#allocation8 + $0x40] sm:$0x1e]
        %v6770 = vld [vmem:[#allocation8 + $0x48] sm:$0x1e]
        %v6771 = vld [vmem:[#allocation8 + $0x50] sm:$0x1e]
        %v6772 = vld [vmem:[#allocation8 + $0x58] sm:$0x1e]
        %s6773 = scalar_lea.vmem %s55, 2
        %v6774 = vld [vmem:[%s6773] sm:$0x3]
        %v6776 = vperm.slane %v6774, 0
        %v6777 = vperm.slane %v6774, 1
        %v6780 = vmul.f32 %v6761, %v6776
        %v6781 = vmul.f32 %v6762, %v6777
        %v6782 = vmul.f32 %v6763, %v6776
        %v6783 = vmul.f32 %v6764, %v6777
        %v6784 = vmul.f32 %v6765, %v6776
        %v6785 = vmul.f32 %v6766, %v6777
        %v6786 = vmul.f32 %v6767, %v6776
        %v6787 = vmul.f32 %v6768, %v6777
        %v6796 = vrot.slane %v6780, 1
        %v6797 = vrot.slane %v6781, 1
        %v6798 = vrot.slane %v6782, 1
        %v6799 = vrot.slane %v6783, 1
        %v6800 = vrot.slane %v6784, 1
        %v6801 = vrot.slane %v6785, 1
        %v6802 = vrot.slane %v6786, 1
        %v6803 = vrot.slane %v6787, 1
        %v6812 = vadd.f32 %v6753, %v6796
        %v6813 = vadd.f32 %v6754, %v6797
        %v6814 = vadd.f32 %v6755, %v6798
        %v6815 = vadd.f32 %v6756, %v6799
        %v6816 = vadd.f32 %v6757, %v6800
        %v6817 = vadd.f32 %v6758, %v6801
        %v6818 = vadd.f32 %v6759, %v6802
        %v6819 = vadd.f32 %v6760, %v6803
        %s6820 = scalar_lea.vmem %s55, 8
        %v6821 = vld [vmem:[%s6820] sm:$0x3]
        %v6823 = vperm.slane %v6821, 0
        %v6824 = vperm.slane %v6821, 1
        %v6827 = vmul.f32 %v6763, %v6823
        %v6828 = vmul.f32 %v6764, %v6824
        %v6829 = vmul.f32 %v6765, %v6823
        %v6830 = vmul.f32 %v6766, %v6824
        %v6831 = vmul.f32 %v6767, %v6823
        %v6832 = vmul.f32 %v6768, %v6824
        %v6833 = vmul.f32 %v6769, %v6823
        %v6834 = vmul.f32 %v6770, %v6824
        %v6843 = vrot.slane %v6827, 1
        %v6844 = vrot.slane %v6828, 1
        %v6845 = vrot.slane %v6829, 1
        %v6846 = vrot.slane %v6830, 1
        %v6847 = vrot.slane %v6831, 1
        %v6848 = vrot.slane %v6832, 1
        %v6849 = vrot.slane %v6833, 1
        %v6850 = vrot.slane %v6834, 1
        %v6859 = vadd.f32 %v6812, %v6843
        %v6860 = vadd.f32 %v6813, %v6844
        %v6861 = vadd.f32 %v6814, %v6845
        %v6862 = vadd.f32 %v6815, %v6846
        %v6863 = vadd.f32 %v6816, %v6847
        %v6864 = vadd.f32 %v6817, %v6848
        %v6865 = vadd.f32 %v6818, %v6849
        %v6866 = vadd.f32 %v6819, %v6850
        %s6867 = scalar_lea.vmem %s55, 14
        %v6868 = vld [vmem:[%s6867] sm:$0x3]
        %v6870 = vperm.slane %v6868, 0
        %v6871 = vperm.slane %v6868, 1
        %v6874 = vmul.f32 %v6765, %v6870
        %v6875 = vmul.f32 %v6766, %v6871
        %v6876 = vmul.f32 %v6767, %v6870
        %v6877 = vmul.f32 %v6768, %v6871
        %v6878 = vmul.f32 %v6769, %v6870
        %v6879 = vmul.f32 %v6770, %v6871
        %v6880 = vmul.f32 %v6771, %v6870
        %v6881 = vmul.f32 %v6772, %v6871
        %v6890 = vrot.slane %v6874, 1
        %v6891 = vrot.slane %v6875, 1
        %v6892 = vrot.slane %v6876, 1
        %v6893 = vrot.slane %v6877, 1
        %v6894 = vrot.slane %v6878, 1
        %v6895 = vrot.slane %v6879, 1
        %v6896 = vrot.slane %v6880, 1
        %v6897 = vrot.slane %v6881, 1
        %v6906 = vadd.f32 %v6859, %v6890
        %v6907 = vadd.f32 %v6860, %v6891
        %v6908 = vadd.f32 %v6861, %v6892
        %v6909 = vadd.f32 %v6862, %v6893
        %v6910 = vadd.f32 %v6863, %v6894
        %v6911 = vadd.f32 %v6864, %v6895
        %v6912 = vadd.f32 %v6865, %v6896
        %v6913 = vadd.f32 %v6866, %v6897
        %v6914 = vld [vmem:[#allocation8] sm:$0x3c]
        %v6915 = vld [vmem:[#allocation8 + $0x8] sm:$0x3c]
        %v6916 = vld [vmem:[#allocation8 + $0x10] sm:$0x3c]
        %v6917 = vld [vmem:[#allocation8 + $0x18] sm:$0x3c]
        %v6918 = vld [vmem:[#allocation8 + $0x20] sm:$0x3c]
        %v6919 = vld [vmem:[#allocation8 + $0x28] sm:$0x3c]
        %v6920 = vld [vmem:[#allocation8 + $0x30] sm:$0x3c]
        %v6921 = vld [vmem:[#allocation8 + $0x38] sm:$0x3c]
        %v6922 = vld [vmem:[#allocation8 + $0x40] sm:$0x3c]
        %v6923 = vld [vmem:[#allocation8 + $0x48] sm:$0x3c]
        %v6924 = vld [vmem:[#allocation8 + $0x50] sm:$0x3c]
        %v6925 = vld [vmem:[#allocation8 + $0x58] sm:$0x3c]
        %s6926 = scalar_lea.vmem %s55, 4
        %v6927 = vld [vmem:[%s6926] sm:$0x3]
        %v6929 = vperm.slane %v6927, 0
        %v6930 = vperm.slane %v6927, 1
        %v6933 = vmul.f32 %v6914, %v6929
        %v6934 = vmul.f32 %v6915, %v6930
        %v6935 = vmul.f32 %v6916, %v6929
        %v6936 = vmul.f32 %v6917, %v6930
        %v6937 = vmul.f32 %v6918, %v6929
        %v6938 = vmul.f32 %v6919, %v6930
        %v6939 = vmul.f32 %v6920, %v6929
        %v6940 = vmul.f32 %v6921, %v6930
        %v6949 = vrot.slane %v6933, 2
        %v6950 = vrot.slane %v6934, 2
        %v6951 = vrot.slane %v6935, 2
        %v6952 = vrot.slane %v6936, 2
        %v6953 = vrot.slane %v6937, 2
        %v6954 = vrot.slane %v6938, 2
        %v6955 = vrot.slane %v6939, 2
        %v6956 = vrot.slane %v6940, 2
        %v6965 = vadd.f32 %v6906, %v6949
        %v6966 = vadd.f32 %v6907, %v6950
        %v6967 = vadd.f32 %v6908, %v6951
        %v6968 = vadd.f32 %v6909, %v6952
        %v6969 = vadd.f32 %v6910, %v6953
        %v6970 = vadd.f32 %v6911, %v6954
        %v6971 = vadd.f32 %v6912, %v6955
        %v6972 = vadd.f32 %v6913, %v6956
        %s6973 = scalar_lea.vmem %s55, 10
        %v6974 = vld [vmem:[%s6973] sm:$0x3]
        %v6976 = vperm.slane %v6974, 0
        %v6977 = vperm.slane %v6974, 1
        %v6980 = vmul.f32 %v6916, %v6976
        %v6981 = vmul.f32 %v6917, %v6977
        %v6982 = vmul.f32 %v6918, %v6976
        %v6983 = vmul.f32 %v6919, %v6977
        %v6984 = vmul.f32 %v6920, %v6976
        %v6985 = vmul.f32 %v6921, %v6977
        %v6986 = vmul.f32 %v6922, %v6976
        %v6987 = vmul.f32 %v6923, %v6977
        %v6996 = vrot.slane %v6980, 2
        %v6997 = vrot.slane %v6981, 2
        %v6998 = vrot.slane %v6982, 2
        %v6999 = vrot.slane %v6983, 2
        %v7000 = vrot.slane %v6984, 2
        %v7001 = vrot.slane %v6985, 2
        %v7002 = vrot.slane %v6986, 2
        %v7003 = vrot.slane %v6987, 2
        %v7012 = vadd.f32 %v6965, %v6996
        %v7013 = vadd.f32 %v6966, %v6997
        %v7014 = vadd.f32 %v6967, %v6998
        %v7015 = vadd.f32 %v6968, %v6999
        %v7016 = vadd.f32 %v6969, %v7000
        %v7017 = vadd.f32 %v6970, %v7001
        %v7018 = vadd.f32 %v6971, %v7002
        %v7019 = vadd.f32 %v6972, %v7003
        %s7020 = scalar_lea.vmem %s55, 16
        %v7021 = vld [vmem:[%s7020] sm:$0x3]
        %v7023 = vperm.slane %v7021, 0
        %v7024 = vperm.slane %v7021, 1
        %v7027 = vmul.f32 %v6918, %v7023
        %v7028 = vmul.f32 %v6919, %v7024
        %v7029 = vmul.f32 %v6920, %v7023
        %v7030 = vmul.f32 %v6921, %v7024
        %v7031 = vmul.f32 %v6922, %v7023
        %v7032 = vmul.f32 %v6923, %v7024
        %v7033 = vmul.f32 %v6924, %v7023
        %v7034 = vmul.f32 %v6925, %v7024
        %v7043 = vrot.slane %v7027, 2
        %v7044 = vrot.slane %v7028, 2
        %v7045 = vrot.slane %v7029, 2
        %v7046 = vrot.slane %v7030, 2
        %v7047 = vrot.slane %v7031, 2
        %v7048 = vrot.slane %v7032, 2
        %v7049 = vrot.slane %v7033, 2
        %v7050 = vrot.slane %v7034, 2
        %v7059 = vadd.f32 %v7012, %v7043
        %v7060 = vadd.f32 %v7013, %v7044
        %v7061 = vadd.f32 %v7014, %v7045
        %v7062 = vadd.f32 %v7015, %v7046
        %v7063 = vadd.f32 %v7016, %v7047
        %v7064 = vadd.f32 %v7017, %v7048
        %v7065 = vadd.f32 %v7018, %v7049
        %v7066 = vadd.f32 %v7019, %v7050
        %v7075 = vrot.slane %v7060, 4
        %v7076 = vrot.slane %v7062, 4
        %v7077 = vrot.slane %v7064, 4
        %v7078 = vrot.slane %v7066, 4
        %v7079 = vsel %vm1207, %v7059, %v7075
        %v7080 = vsel %vm1207, %v7061, %v7076
        %v7081 = vsel %vm1207, %v7063, %v7077
        %v7082 = vsel %vm1207, %v7065, %v7078
        %v7087 = vld [vmem:[%s57] sm:$0x3]
        %v7089 = vperm.slane %v7087, 0
        %v7090 = vperm.slane %v7087, 1
        %v7091 = vrot.slane %v7090, 4
        %v7092 = vsel %vm1207, %v7089, %v7091
        %v7093 = vsel %vm1207, %v7091, %v7089
        %v7094 = vrot.slane %v7093, 4
        %v7097 = vadd.f32 %v7079, %v7092
        %v7098 = vadd.f32 %v7080, %v7094
        %v7099 = vadd.f32 %v7081, %v7092
        %v7100 = vadd.f32 %v7082, %v7094
        %v7101 = vmax.f32 %v7097, 0.0
        %v7102 = vmax.f32 %v7098, 0.0
        %v7103 = vmax.f32 %v7099, 0.0
        %v7104 = vmax.f32 %v7100, 0.0
        %v7105 = vmin.f32 %v7101, 6.0
        %v7106 = vmin.f32 %v7102, 6.0
        %v7107 = vmin.f32 %v7103, 6.0
        %v7108 = vmin.f32 %v7104, 6.0
        %v7109 = vld [vmem:[%s59] sm:$0xff]
        %v7110 = vld [vmem:[%s59 + $0x8] sm:$0xff]
        %v7111 = vld [vmem:[%s59 + $0x10] sm:$0xff]
        %v7112 = vld [vmem:[%s59 + $0x18] sm:$0xff]
        %v7113 = vld [vmem:[%s59 + $0x20] sm:$0xff]
        %v7114 = vld [vmem:[%s59 + $0x28] sm:$0xff]
        %v7115 = vld [vmem:[%s59 + $0x30] sm:$0xff]
        %v7116 = vld [vmem:[%s59 + $0x38] sm:$0xff]
        %v7117 = vld [vmem:[%s59 + $0x40] sm:$0xff]
        %v7118 = vld [vmem:[%s59 + $0x48] sm:$0xff]
        %v7119 = vld [vmem:[%s59 + $0x50] sm:$0xff]
        %v7120 = vld [vmem:[%s59 + $0x58] sm:$0xff]
        %v7121 = vld [vmem:[%s59 + $0x60] sm:$0xff]
        %v7122 = vld [vmem:[%s59 + $0x68] sm:$0xff]
        %v7123 = vld [vmem:[%s59 + $0x70] sm:$0xff]
        %v7124 = vld [vmem:[%s59 + $0x78] sm:$0xff]
        %v7125 = vld [vmem:[%s59 + $0x80] sm:$0xff]
        %v7126 = vld [vmem:[%s59 + $0x88] sm:$0xff]
        %v7127 = vld [vmem:[%s59 + $0x90] sm:$0xff]
        %v7128 = vld [vmem:[%s59 + $0x98] sm:$0xff]
        %v7129 = vld [vmem:[%s59 + $0xa0] sm:$0xff]
        %v7130 = vld [vmem:[%s59 + $0xa8] sm:$0xff]
        %v7131 = vld [vmem:[%s59 + $0xb0] sm:$0xff]
        %v7132 = vld [vmem:[%s59 + $0xb8] sm:$0xff]
        %v7133 = vld [vmem:[%s61] sm:$0x1]
        %v7135 = vperm.slane %v7133, 0
        %7141 = vst [vmem:[#allocation1] ss:$2 sm:$0xff] %v7105
        %s7142 = scalar_lea.vmem [#allocation1], 1
        %7143 = vst [vmem:[%s7142] ss:$2 sm:$0xff] %v7106
        %s7144 = scalar_lea.vmem [#allocation1], 16
        %7145 = vst [vmem:[%s7144] ss:$2 sm:$0xff] %v7107
        %s7146 = scalar_lea.vmem [#allocation1], 17
        %7147 = vst [vmem:[%s7146] ss:$2 sm:$0xff] %v7108
        %v7148 = vld.sshfl [vmem:[#allocation1] sm:$0xff pattern:$0x75316420]
        %v7149 = vld.sshfl [vmem:[#allocation1 + $0x8] sm:$0xff pattern:$0x75316420]
        %v7150 = vld.sshfl [vmem:[#allocation1 + $0x10] sm:$0xff pattern:$0x75316420]
        %v7151 = vld.sshfl [vmem:[#allocation1 + $0x18] sm:$0xff pattern:$0x75316420]
        %vm7154 = vcmask 523264
        %v7155 = vsel %vm7154, %v7149, 0
        %v7157 = vsel %vm7154, %v7151, 0
        %7159 = vmatpush.msra.mxu0 %v7124
        %7160 = vmatpush.msra.mxu0 %v7123
        %7161 = vmatpush.msra.mxu0 %v7122
        %7162 = vmatpush.msra.mxu0 %v7121
        %7163 = vmatpush.msra.mxu0 %v7120
        %7164 = vmatpush.msra.mxu0 %v7119
        %7165 = vmatpush.msra.mxu0 %v7118
        %7166 = vmatpush.msra.mxu0 %v7117
        %7167 = vmatpush.msra.mxu0 %v7116
        %7168 = vmatpush.msra.mxu0 %v7115
        %7169 = vmatpush.msra.mxu0 %v7114
        %7170 = vmatpush.msra.mxu0 %v7113
        %7171 = vmatpush.msra.mxu0 %v7112
        %7172 = vmatpush.msra.mxu0 %v7111
        %7173 = vmatpush.msra.mxu0 %v7110
        %7174 = vmatpush.msra.mxu0 %v7109
        %7175 = vmatmul.f32.gmra.mxu0 %v7148
        %v7176 = vpop.f32.mrf.mxu0
        %v7177 = vadd.f32 %v7135, %v7176
        %7178 = vmatmul.f32.gmra.mxu0 %v7150
        %v7179 = vpop.f32.mrf.mxu0
        %v7180 = vadd.f32 %v7135, %v7179
        %7181 = vdwg.mxu0
        %7182 = vmatpush.msra.mxu0 0.0
        %7183 = vmatpush.msra.mxu0 0.0
        %7184 = vmatpush.msra.mxu0 0.0
        %7185 = vmatpush.msra.mxu0 0.0
        %7186 = vmatpush.msra.mxu0 0.0
        %7187 = vmatpush.msra.mxu0 0.0
        %7188 = vmatpush.msra.mxu0 0.0
        %7189 = vmatpush.msra.mxu0 0.0
        %7190 = vmatpush.msra.mxu0 %v7132
        %7191 = vmatpush.msra.mxu0 %v7131
        %7192 = vmatpush.msra.mxu0 %v7130
        %7193 = vmatpush.msra.mxu0 %v7129
        %7194 = vmatpush.msra.mxu0 %v7128
        %7195 = vmatpush.msra.mxu0 %v7127
        %7196 = vmatpush.msra.mxu0 %v7126
        %7197 = vmatpush.msra.mxu0 %v7125
        %7198 = vmatmul.f32.gmra.mxu0 %v7155
        %v7199 = vpop.f32.mrf.mxu0
        %v7200 = vadd.f32 %v7177, %v7199
        %7201 = vmatmul.f32.gmra.mxu0 %v7157
        %v7202 = vpop.f32.mrf.mxu0
        %v7203 = vadd.f32 %v7180, %v7202
        %7204 = vdwg.mxu0
        %v7205 = vadd.f32 %v7200, %v6536
        %v7206 = vadd.f32 %v7203, %v6539
        %7207 = vst.msk [vmem:[%s951] sm:$0xff] %vm1922, %v7205
        %7208 = vst.msk [vmem:[%s951 + $0x8] sm:$0xff] %vm1922, %v7206
        %s7209 = sand.u32 %s741, 1
        %s7210 = scalar_lea.sflag [#allocation10], %s7209
        %s7211 = sand.u32 %s741, 1
        %s7212 = smul.addr %s7211, 16
        %s7213 = scalar_lea.vmem [#allocation9], %s7212
        // Predicated region
        $region145: #{mobilenet_v2_features.1} parent=143 // pred_check
          %p7214 = pneg %p751
        $region146: #{mobilenet_v2_features.1} parent=143 // pred_check_branch
          %7216 = sbr.rel (%p7214) target = $region148
        $region147: #{mobilenet_v2_features.1} parent=143 // pred_region
          %7218 = vsyncadd %s7210, 0
          %s7219 = smul.addr %s77, 2
          %s7220 = smul.addr %s7219, 8
          %s7221 = scalar_lea.hbm %s63, %s7220
          %s7222 = sshll.u32 %s7213, 4
          %s7223 = int_to_ptr.vmem [resolvable:$true] %s7222
          %s7224 = sshll.u32 %s7221, 4
          %s7225 = int_to_ptr.hbm [resolvable:$true] %s7224
          %7230 = dma.vmem_to_hbm [thread:$0]  %s7223, 256, %s7225, %s7210, 128, 128, 8
        $region148: #{mobilenet_v2_features.1} parent=143 // pred_fallthru
          _
      $region144: #{mobilenet_v2_features.1} parent=5 // pred_fallthru
        _
      %p7231 = scmp.le.s32.totalorder 2, %s72
      // Predicated region
      $region149: #{mobilenet_v2_features.1} parent=5 // pred_check
        %p7232 = pneg %p7231
      $region150: #{mobilenet_v2_features.1} parent=5 // pred_check_branch
        %7234 = sbr.rel (%p7232) target = $region152
      $region151: #{mobilenet_v2_features.1} parent=5 // pred_region
        %s7235 = ssub.s32 %s72, 2
        // Predicated region
        $region153: #{mobilenet_v2_features.1} parent=151 // pred_check
          %p7236 = pneg %p757
        $region154: #{mobilenet_v2_features.1} parent=151 // pred_check_branch
          %7238 = sbr.rel (%p7236) target = $region156
        $region155: #{mobilenet_v2_features.1} parent=151 // pred_region
          %s7239 = sand.u32 %s742, 1
          %s7240 = scalar_lea.sflag [#allocation10], %s7239
          %s7241 = sand.u32 %s742, 1
          %s7242 = smul.addr %s7241, 16
          %s7243 = scalar_lea.vmem [#allocation9], %s7242
          %7245 = dma.done %s7240, 256
        $region156: #{mobilenet_v2_features.1} parent=151 // pred_fallthru
          _
      $region152: #{mobilenet_v2_features.1} parent=5 // pred_fallthru
        _
    $region6: #{mobilenet_v2_features.1} parent=1 // loop_footer
      %s76 = sadd.s32 1, %s72
    $region7: #{mobilenet_v2_features.1} parent=1 // loop_footer_branch
      %71 = sbr.rel target = $region3
    $region8: #{mobilenet_v2_features.1} parent=1 // loop_exit
      _
    %7246 = vsyncpa [#allocation10], 1
    %s7247 = scalar_lea.sflag [#allocation10], 1
    %7248 = vsyncpa %s7247, 1

</llo_original>
